<compile_context>
chip_gen: v7x
topology: tpu7x:2x2x1
jax: 0.10.0
libtpu: 0.0.40
codegen_flags: <defaults>
</compile_context>

<pallas_src>
import functools

import jax
import jax.numpy as jnp
from jax.experimental import pallas as pl
from jax.experimental.pallas import tpu as pltpu

LANE = 128  # one slab == one full lane group


# ----------------------------- in-kernel helpers -----------------------------

def _mish(x):
    # mish(x) = x * tanh(softplus(x)) = x * u/(u+2),  u = e^x (e^x + 2)
    e = jnp.exp(jnp.minimum(x, 20.0))        # clamp: ratio rounds to 1.0 anyway
    u = e * (e + 2.0)
    return x * (u / (u + 2.0))


def _lane_shift_prev(v):
    # out[:, i] = v[:, i-1], out[:, 0] = 0    (single 128-lane slab)
    z = jnp.zeros((v.shape[0], 1), v.dtype)
    return jnp.concatenate([z, v[:, :LANE - 1]], axis=1)


def _lane_shift_next(v):
    # out[:, i] = v[:, i+1], out[:, LANE-1] = 0
    z = jnp.zeros((v.shape[0], 1), v.dtype)
    return jnp.concatenate([v[:, 1:], z], axis=1)


def _bn_mish_pool(z, scale, shift):
    # z: (C, W) slab-major activations.  Eval-mode BN + Mish + MaxPool(2).
    # Processed per slab pair -> bounded temporaries; pool pairs never straddle
    # samples because every sample spans an even number of slabs.
    C, W = z.shape
    scale_b = jnp.broadcast_to(scale, (C, LANE))   # hoisted broadcast
    shift_b = jnp.broadcast_to(shift, (C, LANE))
    parts = []
    for p in range(W // (2 * LANE)):
        ze = z[:, (2 * p) * LANE:(2 * p + 1) * LANE]
        zo = z[:, (2 * p + 1) * LANE:(2 * p + 2) * LANE]
        parts.append(jnp.maximum(_mish(ze * scale_b + shift_b),
                                 _mish(zo * scale_b + shift_b)))
    return parts[0] if len(parts) == 1 else jnp.concatenate(parts, axis=1)


def _conv3_bn_mish_pool(h, w_stacked, scale, shift, n, b_tile, cout):
    # Conv1d(k=3, stride=1, padding=1, bias=False) + BN + Mish + MaxPool(2).
    # h: (Cin, b_tile*n*LANE) f32 in per-sample slab layout.
    # w_stacked: (3*Cout, Cin) bf16 = rows [W_k0; W_k1; W_k2].
    # One matmul produces all three taps; the tap results are shifted by one
    # slab per sample (boundaries handled with a tiny lane shift) and summed.
    z = jnp.dot(w_stacked, h.astype(w_stacked.dtype),
                preferred_element_type=jnp.float32)            # (3*Cout, W)
    z0 = z[:cout]               # tap k=0  -> needs x[l-1]
    z1 = z[cout:2 * cout]       # tap k=1  -> x[l]
    z2 = z[2 * cout:3 * cout]   # tap k=2  -> x[l+1]
    scale_b = jnp.broadcast_to(scale, (cout, LANE))
    shift_b = jnp.broadcast_to(shift, (cout, LANE))
    parts = []
    for b in range(b_tile):
        base = b * n * LANE

        def slab(zz, r, _base=base):
            return zz[:, _base + r * LANE:_base + (r + 1) * LANE]

        for q in range(n // 2):
            re, ro = 2 * q, 2 * q + 1
            # conv output at slab `re`
            prev_e = (_lane_shift_prev(slab(z0, n - 1)) if re == 0
                      else slab(z0, re - 1))
            ce = prev_e + slab(z1, re) + slab(z2, re + 1)
            # conv output at slab `ro`
            next_o = (_lane_shift_next(slab(z2, 0)) if ro == n - 1
                      else slab(z2, ro + 1))
            co = slab(z0, ro - 1) + slab(z1, ro) + next_o
            parts.append(jnp.maximum(_mish(ce * scale_b + shift_b),
                                     _mish(co * scale_b + shift_b)))
    return parts[0] if len(parts) == 1 else jnp.concatenate(parts, axis=1)


# --------------------------------- the kernel ---------------------------------

def _qnet_kernel(nf, n0, b_tile,
                 x_ref, w_att_ref, s1_ref, t1_ref, w1_ref, s2_ref, t2_ref,
                 w2_ref, s3_ref, t3_ref, w3_ref, s4_ref, t4_ref,
                 wfc1_ref, wfc2_ref, wfc3_ref, o_ref, flat_scr):
    f32 = jnp.float32
    bf16 = jnp.bfloat16
    nf2 = 2 * nf

    x = x_ref[...].astype(bf16)                       # (Cin, b_tile*n0*LANE)

    # attention stand-in (1x1 projection, see TODO) + BN1 + Mish + Pool
    z = jnp.dot(w_att_ref[...], x, preferred_element_type=f32)
    h = _bn_mish_pool(z, s1_ref[...], t1_ref[...])            # (nf2, W0/2)

    # conv1 (k=1) + BN2 + Mish + Pool
    z = jnp.dot(w1_ref[...], h.astype(bf16), preferred_element_type=f32)
    h = _bn_mish_pool(z, s2_ref[...], t2_ref[...])            # (nf2, W0/4)

    # conv2 (k=3) + BN3 + Mish + Pool
    h = _conv3_bn_mish_pool(h, w2_ref[...], s3_ref[...], t3_ref[...],
                            n0 // 4, b_tile, nf2)             # (nf2, W0/8)

    # conv3 (k=3) + BN4 + Mish + Pool -> (nf, b_tile*LANE), natural per-sample order
    h = _conv3_bn_mish_pool(h, w3_ref[...], s4_ref[...], t4_ref[...],
                            n0 // 8, b_tile, nf)              # (nf, b_tile*LANE)

    # conFC1 (kernel_size=128 spans the remaining length); dropout == identity.
    # Re-layout (channel -> lanes, sample -> rows) via pure 128-lane block
    # copies into a tiny staging scratch (no in-kernel reshape), then one
    # K = nf*128 matmul with batch on the M axis.
    for b in range(b_tile):
        for c in range(nf):
            flat_scr[b:b + 1, c * LANE:(c + 1) * LANE] = \
                h[c:c + 1, b * LANE:(b + 1) * LANE]
    a = _mish(jnp.dot(flat_scr[...].astype(bf16), wfc1_ref[...],
                      preferred_element_type=f32))            # (b_tile, 512)
    a = _mish(jnp.dot(a.astype(bf16), wfc2_ref[...],
                      preferred_element_type=f32))            # (b_tile, 128)
    a = _mish(jnp.dot(a.astype(bf16), wfc3_ref[...],
                      preferred_element_type=f32))            # (b_tile, 128)
    o_ref[...] = a


# ------------------------------ pallas wrapper ---------------------------------

def _full_spec(arr):
    nd = arr.ndim
    return pl.BlockSpec(arr.shape, lambda g, _nd=nd: (0,) * _nd)


def q_net_forward(params, x_ncl, *, b_tile=2, output_dim=1):
    """x_ncl: (B, input_dim, L), same NCL layout as the PyTorch module."""
    B, cin, L = x_ncl.shape
    nf = params["bn4"][0].shape[0]
    n0 = L // LANE
    if L != 2048:
        raise ValueError("Q_net requires L == 2048 (conFC1 kernel_size=128 "
                         "after four MaxPool(2) stages).")

    # pad the batch to a multiple of b_tile
    Bp = ((B + b_tile - 1) // b_tile) * b_tile
    xp = x_ncl if Bp == B else jnp.pad(x_ncl, ((0, Bp - B), (0, 0), (0, 0)))
    G = Bp // b_tile

    # Host-side re-interleave into the slab layout (column r*128+i holds
    # element n0*i + r), done on the narrow 4-channel input, then group
    # b_tile samples along the lane axis for batch folding.
    x_slab = (xp.astype(jnp.float32)
              .reshape(Bp, cin, LANE, n0)
              .transpose(0, 1, 3, 2)
              .reshape(Bp, cin, L))
    x_grp = (x_slab.reshape(G, b_tile, cin, L)
             .transpose(0, 2, 1, 3)
             .reshape(G, cin, b_tile * L))

    weights = (params["w_att"],
               params["bn1"][0], params["bn1"][1], params["w_conv1"],
               params["bn2"][0], params["bn2"][1], params["w_conv2"],
               params["bn3"][0], params["bn3"][1], params["w_conv3"],
               params["bn4"][0], params["bn4"][1],
               params["w_fc1"], params["w_fc2"], params["w_fc3"])

    kernel = functools.partial(_qnet_kernel, nf, n0, b_tile)
    out = pl.pallas_call(
        kernel,
        out_shape=jax.ShapeDtypeStruct((G, b_tile, LANE), jnp.float32),
        grid=(G,),
        in_specs=[pl.BlockSpec((None, cin, b_tile * L), lambda g: (g, 0, 0))]
                 + [_full_spec(w) for w in weights],
        out_specs=pl.BlockSpec((None, b_tile, LANE), lambda g: (g, 0, 0)),
        scratch_shapes=[pltpu.VMEM((b_tile, nf * LANE), jnp.float32)],
        compiler_params=pltpu.CompilerParams(
            dimension_semantics=("parallel",),
            vmem_limit_bytes=32 * 1024 * 1024),
    )(x_grp, *weights)

    flat = out.reshape(Bp, LANE)[:B, :output_dim]   # (B, output_dim)
    x3d = flat[:, :, None]                          # (B, output_dim, 1) like torch
    return x3d, flat


# ----------------------------- parameters (random) -----------------------------

def init_params(key, input_dim=4, num_init_features=8, output_dim=1):
    nf = num_init_features
    nf2 = 2 * nf
    ks = jax.random.split(key, 11)
    bf16 = jnp.bfloat16
    f32 = jnp.float32

    def nrm(k, shape, scale):
        return (scale * jax.random.normal(k, shape)).astype(f32)

    def bn(k, c):
        k1, k2, k3, k4 = jax.random.split(k, 4)
        gamma = 1.0 + 0.1 * jax.random.normal(k1, (c,))
        beta = 0.1 * jax.random.normal(k2, (c,))
        mean = 0.1 * jax.random.normal(k3, (c,))
        var = 0.5 + jnp.abs(jax.random.normal(k4, (c,)))
        scale = gamma / jnp.sqrt(var + 1e-5)
        shift = beta - mean * scale
        return (scale.reshape(c, 1).astype(f32), shift.reshape(c, 1).astype(f32))

    p = {}
    # attention stand-in: 1x1 projection input_dim -> 2*nf
    p["w_att"] = nrm(ks[0], (nf2, input_dim), 1.0 / jnp.sqrt(input_dim)).astype(bf16)
    p["bn1"] = bn(ks[1], nf2)
    # conv1 (k=1): torch weight (nf2, nf2, 1) -> (nf2, nf2)
    p["w_conv1"] = nrm(ks[2], (nf2, nf2), 1.0 / jnp.sqrt(nf2)).astype(bf16)
    p["bn2"] = bn(ks[3], nf2)
    # conv2 (k=3): torch weight (nf2, nf2, 3) -> stacked rows [W_k0; W_k1; W_k2]
    w2 = nrm(ks[4], (nf2, nf2, 3), 1.0 / jnp.sqrt(3 * nf2))
    p["w_conv2"] = jnp.concatenate([w2[:, :, k] for k in range(3)], axis=0).astype(bf16)
    p["bn3"] = bn(ks[5], nf2)
    # conv3 (k=3): torch weight (nf, nf2, 3)
    w3 = nrm(ks[6], (nf, nf2, 3), 1.0 / jnp.sqrt(3 * nf2))
    p["w_conv3"] = jnp.concatenate([w3[:, :, k] for k in range(3)], axis=0).astype(bf16)
    p["bn4"] = bn(ks[7], nf)
    # conFC1: torch (500, nf, 128) -> (nf*128, 512), zero-padded 500 -> 512
    wfc1 = nrm(ks[8], (500, nf, 128), 1.0 / jnp.sqrt(nf * 128))
    wfc1 = jnp.transpose(wfc1, (1, 2, 0)).reshape(nf * 128, 500)
    p["w_fc1"] = jnp.pad(wfc1, ((0, 0), (0, 12))).astype(bf16)
    # conFC2: torch (100, 500, 1) -> (512, 128), zero-padded
    wfc2 = jnp.transpose(nrm(ks[9], (100, 500, 1), 1.0 / jnp.sqrt(500))[:, :, 0], (1, 0))
    p["w_fc2"] = jnp.pad(wfc2, ((0, 12), (0, 28))).astype(bf16)
    # conFC3: torch (out, 100, 1) -> (128, 128), zero-padded
    wfc3 = jnp.transpose(nrm(ks[10], (output_dim, 100, 1), 1.0 / jnp.sqrt(100))[:, :, 0], (1, 0))
    p["w_fc3"] = jnp.pad(wfc3, ((0, 28), (0, 128 - output_dim))).astype(bf16)
    return p


# --------------------------- pure-JAX reference check ---------------------------

def q_net_reference(params, x_ncl, output_dim=1):
    """Pure-JAX reference with the same bf16 matmul-input quantization."""
    f32 = jnp.float32
    bf16 = jnp.bfloat16
    nf = params["bn4"][0].shape[0]

    def q(h):  # mimic the kernel's bf16 cast of matmul inputs
        return h.astype(bf16).astype(f32)

    def conv1x1(w, h):
        return jnp.einsum('oc,bcl->bol', w.astype(f32), q(h))

    def conv3(w_stacked, h, cout):
        w0 = w_stacked[:cout].astype(f32)
        w1 = w_stacked[cout:2 * cout].astype(f32)
        w2 = w_stacked[2 * cout:3 * cout].astype(f32)
        hp = jnp.pad(q(h), ((0, 0), (0, 0), (1, 1)))
        return (jnp.einsum('oc,bcl->bol', w0, hp[:, :, :-2])
                + jnp.einsum('oc,bcl->bol', w1, hp[:, :, 1:-1])
                + jnp.einsum('oc,bcl->bol', w2, hp[:, :, 2:]))

    def bn(h, p):
        s, t = p
        return h * s[None, :, :] + t[None, :, :]

    def pool2(h):
        Bh, Ch, Lh = h.shape
        return jnp.max(h.reshape(Bh, Ch, Lh // 2, 2), axis=-1)

    h = conv1x1(params["w_att"], x_ncl.astype(f32))
    h = pool2(_mish(bn(h, params["bn1"])))
    h = conv1x1(params["w_conv1"], h)
    h = pool2(_mish(bn(h, params["bn2"])))
    h = conv3(params["w_conv2"], h, 2 * nf)
    h = pool2(_mish(bn(h, params["bn3"])))
    h = conv3(params["w_conv3"], h, nf)
    h = pool2(_mish(bn(h, params["bn4"])))          # (B, nf, 128)
    feat = h.reshape(h.shape[0], nf * LANE)
    a = _mish(q(feat) @ params["w_fc1"].astype(f32))
    a = _mish(q(a) @ params["w_fc2"].astype(f32))
    a = _mish(q(a) @ params["w_fc3"].astype(f32))
    return a[:, :output_dim]


# ------------------------------------ main -------------------------------------

if __name__ == "__main__":
    key = jax.random.PRNGKey(0)
    k_param, k_x = jax.random.split(key)

    input_dim, nf, out_dim = 4, 8, 1
    params = init_params(k_param, input_dim=input_dim,
                         num_init_features=nf, output_dim=out_dim)

    # L = 2048 is required by the module itself (conFC1 kernel_size=128 after
    # four MaxPool(2) stages: 2048 / 16 = 128); batch and channels stay small.
    B, Cin, L = 4, input_dim, 2048
    x = jax.random.normal(k_x, (B, Cin, L), dtype=jnp.float32)

    fwd = jax.jit(functools.partial(q_net_forward, params,
                                    b_tile=2, output_dim=out_dim))
    out3d, out_flat = fwd(x)
    jax.block_until_ready((out3d, out_flat))

    assert out3d.shape == (B, out_dim, 1), out3d.shape
    assert out_flat.shape == (B, out_dim), out_flat.shape
    assert bool(jnp.all(jnp.isfinite(out_flat)))

    ref = q_net_reference(params, x, output_dim=out_dim)
    max_err = float(jnp.max(jnp.abs(out_flat - ref)))
    assert max_err < 1e-2, f"mismatch vs pure-JAX reference: {max_err}"

    print("KERNEL_OK")
</pallas_src>

<mosaic_0001>
module attributes {stable_mosaic.version = 11 : i64} {
  func.func @_qnet_kernel(%arg0: i32, %arg1: memref<1x4x4096xf32, #tpu.memory_space<vmem>>, %arg2: memref<16x4xbf16, #tpu.memory_space<vmem>>, %arg3: memref<16x1xf32, #tpu.memory_space<vmem>>, %arg4: memref<16x1xf32, #tpu.memory_space<vmem>>, %arg5: memref<16x16xbf16, #tpu.memory_space<vmem>>, %arg6: memref<16x1xf32, #tpu.memory_space<vmem>>, %arg7: memref<16x1xf32, #tpu.memory_space<vmem>>, %arg8: memref<48x16xbf16, #tpu.memory_space<vmem>>, %arg9: memref<16x1xf32, #tpu.memory_space<vmem>>, %arg10: memref<16x1xf32, #tpu.memory_space<vmem>>, %arg11: memref<24x16xbf16, #tpu.memory_space<vmem>>, %arg12: memref<8x1xf32, #tpu.memory_space<vmem>>, %arg13: memref<8x1xf32, #tpu.memory_space<vmem>>, %arg14: memref<1024x512xbf16, #tpu.memory_space<vmem>>, %arg15: memref<512x128xbf16, #tpu.memory_space<vmem>>, %arg16: memref<128x128xbf16, #tpu.memory_space<vmem>>, %arg17: memref<1x2x128xf32, #tpu.memory_space<vmem>>, %arg18: memref<2x1024xf32, #tpu.memory_space<vmem>>) attributes {dimension_semantics = [#tpu.dimension_semantics<parallel>], iteration_bounds = array<i64: 2>, scalar_prefetch = 0 : i64, scratch_operands = 1 : i64, tpu.core_type = #tpu.core_type<tc>, window_params = [{transform_indices = @transform_0, window_bounds = array<i64: 1, 4, 4096>}, {pipeline_mode = #tpu.pipeline_mode<synchronous>, transform_indices = @transform_1, window_bounds = array<i64: 16, 4>}, {pipeline_mode = #tpu.pipeline_mode<synchronous>, transform_indices = @transform_2, window_bounds = array<i64: 16, 1>}, {pipeline_mode = #tpu.pipeline_mode<synchronous>, transform_indices = @transform_3, window_bounds = array<i64: 16, 1>}, {pipeline_mode = #tpu.pipeline_mode<synchronous>, transform_indices = @transform_4, window_bounds = array<i64: 16, 16>}, {pipeline_mode = #tpu.pipeline_mode<synchronous>, transform_indices = @transform_5, window_bounds = array<i64: 16, 1>}, {pipeline_mode = #tpu.pipeline_mode<synchronous>, transform_indices = @transform_6, window_bounds = array<i64: 16, 1>}, {pipeline_mode = #tpu.pipeline_mode<synchronous>, transform_indices = @transform_7, window_bounds = array<i64: 48, 16>}, {pipeline_mode = #tpu.pipeline_mode<synchronous>, transform_indices = @transform_8, window_bounds = array<i64: 16, 1>}, {pipeline_mode = #tpu.pipeline_mode<synchronous>, transform_indices = @transform_9, window_bounds = array<i64: 16, 1>}, {pipeline_mode = #tpu.pipeline_mode<synchronous>, transform_indices = @transform_10, window_bounds = array<i64: 24, 16>}, {pipeline_mode = #tpu.pipeline_mode<synchronous>, transform_indices = @transform_11, window_bounds = array<i64: 8, 1>}, {pipeline_mode = #tpu.pipeline_mode<synchronous>, transform_indices = @transform_12, window_bounds = array<i64: 8, 1>}, {pipeline_mode = #tpu.pipeline_mode<synchronous>, transform_indices = @transform_13, window_bounds = array<i64: 1024, 512>}, {pipeline_mode = #tpu.pipeline_mode<synchronous>, transform_indices = @transform_14, window_bounds = array<i64: 512, 128>}, {pipeline_mode = #tpu.pipeline_mode<synchronous>, transform_indices = @transform_15, window_bounds = array<i64: 128, 128>}, {transform_indices = @transform_16, window_bounds = array<i64: 1, 2, 128>}]} {
    %c0 = arith.constant 0 : index
    %c0_0 = arith.constant 0 : index
    %c0_1 = arith.constant 0 : index
    %0 = vector.load %arg1[%c0, %c0_0, %c0_1] : memref<1x4x4096xf32, #tpu.memory_space<vmem>>, vector<1x4x4096xf32>
    %1 = vector.shape_cast %0 : vector<1x4x4096xf32> to vector<4x4096xf32>
    %2 = arith.truncf %1 : vector<4x4096xf32> to vector<4x4096xbf16>
    %c0_2 = arith.constant 0 : index
    %c0_3 = arith.constant 0 : index
    %3 = vector.load %arg2[%c0_2, %c0_3] : memref<16x4xbf16, #tpu.memory_space<vmem>>, vector<16x4xbf16>
    %cst = arith.constant dense<0.000000e+00> : vector<16x4096xf32>
    %4 = tpu.matmul %3, %2, %cst {dimension_numbers = #tpu.dot_dimension_numbers<[1], [0], [0], [1], [0, 0, 1, 1], [], []>} : vector<16x4xbf16>, vector<4x4096xbf16>, vector<16x4096xf32> -> vector<16x4096xf32>
    %c0_4 = arith.constant 0 : index
    %c0_5 = arith.constant 0 : index
    %5 = vector.load %arg3[%c0_4, %c0_5] : memref<16x1xf32, #tpu.memory_space<vmem>>, vector<16x1xf32>
    %c0_6 = arith.constant 0 : index
    %c0_7 = arith.constant 0 : index
    %6 = vector.load %arg4[%c0_6, %c0_7] : memref<16x1xf32, #tpu.memory_space<vmem>>, vector<16x1xf32>
    %7 = vector.shape_cast %5 : vector<16x1xf32> to vector<16x1xf32>
    %8 = vector.broadcast %7 : vector<16x1xf32> to vector<16x128xf32>
    %9 = vector.shape_cast %6 : vector<16x1xf32> to vector<16x1xf32>
    %10 = vector.broadcast %9 : vector<16x1xf32> to vector<16x128xf32>
    %11 = vector.extract_strided_slice %4 {offsets = [0, 0], sizes = [16, 128], strides = [1, 1]} : vector<16x4096xf32> to vector<16x128xf32>
    %12 = vector.extract_strided_slice %4 {offsets = [0, 128], sizes = [16, 128], strides = [1, 1]} : vector<16x4096xf32> to vector<16x128xf32>
    %13 = arith.mulf %11, %8 : vector<16x128xf32>
    %14 = arith.addf %13, %10 : vector<16x128xf32>
    %cst_8 = arith.constant 2.000000e+01 : f32
    %15 = vector.broadcast %cst_8 : f32 to vector<16x128xf32>
    %16 = arith.minimumf %14, %15 : vector<16x128xf32>
    %17 = math.exp %16 : vector<16x128xf32>
    %cst_9 = arith.constant 2.000000e+00 : f32
    %18 = vector.broadcast %cst_9 : f32 to vector<16x128xf32>
    %19 = arith.addf %17, %18 : vector<16x128xf32>
    %20 = arith.mulf %17, %19 : vector<16x128xf32>
    %cst_10 = arith.constant 2.000000e+00 : f32
    %21 = vector.broadcast %cst_10 : f32 to vector<16x128xf32>
    %22 = arith.addf %20, %21 : vector<16x128xf32>
    %23 = arith.divf %20, %22 : vector<16x128xf32>
    %24 = arith.mulf %14, %23 : vector<16x128xf32>
    %25 = arith.mulf %12, %8 : vector<16x128xf32>
    %26 = arith.addf %25, %10 : vector<16x128xf32>
    %cst_11 = arith.constant 2.000000e+01 : f32
    %27 = vector.broadcast %cst_11 : f32 to vector<16x128xf32>
    %28 = arith.minimumf %26, %27 : vector<16x128xf32>
    %29 = math.exp %28 : vector<16x128xf32>
    %cst_12 = arith.constant 2.000000e+00 : f32
    %30 = vector.broadcast %cst_12 : f32 to vector<16x128xf32>
    %31 = arith.addf %29, %30 : vector<16x128xf32>
    %32 = arith.mulf %29, %31 : vector<16x128xf32>
    %cst_13 = arith.constant 2.000000e+00 : f32
    %33 = vector.broadcast %cst_13 : f32 to vector<16x128xf32>
    %34 = arith.addf %32, %33 : vector<16x128xf32>
    %35 = arith.divf %32, %34 : vector<16x128xf32>
    %36 = arith.mulf %26, %35 : vector<16x128xf32>
    %37 = arith.maximumf %24, %36 : vector<16x128xf32>
    %38 = vector.extract_strided_slice %4 {offsets = [0, 256], sizes = [16, 128], strides = [1, 1]} : vector<16x4096xf32> to vector<16x128xf32>
    %39 = vector.extract_strided_slice %4 {offsets = [0, 384], sizes = [16, 128], strides = [1, 1]} : vector<16x4096xf32> to vector<16x128xf32>
    %40 = arith.mulf %38, %8 : vector<16x128xf32>
    %41 = arith.addf %40, %10 : vector<16x128xf32>
    %cst_14 = arith.constant 2.000000e+01 : f32
    %42 = vector.broadcast %cst_14 : f32 to vector<16x128xf32>
    %43 = arith.minimumf %41, %42 : vector<16x128xf32>
    %44 = math.exp %43 : vector<16x128xf32>
    %cst_15 = arith.constant 2.000000e+00 : f32
    %45 = vector.broadcast %cst_15 : f32 to vector<16x128xf32>
    %46 = arith.addf %44, %45 : vector<16x128xf32>
    %47 = arith.mulf %44, %46 : vector<16x128xf32>
    %cst_16 = arith.constant 2.000000e+00 : f32
    %48 = vector.broadcast %cst_16 : f32 to vector<16x128xf32>
    %49 = arith.addf %47, %48 : vector<16x128xf32>
    %50 = arith.divf %47, %49 : vector<16x128xf32>
    %51 = arith.mulf %41, %50 : vector<16x128xf32>
    %52 = arith.mulf %39, %8 : vector<16x128xf32>
    %53 = arith.addf %52, %10 : vector<16x128xf32>
    %cst_17 = arith.constant 2.000000e+01 : f32
    %54 = vector.broadcast %cst_17 : f32 to vector<16x128xf32>
    %55 = arith.minimumf %53, %54 : vector<16x128xf32>
    %56 = math.exp %55 : vector<16x128xf32>
    %cst_18 = arith.constant 2.000000e+00 : f32
    %57 = vector.broadcast %cst_18 : f32 to vector<16x128xf32>
    %58 = arith.addf %56, %57 : vector<16x128xf32>
    %59 = arith.mulf %56, %58 : vector<16x128xf32>
    %cst_19 = arith.constant 2.000000e+00 : f32
    %60 = vector.broadcast %cst_19 : f32 to vector<16x128xf32>
    %61 = arith.addf %59, %60 : vector<16x128xf32>
    %62 = arith.divf %59, %61 : vector<16x128xf32>
    %63 = arith.mulf %53, %62 : vector<16x128xf32>
    %64 = arith.maximumf %51, %63 : vector<16x128xf32>
    %65 = vector.extract_strided_slice %4 {offsets = [0, 512], sizes = [16, 128], strides = [1, 1]} : vector<16x4096xf32> to vector<16x128xf32>
    %66 = vector.extract_strided_slice %4 {offsets = [0, 640], sizes = [16, 128], strides = [1, 1]} : vector<16x4096xf32> to vector<16x128xf32>
    %67 = arith.mulf %65, %8 : vector<16x128xf32>
    %68 = arith.addf %67, %10 : vector<16x128xf32>
    %cst_20 = arith.constant 2.000000e+01 : f32
    %69 = vector.broadcast %cst_20 : f32 to vector<16x128xf32>
    %70 = arith.minimumf %68, %69 : vector<16x128xf32>
    %71 = math.exp %70 : vector<16x128xf32>
    %cst_21 = arith.constant 2.000000e+00 : f32
    %72 = vector.broadcast %cst_21 : f32 to vector<16x128xf32>
    %73 = arith.addf %71, %72 : vector<16x128xf32>
    %74 = arith.mulf %71, %73 : vector<16x128xf32>
    %cst_22 = arith.constant 2.000000e+00 : f32
    %75 = vector.broadcast %cst_22 : f32 to vector<16x128xf32>
    %76 = arith.addf %74, %75 : vector<16x128xf32>
    %77 = arith.divf %74, %76 : vector<16x128xf32>
    %78 = arith.mulf %68, %77 : vector<16x128xf32>
    %79 = arith.mulf %66, %8 : vector<16x128xf32>
    %80 = arith.addf %79, %10 : vector<16x128xf32>
    %cst_23 = arith.constant 2.000000e+01 : f32
    %81 = vector.broadcast %cst_23 : f32 to vector<16x128xf32>
    %82 = arith.minimumf %80, %81 : vector<16x128xf32>
    %83 = math.exp %82 : vector<16x128xf32>
    %cst_24 = arith.constant 2.000000e+00 : f32
    %84 = vector.broadcast %cst_24 : f32 to vector<16x128xf32>
    %85 = arith.addf %83, %84 : vector<16x128xf32>
    %86 = arith.mulf %83, %85 : vector<16x128xf32>
    %cst_25 = arith.constant 2.000000e+00 : f32
    %87 = vector.broadcast %cst_25 : f32 to vector<16x128xf32>
    %88 = arith.addf %86, %87 : vector<16x128xf32>
    %89 = arith.divf %86, %88 : vector<16x128xf32>
    %90 = arith.mulf %80, %89 : vector<16x128xf32>
    %91 = arith.maximumf %78, %90 : vector<16x128xf32>
    %92 = vector.extract_strided_slice %4 {offsets = [0, 768], sizes = [16, 128], strides = [1, 1]} : vector<16x4096xf32> to vector<16x128xf32>
    %93 = vector.extract_strided_slice %4 {offsets = [0, 896], sizes = [16, 128], strides = [1, 1]} : vector<16x4096xf32> to vector<16x128xf32>
    %94 = arith.mulf %92, %8 : vector<16x128xf32>
    %95 = arith.addf %94, %10 : vector<16x128xf32>
    %cst_26 = arith.constant 2.000000e+01 : f32
    %96 = vector.broadcast %cst_26 : f32 to vector<16x128xf32>
    %97 = arith.minimumf %95, %96 : vector<16x128xf32>
    %98 = math.exp %97 : vector<16x128xf32>
    %cst_27 = arith.constant 2.000000e+00 : f32
    %99 = vector.broadcast %cst_27 : f32 to vector<16x128xf32>
    %100 = arith.addf %98, %99 : vector<16x128xf32>
    %101 = arith.mulf %98, %100 : vector<16x128xf32>
    %cst_28 = arith.constant 2.000000e+00 : f32
    %102 = vector.broadcast %cst_28 : f32 to vector<16x128xf32>
    %103 = arith.addf %101, %102 : vector<16x128xf32>
    %104 = arith.divf %101, %103 : vector<16x128xf32>
    %105 = arith.mulf %95, %104 : vector<16x128xf32>
    %106 = arith.mulf %93, %8 : vector<16x128xf32>
    %107 = arith.addf %106, %10 : vector<16x128xf32>
    %cst_29 = arith.constant 2.000000e+01 : f32
    %108 = vector.broadcast %cst_29 : f32 to vector<16x128xf32>
    %109 = arith.minimumf %107, %108 : vector<16x128xf32>
    %110 = math.exp %109 : vector<16x128xf32>
    %cst_30 = arith.constant 2.000000e+00 : f32
    %111 = vector.broadcast %cst_30 : f32 to vector<16x128xf32>
    %112 = arith.addf %110, %111 : vector<16x128xf32>
    %113 = arith.mulf %110, %112 : vector<16x128xf32>
    %cst_31 = arith.constant 2.000000e+00 : f32
    %114 = vector.broadcast %cst_31 : f32 to vector<16x128xf32>
    %115 = arith.addf %113, %114 : vector<16x128xf32>
    %116 = arith.divf %113, %115 : vector<16x128xf32>
    %117 = arith.mulf %107, %116 : vector<16x128xf32>
    %118 = arith.maximumf %105, %117 : vector<16x128xf32>
    %119 = vector.extract_strided_slice %4 {offsets = [0, 1024], sizes = [16, 128], strides = [1, 1]} : vector<16x4096xf32> to vector<16x128xf32>
    %120 = vector.extract_strided_slice %4 {offsets = [0, 1152], sizes = [16, 128], strides = [1, 1]} : vector<16x4096xf32> to vector<16x128xf32>
    %121 = arith.mulf %119, %8 : vector<16x128xf32>
    %122 = arith.addf %121, %10 : vector<16x128xf32>
    %cst_32 = arith.constant 2.000000e+01 : f32
    %123 = vector.broadcast %cst_32 : f32 to vector<16x128xf32>
    %124 = arith.minimumf %122, %123 : vector<16x128xf32>
    %125 = math.exp %124 : vector<16x128xf32>
    %cst_33 = arith.constant 2.000000e+00 : f32
    %126 = vector.broadcast %cst_33 : f32 to vector<16x128xf32>
    %127 = arith.addf %125, %126 : vector<16x128xf32>
    %128 = arith.mulf %125, %127 : vector<16x128xf32>
    %cst_34 = arith.constant 2.000000e+00 : f32
    %129 = vector.broadcast %cst_34 : f32 to vector<16x128xf32>
    %130 = arith.addf %128, %129 : vector<16x128xf32>
    %131 = arith.divf %128, %130 : vector<16x128xf32>
    %132 = arith.mulf %122, %131 : vector<16x128xf32>
    %133 = arith.mulf %120, %8 : vector<16x128xf32>
    %134 = arith.addf %133, %10 : vector<16x128xf32>
    %cst_35 = arith.constant 2.000000e+01 : f32
    %135 = vector.broadcast %cst_35 : f32 to vector<16x128xf32>
    %136 = arith.minimumf %134, %135 : vector<16x128xf32>
    %137 = math.exp %136 : vector<16x128xf32>
    %cst_36 = arith.constant 2.000000e+00 : f32
    %138 = vector.broadcast %cst_36 : f32 to vector<16x128xf32>
    %139 = arith.addf %137, %138 : vector<16x128xf32>
    %140 = arith.mulf %137, %139 : vector<16x128xf32>
    %cst_37 = arith.constant 2.000000e+00 : f32
    %141 = vector.broadcast %cst_37 : f32 to vector<16x128xf32>
    %142 = arith.addf %140, %141 : vector<16x128xf32>
    %143 = arith.divf %140, %142 : vector<16x128xf32>
    %144 = arith.mulf %134, %143 : vector<16x128xf32>
    %145 = arith.maximumf %132, %144 : vector<16x128xf32>
    %146 = vector.extract_strided_slice %4 {offsets = [0, 1280], sizes = [16, 128], strides = [1, 1]} : vector<16x4096xf32> to vector<16x128xf32>
    %147 = vector.extract_strided_slice %4 {offsets = [0, 1408], sizes = [16, 128], strides = [1, 1]} : vector<16x4096xf32> to vector<16x128xf32>
    %148 = arith.mulf %146, %8 : vector<16x128xf32>
    %149 = arith.addf %148, %10 : vector<16x128xf32>
    %cst_38 = arith.constant 2.000000e+01 : f32
    %150 = vector.broadcast %cst_38 : f32 to vector<16x128xf32>
    %151 = arith.minimumf %149, %150 : vector<16x128xf32>
    %152 = math.exp %151 : vector<16x128xf32>
    %cst_39 = arith.constant 2.000000e+00 : f32
    %153 = vector.broadcast %cst_39 : f32 to vector<16x128xf32>
    %154 = arith.addf %152, %153 : vector<16x128xf32>
    %155 = arith.mulf %152, %154 : vector<16x128xf32>
    %cst_40 = arith.constant 2.000000e+00 : f32
    %156 = vector.broadcast %cst_40 : f32 to vector<16x128xf32>
    %157 = arith.addf %155, %156 : vector<16x128xf32>
    %158 = arith.divf %155, %157 : vector<16x128xf32>
    %159 = arith.mulf %149, %158 : vector<16x128xf32>
    %160 = arith.mulf %147, %8 : vector<16x128xf32>
    %161 = arith.addf %160, %10 : vector<16x128xf32>
    %cst_41 = arith.constant 2.000000e+01 : f32
    %162 = vector.broadcast %cst_41 : f32 to vector<16x128xf32>
    %163 = arith.minimumf %161, %162 : vector<16x128xf32>
    %164 = math.exp %163 : vector<16x128xf32>
    %cst_42 = arith.constant 2.000000e+00 : f32
    %165 = vector.broadcast %cst_42 : f32 to vector<16x128xf32>
    %166 = arith.addf %164, %165 : vector<16x128xf32>
    %167 = arith.mulf %164, %166 : vector<16x128xf32>
    %cst_43 = arith.constant 2.000000e+00 : f32
    %168 = vector.broadcast %cst_43 : f32 to vector<16x128xf32>
    %169 = arith.addf %167, %168 : vector<16x128xf32>
    %170 = arith.divf %167, %169 : vector<16x128xf32>
    %171 = arith.mulf %161, %170 : vector<16x128xf32>
    %172 = arith.maximumf %159, %171 : vector<16x128xf32>
    %173 = vector.extract_strided_slice %4 {offsets = [0, 1536], sizes = [16, 128], strides = [1, 1]} : vector<16x4096xf32> to vector<16x128xf32>
    %174 = vector.extract_strided_slice %4 {offsets = [0, 1664], sizes = [16, 128], strides = [1, 1]} : vector<16x4096xf32> to vector<16x128xf32>
    %175 = arith.mulf %173, %8 : vector<16x128xf32>
    %176 = arith.addf %175, %10 : vector<16x128xf32>
    %cst_44 = arith.constant 2.000000e+01 : f32
    %177 = vector.broadcast %cst_44 : f32 to vector<16x128xf32>
    %178 = arith.minimumf %176, %177 : vector<16x128xf32>
    %179 = math.exp %178 : vector<16x128xf32>
    %cst_45 = arith.constant 2.000000e+00 : f32
    %180 = vector.broadcast %cst_45 : f32 to vector<16x128xf32>
    %181 = arith.addf %179, %180 : vector<16x128xf32>
    %182 = arith.mulf %179, %181 : vector<16x128xf32>
    %cst_46 = arith.constant 2.000000e+00 : f32
    %183 = vector.broadcast %cst_46 : f32 to vector<16x128xf32>
    %184 = arith.addf %182, %183 : vector<16x128xf32>
    %185 = arith.divf %182, %184 : vector<16x128xf32>
    %186 = arith.mulf %176, %185 : vector<16x128xf32>
    %187 = arith.mulf %174, %8 : vector<16x128xf32>
    %188 = arith.addf %187, %10 : vector<16x128xf32>
    %cst_47 = arith.constant 2.000000e+01 : f32
    %189 = vector.broadcast %cst_47 : f32 to vector<16x128xf32>
    %190 = arith.minimumf %188, %189 : vector<16x128xf32>
    %191 = math.exp %190 : vector<16x128xf32>
    %cst_48 = arith.constant 2.000000e+00 : f32
    %192 = vector.broadcast %cst_48 : f32 to vector<16x128xf32>
    %193 = arith.addf %191, %192 : vector<16x128xf32>
    %194 = arith.mulf %191, %193 : vector<16x128xf32>
    %cst_49 = arith.constant 2.000000e+00 : f32
    %195 = vector.broadcast %cst_49 : f32 to vector<16x128xf32>
    %196 = arith.addf %194, %195 : vector<16x128xf32>
    %197 = arith.divf %194, %196 : vector<16x128xf32>
    %198 = arith.mulf %188, %197 : vector<16x128xf32>
    %199 = arith.maximumf %186, %198 : vector<16x128xf32>
    %200 = vector.extract_strided_slice %4 {offsets = [0, 1792], sizes = [16, 128], strides = [1, 1]} : vector<16x4096xf32> to vector<16x128xf32>
    %201 = vector.extract_strided_slice %4 {offsets = [0, 1920], sizes = [16, 128], strides = [1, 1]} : vector<16x4096xf32> to vector<16x128xf32>
    %202 = arith.mulf %200, %8 : vector<16x128xf32>
    %203 = arith.addf %202, %10 : vector<16x128xf32>
    %cst_50 = arith.constant 2.000000e+01 : f32
    %204 = vector.broadcast %cst_50 : f32 to vector<16x128xf32>
    %205 = arith.minimumf %203, %204 : vector<16x128xf32>
    %206 = math.exp %205 : vector<16x128xf32>
    %cst_51 = arith.constant 2.000000e+00 : f32
    %207 = vector.broadcast %cst_51 : f32 to vector<16x128xf32>
    %208 = arith.addf %206, %207 : vector<16x128xf32>
    %209 = arith.mulf %206, %208 : vector<16x128xf32>
    %cst_52 = arith.constant 2.000000e+00 : f32
    %210 = vector.broadcast %cst_52 : f32 to vector<16x128xf32>
    %211 = arith.addf %209, %210 : vector<16x128xf32>
    %212 = arith.divf %209, %211 : vector<16x128xf32>
    %213 = arith.mulf %203, %212 : vector<16x128xf32>
    %214 = arith.mulf %201, %8 : vector<16x128xf32>
    %215 = arith.addf %214, %10 : vector<16x128xf32>
    %cst_53 = arith.constant 2.000000e+01 : f32
    %216 = vector.broadcast %cst_53 : f32 to vector<16x128xf32>
    %217 = arith.minimumf %215, %216 : vector<16x128xf32>
    %218 = math.exp %217 : vector<16x128xf32>
    %cst_54 = arith.constant 2.000000e+00 : f32
    %219 = vector.broadcast %cst_54 : f32 to vector<16x128xf32>
    %220 = arith.addf %218, %219 : vector<16x128xf32>
    %221 = arith.mulf %218, %220 : vector<16x128xf32>
    %cst_55 = arith.constant 2.000000e+00 : f32
    %222 = vector.broadcast %cst_55 : f32 to vector<16x128xf32>
    %223 = arith.addf %221, %222 : vector<16x128xf32>
    %224 = arith.divf %221, %223 : vector<16x128xf32>
    %225 = arith.mulf %215, %224 : vector<16x128xf32>
    %226 = arith.maximumf %213, %225 : vector<16x128xf32>
    %227 = vector.extract_strided_slice %4 {offsets = [0, 2048], sizes = [16, 128], strides = [1, 1]} : vector<16x4096xf32> to vector<16x128xf32>
    %228 = vector.extract_strided_slice %4 {offsets = [0, 2176], sizes = [16, 128], strides = [1, 1]} : vector<16x4096xf32> to vector<16x128xf32>
    %229 = arith.mulf %227, %8 : vector<16x128xf32>
    %230 = arith.addf %229, %10 : vector<16x128xf32>
    %cst_56 = arith.constant 2.000000e+01 : f32
    %231 = vector.broadcast %cst_56 : f32 to vector<16x128xf32>
    %232 = arith.minimumf %230, %231 : vector<16x128xf32>
    %233 = math.exp %232 : vector<16x128xf32>
    %cst_57 = arith.constant 2.000000e+00 : f32
    %234 = vector.broadcast %cst_57 : f32 to vector<16x128xf32>
    %235 = arith.addf %233, %234 : vector<16x128xf32>
    %236 = arith.mulf %233, %235 : vector<16x128xf32>
    %cst_58 = arith.constant 2.000000e+00 : f32
    %237 = vector.broadcast %cst_58 : f32 to vector<16x128xf32>
    %238 = arith.addf %236, %237 : vector<16x128xf32>
    %239 = arith.divf %236, %238 : vector<16x128xf32>
    %240 = arith.mulf %230, %239 : vector<16x128xf32>
    %241 = arith.mulf %228, %8 : vector<16x128xf32>
    %242 = arith.addf %241, %10 : vector<16x128xf32>
    %cst_59 = arith.constant 2.000000e+01 : f32
    %243 = vector.broadcast %cst_59 : f32 to vector<16x128xf32>
    %244 = arith.minimumf %242, %243 : vector<16x128xf32>
    %245 = math.exp %244 : vector<16x128xf32>
    %cst_60 = arith.constant 2.000000e+00 : f32
    %246 = vector.broadcast %cst_60 : f32 to vector<16x128xf32>
    %247 = arith.addf %245, %246 : vector<16x128xf32>
    %248 = arith.mulf %245, %247 : vector<16x128xf32>
    %cst_61 = arith.constant 2.000000e+00 : f32
    %249 = vector.broadcast %cst_61 : f32 to vector<16x128xf32>
    %250 = arith.addf %248, %249 : vector<16x128xf32>
    %251 = arith.divf %248, %250 : vector<16x128xf32>
    %252 = arith.mulf %242, %251 : vector<16x128xf32>
    %253 = arith.maximumf %240, %252 : vector<16x128xf32>
    %254 = vector.extract_strided_slice %4 {offsets = [0, 2304], sizes = [16, 128], strides = [1, 1]} : vector<16x4096xf32> to vector<16x128xf32>
    %255 = vector.extract_strided_slice %4 {offsets = [0, 2432], sizes = [16, 128], strides = [1, 1]} : vector<16x4096xf32> to vector<16x128xf32>
    %256 = arith.mulf %254, %8 : vector<16x128xf32>
    %257 = arith.addf %256, %10 : vector<16x128xf32>
    %cst_62 = arith.constant 2.000000e+01 : f32
    %258 = vector.broadcast %cst_62 : f32 to vector<16x128xf32>
    %259 = arith.minimumf %257, %258 : vector<16x128xf32>
    %260 = math.exp %259 : vector<16x128xf32>
    %cst_63 = arith.constant 2.000000e+00 : f32
    %261 = vector.broadcast %cst_63 : f32 to vector<16x128xf32>
    %262 = arith.addf %260, %261 : vector<16x128xf32>
    %263 = arith.mulf %260, %262 : vector<16x128xf32>
    %cst_64 = arith.constant 2.000000e+00 : f32
    %264 = vector.broadcast %cst_64 : f32 to vector<16x128xf32>
    %265 = arith.addf %263, %264 : vector<16x128xf32>
    %266 = arith.divf %263, %265 : vector<16x128xf32>
    %267 = arith.mulf %257, %266 : vector<16x128xf32>
    %268 = arith.mulf %255, %8 : vector<16x128xf32>
    %269 = arith.addf %268, %10 : vector<16x128xf32>
    %cst_65 = arith.constant 2.000000e+01 : f32
    %270 = vector.broadcast %cst_65 : f32 to vector<16x128xf32>
    %271 = arith.minimumf %269, %270 : vector<16x128xf32>
    %272 = math.exp %271 : vector<16x128xf32>
    %cst_66 = arith.constant 2.000000e+00 : f32
    %273 = vector.broadcast %cst_66 : f32 to vector<16x128xf32>
    %274 = arith.addf %272, %273 : vector<16x128xf32>
    %275 = arith.mulf %272, %274 : vector<16x128xf32>
    %cst_67 = arith.constant 2.000000e+00 : f32
    %276 = vector.broadcast %cst_67 : f32 to vector<16x128xf32>
    %277 = arith.addf %275, %276 : vector<16x128xf32>
    %278 = arith.divf %275, %277 : vector<16x128xf32>
    %279 = arith.mulf %269, %278 : vector<16x128xf32>
    %280 = arith.maximumf %267, %279 : vector<16x128xf32>
    %281 = vector.extract_strided_slice %4 {offsets = [0, 2560], sizes = [16, 128], strides = [1, 1]} : vector<16x4096xf32> to vector<16x128xf32>
    %282 = vector.extract_strided_slice %4 {offsets = [0, 2688], sizes = [16, 128], strides = [1, 1]} : vector<16x4096xf32> to vector<16x128xf32>
    %283 = arith.mulf %281, %8 : vector<16x128xf32>
    %284 = arith.addf %283, %10 : vector<16x128xf32>
    %cst_68 = arith.constant 2.000000e+01 : f32
    %285 = vector.broadcast %cst_68 : f32 to vector<16x128xf32>
    %286 = arith.minimumf %284, %285 : vector<16x128xf32>
    %287 = math.exp %286 : vector<16x128xf32>
    %cst_69 = arith.constant 2.000000e+00 : f32
    %288 = vector.broadcast %cst_69 : f32 to vector<16x128xf32>
    %289 = arith.addf %287, %288 : vector<16x128xf32>
    %290 = arith.mulf %287, %289 : vector<16x128xf32>
    %cst_70 = arith.constant 2.000000e+00 : f32
    %291 = vector.broadcast %cst_70 : f32 to vector<16x128xf32>
    %292 = arith.addf %290, %291 : vector<16x128xf32>
    %293 = arith.divf %290, %292 : vector<16x128xf32>
    %294 = arith.mulf %284, %293 : vector<16x128xf32>
    %295 = arith.mulf %282, %8 : vector<16x128xf32>
    %296 = arith.addf %295, %10 : vector<16x128xf32>
    %cst_71 = arith.constant 2.000000e+01 : f32
    %297 = vector.broadcast %cst_71 : f32 to vector<16x128xf32>
    %298 = arith.minimumf %296, %297 : vector<16x128xf32>
    %299 = math.exp %298 : vector<16x128xf32>
    %cst_72 = arith.constant 2.000000e+00 : f32
    %300 = vector.broadcast %cst_72 : f32 to vector<16x128xf32>
    %301 = arith.addf %299, %300 : vector<16x128xf32>
    %302 = arith.mulf %299, %301 : vector<16x128xf32>
    %cst_73 = arith.constant 2.000000e+00 : f32
    %303 = vector.broadcast %cst_73 : f32 to vector<16x128xf32>
    %304 = arith.addf %302, %303 : vector<16x128xf32>
    %305 = arith.divf %302, %304 : vector<16x128xf32>
    %306 = arith.mulf %296, %305 : vector<16x128xf32>
    %307 = arith.maximumf %294, %306 : vector<16x128xf32>
    %308 = vector.extract_strided_slice %4 {offsets = [0, 2816], sizes = [16, 128], strides = [1, 1]} : vector<16x4096xf32> to vector<16x128xf32>
    %309 = vector.extract_strided_slice %4 {offsets = [0, 2944], sizes = [16, 128], strides = [1, 1]} : vector<16x4096xf32> to vector<16x128xf32>
    %310 = arith.mulf %308, %8 : vector<16x128xf32>
    %311 = arith.addf %310, %10 : vector<16x128xf32>
    %cst_74 = arith.constant 2.000000e+01 : f32
    %312 = vector.broadcast %cst_74 : f32 to vector<16x128xf32>
    %313 = arith.minimumf %311, %312 : vector<16x128xf32>
    %314 = math.exp %313 : vector<16x128xf32>
    %cst_75 = arith.constant 2.000000e+00 : f32
    %315 = vector.broadcast %cst_75 : f32 to vector<16x128xf32>
    %316 = arith.addf %314, %315 : vector<16x128xf32>
    %317 = arith.mulf %314, %316 : vector<16x128xf32>
    %cst_76 = arith.constant 2.000000e+00 : f32
    %318 = vector.broadcast %cst_76 : f32 to vector<16x128xf32>
    %319 = arith.addf %317, %318 : vector<16x128xf32>
    %320 = arith.divf %317, %319 : vector<16x128xf32>
    %321 = arith.mulf %311, %320 : vector<16x128xf32>
    %322 = arith.mulf %309, %8 : vector<16x128xf32>
    %323 = arith.addf %322, %10 : vector<16x128xf32>
    %cst_77 = arith.constant 2.000000e+01 : f32
    %324 = vector.broadcast %cst_77 : f32 to vector<16x128xf32>
    %325 = arith.minimumf %323, %324 : vector<16x128xf32>
    %326 = math.exp %325 : vector<16x128xf32>
    %cst_78 = arith.constant 2.000000e+00 : f32
    %327 = vector.broadcast %cst_78 : f32 to vector<16x128xf32>
    %328 = arith.addf %326, %327 : vector<16x128xf32>
    %329 = arith.mulf %326, %328 : vector<16x128xf32>
    %cst_79 = arith.constant 2.000000e+00 : f32
    %330 = vector.broadcast %cst_79 : f32 to vector<16x128xf32>
    %331 = arith.addf %329, %330 : vector<16x128xf32>
    %332 = arith.divf %329, %331 : vector<16x128xf32>
    %333 = arith.mulf %323, %332 : vector<16x128xf32>
    %334 = arith.maximumf %321, %333 : vector<16x128xf32>
    %335 = vector.extract_strided_slice %4 {offsets = [0, 3072], sizes = [16, 128], strides = [1, 1]} : vector<16x4096xf32> to vector<16x128xf32>
    %336 = vector.extract_strided_slice %4 {offsets = [0, 3200], sizes = [16, 128], strides = [1, 1]} : vector<16x4096xf32> to vector<16x128xf32>
    %337 = arith.mulf %335, %8 : vector<16x128xf32>
    %338 = arith.addf %337, %10 : vector<16x128xf32>
    %cst_80 = arith.constant 2.000000e+01 : f32
    %339 = vector.broadcast %cst_80 : f32 to vector<16x128xf32>
    %340 = arith.minimumf %338, %339 : vector<16x128xf32>
    %341 = math.exp %340 : vector<16x128xf32>
    %cst_81 = arith.constant 2.000000e+00 : f32
    %342 = vector.broadcast %cst_81 : f32 to vector<16x128xf32>
    %343 = arith.addf %341, %342 : vector<16x128xf32>
    %344 = arith.mulf %341, %343 : vector<16x128xf32>
    %cst_82 = arith.constant 2.000000e+00 : f32
    %345 = vector.broadcast %cst_82 : f32 to vector<16x128xf32>
    %346 = arith.addf %344, %345 : vector<16x128xf32>
    %347 = arith.divf %344, %346 : vector<16x128xf32>
    %348 = arith.mulf %338, %347 : vector<16x128xf32>
    %349 = arith.mulf %336, %8 : vector<16x128xf32>
    %350 = arith.addf %349, %10 : vector<16x128xf32>
    %cst_83 = arith.constant 2.000000e+01 : f32
    %351 = vector.broadcast %cst_83 : f32 to vector<16x128xf32>
    %352 = arith.minimumf %350, %351 : vector<16x128xf32>
    %353 = math.exp %352 : vector<16x128xf32>
    %cst_84 = arith.constant 2.000000e+00 : f32
    %354 = vector.broadcast %cst_84 : f32 to vector<16x128xf32>
    %355 = arith.addf %353, %354 : vector<16x128xf32>
    %356 = arith.mulf %353, %355 : vector<16x128xf32>
    %cst_85 = arith.constant 2.000000e+00 : f32
    %357 = vector.broadcast %cst_85 : f32 to vector<16x128xf32>
    %358 = arith.addf %356, %357 : vector<16x128xf32>
    %359 = arith.divf %356, %358 : vector<16x128xf32>
    %360 = arith.mulf %350, %359 : vector<16x128xf32>
    %361 = arith.maximumf %348, %360 : vector<16x128xf32>
    %362 = vector.extract_strided_slice %4 {offsets = [0, 3328], sizes = [16, 128], strides = [1, 1]} : vector<16x4096xf32> to vector<16x128xf32>
    %363 = vector.extract_strided_slice %4 {offsets = [0, 3456], sizes = [16, 128], strides = [1, 1]} : vector<16x4096xf32> to vector<16x128xf32>
    %364 = arith.mulf %362, %8 : vector<16x128xf32>
    %365 = arith.addf %364, %10 : vector<16x128xf32>
    %cst_86 = arith.constant 2.000000e+01 : f32
    %366 = vector.broadcast %cst_86 : f32 to vector<16x128xf32>
    %367 = arith.minimumf %365, %366 : vector<16x128xf32>
    %368 = math.exp %367 : vector<16x128xf32>
    %cst_87 = arith.constant 2.000000e+00 : f32
    %369 = vector.broadcast %cst_87 : f32 to vector<16x128xf32>
    %370 = arith.addf %368, %369 : vector<16x128xf32>
    %371 = arith.mulf %368, %370 : vector<16x128xf32>
    %cst_88 = arith.constant 2.000000e+00 : f32
    %372 = vector.broadcast %cst_88 : f32 to vector<16x128xf32>
    %373 = arith.addf %371, %372 : vector<16x128xf32>
    %374 = arith.divf %371, %373 : vector<16x128xf32>
    %375 = arith.mulf %365, %374 : vector<16x128xf32>
    %376 = arith.mulf %363, %8 : vector<16x128xf32>
    %377 = arith.addf %376, %10 : vector<16x128xf32>
    %cst_89 = arith.constant 2.000000e+01 : f32
    %378 = vector.broadcast %cst_89 : f32 to vector<16x128xf32>
    %379 = arith.minimumf %377, %378 : vector<16x128xf32>
    %380 = math.exp %379 : vector<16x128xf32>
    %cst_90 = arith.constant 2.000000e+00 : f32
    %381 = vector.broadcast %cst_90 : f32 to vector<16x128xf32>
    %382 = arith.addf %380, %381 : vector<16x128xf32>
    %383 = arith.mulf %380, %382 : vector<16x128xf32>
    %cst_91 = arith.constant 2.000000e+00 : f32
    %384 = vector.broadcast %cst_91 : f32 to vector<16x128xf32>
    %385 = arith.addf %383, %384 : vector<16x128xf32>
    %386 = arith.divf %383, %385 : vector<16x128xf32>
    %387 = arith.mulf %377, %386 : vector<16x128xf32>
    %388 = arith.maximumf %375, %387 : vector<16x128xf32>
    %389 = vector.extract_strided_slice %4 {offsets = [0, 3584], sizes = [16, 128], strides = [1, 1]} : vector<16x4096xf32> to vector<16x128xf32>
    %390 = vector.extract_strided_slice %4 {offsets = [0, 3712], sizes = [16, 128], strides = [1, 1]} : vector<16x4096xf32> to vector<16x128xf32>
    %391 = arith.mulf %389, %8 : vector<16x128xf32>
    %392 = arith.addf %391, %10 : vector<16x128xf32>
    %cst_92 = arith.constant 2.000000e+01 : f32
    %393 = vector.broadcast %cst_92 : f32 to vector<16x128xf32>
    %394 = arith.minimumf %392, %393 : vector<16x128xf32>
    %395 = math.exp %394 : vector<16x128xf32>
    %cst_93 = arith.constant 2.000000e+00 : f32
    %396 = vector.broadcast %cst_93 : f32 to vector<16x128xf32>
    %397 = arith.addf %395, %396 : vector<16x128xf32>
    %398 = arith.mulf %395, %397 : vector<16x128xf32>
    %cst_94 = arith.constant 2.000000e+00 : f32
    %399 = vector.broadcast %cst_94 : f32 to vector<16x128xf32>
    %400 = arith.addf %398, %399 : vector<16x128xf32>
    %401 = arith.divf %398, %400 : vector<16x128xf32>
    %402 = arith.mulf %392, %401 : vector<16x128xf32>
    %403 = arith.mulf %390, %8 : vector<16x128xf32>
    %404 = arith.addf %403, %10 : vector<16x128xf32>
    %cst_95 = arith.constant 2.000000e+01 : f32
    %405 = vector.broadcast %cst_95 : f32 to vector<16x128xf32>
    %406 = arith.minimumf %404, %405 : vector<16x128xf32>
    %407 = math.exp %406 : vector<16x128xf32>
    %cst_96 = arith.constant 2.000000e+00 : f32
    %408 = vector.broadcast %cst_96 : f32 to vector<16x128xf32>
    %409 = arith.addf %407, %408 : vector<16x128xf32>
    %410 = arith.mulf %407, %409 : vector<16x128xf32>
    %cst_97 = arith.constant 2.000000e+00 : f32
    %411 = vector.broadcast %cst_97 : f32 to vector<16x128xf32>
    %412 = arith.addf %410, %411 : vector<16x128xf32>
    %413 = arith.divf %410, %412 : vector<16x128xf32>
    %414 = arith.mulf %404, %413 : vector<16x128xf32>
    %415 = arith.maximumf %402, %414 : vector<16x128xf32>
    %416 = vector.extract_strided_slice %4 {offsets = [0, 3840], sizes = [16, 128], strides = [1, 1]} : vector<16x4096xf32> to vector<16x128xf32>
    %417 = vector.extract_strided_slice %4 {offsets = [0, 3968], sizes = [16, 128], strides = [1, 1]} : vector<16x4096xf32> to vector<16x128xf32>
    %418 = arith.mulf %416, %8 : vector<16x128xf32>
    %419 = arith.addf %418, %10 : vector<16x128xf32>
    %cst_98 = arith.constant 2.000000e+01 : f32
    %420 = vector.broadcast %cst_98 : f32 to vector<16x128xf32>
    %421 = arith.minimumf %419, %420 : vector<16x128xf32>
    %422 = math.exp %421 : vector<16x128xf32>
    %cst_99 = arith.constant 2.000000e+00 : f32
    %423 = vector.broadcast %cst_99 : f32 to vector<16x128xf32>
    %424 = arith.addf %422, %423 : vector<16x128xf32>
    %425 = arith.mulf %422, %424 : vector<16x128xf32>
    %cst_100 = arith.constant 2.000000e+00 : f32
    %426 = vector.broadcast %cst_100 : f32 to vector<16x128xf32>
    %427 = arith.addf %425, %426 : vector<16x128xf32>
    %428 = arith.divf %425, %427 : vector<16x128xf32>
    %429 = arith.mulf %419, %428 : vector<16x128xf32>
    %430 = arith.mulf %417, %8 : vector<16x128xf32>
    %431 = arith.addf %430, %10 : vector<16x128xf32>
    %cst_101 = arith.constant 2.000000e+01 : f32
    %432 = vector.broadcast %cst_101 : f32 to vector<16x128xf32>
    %433 = arith.minimumf %431, %432 : vector<16x128xf32>
    %434 = math.exp %433 : vector<16x128xf32>
    %cst_102 = arith.constant 2.000000e+00 : f32
    %435 = vector.broadcast %cst_102 : f32 to vector<16x128xf32>
    %436 = arith.addf %434, %435 : vector<16x128xf32>
    %437 = arith.mulf %434, %436 : vector<16x128xf32>
    %cst_103 = arith.constant 2.000000e+00 : f32
    %438 = vector.broadcast %cst_103 : f32 to vector<16x128xf32>
    %439 = arith.addf %437, %438 : vector<16x128xf32>
    %440 = arith.divf %437, %439 : vector<16x128xf32>
    %441 = arith.mulf %431, %440 : vector<16x128xf32>
    %442 = arith.maximumf %429, %441 : vector<16x128xf32>
    %443 = tpu.concatenate %37, %64, %91, %118, %145, %172, %199, %226, %253, %280, %307, %334, %361, %388, %415, %442 in 1 : vector<16x128xf32>, vector<16x128xf32>, vector<16x128xf32>, vector<16x128xf32>, vector<16x128xf32>, vector<16x128xf32>, vector<16x128xf32>, vector<16x128xf32>, vector<16x128xf32>, vector<16x128xf32>, vector<16x128xf32>, vector<16x128xf32>, vector<16x128xf32>, vector<16x128xf32>, vector<16x128xf32>, vector<16x128xf32> -> vector<16x2048xf32>
    %c0_104 = arith.constant 0 : index
    %c0_105 = arith.constant 0 : index
    %444 = vector.load %arg5[%c0_104, %c0_105] : memref<16x16xbf16, #tpu.memory_space<vmem>>, vector<16x16xbf16>
    %445 = arith.truncf %443 : vector<16x2048xf32> to vector<16x2048xbf16>
    %cst_106 = arith.constant dense<0.000000e+00> : vector<16x2048xf32>
    %446 = tpu.matmul %444, %445, %cst_106 {dimension_numbers = #tpu.dot_dimension_numbers<[1], [0], [0], [1], [0, 0, 1, 1], [], []>} : vector<16x16xbf16>, vector<16x2048xbf16>, vector<16x2048xf32> -> vector<16x2048xf32>
    %c0_107 = arith.constant 0 : index
    %c0_108 = arith.constant 0 : index
    %447 = vector.load %arg6[%c0_107, %c0_108] : memref<16x1xf32, #tpu.memory_space<vmem>>, vector<16x1xf32>
    %c0_109 = arith.constant 0 : index
    %c0_110 = arith.constant 0 : index
    %448 = vector.load %arg7[%c0_109, %c0_110] : memref<16x1xf32, #tpu.memory_space<vmem>>, vector<16x1xf32>
    %449 = vector.shape_cast %447 : vector<16x1xf32> to vector<16x1xf32>
    %450 = vector.broadcast %449 : vector<16x1xf32> to vector<16x128xf32>
    %451 = vector.shape_cast %448 : vector<16x1xf32> to vector<16x1xf32>
    %452 = vector.broadcast %451 : vector<16x1xf32> to vector<16x128xf32>
    %453 = vector.extract_strided_slice %446 {offsets = [0, 0], sizes = [16, 128], strides = [1, 1]} : vector<16x2048xf32> to vector<16x128xf32>
    %454 = vector.extract_strided_slice %446 {offsets = [0, 128], sizes = [16, 128], strides = [1, 1]} : vector<16x2048xf32> to vector<16x128xf32>
    %455 = arith.mulf %453, %450 : vector<16x128xf32>
    %456 = arith.addf %455, %452 : vector<16x128xf32>
    %cst_111 = arith.constant 2.000000e+01 : f32
    %457 = vector.broadcast %cst_111 : f32 to vector<16x128xf32>
    %458 = arith.minimumf %456, %457 : vector<16x128xf32>
    %459 = math.exp %458 : vector<16x128xf32>
    %cst_112 = arith.constant 2.000000e+00 : f32
    %460 = vector.broadcast %cst_112 : f32 to vector<16x128xf32>
    %461 = arith.addf %459, %460 : vector<16x128xf32>
    %462 = arith.mulf %459, %461 : vector<16x128xf32>
    %cst_113 = arith.constant 2.000000e+00 : f32
    %463 = vector.broadcast %cst_113 : f32 to vector<16x128xf32>
    %464 = arith.addf %462, %463 : vector<16x128xf32>
    %465 = arith.divf %462, %464 : vector<16x128xf32>
    %466 = arith.mulf %456, %465 : vector<16x128xf32>
    %467 = arith.mulf %454, %450 : vector<16x128xf32>
    %468 = arith.addf %467, %452 : vector<16x128xf32>
    %cst_114 = arith.constant 2.000000e+01 : f32
    %469 = vector.broadcast %cst_114 : f32 to vector<16x128xf32>
    %470 = arith.minimumf %468, %469 : vector<16x128xf32>
    %471 = math.exp %470 : vector<16x128xf32>
    %cst_115 = arith.constant 2.000000e+00 : f32
    %472 = vector.broadcast %cst_115 : f32 to vector<16x128xf32>
    %473 = arith.addf %471, %472 : vector<16x128xf32>
    %474 = arith.mulf %471, %473 : vector<16x128xf32>
    %cst_116 = arith.constant 2.000000e+00 : f32
    %475 = vector.broadcast %cst_116 : f32 to vector<16x128xf32>
    %476 = arith.addf %474, %475 : vector<16x128xf32>
    %477 = arith.divf %474, %476 : vector<16x128xf32>
    %478 = arith.mulf %468, %477 : vector<16x128xf32>
    %479 = arith.maximumf %466, %478 : vector<16x128xf32>
    %480 = vector.extract_strided_slice %446 {offsets = [0, 256], sizes = [16, 128], strides = [1, 1]} : vector<16x2048xf32> to vector<16x128xf32>
    %481 = vector.extract_strided_slice %446 {offsets = [0, 384], sizes = [16, 128], strides = [1, 1]} : vector<16x2048xf32> to vector<16x128xf32>
    %482 = arith.mulf %480, %450 : vector<16x128xf32>
    %483 = arith.addf %482, %452 : vector<16x128xf32>
    %cst_117 = arith.constant 2.000000e+01 : f32
    %484 = vector.broadcast %cst_117 : f32 to vector<16x128xf32>
    %485 = arith.minimumf %483, %484 : vector<16x128xf32>
    %486 = math.exp %485 : vector<16x128xf32>
    %cst_118 = arith.constant 2.000000e+00 : f32
    %487 = vector.broadcast %cst_118 : f32 to vector<16x128xf32>
    %488 = arith.addf %486, %487 : vector<16x128xf32>
    %489 = arith.mulf %486, %488 : vector<16x128xf32>
    %cst_119 = arith.constant 2.000000e+00 : f32
    %490 = vector.broadcast %cst_119 : f32 to vector<16x128xf32>
    %491 = arith.addf %489, %490 : vector<16x128xf32>
    %492 = arith.divf %489, %491 : vector<16x128xf32>
    %493 = arith.mulf %483, %492 : vector<16x128xf32>
    %494 = arith.mulf %481, %450 : vector<16x128xf32>
    %495 = arith.addf %494, %452 : vector<16x128xf32>
    %cst_120 = arith.constant 2.000000e+01 : f32
    %496 = vector.broadcast %cst_120 : f32 to vector<16x128xf32>
    %497 = arith.minimumf %495, %496 : vector<16x128xf32>
    %498 = math.exp %497 : vector<16x128xf32>
    %cst_121 = arith.constant 2.000000e+00 : f32
    %499 = vector.broadcast %cst_121 : f32 to vector<16x128xf32>
    %500 = arith.addf %498, %499 : vector<16x128xf32>
    %501 = arith.mulf %498, %500 : vector<16x128xf32>
    %cst_122 = arith.constant 2.000000e+00 : f32
    %502 = vector.broadcast %cst_122 : f32 to vector<16x128xf32>
    %503 = arith.addf %501, %502 : vector<16x128xf32>
    %504 = arith.divf %501, %503 : vector<16x128xf32>
    %505 = arith.mulf %495, %504 : vector<16x128xf32>
    %506 = arith.maximumf %493, %505 : vector<16x128xf32>
    %507 = vector.extract_strided_slice %446 {offsets = [0, 512], sizes = [16, 128], strides = [1, 1]} : vector<16x2048xf32> to vector<16x128xf32>
    %508 = vector.extract_strided_slice %446 {offsets = [0, 640], sizes = [16, 128], strides = [1, 1]} : vector<16x2048xf32> to vector<16x128xf32>
    %509 = arith.mulf %507, %450 : vector<16x128xf32>
    %510 = arith.addf %509, %452 : vector<16x128xf32>
    %cst_123 = arith.constant 2.000000e+01 : f32
    %511 = vector.broadcast %cst_123 : f32 to vector<16x128xf32>
    %512 = arith.minimumf %510, %511 : vector<16x128xf32>
    %513 = math.exp %512 : vector<16x128xf32>
    %cst_124 = arith.constant 2.000000e+00 : f32
    %514 = vector.broadcast %cst_124 : f32 to vector<16x128xf32>
    %515 = arith.addf %513, %514 : vector<16x128xf32>
    %516 = arith.mulf %513, %515 : vector<16x128xf32>
    %cst_125 = arith.constant 2.000000e+00 : f32
    %517 = vector.broadcast %cst_125 : f32 to vector<16x128xf32>
    %518 = arith.addf %516, %517 : vector<16x128xf32>
    %519 = arith.divf %516, %518 : vector<16x128xf32>
    %520 = arith.mulf %510, %519 : vector<16x128xf32>
    %521 = arith.mulf %508, %450 : vector<16x128xf32>
    %522 = arith.addf %521, %452 : vector<16x128xf32>
    %cst_126 = arith.constant 2.000000e+01 : f32
    %523 = vector.broadcast %cst_126 : f32 to vector<16x128xf32>
    %524 = arith.minimumf %522, %523 : vector<16x128xf32>
    %525 = math.exp %524 : vector<16x128xf32>
    %cst_127 = arith.constant 2.000000e+00 : f32
    %526 = vector.broadcast %cst_127 : f32 to vector<16x128xf32>
    %527 = arith.addf %525, %526 : vector<16x128xf32>
    %528 = arith.mulf %525, %527 : vector<16x128xf32>
    %cst_128 = arith.constant 2.000000e+00 : f32
    %529 = vector.broadcast %cst_128 : f32 to vector<16x128xf32>
    %530 = arith.addf %528, %529 : vector<16x128xf32>
    %531 = arith.divf %528, %530 : vector<16x128xf32>
    %532 = arith.mulf %522, %531 : vector<16x128xf32>
    %533 = arith.maximumf %520, %532 : vector<16x128xf32>
    %534 = vector.extract_strided_slice %446 {offsets = [0, 768], sizes = [16, 128], strides = [1, 1]} : vector<16x2048xf32> to vector<16x128xf32>
    %535 = vector.extract_strided_slice %446 {offsets = [0, 896], sizes = [16, 128], strides = [1, 1]} : vector<16x2048xf32> to vector<16x128xf32>
    %536 = arith.mulf %534, %450 : vector<16x128xf32>
    %537 = arith.addf %536, %452 : vector<16x128xf32>
    %cst_129 = arith.constant 2.000000e+01 : f32
    %538 = vector.broadcast %cst_129 : f32 to vector<16x128xf32>
    %539 = arith.minimumf %537, %538 : vector<16x128xf32>
    %540 = math.exp %539 : vector<16x128xf32>
    %cst_130 = arith.constant 2.000000e+00 : f32
    %541 = vector.broadcast %cst_130 : f32 to vector<16x128xf32>
    %542 = arith.addf %540, %541 : vector<16x128xf32>
    %543 = arith.mulf %540, %542 : vector<16x128xf32>
    %cst_131 = arith.constant 2.000000e+00 : f32
    %544 = vector.broadcast %cst_131 : f32 to vector<16x128xf32>
    %545 = arith.addf %543, %544 : vector<16x128xf32>
    %546 = arith.divf %543, %545 : vector<16x128xf32>
    %547 = arith.mulf %537, %546 : vector<16x128xf32>
    %548 = arith.mulf %535, %450 : vector<16x128xf32>
    %549 = arith.addf %548, %452 : vector<16x128xf32>
    %cst_132 = arith.constant 2.000000e+01 : f32
    %550 = vector.broadcast %cst_132 : f32 to vector<16x128xf32>
    %551 = arith.minimumf %549, %550 : vector<16x128xf32>
    %552 = math.exp %551 : vector<16x128xf32>
    %cst_133 = arith.constant 2.000000e+00 : f32
    %553 = vector.broadcast %cst_133 : f32 to vector<16x128xf32>
    %554 = arith.addf %552, %553 : vector<16x128xf32>
    %555 = arith.mulf %552, %554 : vector<16x128xf32>
    %cst_134 = arith.constant 2.000000e+00 : f32
    %556 = vector.broadcast %cst_134 : f32 to vector<16x128xf32>
    %557 = arith.addf %555, %556 : vector<16x128xf32>
    %558 = arith.divf %555, %557 : vector<16x128xf32>
    %559 = arith.mulf %549, %558 : vector<16x128xf32>
    %560 = arith.maximumf %547, %559 : vector<16x128xf32>
    %561 = vector.extract_strided_slice %446 {offsets = [0, 1024], sizes = [16, 128], strides = [1, 1]} : vector<16x2048xf32> to vector<16x128xf32>
    %562 = vector.extract_strided_slice %446 {offsets = [0, 1152], sizes = [16, 128], strides = [1, 1]} : vector<16x2048xf32> to vector<16x128xf32>
    %563 = arith.mulf %561, %450 : vector<16x128xf32>
    %564 = arith.addf %563, %452 : vector<16x128xf32>
    %cst_135 = arith.constant 2.000000e+01 : f32
    %565 = vector.broadcast %cst_135 : f32 to vector<16x128xf32>
    %566 = arith.minimumf %564, %565 : vector<16x128xf32>
    %567 = math.exp %566 : vector<16x128xf32>
    %cst_136 = arith.constant 2.000000e+00 : f32
    %568 = vector.broadcast %cst_136 : f32 to vector<16x128xf32>
    %569 = arith.addf %567, %568 : vector<16x128xf32>
    %570 = arith.mulf %567, %569 : vector<16x128xf32>
    %cst_137 = arith.constant 2.000000e+00 : f32
    %571 = vector.broadcast %cst_137 : f32 to vector<16x128xf32>
    %572 = arith.addf %570, %571 : vector<16x128xf32>
    %573 = arith.divf %570, %572 : vector<16x128xf32>
    %574 = arith.mulf %564, %573 : vector<16x128xf32>
    %575 = arith.mulf %562, %450 : vector<16x128xf32>
    %576 = arith.addf %575, %452 : vector<16x128xf32>
    %cst_138 = arith.constant 2.000000e+01 : f32
    %577 = vector.broadcast %cst_138 : f32 to vector<16x128xf32>
    %578 = arith.minimumf %576, %577 : vector<16x128xf32>
    %579 = math.exp %578 : vector<16x128xf32>
    %cst_139 = arith.constant 2.000000e+00 : f32
    %580 = vector.broadcast %cst_139 : f32 to vector<16x128xf32>
    %581 = arith.addf %579, %580 : vector<16x128xf32>
    %582 = arith.mulf %579, %581 : vector<16x128xf32>
    %cst_140 = arith.constant 2.000000e+00 : f32
    %583 = vector.broadcast %cst_140 : f32 to vector<16x128xf32>
    %584 = arith.addf %582, %583 : vector<16x128xf32>
    %585 = arith.divf %582, %584 : vector<16x128xf32>
    %586 = arith.mulf %576, %585 : vector<16x128xf32>
    %587 = arith.maximumf %574, %586 : vector<16x128xf32>
    %588 = vector.extract_strided_slice %446 {offsets = [0, 1280], sizes = [16, 128], strides = [1, 1]} : vector<16x2048xf32> to vector<16x128xf32>
    %589 = vector.extract_strided_slice %446 {offsets = [0, 1408], sizes = [16, 128], strides = [1, 1]} : vector<16x2048xf32> to vector<16x128xf32>
    %590 = arith.mulf %588, %450 : vector<16x128xf32>
    %591 = arith.addf %590, %452 : vector<16x128xf32>
    %cst_141 = arith.constant 2.000000e+01 : f32
    %592 = vector.broadcast %cst_141 : f32 to vector<16x128xf32>
    %593 = arith.minimumf %591, %592 : vector<16x128xf32>
    %594 = math.exp %593 : vector<16x128xf32>
    %cst_142 = arith.constant 2.000000e+00 : f32
    %595 = vector.broadcast %cst_142 : f32 to vector<16x128xf32>
    %596 = arith.addf %594, %595 : vector<16x128xf32>
    %597 = arith.mulf %594, %596 : vector<16x128xf32>
    %cst_143 = arith.constant 2.000000e+00 : f32
    %598 = vector.broadcast %cst_143 : f32 to vector<16x128xf32>
    %599 = arith.addf %597, %598 : vector<16x128xf32>
    %600 = arith.divf %597, %599 : vector<16x128xf32>
    %601 = arith.mulf %591, %600 : vector<16x128xf32>
    %602 = arith.mulf %589, %450 : vector<16x128xf32>
    %603 = arith.addf %602, %452 : vector<16x128xf32>
    %cst_144 = arith.constant 2.000000e+01 : f32
    %604 = vector.broadcast %cst_144 : f32 to vector<16x128xf32>
    %605 = arith.minimumf %603, %604 : vector<16x128xf32>
    %606 = math.exp %605 : vector<16x128xf32>
    %cst_145 = arith.constant 2.000000e+00 : f32
    %607 = vector.broadcast %cst_145 : f32 to vector<16x128xf32>
    %608 = arith.addf %606, %607 : vector<16x128xf32>
    %609 = arith.mulf %606, %608 : vector<16x128xf32>
    %cst_146 = arith.constant 2.000000e+00 : f32
    %610 = vector.broadcast %cst_146 : f32 to vector<16x128xf32>
    %611 = arith.addf %609, %610 : vector<16x128xf32>
    %612 = arith.divf %609, %611 : vector<16x128xf32>
    %613 = arith.mulf %603, %612 : vector<16x128xf32>
    %614 = arith.maximumf %601, %613 : vector<16x128xf32>
    %615 = vector.extract_strided_slice %446 {offsets = [0, 1536], sizes = [16, 128], strides = [1, 1]} : vector<16x2048xf32> to vector<16x128xf32>
    %616 = vector.extract_strided_slice %446 {offsets = [0, 1664], sizes = [16, 128], strides = [1, 1]} : vector<16x2048xf32> to vector<16x128xf32>
    %617 = arith.mulf %615, %450 : vector<16x128xf32>
    %618 = arith.addf %617, %452 : vector<16x128xf32>
    %cst_147 = arith.constant 2.000000e+01 : f32
    %619 = vector.broadcast %cst_147 : f32 to vector<16x128xf32>
    %620 = arith.minimumf %618, %619 : vector<16x128xf32>
    %621 = math.exp %620 : vector<16x128xf32>
    %cst_148 = arith.constant 2.000000e+00 : f32
    %622 = vector.broadcast %cst_148 : f32 to vector<16x128xf32>
    %623 = arith.addf %621, %622 : vector<16x128xf32>
    %624 = arith.mulf %621, %623 : vector<16x128xf32>
    %cst_149 = arith.constant 2.000000e+00 : f32
    %625 = vector.broadcast %cst_149 : f32 to vector<16x128xf32>
    %626 = arith.addf %624, %625 : vector<16x128xf32>
    %627 = arith.divf %624, %626 : vector<16x128xf32>
    %628 = arith.mulf %618, %627 : vector<16x128xf32>
    %629 = arith.mulf %616, %450 : vector<16x128xf32>
    %630 = arith.addf %629, %452 : vector<16x128xf32>
    %cst_150 = arith.constant 2.000000e+01 : f32
    %631 = vector.broadcast %cst_150 : f32 to vector<16x128xf32>
    %632 = arith.minimumf %630, %631 : vector<16x128xf32>
    %633 = math.exp %632 : vector<16x128xf32>
    %cst_151 = arith.constant 2.000000e+00 : f32
    %634 = vector.broadcast %cst_151 : f32 to vector<16x128xf32>
    %635 = arith.addf %633, %634 : vector<16x128xf32>
    %636 = arith.mulf %633, %635 : vector<16x128xf32>
    %cst_152 = arith.constant 2.000000e+00 : f32
    %637 = vector.broadcast %cst_152 : f32 to vector<16x128xf32>
    %638 = arith.addf %636, %637 : vector<16x128xf32>
    %639 = arith.divf %636, %638 : vector<16x128xf32>
    %640 = arith.mulf %630, %639 : vector<16x128xf32>
    %641 = arith.maximumf %628, %640 : vector<16x128xf32>
    %642 = vector.extract_strided_slice %446 {offsets = [0, 1792], sizes = [16, 128], strides = [1, 1]} : vector<16x2048xf32> to vector<16x128xf32>
    %643 = vector.extract_strided_slice %446 {offsets = [0, 1920], sizes = [16, 128], strides = [1, 1]} : vector<16x2048xf32> to vector<16x128xf32>
    %644 = arith.mulf %642, %450 : vector<16x128xf32>
    %645 = arith.addf %644, %452 : vector<16x128xf32>
    %cst_153 = arith.constant 2.000000e+01 : f32
    %646 = vector.broadcast %cst_153 : f32 to vector<16x128xf32>
    %647 = arith.minimumf %645, %646 : vector<16x128xf32>
    %648 = math.exp %647 : vector<16x128xf32>
    %cst_154 = arith.constant 2.000000e+00 : f32
    %649 = vector.broadcast %cst_154 : f32 to vector<16x128xf32>
    %650 = arith.addf %648, %649 : vector<16x128xf32>
    %651 = arith.mulf %648, %650 : vector<16x128xf32>
    %cst_155 = arith.constant 2.000000e+00 : f32
    %652 = vector.broadcast %cst_155 : f32 to vector<16x128xf32>
    %653 = arith.addf %651, %652 : vector<16x128xf32>
    %654 = arith.divf %651, %653 : vector<16x128xf32>
    %655 = arith.mulf %645, %654 : vector<16x128xf32>
    %656 = arith.mulf %643, %450 : vector<16x128xf32>
    %657 = arith.addf %656, %452 : vector<16x128xf32>
    %cst_156 = arith.constant 2.000000e+01 : f32
    %658 = vector.broadcast %cst_156 : f32 to vector<16x128xf32>
    %659 = arith.minimumf %657, %658 : vector<16x128xf32>
    %660 = math.exp %659 : vector<16x128xf32>
    %cst_157 = arith.constant 2.000000e+00 : f32
    %661 = vector.broadcast %cst_157 : f32 to vector<16x128xf32>
    %662 = arith.addf %660, %661 : vector<16x128xf32>
    %663 = arith.mulf %660, %662 : vector<16x128xf32>
    %cst_158 = arith.constant 2.000000e+00 : f32
    %664 = vector.broadcast %cst_158 : f32 to vector<16x128xf32>
    %665 = arith.addf %663, %664 : vector<16x128xf32>
    %666 = arith.divf %663, %665 : vector<16x128xf32>
    %667 = arith.mulf %657, %666 : vector<16x128xf32>
    %668 = arith.maximumf %655, %667 : vector<16x128xf32>
    %669 = tpu.concatenate %479, %506, %533, %560, %587, %614, %641, %668 in 1 : vector<16x128xf32>, vector<16x128xf32>, vector<16x128xf32>, vector<16x128xf32>, vector<16x128xf32>, vector<16x128xf32>, vector<16x128xf32>, vector<16x128xf32> -> vector<16x1024xf32>
    %c0_159 = arith.constant 0 : index
    %c0_160 = arith.constant 0 : index
    %670 = vector.load %arg8[%c0_159, %c0_160] : memref<48x16xbf16, #tpu.memory_space<vmem>>, vector<48x16xbf16>
    %c0_161 = arith.constant 0 : index
    %c0_162 = arith.constant 0 : index
    %671 = vector.load %arg9[%c0_161, %c0_162] : memref<16x1xf32, #tpu.memory_space<vmem>>, vector<16x1xf32>
    %c0_163 = arith.constant 0 : index
    %c0_164 = arith.constant 0 : index
    %672 = vector.load %arg10[%c0_163, %c0_164] : memref<16x1xf32, #tpu.memory_space<vmem>>, vector<16x1xf32>
    %673 = arith.truncf %669 : vector<16x1024xf32> to vector<16x1024xbf16>
    %cst_165 = arith.constant dense<0.000000e+00> : vector<48x1024xf32>
    %674 = tpu.matmul %670, %673, %cst_165 {dimension_numbers = #tpu.dot_dimension_numbers<[1], [0], [0], [1], [0, 0, 1, 1], [], []>} : vector<48x16xbf16>, vector<16x1024xbf16>, vector<48x1024xf32> -> vector<48x1024xf32>
    %675 = vector.extract_strided_slice %674 {offsets = [0, 0], sizes = [16, 1024], strides = [1, 1]} : vector<48x1024xf32> to vector<16x1024xf32>
    %676 = vector.extract_strided_slice %674 {offsets = [16, 0], sizes = [16, 1024], strides = [1, 1]} : vector<48x1024xf32> to vector<16x1024xf32>
    %677 = vector.extract_strided_slice %674 {offsets = [32, 0], sizes = [16, 1024], strides = [1, 1]} : vector<48x1024xf32> to vector<16x1024xf32>
    %678 = vector.shape_cast %671 : vector<16x1xf32> to vector<16x1xf32>
    %679 = vector.broadcast %678 : vector<16x1xf32> to vector<16x128xf32>
    %680 = vector.shape_cast %672 : vector<16x1xf32> to vector<16x1xf32>
    %681 = vector.broadcast %680 : vector<16x1xf32> to vector<16x128xf32>
    %682 = vector.extract_strided_slice %675 {offsets = [0, 384], sizes = [16, 128], strides = [1, 1]} : vector<16x1024xf32> to vector<16x128xf32>
    %cst_166 = arith.constant 0.000000e+00 : f32
    %683 = vector.broadcast %cst_166 : f32 to vector<16x1xf32>
    %684 = vector.extract_strided_slice %682 {offsets = [0, 0], sizes = [16, 127], strides = [1, 1]} : vector<16x128xf32> to vector<16x127xf32>
    %685 = tpu.concatenate %683, %684 in 1 : vector<16x1xf32>, vector<16x127xf32> -> vector<16x128xf32>
    %686 = vector.extract_strided_slice %676 {offsets = [0, 0], sizes = [16, 128], strides = [1, 1]} : vector<16x1024xf32> to vector<16x128xf32>
    %687 = arith.addf %685, %686 : vector<16x128xf32>
    %688 = vector.extract_strided_slice %677 {offsets = [0, 128], sizes = [16, 128], strides = [1, 1]} : vector<16x1024xf32> to vector<16x128xf32>
    %689 = arith.addf %687, %688 : vector<16x128xf32>
    %690 = vector.extract_strided_slice %677 {offsets = [0, 256], sizes = [16, 128], strides = [1, 1]} : vector<16x1024xf32> to vector<16x128xf32>
    %691 = vector.extract_strided_slice %675 {offsets = [0, 0], sizes = [16, 128], strides = [1, 1]} : vector<16x1024xf32> to vector<16x128xf32>
    %692 = vector.extract_strided_slice %676 {offsets = [0, 128], sizes = [16, 128], strides = [1, 1]} : vector<16x1024xf32> to vector<16x128xf32>
    %693 = arith.addf %691, %692 : vector<16x128xf32>
    %694 = arith.addf %693, %690 : vector<16x128xf32>
    %695 = arith.mulf %689, %679 : vector<16x128xf32>
    %696 = arith.addf %695, %681 : vector<16x128xf32>
    %cst_167 = arith.constant 2.000000e+01 : f32
    %697 = vector.broadcast %cst_167 : f32 to vector<16x128xf32>
    %698 = arith.minimumf %696, %697 : vector<16x128xf32>
    %699 = math.exp %698 : vector<16x128xf32>
    %cst_168 = arith.constant 2.000000e+00 : f32
    %700 = vector.broadcast %cst_168 : f32 to vector<16x128xf32>
    %701 = arith.addf %699, %700 : vector<16x128xf32>
    %702 = arith.mulf %699, %701 : vector<16x128xf32>
    %cst_169 = arith.constant 2.000000e+00 : f32
    %703 = vector.broadcast %cst_169 : f32 to vector<16x128xf32>
    %704 = arith.addf %702, %703 : vector<16x128xf32>
    %705 = arith.divf %702, %704 : vector<16x128xf32>
    %706 = arith.mulf %696, %705 : vector<16x128xf32>
    %707 = arith.mulf %694, %679 : vector<16x128xf32>
    %708 = arith.addf %707, %681 : vector<16x128xf32>
    %cst_170 = arith.constant 2.000000e+01 : f32
    %709 = vector.broadcast %cst_170 : f32 to vector<16x128xf32>
    %710 = arith.minimumf %708, %709 : vector<16x128xf32>
    %711 = math.exp %710 : vector<16x128xf32>
    %cst_171 = arith.constant 2.000000e+00 : f32
    %712 = vector.broadcast %cst_171 : f32 to vector<16x128xf32>
    %713 = arith.addf %711, %712 : vector<16x128xf32>
    %714 = arith.mulf %711, %713 : vector<16x128xf32>
    %cst_172 = arith.constant 2.000000e+00 : f32
    %715 = vector.broadcast %cst_172 : f32 to vector<16x128xf32>
    %716 = arith.addf %714, %715 : vector<16x128xf32>
    %717 = arith.divf %714, %716 : vector<16x128xf32>
    %718 = arith.mulf %708, %717 : vector<16x128xf32>
    %719 = arith.maximumf %706, %718 : vector<16x128xf32>
    %720 = vector.extract_strided_slice %675 {offsets = [0, 128], sizes = [16, 128], strides = [1, 1]} : vector<16x1024xf32> to vector<16x128xf32>
    %721 = vector.extract_strided_slice %676 {offsets = [0, 256], sizes = [16, 128], strides = [1, 1]} : vector<16x1024xf32> to vector<16x128xf32>
    %722 = arith.addf %720, %721 : vector<16x128xf32>
    %723 = vector.extract_strided_slice %677 {offsets = [0, 384], sizes = [16, 128], strides = [1, 1]} : vector<16x1024xf32> to vector<16x128xf32>
    %724 = arith.addf %722, %723 : vector<16x128xf32>
    %725 = vector.extract_strided_slice %677 {offsets = [0, 0], sizes = [16, 128], strides = [1, 1]} : vector<16x1024xf32> to vector<16x128xf32>
    %cst_173 = arith.constant 0.000000e+00 : f32
    %726 = vector.broadcast %cst_173 : f32 to vector<16x1xf32>
    %727 = vector.extract_strided_slice %725 {offsets = [0, 1], sizes = [16, 127], strides = [1, 1]} : vector<16x128xf32> to vector<16x127xf32>
    %728 = tpu.concatenate %727, %726 in 1 : vector<16x127xf32>, vector<16x1xf32> -> vector<16x128xf32>
    %729 = vector.extract_strided_slice %675 {offsets = [0, 256], sizes = [16, 128], strides = [1, 1]} : vector<16x1024xf32> to vector<16x128xf32>
    %730 = vector.extract_strided_slice %676 {offsets = [0, 384], sizes = [16, 128], strides = [1, 1]} : vector<16x1024xf32> to vector<16x128xf32>
    %731 = arith.addf %729, %730 : vector<16x128xf32>
    %732 = arith.addf %731, %728 : vector<16x128xf32>
    %733 = arith.mulf %724, %679 : vector<16x128xf32>
    %734 = arith.addf %733, %681 : vector<16x128xf32>
    %cst_174 = arith.constant 2.000000e+01 : f32
    %735 = vector.broadcast %cst_174 : f32 to vector<16x128xf32>
    %736 = arith.minimumf %734, %735 : vector<16x128xf32>
    %737 = math.exp %736 : vector<16x128xf32>
    %cst_175 = arith.constant 2.000000e+00 : f32
    %738 = vector.broadcast %cst_175 : f32 to vector<16x128xf32>
    %739 = arith.addf %737, %738 : vector<16x128xf32>
    %740 = arith.mulf %737, %739 : vector<16x128xf32>
    %cst_176 = arith.constant 2.000000e+00 : f32
    %741 = vector.broadcast %cst_176 : f32 to vector<16x128xf32>
    %742 = arith.addf %740, %741 : vector<16x128xf32>
    %743 = arith.divf %740, %742 : vector<16x128xf32>
    %744 = arith.mulf %734, %743 : vector<16x128xf32>
    %745 = arith.mulf %732, %679 : vector<16x128xf32>
    %746 = arith.addf %745, %681 : vector<16x128xf32>
    %cst_177 = arith.constant 2.000000e+01 : f32
    %747 = vector.broadcast %cst_177 : f32 to vector<16x128xf32>
    %748 = arith.minimumf %746, %747 : vector<16x128xf32>
    %749 = math.exp %748 : vector<16x128xf32>
    %cst_178 = arith.constant 2.000000e+00 : f32
    %750 = vector.broadcast %cst_178 : f32 to vector<16x128xf32>
    %751 = arith.addf %749, %750 : vector<16x128xf32>
    %752 = arith.mulf %749, %751 : vector<16x128xf32>
    %cst_179 = arith.constant 2.000000e+00 : f32
    %753 = vector.broadcast %cst_179 : f32 to vector<16x128xf32>
    %754 = arith.addf %752, %753 : vector<16x128xf32>
    %755 = arith.divf %752, %754 : vector<16x128xf32>
    %756 = arith.mulf %746, %755 : vector<16x128xf32>
    %757 = arith.maximumf %744, %756 : vector<16x128xf32>
    %758 = vector.extract_strided_slice %675 {offsets = [0, 896], sizes = [16, 128], strides = [1, 1]} : vector<16x1024xf32> to vector<16x128xf32>
    %cst_180 = arith.constant 0.000000e+00 : f32
    %759 = vector.broadcast %cst_180 : f32 to vector<16x1xf32>
    %760 = vector.extract_strided_slice %758 {offsets = [0, 0], sizes = [16, 127], strides = [1, 1]} : vector<16x128xf32> to vector<16x127xf32>
    %761 = tpu.concatenate %759, %760 in 1 : vector<16x1xf32>, vector<16x127xf32> -> vector<16x128xf32>
    %762 = vector.extract_strided_slice %676 {offsets = [0, 512], sizes = [16, 128], strides = [1, 1]} : vector<16x1024xf32> to vector<16x128xf32>
    %763 = arith.addf %761, %762 : vector<16x128xf32>
    %764 = vector.extract_strided_slice %677 {offsets = [0, 640], sizes = [16, 128], strides = [1, 1]} : vector<16x1024xf32> to vector<16x128xf32>
    %765 = arith.addf %763, %764 : vector<16x128xf32>
    %766 = vector.extract_strided_slice %677 {offsets = [0, 768], sizes = [16, 128], strides = [1, 1]} : vector<16x1024xf32> to vector<16x128xf32>
    %767 = vector.extract_strided_slice %675 {offsets = [0, 512], sizes = [16, 128], strides = [1, 1]} : vector<16x1024xf32> to vector<16x128xf32>
    %768 = vector.extract_strided_slice %676 {offsets = [0, 640], sizes = [16, 128], strides = [1, 1]} : vector<16x1024xf32> to vector<16x128xf32>
    %769 = arith.addf %767, %768 : vector<16x128xf32>
    %770 = arith.addf %769, %766 : vector<16x128xf32>
    %771 = arith.mulf %765, %679 : vector<16x128xf32>
    %772 = arith.addf %771, %681 : vector<16x128xf32>
    %cst_181 = arith.constant 2.000000e+01 : f32
    %773 = vector.broadcast %cst_181 : f32 to vector<16x128xf32>
    %774 = arith.minimumf %772, %773 : vector<16x128xf32>
    %775 = math.exp %774 : vector<16x128xf32>
    %cst_182 = arith.constant 2.000000e+00 : f32
    %776 = vector.broadcast %cst_182 : f32 to vector<16x128xf32>
    %777 = arith.addf %775, %776 : vector<16x128xf32>
    %778 = arith.mulf %775, %777 : vector<16x128xf32>
    %cst_183 = arith.constant 2.000000e+00 : f32
    %779 = vector.broadcast %cst_183 : f32 to vector<16x128xf32>
    %780 = arith.addf %778, %779 : vector<16x128xf32>
    %781 = arith.divf %778, %780 : vector<16x128xf32>
    %782 = arith.mulf %772, %781 : vector<16x128xf32>
    %783 = arith.mulf %770, %679 : vector<16x128xf32>
    %784 = arith.addf %783, %681 : vector<16x128xf32>
    %cst_184 = arith.constant 2.000000e+01 : f32
    %785 = vector.broadcast %cst_184 : f32 to vector<16x128xf32>
    %786 = arith.minimumf %784, %785 : vector<16x128xf32>
    %787 = math.exp %786 : vector<16x128xf32>
    %cst_185 = arith.constant 2.000000e+00 : f32
    %788 = vector.broadcast %cst_185 : f32 to vector<16x128xf32>
    %789 = arith.addf %787, %788 : vector<16x128xf32>
    %790 = arith.mulf %787, %789 : vector<16x128xf32>
    %cst_186 = arith.constant 2.000000e+00 : f32
    %791 = vector.broadcast %cst_186 : f32 to vector<16x128xf32>
    %792 = arith.addf %790, %791 : vector<16x128xf32>
    %793 = arith.divf %790, %792 : vector<16x128xf32>
    %794 = arith.mulf %784, %793 : vector<16x128xf32>
    %795 = arith.maximumf %782, %794 : vector<16x128xf32>
    %796 = vector.extract_strided_slice %675 {offsets = [0, 640], sizes = [16, 128], strides = [1, 1]} : vector<16x1024xf32> to vector<16x128xf32>
    %797 = vector.extract_strided_slice %676 {offsets = [0, 768], sizes = [16, 128], strides = [1, 1]} : vector<16x1024xf32> to vector<16x128xf32>
    %798 = arith.addf %796, %797 : vector<16x128xf32>
    %799 = vector.extract_strided_slice %677 {offsets = [0, 896], sizes = [16, 128], strides = [1, 1]} : vector<16x1024xf32> to vector<16x128xf32>
    %800 = arith.addf %798, %799 : vector<16x128xf32>
    %801 = vector.extract_strided_slice %677 {offsets = [0, 512], sizes = [16, 128], strides = [1, 1]} : vector<16x1024xf32> to vector<16x128xf32>
    %cst_187 = arith.constant 0.000000e+00 : f32
    %802 = vector.broadcast %cst_187 : f32 to vector<16x1xf32>
    %803 = vector.extract_strided_slice %801 {offsets = [0, 1], sizes = [16, 127], strides = [1, 1]} : vector<16x128xf32> to vector<16x127xf32>
    %804 = tpu.concatenate %803, %802 in 1 : vector<16x127xf32>, vector<16x1xf32> -> vector<16x128xf32>
    %805 = vector.extract_strided_slice %675 {offsets = [0, 768], sizes = [16, 128], strides = [1, 1]} : vector<16x1024xf32> to vector<16x128xf32>
    %806 = vector.extract_strided_slice %676 {offsets = [0, 896], sizes = [16, 128], strides = [1, 1]} : vector<16x1024xf32> to vector<16x128xf32>
    %807 = arith.addf %805, %806 : vector<16x128xf32>
    %808 = arith.addf %807, %804 : vector<16x128xf32>
    %809 = arith.mulf %800, %679 : vector<16x128xf32>
    %810 = arith.addf %809, %681 : vector<16x128xf32>
    %cst_188 = arith.constant 2.000000e+01 : f32
    %811 = vector.broadcast %cst_188 : f32 to vector<16x128xf32>
    %812 = arith.minimumf %810, %811 : vector<16x128xf32>
    %813 = math.exp %812 : vector<16x128xf32>
    %cst_189 = arith.constant 2.000000e+00 : f32
    %814 = vector.broadcast %cst_189 : f32 to vector<16x128xf32>
    %815 = arith.addf %813, %814 : vector<16x128xf32>
    %816 = arith.mulf %813, %815 : vector<16x128xf32>
    %cst_190 = arith.constant 2.000000e+00 : f32
    %817 = vector.broadcast %cst_190 : f32 to vector<16x128xf32>
    %818 = arith.addf %816, %817 : vector<16x128xf32>
    %819 = arith.divf %816, %818 : vector<16x128xf32>
    %820 = arith.mulf %810, %819 : vector<16x128xf32>
    %821 = arith.mulf %808, %679 : vector<16x128xf32>
    %822 = arith.addf %821, %681 : vector<16x128xf32>
    %cst_191 = arith.constant 2.000000e+01 : f32
    %823 = vector.broadcast %cst_191 : f32 to vector<16x128xf32>
    %824 = arith.minimumf %822, %823 : vector<16x128xf32>
    %825 = math.exp %824 : vector<16x128xf32>
    %cst_192 = arith.constant 2.000000e+00 : f32
    %826 = vector.broadcast %cst_192 : f32 to vector<16x128xf32>
    %827 = arith.addf %825, %826 : vector<16x128xf32>
    %828 = arith.mulf %825, %827 : vector<16x128xf32>
    %cst_193 = arith.constant 2.000000e+00 : f32
    %829 = vector.broadcast %cst_193 : f32 to vector<16x128xf32>
    %830 = arith.addf %828, %829 : vector<16x128xf32>
    %831 = arith.divf %828, %830 : vector<16x128xf32>
    %832 = arith.mulf %822, %831 : vector<16x128xf32>
    %833 = arith.maximumf %820, %832 : vector<16x128xf32>
    %834 = tpu.concatenate %719, %757, %795, %833 in 1 : vector<16x128xf32>, vector<16x128xf32>, vector<16x128xf32>, vector<16x128xf32> -> vector<16x512xf32>
    %c0_194 = arith.constant 0 : index
    %c0_195 = arith.constant 0 : index
    %835 = vector.load %arg11[%c0_194, %c0_195] : memref<24x16xbf16, #tpu.memory_space<vmem>>, vector<24x16xbf16>
    %c0_196 = arith.constant 0 : index
    %c0_197 = arith.constant 0 : index
    %836 = vector.load %arg12[%c0_196, %c0_197] : memref<8x1xf32, #tpu.memory_space<vmem>>, vector<8x1xf32>
    %c0_198 = arith.constant 0 : index
    %c0_199 = arith.constant 0 : index
    %837 = vector.load %arg13[%c0_198, %c0_199] : memref<8x1xf32, #tpu.memory_space<vmem>>, vector<8x1xf32>
    %838 = arith.truncf %834 : vector<16x512xf32> to vector<16x512xbf16>
    %cst_200 = arith.constant dense<0.000000e+00> : vector<24x512xf32>
    %839 = tpu.matmul %835, %838, %cst_200 {dimension_numbers = #tpu.dot_dimension_numbers<[1], [0], [0], [1], [0, 0, 1, 1], [], []>} : vector<24x16xbf16>, vector<16x512xbf16>, vector<24x512xf32> -> vector<24x512xf32>
    %840 = vector.extract_strided_slice %839 {offsets = [0, 0], sizes = [8, 512], strides = [1, 1]} : vector<24x512xf32> to vector<8x512xf32>
    %841 = vector.extract_strided_slice %839 {offsets = [8, 0], sizes = [8, 512], strides = [1, 1]} : vector<24x512xf32> to vector<8x512xf32>
    %842 = vector.extract_strided_slice %839 {offsets = [16, 0], sizes = [8, 512], strides = [1, 1]} : vector<24x512xf32> to vector<8x512xf32>
    %843 = vector.shape_cast %836 : vector<8x1xf32> to vector<8x1xf32>
    %844 = vector.broadcast %843 : vector<8x1xf32> to vector<8x128xf32>
    %845 = vector.shape_cast %837 : vector<8x1xf32> to vector<8x1xf32>
    %846 = vector.broadcast %845 : vector<8x1xf32> to vector<8x128xf32>
    %847 = vector.extract_strided_slice %840 {offsets = [0, 128], sizes = [8, 128], strides = [1, 1]} : vector<8x512xf32> to vector<8x128xf32>
    %cst_201 = arith.constant 0.000000e+00 : f32
    %848 = vector.broadcast %cst_201 : f32 to vector<8x1xf32>
    %849 = vector.extract_strided_slice %847 {offsets = [0, 0], sizes = [8, 127], strides = [1, 1]} : vector<8x128xf32> to vector<8x127xf32>
    %850 = tpu.concatenate %848, %849 in 1 : vector<8x1xf32>, vector<8x127xf32> -> vector<8x128xf32>
    %851 = vector.extract_strided_slice %841 {offsets = [0, 0], sizes = [8, 128], strides = [1, 1]} : vector<8x512xf32> to vector<8x128xf32>
    %852 = arith.addf %850, %851 : vector<8x128xf32>
    %853 = vector.extract_strided_slice %842 {offsets = [0, 128], sizes = [8, 128], strides = [1, 1]} : vector<8x512xf32> to vector<8x128xf32>
    %854 = arith.addf %852, %853 : vector<8x128xf32>
    %855 = vector.extract_strided_slice %842 {offsets = [0, 0], sizes = [8, 128], strides = [1, 1]} : vector<8x512xf32> to vector<8x128xf32>
    %cst_202 = arith.constant 0.000000e+00 : f32
    %856 = vector.broadcast %cst_202 : f32 to vector<8x1xf32>
    %857 = vector.extract_strided_slice %855 {offsets = [0, 1], sizes = [8, 127], strides = [1, 1]} : vector<8x128xf32> to vector<8x127xf32>
    %858 = tpu.concatenate %857, %856 in 1 : vector<8x127xf32>, vector<8x1xf32> -> vector<8x128xf32>
    %859 = vector.extract_strided_slice %840 {offsets = [0, 0], sizes = [8, 128], strides = [1, 1]} : vector<8x512xf32> to vector<8x128xf32>
    %860 = vector.extract_strided_slice %841 {offsets = [0, 128], sizes = [8, 128], strides = [1, 1]} : vector<8x512xf32> to vector<8x128xf32>
    %861 = arith.addf %859, %860 : vector<8x128xf32>
    %862 = arith.addf %861, %858 : vector<8x128xf32>
    %863 = arith.mulf %854, %844 : vector<8x128xf32>
    %864 = arith.addf %863, %846 : vector<8x128xf32>
    %cst_203 = arith.constant 2.000000e+01 : f32
    %865 = vector.broadcast %cst_203 : f32 to vector<8x128xf32>
    %866 = arith.minimumf %864, %865 : vector<8x128xf32>
    %867 = math.exp %866 : vector<8x128xf32>
    %cst_204 = arith.constant 2.000000e+00 : f32
    %868 = vector.broadcast %cst_204 : f32 to vector<8x128xf32>
    %869 = arith.addf %867, %868 : vector<8x128xf32>
    %870 = arith.mulf %867, %869 : vector<8x128xf32>
    %cst_205 = arith.constant 2.000000e+00 : f32
    %871 = vector.broadcast %cst_205 : f32 to vector<8x128xf32>
    %872 = arith.addf %870, %871 : vector<8x128xf32>
    %873 = arith.divf %870, %872 : vector<8x128xf32>
    %874 = arith.mulf %864, %873 : vector<8x128xf32>
    %875 = arith.mulf %862, %844 : vector<8x128xf32>
    %876 = arith.addf %875, %846 : vector<8x128xf32>
    %cst_206 = arith.constant 2.000000e+01 : f32
    %877 = vector.broadcast %cst_206 : f32 to vector<8x128xf32>
    %878 = arith.minimumf %876, %877 : vector<8x128xf32>
    %879 = math.exp %878 : vector<8x128xf32>
    %cst_207 = arith.constant 2.000000e+00 : f32
    %880 = vector.broadcast %cst_207 : f32 to vector<8x128xf32>
    %881 = arith.addf %879, %880 : vector<8x128xf32>
    %882 = arith.mulf %879, %881 : vector<8x128xf32>
    %cst_208 = arith.constant 2.000000e+00 : f32
    %883 = vector.broadcast %cst_208 : f32 to vector<8x128xf32>
    %884 = arith.addf %882, %883 : vector<8x128xf32>
    %885 = arith.divf %882, %884 : vector<8x128xf32>
    %886 = arith.mulf %876, %885 : vector<8x128xf32>
    %887 = arith.maximumf %874, %886 : vector<8x128xf32>
    %888 = vector.extract_strided_slice %840 {offsets = [0, 384], sizes = [8, 128], strides = [1, 1]} : vector<8x512xf32> to vector<8x128xf32>
    %cst_209 = arith.constant 0.000000e+00 : f32
    %889 = vector.broadcast %cst_209 : f32 to vector<8x1xf32>
    %890 = vector.extract_strided_slice %888 {offsets = [0, 0], sizes = [8, 127], strides = [1, 1]} : vector<8x128xf32> to vector<8x127xf32>
    %891 = tpu.concatenate %889, %890 in 1 : vector<8x1xf32>, vector<8x127xf32> -> vector<8x128xf32>
    %892 = vector.extract_strided_slice %841 {offsets = [0, 256], sizes = [8, 128], strides = [1, 1]} : vector<8x512xf32> to vector<8x128xf32>
    %893 = arith.addf %891, %892 : vector<8x128xf32>
    %894 = vector.extract_strided_slice %842 {offsets = [0, 384], sizes = [8, 128], strides = [1, 1]} : vector<8x512xf32> to vector<8x128xf32>
    %895 = arith.addf %893, %894 : vector<8x128xf32>
    %896 = vector.extract_strided_slice %842 {offsets = [0, 256], sizes = [8, 128], strides = [1, 1]} : vector<8x512xf32> to vector<8x128xf32>
    %cst_210 = arith.constant 0.000000e+00 : f32
    %897 = vector.broadcast %cst_210 : f32 to vector<8x1xf32>
    %898 = vector.extract_strided_slice %896 {offsets = [0, 1], sizes = [8, 127], strides = [1, 1]} : vector<8x128xf32> to vector<8x127xf32>
    %899 = tpu.concatenate %898, %897 in 1 : vector<8x127xf32>, vector<8x1xf32> -> vector<8x128xf32>
    %900 = vector.extract_strided_slice %840 {offsets = [0, 256], sizes = [8, 128], strides = [1, 1]} : vector<8x512xf32> to vector<8x128xf32>
    %901 = vector.extract_strided_slice %841 {offsets = [0, 384], sizes = [8, 128], strides = [1, 1]} : vector<8x512xf32> to vector<8x128xf32>
    %902 = arith.addf %900, %901 : vector<8x128xf32>
    %903 = arith.addf %902, %899 : vector<8x128xf32>
    %904 = arith.mulf %895, %844 : vector<8x128xf32>
    %905 = arith.addf %904, %846 : vector<8x128xf32>
    %cst_211 = arith.constant 2.000000e+01 : f32
    %906 = vector.broadcast %cst_211 : f32 to vector<8x128xf32>
    %907 = arith.minimumf %905, %906 : vector<8x128xf32>
    %908 = math.exp %907 : vector<8x128xf32>
    %cst_212 = arith.constant 2.000000e+00 : f32
    %909 = vector.broadcast %cst_212 : f32 to vector<8x128xf32>
    %910 = arith.addf %908, %909 : vector<8x128xf32>
    %911 = arith.mulf %908, %910 : vector<8x128xf32>
    %cst_213 = arith.constant 2.000000e+00 : f32
    %912 = vector.broadcast %cst_213 : f32 to vector<8x128xf32>
    %913 = arith.addf %911, %912 : vector<8x128xf32>
    %914 = arith.divf %911, %913 : vector<8x128xf32>
    %915 = arith.mulf %905, %914 : vector<8x128xf32>
    %916 = arith.mulf %903, %844 : vector<8x128xf32>
    %917 = arith.addf %916, %846 : vector<8x128xf32>
    %cst_214 = arith.constant 2.000000e+01 : f32
    %918 = vector.broadcast %cst_214 : f32 to vector<8x128xf32>
    %919 = arith.minimumf %917, %918 : vector<8x128xf32>
    %920 = math.exp %919 : vector<8x128xf32>
    %cst_215 = arith.constant 2.000000e+00 : f32
    %921 = vector.broadcast %cst_215 : f32 to vector<8x128xf32>
    %922 = arith.addf %920, %921 : vector<8x128xf32>
    %923 = arith.mulf %920, %922 : vector<8x128xf32>
    %cst_216 = arith.constant 2.000000e+00 : f32
    %924 = vector.broadcast %cst_216 : f32 to vector<8x128xf32>
    %925 = arith.addf %923, %924 : vector<8x128xf32>
    %926 = arith.divf %923, %925 : vector<8x128xf32>
    %927 = arith.mulf %917, %926 : vector<8x128xf32>
    %928 = arith.maximumf %915, %927 : vector<8x128xf32>
    %929 = tpu.concatenate %887, %928 in 1 : vector<8x128xf32>, vector<8x128xf32> -> vector<8x256xf32>
    %930 = vector.extract_strided_slice %929 {offsets = [0, 0], sizes = [1, 128], strides = [1, 1]} : vector<8x256xf32> to vector<1x128xf32>
    %c0_217 = arith.constant 0 : index
    %c0_218 = arith.constant 0 : index
    %931 = vector.load %arg18[%c0_217, %c0_218] : memref<2x1024xf32, #tpu.memory_space<vmem>>, vector<1x128xf32>
    tpu.vector_store %arg18[%c0_217, %c0_218], %930 {strides = array<i32>} : memref<2x1024xf32, #tpu.memory_space<vmem>>, vector<1x128xf32>,
    %932 = vector.extract_strided_slice %929 {offsets = [1, 0], sizes = [1, 128], strides = [1, 1]} : vector<8x256xf32> to vector<1x128xf32>
    %c0_219 = arith.constant 0 : index
    %c128 = arith.constant 128 : index
    %933 = vector.load %arg18[%c0_219, %c128] : memref<2x1024xf32, #tpu.memory_space<vmem>>, vector<1x128xf32>
    tpu.vector_store %arg18[%c0_219, %c128], %932 {strides = array<i32>} : memref<2x1024xf32, #tpu.memory_space<vmem>>, vector<1x128xf32>,
    %934 = vector.extract_strided_slice %929 {offsets = [2, 0], sizes = [1, 128], strides = [1, 1]} : vector<8x256xf32> to vector<1x128xf32>
    %c0_220 = arith.constant 0 : index
    %c256 = arith.constant 256 : index
    %935 = vector.load %arg18[%c0_220, %c256] : memref<2x1024xf32, #tpu.memory_space<vmem>>, vector<1x128xf32>
    tpu.vector_store %arg18[%c0_220, %c256], %934 {strides = array<i32>} : memref<2x1024xf32, #tpu.memory_space<vmem>>, vector<1x128xf32>,
    %936 = vector.extract_strided_slice %929 {offsets = [3, 0], sizes = [1, 128], strides = [1, 1]} : vector<8x256xf32> to vector<1x128xf32>
    %c0_221 = arith.constant 0 : index
    %c384 = arith.constant 384 : index
    %937 = vector.load %arg18[%c0_221, %c384] : memref<2x1024xf32, #tpu.memory_space<vmem>>, vector<1x128xf32>
    tpu.vector_store %arg18[%c0_221, %c384], %936 {strides = array<i32>} : memref<2x1024xf32, #tpu.memory_space<vmem>>, vector<1x128xf32>,
    %938 = vector.extract_strided_slice %929 {offsets = [4, 0], sizes = [1, 128], strides = [1, 1]} : vector<8x256xf32> to vector<1x128xf32>
    %c0_222 = arith.constant 0 : index
    %c512 = arith.constant 512 : index
    %939 = vector.load %arg18[%c0_222, %c512] : memref<2x1024xf32, #tpu.memory_space<vmem>>, vector<1x128xf32>
    tpu.vector_store %arg18[%c0_222, %c512], %938 {strides = array<i32>} : memref<2x1024xf32, #tpu.memory_space<vmem>>, vector<1x128xf32>,
    %940 = vector.extract_strided_slice %929 {offsets = [5, 0], sizes = [1, 128], strides = [1, 1]} : vector<8x256xf32> to vector<1x128xf32>
    %c0_223 = arith.constant 0 : index
    %c640 = arith.constant 640 : index
    %941 = vector.load %arg18[%c0_223, %c640] : memref<2x1024xf32, #tpu.memory_space<vmem>>, vector<1x128xf32>
    tpu.vector_store %arg18[%c0_223, %c640], %940 {strides = array<i32>} : memref<2x1024xf32, #tpu.memory_space<vmem>>, vector<1x128xf32>,
    %942 = vector.extract_strided_slice %929 {offsets = [6, 0], sizes = [1, 128], strides = [1, 1]} : vector<8x256xf32> to vector<1x128xf32>
    %c0_224 = arith.constant 0 : index
    %c768 = arith.constant 768 : index
    %943 = vector.load %arg18[%c0_224, %c768] : memref<2x1024xf32, #tpu.memory_space<vmem>>, vector<1x128xf32>
    tpu.vector_store %arg18[%c0_224, %c768], %942 {strides = array<i32>} : memref<2x1024xf32, #tpu.memory_space<vmem>>, vector<1x128xf32>,
    %944 = vector.extract_strided_slice %929 {offsets = [7, 0], sizes = [1, 128], strides = [1, 1]} : vector<8x256xf32> to vector<1x128xf32>
    %c0_225 = arith.constant 0 : index
    %c896 = arith.constant 896 : index
    %945 = vector.load %arg18[%c0_225, %c896] : memref<2x1024xf32, #tpu.memory_space<vmem>>, vector<1x128xf32>
    tpu.vector_store %arg18[%c0_225, %c896], %944 {strides = array<i32>} : memref<2x1024xf32, #tpu.memory_space<vmem>>, vector<1x128xf32>,
    %946 = vector.extract_strided_slice %929 {offsets = [0, 128], sizes = [1, 128], strides = [1, 1]} : vector<8x256xf32> to vector<1x128xf32>
    %c1 = arith.constant 1 : index
    %c0_226 = arith.constant 0 : index
    %947 = vector.load %arg18[%c1, %c0_226] : memref<2x1024xf32, #tpu.memory_space<vmem>>, vector<1x128xf32>
    tpu.vector_store %arg18[%c1, %c0_226], %946 {strides = array<i32>} : memref<2x1024xf32, #tpu.memory_space<vmem>>, vector<1x128xf32>,
    %948 = vector.extract_strided_slice %929 {offsets = [1, 128], sizes = [1, 128], strides = [1, 1]} : vector<8x256xf32> to vector<1x128xf32>
    %c1_227 = arith.constant 1 : index
    %c128_228 = arith.constant 128 : index
    %949 = vector.load %arg18[%c1_227, %c128_228] : memref<2x1024xf32, #tpu.memory_space<vmem>>, vector<1x128xf32>
    tpu.vector_store %arg18[%c1_227, %c128_228], %948 {strides = array<i32>} : memref<2x1024xf32, #tpu.memory_space<vmem>>, vector<1x128xf32>,
    %950 = vector.extract_strided_slice %929 {offsets = [2, 128], sizes = [1, 128], strides = [1, 1]} : vector<8x256xf32> to vector<1x128xf32>
    %c1_229 = arith.constant 1 : index
    %c256_230 = arith.constant 256 : index
    %951 = vector.load %arg18[%c1_229, %c256_230] : memref<2x1024xf32, #tpu.memory_space<vmem>>, vector<1x128xf32>
    tpu.vector_store %arg18[%c1_229, %c256_230], %950 {strides = array<i32>} : memref<2x1024xf32, #tpu.memory_space<vmem>>, vector<1x128xf32>,
    %952 = vector.extract_strided_slice %929 {offsets = [3, 128], sizes = [1, 128], strides = [1, 1]} : vector<8x256xf32> to vector<1x128xf32>
    %c1_231 = arith.constant 1 : index
    %c384_232 = arith.constant 384 : index
    %953 = vector.load %arg18[%c1_231, %c384_232] : memref<2x1024xf32, #tpu.memory_space<vmem>>, vector<1x128xf32>
    tpu.vector_store %arg18[%c1_231, %c384_232], %952 {strides = array<i32>} : memref<2x1024xf32, #tpu.memory_space<vmem>>, vector<1x128xf32>,
    %954 = vector.extract_strided_slice %929 {offsets = [4, 128], sizes = [1, 128], strides = [1, 1]} : vector<8x256xf32> to vector<1x128xf32>
    %c1_233 = arith.constant 1 : index
    %c512_234 = arith.constant 512 : index
    %955 = vector.load %arg18[%c1_233, %c512_234] : memref<2x1024xf32, #tpu.memory_space<vmem>>, vector<1x128xf32>
    tpu.vector_store %arg18[%c1_233, %c512_234], %954 {strides = array<i32>} : memref<2x1024xf32, #tpu.memory_space<vmem>>, vector<1x128xf32>,
    %956 = vector.extract_strided_slice %929 {offsets = [5, 128], sizes = [1, 128], strides = [1, 1]} : vector<8x256xf32> to vector<1x128xf32>
    %c1_235 = arith.constant 1 : index
    %c640_236 = arith.constant 640 : index
    %957 = vector.load %arg18[%c1_235, %c640_236] : memref<2x1024xf32, #tpu.memory_space<vmem>>, vector<1x128xf32>
    tpu.vector_store %arg18[%c1_235, %c640_236], %956 {strides = array<i32>} : memref<2x1024xf32, #tpu.memory_space<vmem>>, vector<1x128xf32>,
    %958 = vector.extract_strided_slice %929 {offsets = [6, 128], sizes = [1, 128], strides = [1, 1]} : vector<8x256xf32> to vector<1x128xf32>
    %c1_237 = arith.constant 1 : index
    %c768_238 = arith.constant 768 : index
    %959 = vector.load %arg18[%c1_237, %c768_238] : memref<2x1024xf32, #tpu.memory_space<vmem>>, vector<1x128xf32>
    tpu.vector_store %arg18[%c1_237, %c768_238], %958 {strides = array<i32>} : memref<2x1024xf32, #tpu.memory_space<vmem>>, vector<1x128xf32>,
    %960 = vector.extract_strided_slice %929 {offsets = [7, 128], sizes = [1, 128], strides = [1, 1]} : vector<8x256xf32> to vector<1x128xf32>
    %c1_239 = arith.constant 1 : index
    %c896_240 = arith.constant 896 : index
    %961 = vector.load %arg18[%c1_239, %c896_240] : memref<2x1024xf32, #tpu.memory_space<vmem>>, vector<1x128xf32>
    tpu.vector_store %arg18[%c1_239, %c896_240], %960 {strides = array<i32>} : memref<2x1024xf32, #tpu.memory_space<vmem>>, vector<1x128xf32>,
    %c0_241 = arith.constant 0 : index
    %c0_242 = arith.constant 0 : index
    %962 = vector.load %arg18[%c0_241, %c0_242] : memref<2x1024xf32, #tpu.memory_space<vmem>>, vector<2x1024xf32>
    %963 = arith.truncf %962 : vector<2x1024xf32> to vector<2x1024xbf16>
    %c0_243 = arith.constant 0 : index
    %c0_244 = arith.constant 0 : index
    %964 = vector.load %arg14[%c0_243, %c0_244] : memref<1024x512xbf16, #tpu.memory_space<vmem>>, vector<1024x512xbf16>
    %cst_245 = arith.constant dense<0.000000e+00> : vector<2x512xf32>
    %965 = tpu.matmul %963, %964, %cst_245 {dimension_numbers = #tpu.dot_dimension_numbers<[1], [0], [0], [1], [0, 0, 1, 1], [], []>} : vector<2x1024xbf16>, vector<1024x512xbf16>, vector<2x512xf32> -> vector<2x512xf32>
    %cst_246 = arith.constant 2.000000e+01 : f32
    %966 = vector.broadcast %cst_246 : f32 to vector<2x512xf32>
    %967 = arith.minimumf %965, %966 : vector<2x512xf32>
    %968 = math.exp %967 : vector<2x512xf32>
    %cst_247 = arith.constant 2.000000e+00 : f32
    %969 = vector.broadcast %cst_247 : f32 to vector<2x512xf32>
    %970 = arith.addf %968, %969 : vector<2x512xf32>
    %971 = arith.mulf %968, %970 : vector<2x512xf32>
    %cst_248 = arith.constant 2.000000e+00 : f32
    %972 = vector.broadcast %cst_248 : f32 to vector<2x512xf32>
    %973 = arith.addf %971, %972 : vector<2x512xf32>
    %974 = arith.divf %971, %973 : vector<2x512xf32>
    %975 = arith.mulf %965, %974 : vector<2x512xf32>
    %976 = arith.truncf %975 : vector<2x512xf32> to vector<2x512xbf16>
    %c0_249 = arith.constant 0 : index
    %c0_250 = arith.constant 0 : index
    %977 = vector.load %arg15[%c0_249, %c0_250] : memref<512x128xbf16, #tpu.memory_space<vmem>>, vector<512x128xbf16>
    %cst_251 = arith.constant dense<0.000000e+00> : vector<2x128xf32>
    %978 = tpu.matmul %976, %977, %cst_251 {dimension_numbers = #tpu.dot_dimension_numbers<[1], [0], [0], [1], [0, 0, 1, 1], [], []>} : vector<2x512xbf16>, vector<512x128xbf16>, vector<2x128xf32> -> vector<2x128xf32>
    %cst_252 = arith.constant 2.000000e+01 : f32
    %979 = vector.broadcast %cst_252 : f32 to vector<2x128xf32>
    %980 = arith.minimumf %978, %979 : vector<2x128xf32>
    %981 = math.exp %980 : vector<2x128xf32>
    %cst_253 = arith.constant 2.000000e+00 : f32
    %982 = vector.broadcast %cst_253 : f32 to vector<2x128xf32>
    %983 = arith.addf %981, %982 : vector<2x128xf32>
    %984 = arith.mulf %981, %983 : vector<2x128xf32>
    %cst_254 = arith.constant 2.000000e+00 : f32
    %985 = vector.broadcast %cst_254 : f32 to vector<2x128xf32>
    %986 = arith.addf %984, %985 : vector<2x128xf32>
    %987 = arith.divf %984, %986 : vector<2x128xf32>
    %988 = arith.mulf %978, %987 : vector<2x128xf32>
    %989 = arith.truncf %988 : vector<2x128xf32> to vector<2x128xbf16>
    %c0_255 = arith.constant 0 : index
    %c0_256 = arith.constant 0 : index
    %990 = vector.load %arg16[%c0_255, %c0_256] : memref<128x128xbf16, #tpu.memory_space<vmem>>, vector<128x128xbf16>
    %cst_257 = arith.constant dense<0.000000e+00> : vector<2x128xf32>
    %991 = tpu.matmul %989, %990, %cst_257 {dimension_numbers = #tpu.dot_dimension_numbers<[1], [0], [0], [1], [0, 0, 1, 1], [], []>} : vector<2x128xbf16>, vector<128x128xbf16>, vector<2x128xf32> -> vector<2x128xf32>
    %cst_258 = arith.constant 2.000000e+01 : f32
    %992 = vector.broadcast %cst_258 : f32 to vector<2x128xf32>
    %993 = arith.minimumf %991, %992 : vector<2x128xf32>
    %994 = math.exp %993 : vector<2x128xf32>
    %cst_259 = arith.constant 2.000000e+00 : f32
    %995 = vector.broadcast %cst_259 : f32 to vector<2x128xf32>
    %996 = arith.addf %994, %995 : vector<2x128xf32>
    %997 = arith.mulf %994, %996 : vector<2x128xf32>
    %cst_260 = arith.constant 2.000000e+00 : f32
    %998 = vector.broadcast %cst_260 : f32 to vector<2x128xf32>
    %999 = arith.addf %997, %998 : vector<2x128xf32>
    %1000 = arith.divf %997, %999 : vector<2x128xf32>
    %1001 = arith.mulf %991, %1000 : vector<2x128xf32>
    %c0_261 = arith.constant 0 : index
    %c0_262 = arith.constant 0 : index
    %c0_263 = arith.constant 0 : index
    %1002 = vector.load %arg17[%c0_261, %c0_262, %c0_263] : memref<1x2x128xf32, #tpu.memory_space<vmem>>, vector<1x2x128xf32>
    %1003 = vector.shape_cast %1002 : vector<1x2x128xf32> to vector<2x128xf32>
    %1004 = vector.shape_cast %1001 : vector<2x128xf32> to vector<1x2x128xf32>
    tpu.vector_store %arg17[%c0_261, %c0_262, %c0_263], %1004 {strides = array<i32>} : memref<1x2x128xf32, #tpu.memory_space<vmem>>, vector<1x2x128xf32>,
    return
  }
  func.func @transform_0(%arg0: i32) -> (i32, i32, i32) {
    %c0_i32 = arith.constant 0 : i32
    %c0_i32_0 = arith.constant 0 : i32
    %c0_i32_1 = arith.constant 0 : i32
    return %arg0, %c0_i32, %c0_i32_0 : i32, i32, i32
  }
  func.func @transform_1(%arg0: i32) -> (i32, i32) {
    %c0_i32 = arith.constant 0 : i32
    %c0_i32_0 = arith.constant 0 : i32
    %c0_i32_1 = arith.constant 0 : i32
    return %c0_i32, %c0_i32_0 : i32, i32
  }
  func.func @transform_2(%arg0: i32) -> (i32, i32) {
    %c0_i32 = arith.constant 0 : i32
    %c0_i32_0 = arith.constant 0 : i32
    %c0_i32_1 = arith.constant 0 : i32
    return %c0_i32, %c0_i32_0 : i32, i32
  }
  func.func @transform_3(%arg0: i32) -> (i32, i32) {
    %c0_i32 = arith.constant 0 : i32
    %c0_i32_0 = arith.constant 0 : i32
    %c0_i32_1 = arith.constant 0 : i32
    return %c0_i32, %c0_i32_0 : i32, i32
  }
  func.func @transform_4(%arg0: i32) -> (i32, i32) {
    %c0_i32 = arith.constant 0 : i32
    %c0_i32_0 = arith.constant 0 : i32
    %c0_i32_1 = arith.constant 0 : i32
    return %c0_i32, %c0_i32_0 : i32, i32
  }
  func.func @transform_5(%arg0: i32) -> (i32, i32) {
    %c0_i32 = arith.constant 0 : i32
    %c0_i32_0 = arith.constant 0 : i32
    %c0_i32_1 = arith.constant 0 : i32
    return %c0_i32, %c0_i32_0 : i32, i32
  }
  func.func @transform_6(%arg0: i32) -> (i32, i32) {
    %c0_i32 = arith.constant 0 : i32
    %c0_i32_0 = arith.constant 0 : i32
    %c0_i32_1 = arith.constant 0 : i32
    return %c0_i32, %c0_i32_0 : i32, i32
  }
  func.func @transform_7(%arg0: i32) -> (i32, i32) {
    %c0_i32 = arith.constant 0 : i32
    %c0_i32_0 = arith.constant 0 : i32
    %c0_i32_1 = arith.constant 0 : i32
    return %c0_i32, %c0_i32_0 : i32, i32
  }
  func.func @transform_8(%arg0: i32) -> (i32, i32) {
    %c0_i32 = arith.constant 0 : i32
    %c0_i32_0 = arith.constant 0 : i32
    %c0_i32_1 = arith.constant 0 : i32
    return %c0_i32, %c0_i32_0 : i32, i32
  }
  func.func @transform_9(%arg0: i32) -> (i32, i32) {
    %c0_i32 = arith.constant 0 : i32
    %c0_i32_0 = arith.constant 0 : i32
    %c0_i32_1 = arith.constant 0 : i32
    return %c0_i32, %c0_i32_0 : i32, i32
  }
  func.func @transform_10(%arg0: i32) -> (i32, i32) {
    %c0_i32 = arith.constant 0 : i32
    %c0_i32_0 = arith.constant 0 : i32
    %c0_i32_1 = arith.constant 0 : i32
    return %c0_i32, %c0_i32_0 : i32, i32
  }
  func.func @transform_11(%arg0: i32) -> (i32, i32) {
    %c0_i32 = arith.constant 0 : i32
    %c0_i32_0 = arith.constant 0 : i32
    %c0_i32_1 = arith.constant 0 : i32
    return %c0_i32, %c0_i32_0 : i32, i32
  }
  func.func @transform_12(%arg0: i32) -> (i32, i32) {
    %c0_i32 = arith.constant 0 : i32
    %c0_i32_0 = arith.constant 0 : i32
    %c0_i32_1 = arith.constant 0 : i32
    return %c0_i32, %c0_i32_0 : i32, i32
  }
  func.func @transform_13(%arg0: i32) -> (i32, i32) {
    %c0_i32 = arith.constant 0 : i32
    %c0_i32_0 = arith.constant 0 : i32
    %c0_i32_1 = arith.constant 0 : i32
    return %c0_i32, %c0_i32_0 : i32, i32
  }
  func.func @transform_14(%arg0: i32) -> (i32, i32) {
    %c0_i32 = arith.constant 0 : i32
    %c0_i32_0 = arith.constant 0 : i32
    %c0_i32_1 = arith.constant 0 : i32
    return %c0_i32, %c0_i32_0 : i32, i32
  }
  func.func @transform_15(%arg0: i32) -> (i32, i32) {
    %c0_i32 = arith.constant 0 : i32
    %c0_i32_0 = arith.constant 0 : i32
    %c0_i32_1 = arith.constant 0 : i32
    return %c0_i32, %c0_i32_0 : i32, i32
  }
  func.func @transform_16(%arg0: i32) -> (i32, i32, i32) {
    %c0_i32 = arith.constant 0 : i32
    %c0_i32_0 = arith.constant 0 : i32
    %c0_i32_1 = arith.constant 0 : i32
    return %arg0, %c0_i32, %c0_i32_0 : i32, i32, i32
  }
}

</mosaic_0001>

<llo_original>
// kernel: q_net_forward.1
$region0: #{q_net_forward.1}
  #allocation0 [shape = 'u32[]', space=smem, size = 0x4, offset = 0x4, fixed_abs, tag = 'smem constant byte address 0x4 - core index']
  #allocation1 [shape = 'u32[144,128]{1,0:T(1,128)}', space=vmem, size = 0x12000, scoped, tag = 'internal scratch']
  #allocation2 [shape = 'f32[2,1024]{1,0:T(2,128)}', space=vmem, size = 0x2000, scoped, tag = 'scratch operand']
  %s0 = inlined_call_operand.vmem [shape: f32[2,4,4096], index: 0, kind: input, shape index: {}]
  %s1 = inlined_call_operand.vmem [shape: bf16[16,4], index: 1, kind: input, shape index: {}]
  %s2 = inlined_call_operand.vmem [shape: f32[16,1], index: 2, kind: input, shape index: {}]
  %s3 = inlined_call_operand.vmem [shape: f32[16,1], index: 3, kind: input, shape index: {}]
  %s4 = inlined_call_operand.vmem [shape: bf16[16,16], index: 4, kind: input, shape index: {}]
  %s5 = inlined_call_operand.vmem [shape: f32[16,1], index: 5, kind: input, shape index: {}]
  %s6 = inlined_call_operand.vmem [shape: f32[16,1], index: 6, kind: input, shape index: {}]
  %s7 = inlined_call_operand.vmem [shape: bf16[48,16], index: 7, kind: input, shape index: {}]
  %s8 = inlined_call_operand.vmem [shape: f32[16,1], index: 8, kind: input, shape index: {}]
  %s9 = inlined_call_operand.vmem [shape: f32[16,1], index: 9, kind: input, shape index: {}]
  %s10 = inlined_call_operand.vmem [shape: bf16[24,16], index: 10, kind: input, shape index: {}]
  %s11 = inlined_call_operand.vmem [shape: f32[8,1], index: 11, kind: input, shape index: {}]
  %s12 = inlined_call_operand.vmem [shape: f32[8,1], index: 12, kind: input, shape index: {}]
  %s13 = inlined_call_operand.vmem [shape: bf16[1024,512], index: 13, kind: input, shape index: {}]
  %s14 = inlined_call_operand.vmem [shape: bf16[512,128], index: 14, kind: input, shape index: {}]
  %s15 = inlined_call_operand.vmem [shape: bf16[128,128], index: 15, kind: input, shape index: {}]
  %s16 = inlined_call_operand.vmem [shape: f32[2,2,128], index: 16, kind: output, shape index: {}]
  %s17 = sld [smem:[#allocation0]]
  $region97: #{q_net_forward.1} parent=0
    _
  %s19 = ssub.s32 1, %s17
  %s20 = scalar_select 0, %s19, %s17
  loop: start=0, step=1, limit=4
  $region2: #{q_net_forward.1} parent=0 // loop_pre_header
    _
  $region3: #{q_net_forward.1} parent=0 // loop_header
    %s22 = sphi 0, %s26
    %p23 = scmp.ge.s32.totalorder %s22, 4
    %s32 = sphi 0, %s34
    %s35 = sphi 0, %s32
    %s36 = sphi 0, %s35
    %s52 = sphi 0, %s36
    %s56 = sphi 0, %s56
    %s58 = sphi 0, %s56
    %s59 = sphi 0, %s58
    %s73 = sphi 0, %s59
    %s77 = sphi 0, %s77
    %s79 = sphi 0, %s77
    %s80 = sphi 0, %s79
    %s94 = sphi 0, %s80
    %s98 = sphi 0, %s98
    %s100 = sphi 0, %s98
    %s101 = sphi 0, %s100
    %s115 = sphi 0, %s101
    %s119 = sphi 0, %s119
    %s121 = sphi 0, %s119
    %s122 = sphi 0, %s121
    %s136 = sphi 0, %s122
    %s140 = sphi 0, %s140
    %s142 = sphi 0, %s140
    %s143 = sphi 0, %s142
    %s157 = sphi 0, %s143
    %s161 = sphi 0, %s161
    %s163 = sphi 0, %s161
    %s164 = sphi 0, %s163
    %s178 = sphi 0, %s164
    %s182 = sphi 0, %s182
    %s184 = sphi 0, %s182
    %s185 = sphi 0, %s184
    %s199 = sphi 0, %s185
    %s203 = sphi 0, %s203
    %s205 = sphi 0, %s203
    %s206 = sphi 0, %s205
    %s220 = sphi 0, %s206
    %s224 = sphi 0, %s224
    %s226 = sphi 0, %s224
    %s227 = sphi 0, %s226
    %s241 = sphi 0, %s227
    %s245 = sphi 0, %s245
    %s247 = sphi 0, %s245
    %s248 = sphi 0, %s247
    %s262 = sphi 0, %s248
    %s266 = sphi 0, %s266
    %s268 = sphi 0, %s266
    %s269 = sphi 0, %s268
    %s283 = sphi 0, %s269
    %s287 = sphi 0, %s287
    %s289 = sphi 0, %s287
    %s290 = sphi 0, %s289
    %s304 = sphi 0, %s290
    %s308 = sphi 0, %s308
    %s310 = sphi 0, %s308
    %s311 = sphi 0, %s310
    %s325 = sphi 0, %s311
    %s329 = sphi 0, %s329
    %s331 = sphi 0, %s329
    %s332 = sphi 0, %s331
    %s346 = sphi 0, %s332
    %s350 = sphi 0, %s350
    %s352 = sphi 0, %s350
    %s353 = sphi 0, %s352
    %s367 = sphi 0, %s353
    %s373 = sphi 0, %s375
    %s376 = sphi 0, %s373
    %s377 = sphi 0, %s376
    %s393 = sphi 0, %s377
  $region4: #{q_net_forward.1} parent=0 // loop_header_branch
    %25 = sbr.rel (%p23) target = $region8
  $region5: #{q_net_forward.1} parent=0 // loop_body
    %s27 = ssub.s32 %s22, 1
    %s28 = ssub.s32 %s22, 2
    %s29 = sadd.s32 %s22, 1
    %s30 = ssub.s32 %s22, %s29
    %p31 = scmp.eq.s32.totalorder %s30, 0
    %s33 = sadd.s32 %s32, 1
    %s34 = scalar_select %p31, %s32, %s33
    %p37 = pneg %p31
    %p38 = scmp.eq.s32.totalorder %s22, 1
    %p39 = por %p37, %p38
    %p40 = scmp.ne.s32.totalorder %s32, %s35
    %p41 = scmp.eq.s32.totalorder %s22, 0
    %p42 = por %p40, %p41
    %p43 = scmp.ne.s32.totalorder %s32, %s35
    %p44 = scmp.eq.s32.totalorder %s27, 1
    %p45 = por %p43, %p44
    %p46 = scmp.ne.s32.totalorder %s35, %s36
    %p47 = scmp.eq.s32.totalorder %s27, 0
    %p48 = por %p46, %p47
    %p49 = scmp.ne.s32.totalorder %s35, %s36
    %p50 = scmp.eq.s32.totalorder %s28, 1
    %p51 = por %p49, %p50
    %p53 = scmp.ne.s32.totalorder %s36, %s52
    %p54 = scmp.eq.s32.totalorder %s28, 0
    %p55 = por %p53, %p54
    %s57 = sadd.s32 %s56, 1
    %p60 = scmp.eq.s32.totalorder %s22, 1
    %p61 = scmp.ne.s32.totalorder %s56, %s58
    %p62 = scmp.eq.s32.totalorder %s22, 0
    %p63 = por %p61, %p62
    %p64 = scmp.ne.s32.totalorder %s56, %s58
    %p65 = scmp.eq.s32.totalorder %s27, 1
    %p66 = por %p64, %p65
    %p67 = scmp.ne.s32.totalorder %s58, %s59
    %p68 = scmp.eq.s32.totalorder %s27, 0
    %p69 = por %p67, %p68
    %p70 = scmp.ne.s32.totalorder %s58, %s59
    %p71 = scmp.eq.s32.totalorder %s28, 1
    %p72 = por %p70, %p71
    %p74 = scmp.ne.s32.totalorder %s59, %s73
    %p75 = scmp.eq.s32.totalorder %s28, 0
    %p76 = por %p74, %p75
    %s78 = sadd.s32 %s77, 1
    %p81 = scmp.eq.s32.totalorder %s22, 1
    %p82 = scmp.ne.s32.totalorder %s77, %s79
    %p83 = scmp.eq.s32.totalorder %s22, 0
    %p84 = por %p82, %p83
    %p85 = scmp.ne.s32.totalorder %s77, %s79
    %p86 = scmp.eq.s32.totalorder %s27, 1
    %p87 = por %p85, %p86
    %p88 = scmp.ne.s32.totalorder %s79, %s80
    %p89 = scmp.eq.s32.totalorder %s27, 0
    %p90 = por %p88, %p89
    %p91 = scmp.ne.s32.totalorder %s79, %s80
    %p92 = scmp.eq.s32.totalorder %s28, 1
    %p93 = por %p91, %p92
    %p95 = scmp.ne.s32.totalorder %s80, %s94
    %p96 = scmp.eq.s32.totalorder %s28, 0
    %p97 = por %p95, %p96
    %s99 = sadd.s32 %s98, 1
    %p102 = scmp.eq.s32.totalorder %s22, 1
    %p103 = scmp.ne.s32.totalorder %s98, %s100
    %p104 = scmp.eq.s32.totalorder %s22, 0
    %p105 = por %p103, %p104
    %p106 = scmp.ne.s32.totalorder %s98, %s100
    %p107 = scmp.eq.s32.totalorder %s27, 1
    %p108 = por %p106, %p107
    %p109 = scmp.ne.s32.totalorder %s100, %s101
    %p110 = scmp.eq.s32.totalorder %s27, 0
    %p111 = por %p109, %p110
    %p112 = scmp.ne.s32.totalorder %s100, %s101
    %p113 = scmp.eq.s32.totalorder %s28, 1
    %p114 = por %p112, %p113
    %p116 = scmp.ne.s32.totalorder %s101, %s115
    %p117 = scmp.eq.s32.totalorder %s28, 0
    %p118 = por %p116, %p117
    %s120 = sadd.s32 %s119, 1
    %p123 = scmp.eq.s32.totalorder %s22, 1
    %p124 = scmp.ne.s32.totalorder %s119, %s121
    %p125 = scmp.eq.s32.totalorder %s22, 0
    %p126 = por %p124, %p125
    %p127 = scmp.ne.s32.totalorder %s119, %s121
    %p128 = scmp.eq.s32.totalorder %s27, 1
    %p129 = por %p127, %p128
    %p130 = scmp.ne.s32.totalorder %s121, %s122
    %p131 = scmp.eq.s32.totalorder %s27, 0
    %p132 = por %p130, %p131
    %p133 = scmp.ne.s32.totalorder %s121, %s122
    %p134 = scmp.eq.s32.totalorder %s28, 1
    %p135 = por %p133, %p134
    %p137 = scmp.ne.s32.totalorder %s122, %s136
    %p138 = scmp.eq.s32.totalorder %s28, 0
    %p139 = por %p137, %p138
    %s141 = sadd.s32 %s140, 1
    %p144 = scmp.eq.s32.totalorder %s22, 1
    %p145 = scmp.ne.s32.totalorder %s140, %s142
    %p146 = scmp.eq.s32.totalorder %s22, 0
    %p147 = por %p145, %p146
    %p148 = scmp.ne.s32.totalorder %s140, %s142
    %p149 = scmp.eq.s32.totalorder %s27, 1
    %p150 = por %p148, %p149
    %p151 = scmp.ne.s32.totalorder %s142, %s143
    %p152 = scmp.eq.s32.totalorder %s27, 0
    %p153 = por %p151, %p152
    %p154 = scmp.ne.s32.totalorder %s142, %s143
    %p155 = scmp.eq.s32.totalorder %s28, 1
    %p156 = por %p154, %p155
    %p158 = scmp.ne.s32.totalorder %s143, %s157
    %p159 = scmp.eq.s32.totalorder %s28, 0
    %p160 = por %p158, %p159
    %s162 = sadd.s32 %s161, 1
    %p165 = scmp.eq.s32.totalorder %s22, 1
    %p166 = scmp.ne.s32.totalorder %s161, %s163
    %p167 = scmp.eq.s32.totalorder %s22, 0
    %p168 = por %p166, %p167
    %p169 = scmp.ne.s32.totalorder %s161, %s163
    %p170 = scmp.eq.s32.totalorder %s27, 1
    %p171 = por %p169, %p170
    %p172 = scmp.ne.s32.totalorder %s163, %s164
    %p173 = scmp.eq.s32.totalorder %s27, 0
    %p174 = por %p172, %p173
    %p175 = scmp.ne.s32.totalorder %s163, %s164
    %p176 = scmp.eq.s32.totalorder %s28, 1
    %p177 = por %p175, %p176
    %p179 = scmp.ne.s32.totalorder %s164, %s178
    %p180 = scmp.eq.s32.totalorder %s28, 0
    %p181 = por %p179, %p180
    %s183 = sadd.s32 %s182, 1
    %p186 = scmp.eq.s32.totalorder %s22, 1
    %p187 = scmp.ne.s32.totalorder %s182, %s184
    %p188 = scmp.eq.s32.totalorder %s22, 0
    %p189 = por %p187, %p188
    %p190 = scmp.ne.s32.totalorder %s182, %s184
    %p191 = scmp.eq.s32.totalorder %s27, 1
    %p192 = por %p190, %p191
    %p193 = scmp.ne.s32.totalorder %s184, %s185
    %p194 = scmp.eq.s32.totalorder %s27, 0
    %p195 = por %p193, %p194
    %p196 = scmp.ne.s32.totalorder %s184, %s185
    %p197 = scmp.eq.s32.totalorder %s28, 1
    %p198 = por %p196, %p197
    %p200 = scmp.ne.s32.totalorder %s185, %s199
    %p201 = scmp.eq.s32.totalorder %s28, 0
    %p202 = por %p200, %p201
    %s204 = sadd.s32 %s203, 1
    %p207 = scmp.eq.s32.totalorder %s22, 1
    %p208 = scmp.ne.s32.totalorder %s203, %s205
    %p209 = scmp.eq.s32.totalorder %s22, 0
    %p210 = por %p208, %p209
    %p211 = scmp.ne.s32.totalorder %s203, %s205
    %p212 = scmp.eq.s32.totalorder %s27, 1
    %p213 = por %p211, %p212
    %p214 = scmp.ne.s32.totalorder %s205, %s206
    %p215 = scmp.eq.s32.totalorder %s27, 0
    %p216 = por %p214, %p215
    %p217 = scmp.ne.s32.totalorder %s205, %s206
    %p218 = scmp.eq.s32.totalorder %s28, 1
    %p219 = por %p217, %p218
    %p221 = scmp.ne.s32.totalorder %s206, %s220
    %p222 = scmp.eq.s32.totalorder %s28, 0
    %p223 = por %p221, %p222
    %s225 = sadd.s32 %s224, 1
    %p228 = scmp.eq.s32.totalorder %s22, 1
    %p229 = scmp.ne.s32.totalorder %s224, %s226
    %p230 = scmp.eq.s32.totalorder %s22, 0
    %p231 = por %p229, %p230
    %p232 = scmp.ne.s32.totalorder %s224, %s226
    %p233 = scmp.eq.s32.totalorder %s27, 1
    %p234 = por %p232, %p233
    %p235 = scmp.ne.s32.totalorder %s226, %s227
    %p236 = scmp.eq.s32.totalorder %s27, 0
    %p237 = por %p235, %p236
    %p238 = scmp.ne.s32.totalorder %s226, %s227
    %p239 = scmp.eq.s32.totalorder %s28, 1
    %p240 = por %p238, %p239
    %p242 = scmp.ne.s32.totalorder %s227, %s241
    %p243 = scmp.eq.s32.totalorder %s28, 0
    %p244 = por %p242, %p243
    %s246 = sadd.s32 %s245, 1
    %p249 = scmp.eq.s32.totalorder %s22, 1
    %p250 = scmp.ne.s32.totalorder %s245, %s247
    %p251 = scmp.eq.s32.totalorder %s22, 0
    %p252 = por %p250, %p251
    %p253 = scmp.ne.s32.totalorder %s245, %s247
    %p254 = scmp.eq.s32.totalorder %s27, 1
    %p255 = por %p253, %p254
    %p256 = scmp.ne.s32.totalorder %s247, %s248
    %p257 = scmp.eq.s32.totalorder %s27, 0
    %p258 = por %p256, %p257
    %p259 = scmp.ne.s32.totalorder %s247, %s248
    %p260 = scmp.eq.s32.totalorder %s28, 1
    %p261 = por %p259, %p260
    %p263 = scmp.ne.s32.totalorder %s248, %s262
    %p264 = scmp.eq.s32.totalorder %s28, 0
    %p265 = por %p263, %p264
    %s267 = sadd.s32 %s266, 1
    %p270 = scmp.eq.s32.totalorder %s22, 1
    %p271 = scmp.ne.s32.totalorder %s266, %s268
    %p272 = scmp.eq.s32.totalorder %s22, 0
    %p273 = por %p271, %p272
    %p274 = scmp.ne.s32.totalorder %s266, %s268
    %p275 = scmp.eq.s32.totalorder %s27, 1
    %p276 = por %p274, %p275
    %p277 = scmp.ne.s32.totalorder %s268, %s269
    %p278 = scmp.eq.s32.totalorder %s27, 0
    %p279 = por %p277, %p278
    %p280 = scmp.ne.s32.totalorder %s268, %s269
    %p281 = scmp.eq.s32.totalorder %s28, 1
    %p282 = por %p280, %p281
    %p284 = scmp.ne.s32.totalorder %s269, %s283
    %p285 = scmp.eq.s32.totalorder %s28, 0
    %p286 = por %p284, %p285
    %s288 = sadd.s32 %s287, 1
    %p291 = scmp.eq.s32.totalorder %s22, 1
    %p292 = scmp.ne.s32.totalorder %s287, %s289
    %p293 = scmp.eq.s32.totalorder %s22, 0
    %p294 = por %p292, %p293
    %p295 = scmp.ne.s32.totalorder %s287, %s289
    %p296 = scmp.eq.s32.totalorder %s27, 1
    %p297 = por %p295, %p296
    %p298 = scmp.ne.s32.totalorder %s289, %s290
    %p299 = scmp.eq.s32.totalorder %s27, 0
    %p300 = por %p298, %p299
    %p301 = scmp.ne.s32.totalorder %s289, %s290
    %p302 = scmp.eq.s32.totalorder %s28, 1
    %p303 = por %p301, %p302
    %p305 = scmp.ne.s32.totalorder %s290, %s304
    %p306 = scmp.eq.s32.totalorder %s28, 0
    %p307 = por %p305, %p306
    %s309 = sadd.s32 %s308, 1
    %p312 = scmp.eq.s32.totalorder %s22, 1
    %p313 = scmp.ne.s32.totalorder %s308, %s310
    %p314 = scmp.eq.s32.totalorder %s22, 0
    %p315 = por %p313, %p314
    %p316 = scmp.ne.s32.totalorder %s308, %s310
    %p317 = scmp.eq.s32.totalorder %s27, 1
    %p318 = por %p316, %p317
    %p319 = scmp.ne.s32.totalorder %s310, %s311
    %p320 = scmp.eq.s32.totalorder %s27, 0
    %p321 = por %p319, %p320
    %p322 = scmp.ne.s32.totalorder %s310, %s311
    %p323 = scmp.eq.s32.totalorder %s28, 1
    %p324 = por %p322, %p323
    %p326 = scmp.ne.s32.totalorder %s311, %s325
    %p327 = scmp.eq.s32.totalorder %s28, 0
    %p328 = por %p326, %p327
    %s330 = sadd.s32 %s329, 1
    %p333 = scmp.eq.s32.totalorder %s22, 1
    %p334 = scmp.ne.s32.totalorder %s329, %s331
    %p335 = scmp.eq.s32.totalorder %s22, 0
    %p336 = por %p334, %p335
    %p337 = scmp.ne.s32.totalorder %s329, %s331
    %p338 = scmp.eq.s32.totalorder %s27, 1
    %p339 = por %p337, %p338
    %p340 = scmp.ne.s32.totalorder %s331, %s332
    %p341 = scmp.eq.s32.totalorder %s27, 0
    %p342 = por %p340, %p341
    %p343 = scmp.ne.s32.totalorder %s331, %s332
    %p344 = scmp.eq.s32.totalorder %s28, 1
    %p345 = por %p343, %p344
    %p347 = scmp.ne.s32.totalorder %s332, %s346
    %p348 = scmp.eq.s32.totalorder %s28, 0
    %p349 = por %p347, %p348
    %s351 = sadd.s32 %s350, 1
    %p354 = scmp.eq.s32.totalorder %s22, 1
    %p355 = scmp.ne.s32.totalorder %s350, %s352
    %p356 = scmp.eq.s32.totalorder %s22, 0
    %p357 = por %p355, %p356
    %p358 = scmp.ne.s32.totalorder %s350, %s352
    %p359 = scmp.eq.s32.totalorder %s27, 1
    %p360 = por %p358, %p359
    %p361 = scmp.ne.s32.totalorder %s352, %s353
    %p362 = scmp.eq.s32.totalorder %s27, 0
    %p363 = por %p361, %p362
    %p364 = scmp.ne.s32.totalorder %s352, %s353
    %p365 = scmp.eq.s32.totalorder %s28, 1
    %p366 = por %p364, %p365
    %p368 = scmp.ne.s32.totalorder %s353, %s367
    %p369 = scmp.eq.s32.totalorder %s28, 0
    %p370 = por %p368, %p369
    %s371 = ssub.s32 %s22, %s29
    %p372 = scmp.eq.s32.totalorder %s371, 0
    %s374 = sadd.s32 %s373, 1
    %s375 = scalar_select %p372, %s373, %s374
    %p378 = pneg %p372
    %p379 = scmp.eq.s32.totalorder %s22, 1
    %p380 = por %p378, %p379
    %p381 = scmp.ne.s32.totalorder %s373, %s376
    %p382 = scmp.eq.s32.totalorder %s22, 0
    %p383 = por %p381, %p382
    %p384 = scmp.ne.s32.totalorder %s373, %s376
    %p385 = scmp.eq.s32.totalorder %s27, 1
    %p386 = por %p384, %p385
    %p387 = scmp.ne.s32.totalorder %s376, %s377
    %p388 = scmp.eq.s32.totalorder %s27, 0
    %p389 = por %p387, %p388
    %p390 = scmp.ne.s32.totalorder %s376, %s377
    %p391 = scmp.eq.s32.totalorder %s28, 1
    %p392 = por %p390, %p391
    %p394 = scmp.ne.s32.totalorder %s377, %s393
    %p395 = scmp.eq.s32.totalorder %s28, 0
    %p396 = por %p394, %p395
    %p397 = scmp.le.s32.totalorder 1, %s22
    %p398 = scmp.lt.s32.totalorder %s22, 3
    %p399 = pnand %p397, %p398
    %p400 = pneg %p399
    // Predicated region
    $region9: #{q_net_forward.1} parent=5 // pred_check
      _
    $region10: #{q_net_forward.1} parent=5 // pred_check_branch
      %402 = sbr.rel (%p399) target = $region12
    $region11: #{q_net_forward.1} parent=5 // pred_region
      %s403 = ssub.s32 %s22, 1
      // Predicated region
      $region13: #{q_net_forward.1} parent=11 // pred_check
        %p404 = pneg %p69
      $region14: #{q_net_forward.1} parent=11 // pred_check_branch
        %406 = sbr.rel (%p404) target = $region16
      $region15: #{q_net_forward.1} parent=11 // pred_region
        _
      $region16: #{q_net_forward.1} parent=11 // pred_fallthru
        _
      // Predicated region
      $region17: #{q_net_forward.1} parent=11 // pred_check
        %p407 = pneg %p90
      $region18: #{q_net_forward.1} parent=11 // pred_check_branch
        %409 = sbr.rel (%p407) target = $region20
      $region19: #{q_net_forward.1} parent=11 // pred_region
        _
      $region20: #{q_net_forward.1} parent=11 // pred_fallthru
        _
      // Predicated region
      $region21: #{q_net_forward.1} parent=11 // pred_check
        %p410 = pneg %p111
      $region22: #{q_net_forward.1} parent=11 // pred_check_branch
        %412 = sbr.rel (%p410) target = $region24
      $region23: #{q_net_forward.1} parent=11 // pred_region
        _
      $region24: #{q_net_forward.1} parent=11 // pred_fallthru
        _
      // Predicated region
      $region25: #{q_net_forward.1} parent=11 // pred_check
        %p413 = pneg %p132
      $region26: #{q_net_forward.1} parent=11 // pred_check_branch
        %415 = sbr.rel (%p413) target = $region28
      $region27: #{q_net_forward.1} parent=11 // pred_region
        _
      $region28: #{q_net_forward.1} parent=11 // pred_fallthru
        _
      // Predicated region
      $region29: #{q_net_forward.1} parent=11 // pred_check
        %p416 = pneg %p153
      $region30: #{q_net_forward.1} parent=11 // pred_check_branch
        %418 = sbr.rel (%p416) target = $region32
      $region31: #{q_net_forward.1} parent=11 // pred_region
        _
      $region32: #{q_net_forward.1} parent=11 // pred_fallthru
        _
      // Predicated region
      $region33: #{q_net_forward.1} parent=11 // pred_check
        %p419 = pneg %p174
      $region34: #{q_net_forward.1} parent=11 // pred_check_branch
        %421 = sbr.rel (%p419) target = $region36
      $region35: #{q_net_forward.1} parent=11 // pred_region
        _
      $region36: #{q_net_forward.1} parent=11 // pred_fallthru
        _
      // Predicated region
      $region37: #{q_net_forward.1} parent=11 // pred_check
        %p422 = pneg %p195
      $region38: #{q_net_forward.1} parent=11 // pred_check_branch
        %424 = sbr.rel (%p422) target = $region40
      $region39: #{q_net_forward.1} parent=11 // pred_region
        _
      $region40: #{q_net_forward.1} parent=11 // pred_fallthru
        _
      // Predicated region
      $region41: #{q_net_forward.1} parent=11 // pred_check
        %p425 = pneg %p216
      $region42: #{q_net_forward.1} parent=11 // pred_check_branch
        %427 = sbr.rel (%p425) target = $region44
      $region43: #{q_net_forward.1} parent=11 // pred_region
        _
      $region44: #{q_net_forward.1} parent=11 // pred_fallthru
        _
      // Predicated region
      $region45: #{q_net_forward.1} parent=11 // pred_check
        %p428 = pneg %p237
      $region46: #{q_net_forward.1} parent=11 // pred_check_branch
        %430 = sbr.rel (%p428) target = $region48
      $region47: #{q_net_forward.1} parent=11 // pred_region
        _
      $region48: #{q_net_forward.1} parent=11 // pred_fallthru
        _
      // Predicated region
      $region49: #{q_net_forward.1} parent=11 // pred_check
        %p431 = pneg %p258
      $region50: #{q_net_forward.1} parent=11 // pred_check_branch
        %433 = sbr.rel (%p431) target = $region52
      $region51: #{q_net_forward.1} parent=11 // pred_region
        _
      $region52: #{q_net_forward.1} parent=11 // pred_fallthru
        _
      // Predicated region
      $region53: #{q_net_forward.1} parent=11 // pred_check
        %p434 = pneg %p279
      $region54: #{q_net_forward.1} parent=11 // pred_check_branch
        %436 = sbr.rel (%p434) target = $region56
      $region55: #{q_net_forward.1} parent=11 // pred_region
        _
      $region56: #{q_net_forward.1} parent=11 // pred_fallthru
        _
      // Predicated region
      $region57: #{q_net_forward.1} parent=11 // pred_check
        %p437 = pneg %p300
      $region58: #{q_net_forward.1} parent=11 // pred_check_branch
        %439 = sbr.rel (%p437) target = $region60
      $region59: #{q_net_forward.1} parent=11 // pred_region
        _
      $region60: #{q_net_forward.1} parent=11 // pred_fallthru
        _
      // Predicated region
      $region61: #{q_net_forward.1} parent=11 // pred_check
        %p440 = pneg %p321
      $region62: #{q_net_forward.1} parent=11 // pred_check_branch
        %442 = sbr.rel (%p440) target = $region64
      $region63: #{q_net_forward.1} parent=11 // pred_region
        _
      $region64: #{q_net_forward.1} parent=11 // pred_fallthru
        _
      // Predicated region
      $region65: #{q_net_forward.1} parent=11 // pred_check
        %p443 = pneg %p342
      $region66: #{q_net_forward.1} parent=11 // pred_check_branch
        %445 = sbr.rel (%p443) target = $region68
      $region67: #{q_net_forward.1} parent=11 // pred_region
        _
      $region68: #{q_net_forward.1} parent=11 // pred_fallthru
        _
      // Predicated region
      $region69: #{q_net_forward.1} parent=11 // pred_check
        %p446 = pneg %p363
      $region70: #{q_net_forward.1} parent=11 // pred_check_branch
        %448 = sbr.rel (%p446) target = $region72
      $region71: #{q_net_forward.1} parent=11 // pred_region
        _
      $region72: #{q_net_forward.1} parent=11 // pred_fallthru
        _
    $region12: #{q_net_forward.1} parent=5 // pred_fallthru
      _
    %p449 = scmp.lt.s32.totalorder %s22, 2
    // Predicated region
    $region73: #{q_net_forward.1} parent=5 // pred_check
      %p450 = pneg %p449
    $region74: #{q_net_forward.1} parent=5 // pred_check_branch
      %452 = sbr.rel (%p450) target = $region76
    $region75: #{q_net_forward.1} parent=5 // pred_region
      // Predicated region
      $region77: #{q_net_forward.1} parent=75 // pred_check
        %p453 = pneg %p42
      $region78: #{q_net_forward.1} parent=75 // pred_check_branch
        %455 = sbr.rel (%p453) target = $region80
      $region79: #{q_net_forward.1} parent=75 // pred_region
        %p456 = scmp.lt.s32.totalorder %s22, 1
        %s457 = scalar_select %p456, %s22, 1
        %s458 = smul.addr %s457, 32
        %s459 = smul.addr %s458, 4
        %s460 = scalar_lea.vmem %s0, %s459
      $region80: #{q_net_forward.1} parent=75 // pred_fallthru
        _
    $region76: #{q_net_forward.1} parent=5 // pred_fallthru
      _
    %p461 = scmp.le.s32.totalorder 1, %s22
    %p462 = scmp.lt.s32.totalorder %s22, 3
    %p463 = pnand %p461, %p462
    %p464 = pneg %p463
    // Predicated region
    $region81: #{q_net_forward.1} parent=5 // pred_check
      _
    $region82: #{q_net_forward.1} parent=5 // pred_check_branch
      %466 = sbr.rel (%p463) target = $region84
    $region83: #{q_net_forward.1} parent=5 // pred_region
      %s467 = ssub.s32 %s22, 1
      %p468 = scmp.lt.s32.totalorder %s27, 1
      %s469 = scalar_select %p468, %s27, 1
      %s470 = smul.addr %s469, 32
      %s471 = smul.addr %s470, 4
      %s472 = scalar_lea.vmem %s0, %s471
      %p473 = pneg %p48
      %p474 = pneg %p45
      %p475 = pneg %p69
      %p476 = pneg %p66
      %p477 = pneg %p90
      %p478 = pneg %p87
      %p479 = pneg %p111
      %p480 = pneg %p108
      %p481 = pneg %p132
      %p482 = pneg %p129
      %p483 = pneg %p153
      %p484 = pneg %p150
      %p485 = pneg %p174
      %p486 = pneg %p171
      %p487 = pneg %p195
      %p488 = pneg %p192
      %p489 = pneg %p216
      %p490 = pneg %p213
      %p491 = pneg %p237
      %p492 = pneg %p234
      %p493 = pneg %p258
      %p494 = pneg %p255
      %p495 = pneg %p279
      %p496 = pneg %p276
      %p497 = pneg %p300
      %p498 = pneg %p297
      %p499 = pneg %p321
      %p500 = pneg %p318
      %p501 = pneg %p342
      %p502 = pneg %p339
      %p503 = pneg %p363
      %p504 = pneg %p360
      %p505 = pneg %p389
      %p506 = pneg %p386
      %p507 = scmp.lt.s32.totalorder %s27, 1
      %s508 = scalar_select %p507, %s27, 1
      %s509 = smul.addr %s508, 2
      %s510 = scalar_lea.vmem %s16, %s509
      %p511 = scmp.lt.s32.totalorder %s27, 1
      %s512 = scalar_select %p511, %s27, 1
      %s513 = smul.addr %s512, 32
      %s514 = smul.addr %s513, 4
      %s515 = scalar_lea.vmem %s0, %s514
      %p516 = scmp.lt.s32.totalorder %s27, 1
      %s517 = scalar_select %p516, %s27, 1
      %s518 = smul.addr %s517, 2
      %s519 = scalar_lea.vmem %s16, %s518
      %v521 = vld [vmem:[%s515] sm:$0xff]
      %v522 = vld [vmem:[%s515 + $0x8] sm:$0xff]
      %v523 = vld [vmem:[%s515 + $0x10] sm:$0xff]
      %v524 = vld [vmem:[%s515 + $0x18] sm:$0xff]
      %v525 = vld [vmem:[%s515 + $0x20] sm:$0xff]
      %v526 = vld [vmem:[%s515 + $0x28] sm:$0xff]
      %v527 = vld [vmem:[%s515 + $0x30] sm:$0xff]
      %v528 = vld [vmem:[%s515 + $0x38] sm:$0xff]
      %v529 = vld [vmem:[%s515 + $0x40] sm:$0xff]
      %v530 = vld [vmem:[%s515 + $0x48] sm:$0xff]
      %v531 = vld [vmem:[%s515 + $0x50] sm:$0xff]
      %v532 = vld [vmem:[%s515 + $0x58] sm:$0xff]
      %v533 = vld [vmem:[%s515 + $0x60] sm:$0xff]
      %v534 = vld [vmem:[%s515 + $0x68] sm:$0xff]
      %v535 = vld [vmem:[%s515 + $0x70] sm:$0xff]
      %v536 = vld [vmem:[%s515 + $0x78] sm:$0xff]
      %v553 = vcombine.high %v521, %v521
      %v554 = vcombine.high %v522, %v522
      %v555 = vcombine.high %v523, %v523
      %v556 = vcombine.high %v524, %v524
      %v557 = vcombine.high %v525, %v525
      %v558 = vcombine.high %v526, %v526
      %v559 = vcombine.high %v527, %v527
      %v560 = vcombine.high %v528, %v528
      %v561 = vcombine.high %v529, %v529
      %v562 = vcombine.high %v530, %v530
      %v563 = vcombine.high %v531, %v531
      %v564 = vcombine.high %v532, %v532
      %v565 = vcombine.high %v533, %v533
      %v566 = vcombine.high %v534, %v534
      %v567 = vcombine.high %v535, %v535
      %v568 = vcombine.high %v536, %v536
      %v585 = vpack.c.bf16 %v521, %v521
      %v586 = vpack.c.bf16 %v553, %v553
      %v587 = vpack.c.bf16 %v522, %v522
      %v588 = vpack.c.bf16 %v554, %v554
      %v589 = vpack.c.bf16 %v523, %v523
      %v590 = vpack.c.bf16 %v555, %v555
      %v591 = vpack.c.bf16 %v524, %v524
      %v592 = vpack.c.bf16 %v556, %v556
      %v593 = vpack.c.bf16 %v525, %v525
      %v594 = vpack.c.bf16 %v557, %v557
      %v595 = vpack.c.bf16 %v526, %v526
      %v596 = vpack.c.bf16 %v558, %v558
      %v597 = vpack.c.bf16 %v527, %v527
      %v598 = vpack.c.bf16 %v559, %v559
      %v599 = vpack.c.bf16 %v528, %v528
      %v600 = vpack.c.bf16 %v560, %v560
      %v601 = vpack.c.bf16 %v529, %v529
      %v602 = vpack.c.bf16 %v561, %v561
      %v603 = vpack.c.bf16 %v530, %v530
      %v604 = vpack.c.bf16 %v562, %v562
      %v605 = vpack.c.bf16 %v531, %v531
      %v606 = vpack.c.bf16 %v563, %v563
      %v607 = vpack.c.bf16 %v532, %v532
      %v608 = vpack.c.bf16 %v564, %v564
      %v609 = vpack.c.bf16 %v533, %v533
      %v610 = vpack.c.bf16 %v565, %v565
      %v611 = vpack.c.bf16 %v534, %v534
      %v612 = vpack.c.bf16 %v566, %v566
      %v613 = vpack.c.bf16 %v535, %v535
      %v614 = vpack.c.bf16 %v567, %v567
      %v615 = vpack.c.bf16 %v536, %v536
      %v616 = vpack.c.bf16 %v568, %v568
      %v617 = vld [vmem:[%s1] sm:$0xf]
      %v618 = vld [vmem:[%s1 + $0x4] sm:$0xf]
      %v621 = vunpack.c.l.b16 %v617
      %v622 = vunpack.c.l.b16 %v618
      %v623 = vpack.c.b16 %v622, %v621
      %vm624 = vcmask 31744
      %v626 = vsel %vm624, %v623, 0
      %vm628 = vcmask 1041408
      %v630 = vsel %vm628, %v585, 0
      %v633 = vsel %vm628, %v586, 0
      %v636 = vsel %vm628, %v587, 0
      %v639 = vsel %vm628, %v588, 0
      %v642 = vsel %vm628, %v589, 0
      %v645 = vsel %vm628, %v590, 0
      %v648 = vsel %vm628, %v591, 0
      %v651 = vsel %vm628, %v592, 0
      %v654 = vsel %vm628, %v593, 0
      %v657 = vsel %vm628, %v594, 0
      %v660 = vsel %vm628, %v595, 0
      %v663 = vsel %vm628, %v596, 0
      %v666 = vsel %vm628, %v597, 0
      %v669 = vsel %vm628, %v598, 0
      %v672 = vsel %vm628, %v599, 0
      %v675 = vsel %vm628, %v600, 0
      %v678 = vsel %vm628, %v601, 0
      %v681 = vsel %vm628, %v602, 0
      %v684 = vsel %vm628, %v603, 0
      %v687 = vsel %vm628, %v604, 0
      %v690 = vsel %vm628, %v605, 0
      %v693 = vsel %vm628, %v606, 0
      %v696 = vsel %vm628, %v607, 0
      %v699 = vsel %vm628, %v608, 0
      %v702 = vsel %vm628, %v609, 0
      %v705 = vsel %vm628, %v610, 0
      %v708 = vsel %vm628, %v611, 0
      %v711 = vsel %vm628, %v612, 0
      %v714 = vsel %vm628, %v613, 0
      %v717 = vsel %vm628, %v614, 0
      %v720 = vsel %vm628, %v615, 0
      %v723 = vsel %vm628, %v616, 0
      %725 = vmatprep.subr.bf16.mxu0 %v633
      %726 = vmatpush1.bf16.msra.mxu0 %v630
      %727 = vmatprep.subr.bf16.mxu0 0
      %728 = vmatpush1.bf16.msra.mxu0 0
      %729 = vmatprep.subr.bf16.mxu0 0
      %730 = vmatpush1.bf16.msra.mxu0 0
      %731 = vmatprep.subr.bf16.mxu0 0
      %732 = vmatpush1.bf16.msra.mxu0 0
      %733 = vmatprep.subr.bf16.mxu0 0
      %734 = vmatpush1.bf16.msra.mxu0 0
      %735 = vmatprep.subr.bf16.mxu0 0
      %736 = vmatpush1.bf16.msra.mxu0 0
      %737 = vmatprep.subr.bf16.mxu0 0
      %738 = vmatpush1.bf16.msra.mxu0 0
      %739 = vmatprep.subr.bf16.mxu0 0
      %740 = vmatpush1.bf16.msra.mxu0 0
      %741 = vmatprep.subr.bf16.mxu0 0
      %742 = vmatpush1.bf16.msra.mxu0 0
      %743 = vmatprep.subr.bf16.mxu0 0
      %744 = vmatpush1.bf16.msra.mxu0 0
      %745 = vmatprep.subr.bf16.mxu0 0
      %746 = vmatpush1.bf16.msra.mxu0 0
      %747 = vmatprep.subr.bf16.mxu0 0
      %748 = vmatpush1.bf16.msra.mxu0 0
      %749 = vmatprep.subr.bf16.mxu0 0
      %750 = vmatpush1.bf16.msra.mxu0 0
      %751 = vmatprep.subr.bf16.mxu0 0
      %752 = vmatpush1.bf16.msra.mxu0 0
      %753 = vmatprep.subr.bf16.mxu0 0
      %754 = vmatpush1.bf16.msra.mxu0 0
      %755 = vmatprep.subr.bf16.mxu0 0
      %756 = vmatpush1.bf16.msra.mxu0 0
      %757 = vmatprep.mubr.bf16.mxu0 0
      %758 = vmatmul.mubr.bf16.gmra.mrb[0].mxu0 %v626
      %v759 = vpop.f32.mrb[0].mxu0
      %v760 = vadd.f32 0.0, %v759
      %v761 = vpop.f32.mrb[0].mxu0
      %v762 = vadd.f32 0.0, %v761
      %v763 = vpop.f32.mrb[0].mxu0
      %v764 = vadd.f32 0.0, %v763
      %v765 = vpop.f32.mrb[0].mxu0
      %v766 = vadd.f32 0.0, %v765
      %767 = vdwg.mxu0
      %768 = vmatprep.subr.bf16.mxu0 %v639
      %769 = vmatpush1.bf16.msra.mxu0 %v636
      %770 = vmatprep.subr.bf16.mxu0 0
      %771 = vmatpush1.bf16.msra.mxu0 0
      %772 = vmatprep.subr.bf16.mxu0 0
      %773 = vmatpush1.bf16.msra.mxu0 0
      %774 = vmatprep.subr.bf16.mxu0 0
      %775 = vmatpush1.bf16.msra.mxu0 0
      %776 = vmatprep.subr.bf16.mxu0 0
      %777 = vmatpush1.bf16.msra.mxu0 0
      %778 = vmatprep.subr.bf16.mxu0 0
      %779 = vmatpush1.bf16.msra.mxu0 0
      %780 = vmatprep.subr.bf16.mxu0 0
      %781 = vmatpush1.bf16.msra.mxu0 0
      %782 = vmatprep.subr.bf16.mxu0 0
      %783 = vmatpush1.bf16.msra.mxu0 0
      %784 = vmatprep.subr.bf16.mxu0 0
      %785 = vmatpush1.bf16.msra.mxu0 0
      %786 = vmatprep.subr.bf16.mxu0 0
      %787 = vmatpush1.bf16.msra.mxu0 0
      %788 = vmatprep.subr.bf16.mxu0 0
      %789 = vmatpush1.bf16.msra.mxu0 0
      %790 = vmatprep.subr.bf16.mxu0 0
      %791 = vmatpush1.bf16.msra.mxu0 0
      %792 = vmatprep.subr.bf16.mxu0 0
      %793 = vmatpush1.bf16.msra.mxu0 0
      %794 = vmatprep.subr.bf16.mxu0 0
      %795 = vmatpush1.bf16.msra.mxu0 0
      %796 = vmatprep.subr.bf16.mxu0 0
      %797 = vmatpush1.bf16.msra.mxu0 0
      %798 = vmatprep.subr.bf16.mxu0 0
      %799 = vmatpush1.bf16.msra.mxu0 0
      %800 = vmatprep.mubr.bf16.mxu0 0
      %801 = vmatmul.mubr.bf16.gmra.mrb[0].mxu0 %v626
      %v802 = vpop.f32.mrb[0].mxu0
      %v803 = vadd.f32 0.0, %v802
      %v804 = vpop.f32.mrb[0].mxu0
      %v805 = vadd.f32 0.0, %v804
      %v806 = vpop.f32.mrb[0].mxu0
      %v807 = vadd.f32 0.0, %v806
      %v808 = vpop.f32.mrb[0].mxu0
      %v809 = vadd.f32 0.0, %v808
      %810 = vdwg.mxu0
      %811 = vmatprep.subr.bf16.mxu0 %v645
      %812 = vmatpush1.bf16.msra.mxu0 %v642
      %813 = vmatprep.subr.bf16.mxu0 0
      %814 = vmatpush1.bf16.msra.mxu0 0
      %815 = vmatprep.subr.bf16.mxu0 0
      %816 = vmatpush1.bf16.msra.mxu0 0
      %817 = vmatprep.subr.bf16.mxu0 0
      %818 = vmatpush1.bf16.msra.mxu0 0
      %819 = vmatprep.subr.bf16.mxu0 0
      %820 = vmatpush1.bf16.msra.mxu0 0
      %821 = vmatprep.subr.bf16.mxu0 0
      %822 = vmatpush1.bf16.msra.mxu0 0
      %823 = vmatprep.subr.bf16.mxu0 0
      %824 = vmatpush1.bf16.msra.mxu0 0
      %825 = vmatprep.subr.bf16.mxu0 0
      %826 = vmatpush1.bf16.msra.mxu0 0
      %827 = vmatprep.subr.bf16.mxu0 0
      %828 = vmatpush1.bf16.msra.mxu0 0
      %829 = vmatprep.subr.bf16.mxu0 0
      %830 = vmatpush1.bf16.msra.mxu0 0
      %831 = vmatprep.subr.bf16.mxu0 0
      %832 = vmatpush1.bf16.msra.mxu0 0
      %833 = vmatprep.subr.bf16.mxu0 0
      %834 = vmatpush1.bf16.msra.mxu0 0
      %835 = vmatprep.subr.bf16.mxu0 0
      %836 = vmatpush1.bf16.msra.mxu0 0
      %837 = vmatprep.subr.bf16.mxu0 0
      %838 = vmatpush1.bf16.msra.mxu0 0
      %839 = vmatprep.subr.bf16.mxu0 0
      %840 = vmatpush1.bf16.msra.mxu0 0
      %841 = vmatprep.subr.bf16.mxu0 0
      %842 = vmatpush1.bf16.msra.mxu0 0
      %843 = vmatprep.mubr.bf16.mxu0 0
      %844 = vmatmul.mubr.bf16.gmra.mrb[0].mxu0 %v626
      %v845 = vpop.f32.mrb[0].mxu0
      %v846 = vadd.f32 0.0, %v845
      %v847 = vpop.f32.mrb[0].mxu0
      %v848 = vadd.f32 0.0, %v847
      %v849 = vpop.f32.mrb[0].mxu0
      %v850 = vadd.f32 0.0, %v849
      %v851 = vpop.f32.mrb[0].mxu0
      %v852 = vadd.f32 0.0, %v851
      %853 = vdwg.mxu0
      %854 = vmatprep.subr.bf16.mxu0 %v651
      %855 = vmatpush1.bf16.msra.mxu0 %v648
      %856 = vmatprep.subr.bf16.mxu0 0
      %857 = vmatpush1.bf16.msra.mxu0 0
      %858 = vmatprep.subr.bf16.mxu0 0
      %859 = vmatpush1.bf16.msra.mxu0 0
      %860 = vmatprep.subr.bf16.mxu0 0
      %861 = vmatpush1.bf16.msra.mxu0 0
      %862 = vmatprep.subr.bf16.mxu0 0
      %863 = vmatpush1.bf16.msra.mxu0 0
      %864 = vmatprep.subr.bf16.mxu0 0
      %865 = vmatpush1.bf16.msra.mxu0 0
      %866 = vmatprep.subr.bf16.mxu0 0
      %867 = vmatpush1.bf16.msra.mxu0 0
      %868 = vmatprep.subr.bf16.mxu0 0
      %869 = vmatpush1.bf16.msra.mxu0 0
      %870 = vmatprep.subr.bf16.mxu0 0
      %871 = vmatpush1.bf16.msra.mxu0 0
      %872 = vmatprep.subr.bf16.mxu0 0
      %873 = vmatpush1.bf16.msra.mxu0 0
      %874 = vmatprep.subr.bf16.mxu0 0
      %875 = vmatpush1.bf16.msra.mxu0 0
      %876 = vmatprep.subr.bf16.mxu0 0
      %877 = vmatpush1.bf16.msra.mxu0 0
      %878 = vmatprep.subr.bf16.mxu0 0
      %879 = vmatpush1.bf16.msra.mxu0 0
      %880 = vmatprep.subr.bf16.mxu0 0
      %881 = vmatpush1.bf16.msra.mxu0 0
      %882 = vmatprep.subr.bf16.mxu0 0
      %883 = vmatpush1.bf16.msra.mxu0 0
      %884 = vmatprep.subr.bf16.mxu0 0
      %885 = vmatpush1.bf16.msra.mxu0 0
      %886 = vmatprep.mubr.bf16.mxu0 0
      %887 = vmatmul.mubr.bf16.gmra.mrb[0].mxu0 %v626
      %v888 = vpop.f32.mrb[0].mxu0
      %v889 = vadd.f32 0.0, %v888
      %v890 = vpop.f32.mrb[0].mxu0
      %v891 = vadd.f32 0.0, %v890
      %v892 = vpop.f32.mrb[0].mxu0
      %v893 = vadd.f32 0.0, %v892
      %v894 = vpop.f32.mrb[0].mxu0
      %v895 = vadd.f32 0.0, %v894
      %896 = vdwg.mxu0
      %897 = vmatprep.subr.bf16.mxu0 %v657
      %898 = vmatpush1.bf16.msra.mxu0 %v654
      %899 = vmatprep.subr.bf16.mxu0 0
      %900 = vmatpush1.bf16.msra.mxu0 0
      %901 = vmatprep.subr.bf16.mxu0 0
      %902 = vmatpush1.bf16.msra.mxu0 0
      %903 = vmatprep.subr.bf16.mxu0 0
      %904 = vmatpush1.bf16.msra.mxu0 0
      %905 = vmatprep.subr.bf16.mxu0 0
      %906 = vmatpush1.bf16.msra.mxu0 0
      %907 = vmatprep.subr.bf16.mxu0 0
      %908 = vmatpush1.bf16.msra.mxu0 0
      %909 = vmatprep.subr.bf16.mxu0 0
      %910 = vmatpush1.bf16.msra.mxu0 0
      %911 = vmatprep.subr.bf16.mxu0 0
      %912 = vmatpush1.bf16.msra.mxu0 0
      %913 = vmatprep.subr.bf16.mxu0 0
      %914 = vmatpush1.bf16.msra.mxu0 0
      %915 = vmatprep.subr.bf16.mxu0 0
      %916 = vmatpush1.bf16.msra.mxu0 0
      %917 = vmatprep.subr.bf16.mxu0 0
      %918 = vmatpush1.bf16.msra.mxu0 0
      %919 = vmatprep.subr.bf16.mxu0 0
      %920 = vmatpush1.bf16.msra.mxu0 0
      %921 = vmatprep.subr.bf16.mxu0 0
      %922 = vmatpush1.bf16.msra.mxu0 0
      %923 = vmatprep.subr.bf16.mxu0 0
      %924 = vmatpush1.bf16.msra.mxu0 0
      %925 = vmatprep.subr.bf16.mxu0 0
      %926 = vmatpush1.bf16.msra.mxu0 0
      %927 = vmatprep.subr.bf16.mxu0 0
      %928 = vmatpush1.bf16.msra.mxu0 0
      %929 = vmatprep.mubr.bf16.mxu0 0
      %930 = vmatmul.mubr.bf16.gmra.mrb[0].mxu0 %v626
      %v931 = vpop.f32.mrb[0].mxu0
      %v932 = vadd.f32 0.0, %v931
      %v933 = vpop.f32.mrb[0].mxu0
      %v934 = vadd.f32 0.0, %v933
      %v935 = vpop.f32.mrb[0].mxu0
      %v936 = vadd.f32 0.0, %v935
      %v937 = vpop.f32.mrb[0].mxu0
      %v938 = vadd.f32 0.0, %v937
      %939 = vdwg.mxu0
      %940 = vmatprep.subr.bf16.mxu0 %v663
      %941 = vmatpush1.bf16.msra.mxu0 %v660
      %942 = vmatprep.subr.bf16.mxu0 0
      %943 = vmatpush1.bf16.msra.mxu0 0
      %944 = vmatprep.subr.bf16.mxu0 0
      %945 = vmatpush1.bf16.msra.mxu0 0
      %946 = vmatprep.subr.bf16.mxu0 0
      %947 = vmatpush1.bf16.msra.mxu0 0
      %948 = vmatprep.subr.bf16.mxu0 0
      %949 = vmatpush1.bf16.msra.mxu0 0
      %950 = vmatprep.subr.bf16.mxu0 0
      %951 = vmatpush1.bf16.msra.mxu0 0
      %952 = vmatprep.subr.bf16.mxu0 0
      %953 = vmatpush1.bf16.msra.mxu0 0
      %954 = vmatprep.subr.bf16.mxu0 0
      %955 = vmatpush1.bf16.msra.mxu0 0
      %956 = vmatprep.subr.bf16.mxu0 0
      %957 = vmatpush1.bf16.msra.mxu0 0
      %958 = vmatprep.subr.bf16.mxu0 0
      %959 = vmatpush1.bf16.msra.mxu0 0
      %960 = vmatprep.subr.bf16.mxu0 0
      %961 = vmatpush1.bf16.msra.mxu0 0
      %962 = vmatprep.subr.bf16.mxu0 0
      %963 = vmatpush1.bf16.msra.mxu0 0
      %964 = vmatprep.subr.bf16.mxu0 0
      %965 = vmatpush1.bf16.msra.mxu0 0
      %966 = vmatprep.subr.bf16.mxu0 0
      %967 = vmatpush1.bf16.msra.mxu0 0
      %968 = vmatprep.subr.bf16.mxu0 0
      %969 = vmatpush1.bf16.msra.mxu0 0
      %970 = vmatprep.subr.bf16.mxu0 0
      %971 = vmatpush1.bf16.msra.mxu0 0
      %972 = vmatprep.mubr.bf16.mxu0 0
      %973 = vmatmul.mubr.bf16.gmra.mrb[0].mxu0 %v626
      %v974 = vpop.f32.mrb[0].mxu0
      %v975 = vadd.f32 0.0, %v974
      %v976 = vpop.f32.mrb[0].mxu0
      %v977 = vadd.f32 0.0, %v976
      %v978 = vpop.f32.mrb[0].mxu0
      %v979 = vadd.f32 0.0, %v978
      %v980 = vpop.f32.mrb[0].mxu0
      %v981 = vadd.f32 0.0, %v980
      %982 = vdwg.mxu0
      %983 = vmatprep.subr.bf16.mxu0 %v669
      %984 = vmatpush1.bf16.msra.mxu0 %v666
      %985 = vmatprep.subr.bf16.mxu0 0
      %986 = vmatpush1.bf16.msra.mxu0 0
      %987 = vmatprep.subr.bf16.mxu0 0
      %988 = vmatpush1.bf16.msra.mxu0 0
      %989 = vmatprep.subr.bf16.mxu0 0
      %990 = vmatpush1.bf16.msra.mxu0 0
      %991 = vmatprep.subr.bf16.mxu0 0
      %992 = vmatpush1.bf16.msra.mxu0 0
      %993 = vmatprep.subr.bf16.mxu0 0
      %994 = vmatpush1.bf16.msra.mxu0 0
      %995 = vmatprep.subr.bf16.mxu0 0
      %996 = vmatpush1.bf16.msra.mxu0 0
      %997 = vmatprep.subr.bf16.mxu0 0
      %998 = vmatpush1.bf16.msra.mxu0 0
      %999 = vmatprep.subr.bf16.mxu0 0
      %1000 = vmatpush1.bf16.msra.mxu0 0
      %1001 = vmatprep.subr.bf16.mxu0 0
      %1002 = vmatpush1.bf16.msra.mxu0 0
      %1003 = vmatprep.subr.bf16.mxu0 0
      %1004 = vmatpush1.bf16.msra.mxu0 0
      %1005 = vmatprep.subr.bf16.mxu0 0
      %1006 = vmatpush1.bf16.msra.mxu0 0
      %1007 = vmatprep.subr.bf16.mxu0 0
      %1008 = vmatpush1.bf16.msra.mxu0 0
      %1009 = vmatprep.subr.bf16.mxu0 0
      %1010 = vmatpush1.bf16.msra.mxu0 0
      %1011 = vmatprep.subr.bf16.mxu0 0
      %1012 = vmatpush1.bf16.msra.mxu0 0
      %1013 = vmatprep.subr.bf16.mxu0 0
      %1014 = vmatpush1.bf16.msra.mxu0 0
      %1015 = vmatprep.mubr.bf16.mxu0 0
      %1016 = vmatmul.mubr.bf16.gmra.mrb[0].mxu0 %v626
      %v1017 = vpop.f32.mrb[0].mxu0
      %v1018 = vadd.f32 0.0, %v1017
      %v1019 = vpop.f32.mrb[0].mxu0
      %v1020 = vadd.f32 0.0, %v1019
      %v1021 = vpop.f32.mrb[0].mxu0
      %v1022 = vadd.f32 0.0, %v1021
      %v1023 = vpop.f32.mrb[0].mxu0
      %v1024 = vadd.f32 0.0, %v1023
      %1025 = vdwg.mxu0
      %1026 = vmatprep.subr.bf16.mxu0 %v675
      %1027 = vmatpush1.bf16.msra.mxu0 %v672
      %1028 = vmatprep.subr.bf16.mxu0 0
      %1029 = vmatpush1.bf16.msra.mxu0 0
      %1030 = vmatprep.subr.bf16.mxu0 0
      %1031 = vmatpush1.bf16.msra.mxu0 0
      %1032 = vmatprep.subr.bf16.mxu0 0
      %1033 = vmatpush1.bf16.msra.mxu0 0
      %1034 = vmatprep.subr.bf16.mxu0 0
      %1035 = vmatpush1.bf16.msra.mxu0 0
      %1036 = vmatprep.subr.bf16.mxu0 0
      %1037 = vmatpush1.bf16.msra.mxu0 0
      %1038 = vmatprep.subr.bf16.mxu0 0
      %1039 = vmatpush1.bf16.msra.mxu0 0
      %1040 = vmatprep.subr.bf16.mxu0 0
      %1041 = vmatpush1.bf16.msra.mxu0 0
      %1042 = vmatprep.subr.bf16.mxu0 0
      %1043 = vmatpush1.bf16.msra.mxu0 0
      %1044 = vmatprep.subr.bf16.mxu0 0
      %1045 = vmatpush1.bf16.msra.mxu0 0
      %1046 = vmatprep.subr.bf16.mxu0 0
      %1047 = vmatpush1.bf16.msra.mxu0 0
      %1048 = vmatprep.subr.bf16.mxu0 0
      %1049 = vmatpush1.bf16.msra.mxu0 0
      %1050 = vmatprep.subr.bf16.mxu0 0
      %1051 = vmatpush1.bf16.msra.mxu0 0
      %1052 = vmatprep.subr.bf16.mxu0 0
      %1053 = vmatpush1.bf16.msra.mxu0 0
      %1054 = vmatprep.subr.bf16.mxu0 0
      %1055 = vmatpush1.bf16.msra.mxu0 0
      %1056 = vmatprep.subr.bf16.mxu0 0
      %1057 = vmatpush1.bf16.msra.mxu0 0
      %1058 = vmatprep.mubr.bf16.mxu0 0
      %1059 = vmatmul.mubr.bf16.gmra.mrb[0].mxu0 %v626
      %v1060 = vpop.f32.mrb[0].mxu0
      %v1061 = vadd.f32 0.0, %v1060
      %v1062 = vpop.f32.mrb[0].mxu0
      %v1063 = vadd.f32 0.0, %v1062
      %v1064 = vpop.f32.mrb[0].mxu0
      %v1065 = vadd.f32 0.0, %v1064
      %v1066 = vpop.f32.mrb[0].mxu0
      %v1067 = vadd.f32 0.0, %v1066
      %1068 = vdwg.mxu0
      %1069 = vmatprep.subr.bf16.mxu0 %v681
      %1070 = vmatpush1.bf16.msra.mxu0 %v678
      %1071 = vmatprep.subr.bf16.mxu0 0
      %1072 = vmatpush1.bf16.msra.mxu0 0
      %1073 = vmatprep.subr.bf16.mxu0 0
      %1074 = vmatpush1.bf16.msra.mxu0 0
      %1075 = vmatprep.subr.bf16.mxu0 0
      %1076 = vmatpush1.bf16.msra.mxu0 0
      %1077 = vmatprep.subr.bf16.mxu0 0
      %1078 = vmatpush1.bf16.msra.mxu0 0
      %1079 = vmatprep.subr.bf16.mxu0 0
      %1080 = vmatpush1.bf16.msra.mxu0 0
      %1081 = vmatprep.subr.bf16.mxu0 0
      %1082 = vmatpush1.bf16.msra.mxu0 0
      %1083 = vmatprep.subr.bf16.mxu0 0
      %1084 = vmatpush1.bf16.msra.mxu0 0
      %1085 = vmatprep.subr.bf16.mxu0 0
      %1086 = vmatpush1.bf16.msra.mxu0 0
      %1087 = vmatprep.subr.bf16.mxu0 0
      %1088 = vmatpush1.bf16.msra.mxu0 0
      %1089 = vmatprep.subr.bf16.mxu0 0
      %1090 = vmatpush1.bf16.msra.mxu0 0
      %1091 = vmatprep.subr.bf16.mxu0 0
      %1092 = vmatpush1.bf16.msra.mxu0 0
      %1093 = vmatprep.subr.bf16.mxu0 0
      %1094 = vmatpush1.bf16.msra.mxu0 0
      %1095 = vmatprep.subr.bf16.mxu0 0
      %1096 = vmatpush1.bf16.msra.mxu0 0
      %1097 = vmatprep.subr.bf16.mxu0 0
      %1098 = vmatpush1.bf16.msra.mxu0 0
      %1099 = vmatprep.subr.bf16.mxu0 0
      %1100 = vmatpush1.bf16.msra.mxu0 0
      %1101 = vmatprep.mubr.bf16.mxu0 0
      %1102 = vmatmul.mubr.bf16.gmra.mrb[0].mxu0 %v626
      %v1103 = vpop.f32.mrb[0].mxu0
      %v1104 = vadd.f32 0.0, %v1103
      %v1105 = vpop.f32.mrb[0].mxu0
      %v1106 = vadd.f32 0.0, %v1105
      %v1107 = vpop.f32.mrb[0].mxu0
      %v1108 = vadd.f32 0.0, %v1107
      %v1109 = vpop.f32.mrb[0].mxu0
      %v1110 = vadd.f32 0.0, %v1109
      %1111 = vdwg.mxu0
      %1112 = vmatprep.subr.bf16.mxu0 %v687
      %1113 = vmatpush1.bf16.msra.mxu0 %v684
      %1114 = vmatprep.subr.bf16.mxu0 0
      %1115 = vmatpush1.bf16.msra.mxu0 0
      %1116 = vmatprep.subr.bf16.mxu0 0
      %1117 = vmatpush1.bf16.msra.mxu0 0
      %1118 = vmatprep.subr.bf16.mxu0 0
      %1119 = vmatpush1.bf16.msra.mxu0 0
      %1120 = vmatprep.subr.bf16.mxu0 0
      %1121 = vmatpush1.bf16.msra.mxu0 0
      %1122 = vmatprep.subr.bf16.mxu0 0
      %1123 = vmatpush1.bf16.msra.mxu0 0
      %1124 = vmatprep.subr.bf16.mxu0 0
      %1125 = vmatpush1.bf16.msra.mxu0 0
      %1126 = vmatprep.subr.bf16.mxu0 0
      %1127 = vmatpush1.bf16.msra.mxu0 0
      %1128 = vmatprep.subr.bf16.mxu0 0
      %1129 = vmatpush1.bf16.msra.mxu0 0
      %1130 = vmatprep.subr.bf16.mxu0 0
      %1131 = vmatpush1.bf16.msra.mxu0 0
      %1132 = vmatprep.subr.bf16.mxu0 0
      %1133 = vmatpush1.bf16.msra.mxu0 0
      %1134 = vmatprep.subr.bf16.mxu0 0
      %1135 = vmatpush1.bf16.msra.mxu0 0
      %1136 = vmatprep.subr.bf16.mxu0 0
      %1137 = vmatpush1.bf16.msra.mxu0 0
      %1138 = vmatprep.subr.bf16.mxu0 0
      %1139 = vmatpush1.bf16.msra.mxu0 0
      %1140 = vmatprep.subr.bf16.mxu0 0
      %1141 = vmatpush1.bf16.msra.mxu0 0
      %1142 = vmatprep.subr.bf16.mxu0 0
      %1143 = vmatpush1.bf16.msra.mxu0 0
      %1144 = vmatprep.mubr.bf16.mxu0 0
      %1145 = vmatmul.mubr.bf16.gmra.mrb[0].mxu0 %v626
      %v1146 = vpop.f32.mrb[0].mxu0
      %v1147 = vadd.f32 0.0, %v1146
      %v1148 = vpop.f32.mrb[0].mxu0
      %v1149 = vadd.f32 0.0, %v1148
      %v1150 = vpop.f32.mrb[0].mxu0
      %v1151 = vadd.f32 0.0, %v1150
      %v1152 = vpop.f32.mrb[0].mxu0
      %v1153 = vadd.f32 0.0, %v1152
      %1154 = vdwg.mxu0
      %1155 = vmatprep.subr.bf16.mxu0 %v693
      %1156 = vmatpush1.bf16.msra.mxu0 %v690
      %1157 = vmatprep.subr.bf16.mxu0 0
      %1158 = vmatpush1.bf16.msra.mxu0 0
      %1159 = vmatprep.subr.bf16.mxu0 0
      %1160 = vmatpush1.bf16.msra.mxu0 0
      %1161 = vmatprep.subr.bf16.mxu0 0
      %1162 = vmatpush1.bf16.msra.mxu0 0
      %1163 = vmatprep.subr.bf16.mxu0 0
      %1164 = vmatpush1.bf16.msra.mxu0 0
      %1165 = vmatprep.subr.bf16.mxu0 0
      %1166 = vmatpush1.bf16.msra.mxu0 0
      %1167 = vmatprep.subr.bf16.mxu0 0
      %1168 = vmatpush1.bf16.msra.mxu0 0
      %1169 = vmatprep.subr.bf16.mxu0 0
      %1170 = vmatpush1.bf16.msra.mxu0 0
      %1171 = vmatprep.subr.bf16.mxu0 0
      %1172 = vmatpush1.bf16.msra.mxu0 0
      %1173 = vmatprep.subr.bf16.mxu0 0
      %1174 = vmatpush1.bf16.msra.mxu0 0
      %1175 = vmatprep.subr.bf16.mxu0 0
      %1176 = vmatpush1.bf16.msra.mxu0 0
      %1177 = vmatprep.subr.bf16.mxu0 0
      %1178 = vmatpush1.bf16.msra.mxu0 0
      %1179 = vmatprep.subr.bf16.mxu0 0
      %1180 = vmatpush1.bf16.msra.mxu0 0
      %1181 = vmatprep.subr.bf16.mxu0 0
      %1182 = vmatpush1.bf16.msra.mxu0 0
      %1183 = vmatprep.subr.bf16.mxu0 0
      %1184 = vmatpush1.bf16.msra.mxu0 0
      %1185 = vmatprep.subr.bf16.mxu0 0
      %1186 = vmatpush1.bf16.msra.mxu0 0
      %1187 = vmatprep.mubr.bf16.mxu0 0
      %1188 = vmatmul.mubr.bf16.gmra.mrb[0].mxu0 %v626
      %v1189 = vpop.f32.mrb[0].mxu0
      %v1190 = vadd.f32 0.0, %v1189
      %v1191 = vpop.f32.mrb[0].mxu0
      %v1192 = vadd.f32 0.0, %v1191
      %v1193 = vpop.f32.mrb[0].mxu0
      %v1194 = vadd.f32 0.0, %v1193
      %v1195 = vpop.f32.mrb[0].mxu0
      %v1196 = vadd.f32 0.0, %v1195
      %1197 = vdwg.mxu0
      %1198 = vmatprep.subr.bf16.mxu0 %v699
      %1199 = vmatpush1.bf16.msra.mxu0 %v696
      %1200 = vmatprep.subr.bf16.mxu0 0
      %1201 = vmatpush1.bf16.msra.mxu0 0
      %1202 = vmatprep.subr.bf16.mxu0 0
      %1203 = vmatpush1.bf16.msra.mxu0 0
      %1204 = vmatprep.subr.bf16.mxu0 0
      %1205 = vmatpush1.bf16.msra.mxu0 0
      %1206 = vmatprep.subr.bf16.mxu0 0
      %1207 = vmatpush1.bf16.msra.mxu0 0
      %1208 = vmatprep.subr.bf16.mxu0 0
      %1209 = vmatpush1.bf16.msra.mxu0 0
      %1210 = vmatprep.subr.bf16.mxu0 0
      %1211 = vmatpush1.bf16.msra.mxu0 0
      %1212 = vmatprep.subr.bf16.mxu0 0
      %1213 = vmatpush1.bf16.msra.mxu0 0
      %1214 = vmatprep.subr.bf16.mxu0 0
      %1215 = vmatpush1.bf16.msra.mxu0 0
      %1216 = vmatprep.subr.bf16.mxu0 0
      %1217 = vmatpush1.bf16.msra.mxu0 0
      %1218 = vmatprep.subr.bf16.mxu0 0
      %1219 = vmatpush1.bf16.msra.mxu0 0
      %1220 = vmatprep.subr.bf16.mxu0 0
      %1221 = vmatpush1.bf16.msra.mxu0 0
      %1222 = vmatprep.subr.bf16.mxu0 0
      %1223 = vmatpush1.bf16.msra.mxu0 0
      %1224 = vmatprep.subr.bf16.mxu0 0
      %1225 = vmatpush1.bf16.msra.mxu0 0
      %1226 = vmatprep.subr.bf16.mxu0 0
      %1227 = vmatpush1.bf16.msra.mxu0 0
      %1228 = vmatprep.subr.bf16.mxu0 0
      %1229 = vmatpush1.bf16.msra.mxu0 0
      %1230 = vmatprep.mubr.bf16.mxu0 0
      %1231 = vmatmul.mubr.bf16.gmra.mrb[0].mxu0 %v626
      %v1232 = vpop.f32.mrb[0].mxu0
      %v1233 = vadd.f32 0.0, %v1232
      %v1234 = vpop.f32.mrb[0].mxu0
      %v1235 = vadd.f32 0.0, %v1234
      %v1236 = vpop.f32.mrb[0].mxu0
      %v1237 = vadd.f32 0.0, %v1236
      %v1238 = vpop.f32.mrb[0].mxu0
      %v1239 = vadd.f32 0.0, %v1238
      %1240 = vdwg.mxu0
      %1241 = vmatprep.subr.bf16.mxu0 %v705
      %1242 = vmatpush1.bf16.msra.mxu0 %v702
      %1243 = vmatprep.subr.bf16.mxu0 0
      %1244 = vmatpush1.bf16.msra.mxu0 0
      %1245 = vmatprep.subr.bf16.mxu0 0
      %1246 = vmatpush1.bf16.msra.mxu0 0
      %1247 = vmatprep.subr.bf16.mxu0 0
      %1248 = vmatpush1.bf16.msra.mxu0 0
      %1249 = vmatprep.subr.bf16.mxu0 0
      %1250 = vmatpush1.bf16.msra.mxu0 0
      %1251 = vmatprep.subr.bf16.mxu0 0
      %1252 = vmatpush1.bf16.msra.mxu0 0
      %1253 = vmatprep.subr.bf16.mxu0 0
      %1254 = vmatpush1.bf16.msra.mxu0 0
      %1255 = vmatprep.subr.bf16.mxu0 0
      %1256 = vmatpush1.bf16.msra.mxu0 0
      %1257 = vmatprep.subr.bf16.mxu0 0
      %1258 = vmatpush1.bf16.msra.mxu0 0
      %1259 = vmatprep.subr.bf16.mxu0 0
      %1260 = vmatpush1.bf16.msra.mxu0 0
      %1261 = vmatprep.subr.bf16.mxu0 0
      %1262 = vmatpush1.bf16.msra.mxu0 0
      %1263 = vmatprep.subr.bf16.mxu0 0
      %1264 = vmatpush1.bf16.msra.mxu0 0
      %1265 = vmatprep.subr.bf16.mxu0 0
      %1266 = vmatpush1.bf16.msra.mxu0 0
      %1267 = vmatprep.subr.bf16.mxu0 0
      %1268 = vmatpush1.bf16.msra.mxu0 0
      %1269 = vmatprep.subr.bf16.mxu0 0
      %1270 = vmatpush1.bf16.msra.mxu0 0
      %1271 = vmatprep.subr.bf16.mxu0 0
      %1272 = vmatpush1.bf16.msra.mxu0 0
      %1273 = vmatprep.mubr.bf16.mxu0 0
      %1274 = vmatmul.mubr.bf16.gmra.mrb[0].mxu0 %v626
      %v1275 = vpop.f32.mrb[0].mxu0
      %v1276 = vadd.f32 0.0, %v1275
      %v1277 = vpop.f32.mrb[0].mxu0
      %v1278 = vadd.f32 0.0, %v1277
      %v1279 = vpop.f32.mrb[0].mxu0
      %v1280 = vadd.f32 0.0, %v1279
      %v1281 = vpop.f32.mrb[0].mxu0
      %v1282 = vadd.f32 0.0, %v1281
      %1283 = vdwg.mxu0
      %1284 = vmatprep.subr.bf16.mxu0 %v711
      %1285 = vmatpush1.bf16.msra.mxu0 %v708
      %1286 = vmatprep.subr.bf16.mxu0 0
      %1287 = vmatpush1.bf16.msra.mxu0 0
      %1288 = vmatprep.subr.bf16.mxu0 0
      %1289 = vmatpush1.bf16.msra.mxu0 0
      %1290 = vmatprep.subr.bf16.mxu0 0
      %1291 = vmatpush1.bf16.msra.mxu0 0
      %1292 = vmatprep.subr.bf16.mxu0 0
      %1293 = vmatpush1.bf16.msra.mxu0 0
      %1294 = vmatprep.subr.bf16.mxu0 0
      %1295 = vmatpush1.bf16.msra.mxu0 0
      %1296 = vmatprep.subr.bf16.mxu0 0
      %1297 = vmatpush1.bf16.msra.mxu0 0
      %1298 = vmatprep.subr.bf16.mxu0 0
      %1299 = vmatpush1.bf16.msra.mxu0 0
      %1300 = vmatprep.subr.bf16.mxu0 0
      %1301 = vmatpush1.bf16.msra.mxu0 0
      %1302 = vmatprep.subr.bf16.mxu0 0
      %1303 = vmatpush1.bf16.msra.mxu0 0
      %1304 = vmatprep.subr.bf16.mxu0 0
      %1305 = vmatpush1.bf16.msra.mxu0 0
      %1306 = vmatprep.subr.bf16.mxu0 0
      %1307 = vmatpush1.bf16.msra.mxu0 0
      %1308 = vmatprep.subr.bf16.mxu0 0
      %1309 = vmatpush1.bf16.msra.mxu0 0
      %1310 = vmatprep.subr.bf16.mxu0 0
      %1311 = vmatpush1.bf16.msra.mxu0 0
      %1312 = vmatprep.subr.bf16.mxu0 0
      %1313 = vmatpush1.bf16.msra.mxu0 0
      %1314 = vmatprep.subr.bf16.mxu0 0
      %1315 = vmatpush1.bf16.msra.mxu0 0
      %1316 = vmatprep.mubr.bf16.mxu0 0
      %1317 = vmatmul.mubr.bf16.gmra.mrb[0].mxu0 %v626
      %v1318 = vpop.f32.mrb[0].mxu0
      %v1319 = vadd.f32 0.0, %v1318
      %v1320 = vpop.f32.mrb[0].mxu0
      %v1321 = vadd.f32 0.0, %v1320
      %v1322 = vpop.f32.mrb[0].mxu0
      %v1323 = vadd.f32 0.0, %v1322
      %v1324 = vpop.f32.mrb[0].mxu0
      %v1325 = vadd.f32 0.0, %v1324
      %1326 = vdwg.mxu0
      %1327 = vmatprep.subr.bf16.mxu0 %v717
      %1328 = vmatpush1.bf16.msra.mxu0 %v714
      %1329 = vmatprep.subr.bf16.mxu0 0
      %1330 = vmatpush1.bf16.msra.mxu0 0
      %1331 = vmatprep.subr.bf16.mxu0 0
      %1332 = vmatpush1.bf16.msra.mxu0 0
      %1333 = vmatprep.subr.bf16.mxu0 0
      %1334 = vmatpush1.bf16.msra.mxu0 0
      %1335 = vmatprep.subr.bf16.mxu0 0
      %1336 = vmatpush1.bf16.msra.mxu0 0
      %1337 = vmatprep.subr.bf16.mxu0 0
      %1338 = vmatpush1.bf16.msra.mxu0 0
      %1339 = vmatprep.subr.bf16.mxu0 0
      %1340 = vmatpush1.bf16.msra.mxu0 0
      %1341 = vmatprep.subr.bf16.mxu0 0
      %1342 = vmatpush1.bf16.msra.mxu0 0
      %1343 = vmatprep.subr.bf16.mxu0 0
      %1344 = vmatpush1.bf16.msra.mxu0 0
      %1345 = vmatprep.subr.bf16.mxu0 0
      %1346 = vmatpush1.bf16.msra.mxu0 0
      %1347 = vmatprep.subr.bf16.mxu0 0
      %1348 = vmatpush1.bf16.msra.mxu0 0
      %1349 = vmatprep.subr.bf16.mxu0 0
      %1350 = vmatpush1.bf16.msra.mxu0 0
      %1351 = vmatprep.subr.bf16.mxu0 0
      %1352 = vmatpush1.bf16.msra.mxu0 0
      %1353 = vmatprep.subr.bf16.mxu0 0
      %1354 = vmatpush1.bf16.msra.mxu0 0
      %1355 = vmatprep.subr.bf16.mxu0 0
      %1356 = vmatpush1.bf16.msra.mxu0 0
      %1357 = vmatprep.subr.bf16.mxu0 0
      %1358 = vmatpush1.bf16.msra.mxu0 0
      %1359 = vmatprep.mubr.bf16.mxu0 0
      %1360 = vmatmul.mubr.bf16.gmra.mrb[0].mxu0 %v626
      %v1361 = vpop.f32.mrb[0].mxu0
      %v1362 = vadd.f32 0.0, %v1361
      %v1363 = vpop.f32.mrb[0].mxu0
      %v1364 = vadd.f32 0.0, %v1363
      %v1365 = vpop.f32.mrb[0].mxu0
      %v1366 = vadd.f32 0.0, %v1365
      %v1367 = vpop.f32.mrb[0].mxu0
      %v1368 = vadd.f32 0.0, %v1367
      %1369 = vdwg.mxu0
      %1370 = vmatprep.subr.bf16.mxu0 %v723
      %1371 = vmatpush1.bf16.msra.mxu0 %v720
      %1372 = vmatprep.subr.bf16.mxu0 0
      %1373 = vmatpush1.bf16.msra.mxu0 0
      %1374 = vmatprep.subr.bf16.mxu0 0
      %1375 = vmatpush1.bf16.msra.mxu0 0
      %1376 = vmatprep.subr.bf16.mxu0 0
      %1377 = vmatpush1.bf16.msra.mxu0 0
      %1378 = vmatprep.subr.bf16.mxu0 0
      %1379 = vmatpush1.bf16.msra.mxu0 0
      %1380 = vmatprep.subr.bf16.mxu0 0
      %1381 = vmatpush1.bf16.msra.mxu0 0
      %1382 = vmatprep.subr.bf16.mxu0 0
      %1383 = vmatpush1.bf16.msra.mxu0 0
      %1384 = vmatprep.subr.bf16.mxu0 0
      %1385 = vmatpush1.bf16.msra.mxu0 0
      %1386 = vmatprep.subr.bf16.mxu0 0
      %1387 = vmatpush1.bf16.msra.mxu0 0
      %1388 = vmatprep.subr.bf16.mxu0 0
      %1389 = vmatpush1.bf16.msra.mxu0 0
      %1390 = vmatprep.subr.bf16.mxu0 0
      %1391 = vmatpush1.bf16.msra.mxu0 0
      %1392 = vmatprep.subr.bf16.mxu0 0
      %1393 = vmatpush1.bf16.msra.mxu0 0
      %1394 = vmatprep.subr.bf16.mxu0 0
      %1395 = vmatpush1.bf16.msra.mxu0 0
      %1396 = vmatprep.subr.bf16.mxu0 0
      %1397 = vmatpush1.bf16.msra.mxu0 0
      %1398 = vmatprep.subr.bf16.mxu0 0
      %1399 = vmatpush1.bf16.msra.mxu0 0
      %1400 = vmatprep.subr.bf16.mxu0 0
      %1401 = vmatpush1.bf16.msra.mxu0 0
      %1402 = vmatprep.mubr.bf16.mxu0 0
      %1403 = vmatmul.mubr.bf16.gmra.mrb[0].mxu0 %v626
      %v1404 = vpop.f32.mrb[0].mxu0
      %v1405 = vadd.f32 0.0, %v1404
      %v1406 = vpop.f32.mrb[0].mxu0
      %v1407 = vadd.f32 0.0, %v1406
      %v1408 = vpop.f32.mrb[0].mxu0
      %v1409 = vadd.f32 0.0, %v1408
      %v1410 = vpop.f32.mrb[0].mxu0
      %v1411 = vadd.f32 0.0, %v1410
      %1412 = vdwg.mxu0
      %v1413 = vld [vmem:[%s2] sm:$0xff]
      %v1414 = vld [vmem:[%s2 + $0x8] sm:$0xff]
      %v1415 = vld [vmem:[%s3] sm:$0xff]
      %v1416 = vld [vmem:[%s3 + $0x8] sm:$0xff]
      %1418 = vset.pattern.permute.xlu0 0
      %1419 = vperm.xlu0 %1418, %v1413
      %v1420 = vpop.permute.xlu0 %1419
      %1423 = vset.pattern.permute.xlu0 0
      %1424 = vperm.xlu0 %1423, %v1414
      %v1425 = vpop.permute.xlu0 %1424
      %1428 = vset.pattern.permute.xlu0 0
      %1429 = vperm.xlu0 %1428, %v1415
      %v1430 = vpop.permute.xlu0 %1429
      %1433 = vset.pattern.permute.xlu0 0
      %1434 = vperm.xlu0 %1433, %v1416
      %v1435 = vpop.permute.xlu0 %1434
      %v1437 = vmul.f32 %v760, %v1420
      %v1438 = vmul.f32 %v764, %v1425
      %v1439 = vadd.f32 %v1437, %v1430
      %v1440 = vadd.f32 %v1438, %v1435
      %v1441 = vmin.f32 %v1439, 20.0
      %v1442 = vmin.f32 %v1440, 20.0
      %v1443 = vmul.f32 %v1441, 1.442695
      %v1444 = vpow.pop %v1443
      %v1445 = vmul.f32 %v1442, 1.442695
      %v1446 = vpow.pop %v1445
      %v1447 = vadd.f32 %v1444, 2.0
      %v1448 = vadd.f32 %v1446, 2.0
      %v1449 = vmul.f32 %v1444, %v1447
      %v1450 = vmul.f32 %v1446, %v1448
      %v1451 = vadd.f32 %v1449, 2.0
      %v1452 = vadd.f32 %v1450, 2.0
      %v1453 = vrcp.pop %v1451
      %v1454 = vmul.f32 %v1449, %v1453
      %v1455 = vrcp.pop %v1452
      %v1456 = vmul.f32 %v1450, %v1455
      %v1457 = vmul.f32 %v1439, %v1454
      %v1458 = vmul.f32 %v1440, %v1456
      %v1459 = vmul.f32 %v762, %v1420
      %v1460 = vmul.f32 %v766, %v1425
      %v1461 = vadd.f32 %v1459, %v1430
      %v1462 = vadd.f32 %v1460, %v1435
      %v1463 = vmin.f32 %v1461, 20.0
      %v1464 = vmin.f32 %v1462, 20.0
      %v1465 = vmul.f32 %v1463, 1.442695
      %v1466 = vpow.pop %v1465
      %v1467 = vmul.f32 %v1464, 1.442695
      %v1468 = vpow.pop %v1467
      %v1469 = vadd.f32 %v1466, 2.0
      %v1470 = vadd.f32 %v1468, 2.0
      %v1471 = vmul.f32 %v1466, %v1469
      %v1472 = vmul.f32 %v1468, %v1470
      %v1473 = vadd.f32 %v1471, 2.0
      %v1474 = vadd.f32 %v1472, 2.0
      %v1475 = vrcp.pop %v1473
      %v1476 = vmul.f32 %v1471, %v1475
      %v1477 = vrcp.pop %v1474
      %v1478 = vmul.f32 %v1472, %v1477
      %v1479 = vmul.f32 %v1461, %v1476
      %v1480 = vmul.f32 %v1462, %v1478
      %v1481 = vmax.f32 %v1457, %v1479
      %v1482 = vmax.f32 %v1458, %v1480
      %v1483 = vmul.f32 %v803, %v1420
      %v1484 = vmul.f32 %v807, %v1425
      %v1485 = vadd.f32 %v1483, %v1430
      %v1486 = vadd.f32 %v1484, %v1435
      %v1487 = vmin.f32 %v1485, 20.0
      %v1488 = vmin.f32 %v1486, 20.0
      %v1489 = vmul.f32 %v1487, 1.442695
      %v1490 = vpow.pop %v1489
      %v1491 = vmul.f32 %v1488, 1.442695
      %v1492 = vpow.pop %v1491
      %v1493 = vadd.f32 %v1490, 2.0
      %v1494 = vadd.f32 %v1492, 2.0
      %v1495 = vmul.f32 %v1490, %v1493
      %v1496 = vmul.f32 %v1492, %v1494
      %v1497 = vadd.f32 %v1495, 2.0
      %v1498 = vadd.f32 %v1496, 2.0
      %v1499 = vrcp.pop %v1497
      %v1500 = vmul.f32 %v1495, %v1499
      %v1501 = vrcp.pop %v1498
      %v1502 = vmul.f32 %v1496, %v1501
      %v1503 = vmul.f32 %v1485, %v1500
      %v1504 = vmul.f32 %v1486, %v1502
      %v1505 = vmul.f32 %v805, %v1420
      %v1506 = vmul.f32 %v809, %v1425
      %v1507 = vadd.f32 %v1505, %v1430
      %v1508 = vadd.f32 %v1506, %v1435
      %v1509 = vmin.f32 %v1507, 20.0
      %v1510 = vmin.f32 %v1508, 20.0
      %v1511 = vmul.f32 %v1509, 1.442695
      %v1512 = vpow.pop %v1511
      %v1513 = vmul.f32 %v1510, 1.442695
      %v1514 = vpow.pop %v1513
      %v1515 = vadd.f32 %v1512, 2.0
      %v1516 = vadd.f32 %v1514, 2.0
      %v1517 = vmul.f32 %v1512, %v1515
      %v1518 = vmul.f32 %v1514, %v1516
      %v1519 = vadd.f32 %v1517, 2.0
      %v1520 = vadd.f32 %v1518, 2.0
      %v1521 = vrcp.pop %v1519
      %v1522 = vmul.f32 %v1517, %v1521
      %v1523 = vrcp.pop %v1520
      %v1524 = vmul.f32 %v1518, %v1523
      %v1525 = vmul.f32 %v1507, %v1522
      %v1526 = vmul.f32 %v1508, %v1524
      %v1527 = vmax.f32 %v1503, %v1525
      %v1528 = vmax.f32 %v1504, %v1526
      %v1529 = vmul.f32 %v846, %v1420
      %v1530 = vmul.f32 %v850, %v1425
      %v1531 = vadd.f32 %v1529, %v1430
      %v1532 = vadd.f32 %v1530, %v1435
      %v1533 = vmin.f32 %v1531, 20.0
      %v1534 = vmin.f32 %v1532, 20.0
      %v1535 = vmul.f32 %v1533, 1.442695
      %v1536 = vpow.pop %v1535
      %v1537 = vmul.f32 %v1534, 1.442695
      %v1538 = vpow.pop %v1537
      %v1539 = vadd.f32 %v1536, 2.0
      %v1540 = vadd.f32 %v1538, 2.0
      %v1541 = vmul.f32 %v1536, %v1539
      %v1542 = vmul.f32 %v1538, %v1540
      %v1543 = vadd.f32 %v1541, 2.0
      %v1544 = vadd.f32 %v1542, 2.0
      %v1545 = vrcp.pop %v1543
      %v1546 = vmul.f32 %v1541, %v1545
      %v1547 = vrcp.pop %v1544
      %v1548 = vmul.f32 %v1542, %v1547
      %v1549 = vmul.f32 %v1531, %v1546
      %v1550 = vmul.f32 %v1532, %v1548
      %v1551 = vmul.f32 %v848, %v1420
      %v1552 = vmul.f32 %v852, %v1425
      %v1553 = vadd.f32 %v1551, %v1430
      %v1554 = vadd.f32 %v1552, %v1435
      %v1555 = vmin.f32 %v1553, 20.0
      %v1556 = vmin.f32 %v1554, 20.0
      %v1557 = vmul.f32 %v1555, 1.442695
      %v1558 = vpow.pop %v1557
      %v1559 = vmul.f32 %v1556, 1.442695
      %v1560 = vpow.pop %v1559
      %v1561 = vadd.f32 %v1558, 2.0
      %v1562 = vadd.f32 %v1560, 2.0
      %v1563 = vmul.f32 %v1558, %v1561
      %v1564 = vmul.f32 %v1560, %v1562
      %v1565 = vadd.f32 %v1563, 2.0
      %v1566 = vadd.f32 %v1564, 2.0
      %v1567 = vrcp.pop %v1565
      %v1568 = vmul.f32 %v1563, %v1567
      %v1569 = vrcp.pop %v1566
      %v1570 = vmul.f32 %v1564, %v1569
      %v1571 = vmul.f32 %v1553, %v1568
      %v1572 = vmul.f32 %v1554, %v1570
      %v1573 = vmax.f32 %v1549, %v1571
      %v1574 = vmax.f32 %v1550, %v1572
      %v1575 = vmul.f32 %v889, %v1420
      %v1576 = vmul.f32 %v893, %v1425
      %v1577 = vadd.f32 %v1575, %v1430
      %v1578 = vadd.f32 %v1576, %v1435
      %v1579 = vmin.f32 %v1577, 20.0
      %v1580 = vmin.f32 %v1578, 20.0
      %v1581 = vmul.f32 %v1579, 1.442695
      %v1582 = vpow.pop %v1581
      %v1583 = vmul.f32 %v1580, 1.442695
      %v1584 = vpow.pop %v1583
      %v1585 = vadd.f32 %v1582, 2.0
      %v1586 = vadd.f32 %v1584, 2.0
      %v1587 = vmul.f32 %v1582, %v1585
      %v1588 = vmul.f32 %v1584, %v1586
      %v1589 = vadd.f32 %v1587, 2.0
      %v1590 = vadd.f32 %v1588, 2.0
      %v1591 = vrcp.pop %v1589
      %v1592 = vmul.f32 %v1587, %v1591
      %v1593 = vrcp.pop %v1590
      %v1594 = vmul.f32 %v1588, %v1593
      %v1595 = vmul.f32 %v1577, %v1592
      %v1596 = vmul.f32 %v1578, %v1594
      %v1597 = vmul.f32 %v891, %v1420
      %v1598 = vmul.f32 %v895, %v1425
      %v1599 = vadd.f32 %v1597, %v1430
      %v1600 = vadd.f32 %v1598, %v1435
      %v1601 = vmin.f32 %v1599, 20.0
      %v1602 = vmin.f32 %v1600, 20.0
      %v1603 = vmul.f32 %v1601, 1.442695
      %v1604 = vpow.pop %v1603
      %v1605 = vmul.f32 %v1602, 1.442695
      %v1606 = vpow.pop %v1605
      %v1607 = vadd.f32 %v1604, 2.0
      %v1608 = vadd.f32 %v1606, 2.0
      %v1609 = vmul.f32 %v1604, %v1607
      %v1610 = vmul.f32 %v1606, %v1608
      %v1611 = vadd.f32 %v1609, 2.0
      %v1612 = vadd.f32 %v1610, 2.0
      %v1613 = vrcp.pop %v1611
      %v1614 = vmul.f32 %v1609, %v1613
      %v1615 = vrcp.pop %v1612
      %v1616 = vmul.f32 %v1610, %v1615
      %v1617 = vmul.f32 %v1599, %v1614
      %v1618 = vmul.f32 %v1600, %v1616
      %v1619 = vmax.f32 %v1595, %v1617
      %v1620 = vmax.f32 %v1596, %v1618
      %v1621 = vmul.f32 %v932, %v1420
      %v1622 = vmul.f32 %v936, %v1425
      %v1623 = vadd.f32 %v1621, %v1430
      %v1624 = vadd.f32 %v1622, %v1435
      %v1625 = vmin.f32 %v1623, 20.0
      %v1626 = vmin.f32 %v1624, 20.0
      %v1627 = vmul.f32 %v1625, 1.442695
      %v1628 = vpow.pop %v1627
      %v1629 = vmul.f32 %v1626, 1.442695
      %v1630 = vpow.pop %v1629
      %v1631 = vadd.f32 %v1628, 2.0
      %v1632 = vadd.f32 %v1630, 2.0
      %v1633 = vmul.f32 %v1628, %v1631
      %v1634 = vmul.f32 %v1630, %v1632
      %v1635 = vadd.f32 %v1633, 2.0
      %v1636 = vadd.f32 %v1634, 2.0
      %v1637 = vrcp.pop %v1635
      %v1638 = vmul.f32 %v1633, %v1637
      %v1639 = vrcp.pop %v1636
      %v1640 = vmul.f32 %v1634, %v1639
      %v1641 = vmul.f32 %v1623, %v1638
      %v1642 = vmul.f32 %v1624, %v1640
      %v1643 = vmul.f32 %v934, %v1420
      %v1644 = vmul.f32 %v938, %v1425
      %v1645 = vadd.f32 %v1643, %v1430
      %v1646 = vadd.f32 %v1644, %v1435
      %v1647 = vmin.f32 %v1645, 20.0
      %v1648 = vmin.f32 %v1646, 20.0
      %v1649 = vmul.f32 %v1647, 1.442695
      %v1650 = vpow.pop %v1649
      %v1651 = vmul.f32 %v1648, 1.442695
      %v1652 = vpow.pop %v1651
      %v1653 = vadd.f32 %v1650, 2.0
      %v1654 = vadd.f32 %v1652, 2.0
      %v1655 = vmul.f32 %v1650, %v1653
      %v1656 = vmul.f32 %v1652, %v1654
      %v1657 = vadd.f32 %v1655, 2.0
      %v1658 = vadd.f32 %v1656, 2.0
      %v1659 = vrcp.pop %v1657
      %v1660 = vmul.f32 %v1655, %v1659
      %v1661 = vrcp.pop %v1658
      %v1662 = vmul.f32 %v1656, %v1661
      %v1663 = vmul.f32 %v1645, %v1660
      %v1664 = vmul.f32 %v1646, %v1662
      %v1665 = vmax.f32 %v1641, %v1663
      %v1666 = vmax.f32 %v1642, %v1664
      %v1667 = vmul.f32 %v975, %v1420
      %v1668 = vmul.f32 %v979, %v1425
      %v1669 = vadd.f32 %v1667, %v1430
      %v1670 = vadd.f32 %v1668, %v1435
      %v1671 = vmin.f32 %v1669, 20.0
      %v1672 = vmin.f32 %v1670, 20.0
      %v1673 = vmul.f32 %v1671, 1.442695
      %v1674 = vpow.pop %v1673
      %v1675 = vmul.f32 %v1672, 1.442695
      %v1676 = vpow.pop %v1675
      %v1677 = vadd.f32 %v1674, 2.0
      %v1678 = vadd.f32 %v1676, 2.0
      %v1679 = vmul.f32 %v1674, %v1677
      %v1680 = vmul.f32 %v1676, %v1678
      %v1681 = vadd.f32 %v1679, 2.0
      %v1682 = vadd.f32 %v1680, 2.0
      %v1683 = vrcp.pop %v1681
      %v1684 = vmul.f32 %v1679, %v1683
      %v1685 = vrcp.pop %v1682
      %v1686 = vmul.f32 %v1680, %v1685
      %v1687 = vmul.f32 %v1669, %v1684
      %v1688 = vmul.f32 %v1670, %v1686
      %v1689 = vmul.f32 %v977, %v1420
      %v1690 = vmul.f32 %v981, %v1425
      %v1691 = vadd.f32 %v1689, %v1430
      %v1692 = vadd.f32 %v1690, %v1435
      %v1693 = vmin.f32 %v1691, 20.0
      %v1694 = vmin.f32 %v1692, 20.0
      %v1695 = vmul.f32 %v1693, 1.442695
      %v1696 = vpow.pop %v1695
      %v1697 = vmul.f32 %v1694, 1.442695
      %v1698 = vpow.pop %v1697
      %v1699 = vadd.f32 %v1696, 2.0
      %v1700 = vadd.f32 %v1698, 2.0
      %v1701 = vmul.f32 %v1696, %v1699
      %v1702 = vmul.f32 %v1698, %v1700
      %v1703 = vadd.f32 %v1701, 2.0
      %v1704 = vadd.f32 %v1702, 2.0
      %v1705 = vrcp.pop %v1703
      %v1706 = vmul.f32 %v1701, %v1705
      %v1707 = vrcp.pop %v1704
      %v1708 = vmul.f32 %v1702, %v1707
      %v1709 = vmul.f32 %v1691, %v1706
      %v1710 = vmul.f32 %v1692, %v1708
      %v1711 = vmax.f32 %v1687, %v1709
      %v1712 = vmax.f32 %v1688, %v1710
      %v1713 = vmul.f32 %v1018, %v1420
      %v1714 = vmul.f32 %v1022, %v1425
      %v1715 = vadd.f32 %v1713, %v1430
      %v1716 = vadd.f32 %v1714, %v1435
      %v1717 = vmin.f32 %v1715, 20.0
      %v1718 = vmin.f32 %v1716, 20.0
      %v1719 = vmul.f32 %v1717, 1.442695
      %v1720 = vpow.pop %v1719
      %v1721 = vmul.f32 %v1718, 1.442695
      %v1722 = vpow.pop %v1721
      %v1723 = vadd.f32 %v1720, 2.0
      %v1724 = vadd.f32 %v1722, 2.0
      %v1725 = vmul.f32 %v1720, %v1723
      %v1726 = vmul.f32 %v1722, %v1724
      %v1727 = vadd.f32 %v1725, 2.0
      %v1728 = vadd.f32 %v1726, 2.0
      %v1729 = vrcp.pop %v1727
      %v1730 = vmul.f32 %v1725, %v1729
      %v1731 = vrcp.pop %v1728
      %v1732 = vmul.f32 %v1726, %v1731
      %v1733 = vmul.f32 %v1715, %v1730
      %v1734 = vmul.f32 %v1716, %v1732
      %v1735 = vmul.f32 %v1020, %v1420
      %v1736 = vmul.f32 %v1024, %v1425
      %v1737 = vadd.f32 %v1735, %v1430
      %v1738 = vadd.f32 %v1736, %v1435
      %v1739 = vmin.f32 %v1737, 20.0
      %v1740 = vmin.f32 %v1738, 20.0
      %v1741 = vmul.f32 %v1739, 1.442695
      %v1742 = vpow.pop %v1741
      %v1743 = vmul.f32 %v1740, 1.442695
      %v1744 = vpow.pop %v1743
      %v1745 = vadd.f32 %v1742, 2.0
      %v1746 = vadd.f32 %v1744, 2.0
      %v1747 = vmul.f32 %v1742, %v1745
      %v1748 = vmul.f32 %v1744, %v1746
      %v1749 = vadd.f32 %v1747, 2.0
      %v1750 = vadd.f32 %v1748, 2.0
      %v1751 = vrcp.pop %v1749
      %v1752 = vmul.f32 %v1747, %v1751
      %v1753 = vrcp.pop %v1750
      %v1754 = vmul.f32 %v1748, %v1753
      %v1755 = vmul.f32 %v1737, %v1752
      %v1756 = vmul.f32 %v1738, %v1754
      %v1757 = vmax.f32 %v1733, %v1755
      %v1758 = vmax.f32 %v1734, %v1756
      %v1759 = vmul.f32 %v1061, %v1420
      %v1760 = vmul.f32 %v1065, %v1425
      %v1761 = vadd.f32 %v1759, %v1430
      %v1762 = vadd.f32 %v1760, %v1435
      %v1763 = vmin.f32 %v1761, 20.0
      %v1764 = vmin.f32 %v1762, 20.0
      %v1765 = vmul.f32 %v1763, 1.442695
      %v1766 = vpow.pop %v1765
      %v1767 = vmul.f32 %v1764, 1.442695
      %v1768 = vpow.pop %v1767
      %v1769 = vadd.f32 %v1766, 2.0
      %v1770 = vadd.f32 %v1768, 2.0
      %v1771 = vmul.f32 %v1766, %v1769
      %v1772 = vmul.f32 %v1768, %v1770
      %v1773 = vadd.f32 %v1771, 2.0
      %v1774 = vadd.f32 %v1772, 2.0
      %v1775 = vrcp.pop %v1773
      %v1776 = vmul.f32 %v1771, %v1775
      %v1777 = vrcp.pop %v1774
      %v1778 = vmul.f32 %v1772, %v1777
      %v1779 = vmul.f32 %v1761, %v1776
      %v1780 = vmul.f32 %v1762, %v1778
      %v1781 = vmul.f32 %v1063, %v1420
      %v1782 = vmul.f32 %v1067, %v1425
      %v1783 = vadd.f32 %v1781, %v1430
      %v1784 = vadd.f32 %v1782, %v1435
      %v1785 = vmin.f32 %v1783, 20.0
      %v1786 = vmin.f32 %v1784, 20.0
      %v1787 = vmul.f32 %v1785, 1.442695
      %v1788 = vpow.pop %v1787
      %v1789 = vmul.f32 %v1786, 1.442695
      %v1790 = vpow.pop %v1789
      %v1791 = vadd.f32 %v1788, 2.0
      %v1792 = vadd.f32 %v1790, 2.0
      %v1793 = vmul.f32 %v1788, %v1791
      %v1794 = vmul.f32 %v1790, %v1792
      %v1795 = vadd.f32 %v1793, 2.0
      %v1796 = vadd.f32 %v1794, 2.0
      %v1797 = vrcp.pop %v1795
      %v1798 = vmul.f32 %v1793, %v1797
      %v1799 = vrcp.pop %v1796
      %v1800 = vmul.f32 %v1794, %v1799
      %v1801 = vmul.f32 %v1783, %v1798
      %v1802 = vmul.f32 %v1784, %v1800
      %v1803 = vmax.f32 %v1779, %v1801
      %v1804 = vmax.f32 %v1780, %v1802
      %v1805 = vmul.f32 %v1104, %v1420
      %v1806 = vmul.f32 %v1108, %v1425
      %v1807 = vadd.f32 %v1805, %v1430
      %v1808 = vadd.f32 %v1806, %v1435
      %v1809 = vmin.f32 %v1807, 20.0
      %v1810 = vmin.f32 %v1808, 20.0
      %v1811 = vmul.f32 %v1809, 1.442695
      %v1812 = vpow.pop %v1811
      %v1813 = vmul.f32 %v1810, 1.442695
      %v1814 = vpow.pop %v1813
      %v1815 = vadd.f32 %v1812, 2.0
      %v1816 = vadd.f32 %v1814, 2.0
      %v1817 = vmul.f32 %v1812, %v1815
      %v1818 = vmul.f32 %v1814, %v1816
      %v1819 = vadd.f32 %v1817, 2.0
      %v1820 = vadd.f32 %v1818, 2.0
      %v1821 = vrcp.pop %v1819
      %v1822 = vmul.f32 %v1817, %v1821
      %v1823 = vrcp.pop %v1820
      %v1824 = vmul.f32 %v1818, %v1823
      %v1825 = vmul.f32 %v1807, %v1822
      %v1826 = vmul.f32 %v1808, %v1824
      %v1827 = vmul.f32 %v1106, %v1420
      %v1828 = vmul.f32 %v1110, %v1425
      %v1829 = vadd.f32 %v1827, %v1430
      %v1830 = vadd.f32 %v1828, %v1435
      %v1831 = vmin.f32 %v1829, 20.0
      %v1832 = vmin.f32 %v1830, 20.0
      %v1833 = vmul.f32 %v1831, 1.442695
      %v1834 = vpow.pop %v1833
      %v1835 = vmul.f32 %v1832, 1.442695
      %v1836 = vpow.pop %v1835
      %v1837 = vadd.f32 %v1834, 2.0
      %v1838 = vadd.f32 %v1836, 2.0
      %v1839 = vmul.f32 %v1834, %v1837
      %v1840 = vmul.f32 %v1836, %v1838
      %v1841 = vadd.f32 %v1839, 2.0
      %v1842 = vadd.f32 %v1840, 2.0
      %v1843 = vrcp.pop %v1841
      %v1844 = vmul.f32 %v1839, %v1843
      %v1845 = vrcp.pop %v1842
      %v1846 = vmul.f32 %v1840, %v1845
      %v1847 = vmul.f32 %v1829, %v1844
      %v1848 = vmul.f32 %v1830, %v1846
      %v1849 = vmax.f32 %v1825, %v1847
      %v1850 = vmax.f32 %v1826, %v1848
      %v1851 = vmul.f32 %v1147, %v1420
      %v1852 = vmul.f32 %v1151, %v1425
      %v1853 = vadd.f32 %v1851, %v1430
      %v1854 = vadd.f32 %v1852, %v1435
      %v1855 = vmin.f32 %v1853, 20.0
      %v1856 = vmin.f32 %v1854, 20.0
      %v1857 = vmul.f32 %v1855, 1.442695
      %v1858 = vpow.pop %v1857
      %v1859 = vmul.f32 %v1856, 1.442695
      %v1860 = vpow.pop %v1859
      %v1861 = vadd.f32 %v1858, 2.0
      %v1862 = vadd.f32 %v1860, 2.0
      %v1863 = vmul.f32 %v1858, %v1861
      %v1864 = vmul.f32 %v1860, %v1862
      %v1865 = vadd.f32 %v1863, 2.0
      %v1866 = vadd.f32 %v1864, 2.0
      %v1867 = vrcp.pop %v1865
      %v1868 = vmul.f32 %v1863, %v1867
      %v1869 = vrcp.pop %v1866
      %v1870 = vmul.f32 %v1864, %v1869
      %v1871 = vmul.f32 %v1853, %v1868
      %v1872 = vmul.f32 %v1854, %v1870
      %v1873 = vmul.f32 %v1149, %v1420
      %v1874 = vmul.f32 %v1153, %v1425
      %v1875 = vadd.f32 %v1873, %v1430
      %v1876 = vadd.f32 %v1874, %v1435
      %v1877 = vmin.f32 %v1875, 20.0
      %v1878 = vmin.f32 %v1876, 20.0
      %v1879 = vmul.f32 %v1877, 1.442695
      %v1880 = vpow.pop %v1879
      %v1881 = vmul.f32 %v1878, 1.442695
      %v1882 = vpow.pop %v1881
      %v1883 = vadd.f32 %v1880, 2.0
      %v1884 = vadd.f32 %v1882, 2.0
      %v1885 = vmul.f32 %v1880, %v1883
      %v1886 = vmul.f32 %v1882, %v1884
      %v1887 = vadd.f32 %v1885, 2.0
      %v1888 = vadd.f32 %v1886, 2.0
      %v1889 = vrcp.pop %v1887
      %v1890 = vmul.f32 %v1885, %v1889
      %v1891 = vrcp.pop %v1888
      %v1892 = vmul.f32 %v1886, %v1891
      %v1893 = vmul.f32 %v1875, %v1890
      %v1894 = vmul.f32 %v1876, %v1892
      %v1895 = vmax.f32 %v1871, %v1893
      %v1896 = vmax.f32 %v1872, %v1894
      %v1897 = vmul.f32 %v1190, %v1420
      %v1898 = vmul.f32 %v1194, %v1425
      %v1899 = vadd.f32 %v1897, %v1430
      %v1900 = vadd.f32 %v1898, %v1435
      %v1901 = vmin.f32 %v1899, 20.0
      %v1902 = vmin.f32 %v1900, 20.0
      %v1903 = vmul.f32 %v1901, 1.442695
      %v1904 = vpow.pop %v1903
      %v1905 = vmul.f32 %v1902, 1.442695
      %v1906 = vpow.pop %v1905
      %v1907 = vadd.f32 %v1904, 2.0
      %v1908 = vadd.f32 %v1906, 2.0
      %v1909 = vmul.f32 %v1904, %v1907
      %v1910 = vmul.f32 %v1906, %v1908
      %v1911 = vadd.f32 %v1909, 2.0
      %v1912 = vadd.f32 %v1910, 2.0
      %v1913 = vrcp.pop %v1911
      %v1914 = vmul.f32 %v1909, %v1913
      %v1915 = vrcp.pop %v1912
      %v1916 = vmul.f32 %v1910, %v1915
      %v1917 = vmul.f32 %v1899, %v1914
      %v1918 = vmul.f32 %v1900, %v1916
      %v1919 = vmul.f32 %v1192, %v1420
      %v1920 = vmul.f32 %v1196, %v1425
      %v1921 = vadd.f32 %v1919, %v1430
      %v1922 = vadd.f32 %v1920, %v1435
      %v1923 = vmin.f32 %v1921, 20.0
      %v1924 = vmin.f32 %v1922, 20.0
      %v1925 = vmul.f32 %v1923, 1.442695
      %v1926 = vpow.pop %v1925
      %v1927 = vmul.f32 %v1924, 1.442695
      %v1928 = vpow.pop %v1927
      %v1929 = vadd.f32 %v1926, 2.0
      %v1930 = vadd.f32 %v1928, 2.0
      %v1931 = vmul.f32 %v1926, %v1929
      %v1932 = vmul.f32 %v1928, %v1930
      %v1933 = vadd.f32 %v1931, 2.0
      %v1934 = vadd.f32 %v1932, 2.0
      %v1935 = vrcp.pop %v1933
      %v1936 = vmul.f32 %v1931, %v1935
      %v1937 = vrcp.pop %v1934
      %v1938 = vmul.f32 %v1932, %v1937
      %v1939 = vmul.f32 %v1921, %v1936
      %v1940 = vmul.f32 %v1922, %v1938
      %v1941 = vmax.f32 %v1917, %v1939
      %v1942 = vmax.f32 %v1918, %v1940
      %v1943 = vmul.f32 %v1233, %v1420
      %v1944 = vmul.f32 %v1237, %v1425
      %v1945 = vadd.f32 %v1943, %v1430
      %v1946 = vadd.f32 %v1944, %v1435
      %v1947 = vmin.f32 %v1945, 20.0
      %v1948 = vmin.f32 %v1946, 20.0
      %v1949 = vmul.f32 %v1947, 1.442695
      %v1950 = vpow.pop %v1949
      %v1951 = vmul.f32 %v1948, 1.442695
      %v1952 = vpow.pop %v1951
      %v1953 = vadd.f32 %v1950, 2.0
      %v1954 = vadd.f32 %v1952, 2.0
      %v1955 = vmul.f32 %v1950, %v1953
      %v1956 = vmul.f32 %v1952, %v1954
      %v1957 = vadd.f32 %v1955, 2.0
      %v1958 = vadd.f32 %v1956, 2.0
      %v1959 = vrcp.pop %v1957
      %v1960 = vmul.f32 %v1955, %v1959
      %v1961 = vrcp.pop %v1958
      %v1962 = vmul.f32 %v1956, %v1961
      %v1963 = vmul.f32 %v1945, %v1960
      %v1964 = vmul.f32 %v1946, %v1962
      %v1965 = vmul.f32 %v1235, %v1420
      %v1966 = vmul.f32 %v1239, %v1425
      %v1967 = vadd.f32 %v1965, %v1430
      %v1968 = vadd.f32 %v1966, %v1435
      %v1969 = vmin.f32 %v1967, 20.0
      %v1970 = vmin.f32 %v1968, 20.0
      %v1971 = vmul.f32 %v1969, 1.442695
      %v1972 = vpow.pop %v1971
      %v1973 = vmul.f32 %v1970, 1.442695
      %v1974 = vpow.pop %v1973
      %v1975 = vadd.f32 %v1972, 2.0
      %v1976 = vadd.f32 %v1974, 2.0
      %v1977 = vmul.f32 %v1972, %v1975
      %v1978 = vmul.f32 %v1974, %v1976
      %v1979 = vadd.f32 %v1977, 2.0
      %v1980 = vadd.f32 %v1978, 2.0
      %v1981 = vrcp.pop %v1979
      %v1982 = vmul.f32 %v1977, %v1981
      %v1983 = vrcp.pop %v1980
      %v1984 = vmul.f32 %v1978, %v1983
      %v1985 = vmul.f32 %v1967, %v1982
      %v1986 = vmul.f32 %v1968, %v1984
      %v1987 = vmax.f32 %v1963, %v1985
      %v1988 = vmax.f32 %v1964, %v1986
      %v1989 = vmul.f32 %v1276, %v1420
      %v1990 = vmul.f32 %v1280, %v1425
      %v1991 = vadd.f32 %v1989, %v1430
      %v1992 = vadd.f32 %v1990, %v1435
      %v1993 = vmin.f32 %v1991, 20.0
      %v1994 = vmin.f32 %v1992, 20.0
      %v1995 = vmul.f32 %v1993, 1.442695
      %v1996 = vpow.pop %v1995
      %v1997 = vmul.f32 %v1994, 1.442695
      %v1998 = vpow.pop %v1997
      %v1999 = vadd.f32 %v1996, 2.0
      %v2000 = vadd.f32 %v1998, 2.0
      %v2001 = vmul.f32 %v1996, %v1999
      %v2002 = vmul.f32 %v1998, %v2000
      %v2003 = vadd.f32 %v2001, 2.0
      %v2004 = vadd.f32 %v2002, 2.0
      %v2005 = vrcp.pop %v2003
      %v2006 = vmul.f32 %v2001, %v2005
      %v2007 = vrcp.pop %v2004
      %v2008 = vmul.f32 %v2002, %v2007
      %v2009 = vmul.f32 %v1991, %v2006
      %v2010 = vmul.f32 %v1992, %v2008
      %v2011 = vmul.f32 %v1278, %v1420
      %v2012 = vmul.f32 %v1282, %v1425
      %v2013 = vadd.f32 %v2011, %v1430
      %v2014 = vadd.f32 %v2012, %v1435
      %v2015 = vmin.f32 %v2013, 20.0
      %v2016 = vmin.f32 %v2014, 20.0
      %v2017 = vmul.f32 %v2015, 1.442695
      %v2018 = vpow.pop %v2017
      %v2019 = vmul.f32 %v2016, 1.442695
      %v2020 = vpow.pop %v2019
      %v2021 = vadd.f32 %v2018, 2.0
      %v2022 = vadd.f32 %v2020, 2.0
      %v2023 = vmul.f32 %v2018, %v2021
      %v2024 = vmul.f32 %v2020, %v2022
      %v2025 = vadd.f32 %v2023, 2.0
      %v2026 = vadd.f32 %v2024, 2.0
      %v2027 = vrcp.pop %v2025
      %v2028 = vmul.f32 %v2023, %v2027
      %v2029 = vrcp.pop %v2026
      %v2030 = vmul.f32 %v2024, %v2029
      %v2031 = vmul.f32 %v2013, %v2028
      %v2032 = vmul.f32 %v2014, %v2030
      %v2033 = vmax.f32 %v2009, %v2031
      %v2034 = vmax.f32 %v2010, %v2032
      %v2035 = vmul.f32 %v1319, %v1420
      %v2036 = vmul.f32 %v1323, %v1425
      %v2037 = vadd.f32 %v2035, %v1430
      %v2038 = vadd.f32 %v2036, %v1435
      %v2039 = vmin.f32 %v2037, 20.0
      %v2040 = vmin.f32 %v2038, 20.0
      %v2041 = vmul.f32 %v2039, 1.442695
      %v2042 = vpow.pop %v2041
      %v2043 = vmul.f32 %v2040, 1.442695
      %v2044 = vpow.pop %v2043
      %v2045 = vadd.f32 %v2042, 2.0
      %v2046 = vadd.f32 %v2044, 2.0
      %v2047 = vmul.f32 %v2042, %v2045
      %v2048 = vmul.f32 %v2044, %v2046
      %v2049 = vadd.f32 %v2047, 2.0
      %v2050 = vadd.f32 %v2048, 2.0
      %v2051 = vrcp.pop %v2049
      %v2052 = vmul.f32 %v2047, %v2051
      %v2053 = vrcp.pop %v2050
      %v2054 = vmul.f32 %v2048, %v2053
      %v2055 = vmul.f32 %v2037, %v2052
      %v2056 = vmul.f32 %v2038, %v2054
      %v2057 = vmul.f32 %v1321, %v1420
      %v2058 = vmul.f32 %v1325, %v1425
      %v2059 = vadd.f32 %v2057, %v1430
      %v2060 = vadd.f32 %v2058, %v1435
      %v2061 = vmin.f32 %v2059, 20.0
      %v2062 = vmin.f32 %v2060, 20.0
      %v2063 = vmul.f32 %v2061, 1.442695
      %v2064 = vpow.pop %v2063
      %v2065 = vmul.f32 %v2062, 1.442695
      %v2066 = vpow.pop %v2065
      %v2067 = vadd.f32 %v2064, 2.0
      %v2068 = vadd.f32 %v2066, 2.0
      %v2069 = vmul.f32 %v2064, %v2067
      %v2070 = vmul.f32 %v2066, %v2068
      %v2071 = vadd.f32 %v2069, 2.0
      %v2072 = vadd.f32 %v2070, 2.0
      %v2073 = vrcp.pop %v2071
      %v2074 = vmul.f32 %v2069, %v2073
      %v2075 = vrcp.pop %v2072
      %v2076 = vmul.f32 %v2070, %v2075
      %v2077 = vmul.f32 %v2059, %v2074
      %v2078 = vmul.f32 %v2060, %v2076
      %v2079 = vmax.f32 %v2055, %v2077
      %v2080 = vmax.f32 %v2056, %v2078
      %v2081 = vmul.f32 %v1362, %v1420
      %v2082 = vmul.f32 %v1366, %v1425
      %v2083 = vadd.f32 %v2081, %v1430
      %v2084 = vadd.f32 %v2082, %v1435
      %v2085 = vmin.f32 %v2083, 20.0
      %v2086 = vmin.f32 %v2084, 20.0
      %v2087 = vmul.f32 %v2085, 1.442695
      %v2088 = vpow.pop %v2087
      %v2089 = vmul.f32 %v2086, 1.442695
      %v2090 = vpow.pop %v2089
      %v2091 = vadd.f32 %v2088, 2.0
      %v2092 = vadd.f32 %v2090, 2.0
      %v2093 = vmul.f32 %v2088, %v2091
      %v2094 = vmul.f32 %v2090, %v2092
      %v2095 = vadd.f32 %v2093, 2.0
      %v2096 = vadd.f32 %v2094, 2.0
      %v2097 = vrcp.pop %v2095
      %v2098 = vmul.f32 %v2093, %v2097
      %v2099 = vrcp.pop %v2096
      %v2100 = vmul.f32 %v2094, %v2099
      %v2101 = vmul.f32 %v2083, %v2098
      %v2102 = vmul.f32 %v2084, %v2100
      %v2103 = vmul.f32 %v1364, %v1420
      %v2104 = vmul.f32 %v1368, %v1425
      %v2105 = vadd.f32 %v2103, %v1430
      %v2106 = vadd.f32 %v2104, %v1435
      %v2107 = vmin.f32 %v2105, 20.0
      %v2108 = vmin.f32 %v2106, 20.0
      %v2109 = vmul.f32 %v2107, 1.442695
      %v2110 = vpow.pop %v2109
      %v2111 = vmul.f32 %v2108, 1.442695
      %v2112 = vpow.pop %v2111
      %v2113 = vadd.f32 %v2110, 2.0
      %v2114 = vadd.f32 %v2112, 2.0
      %v2115 = vmul.f32 %v2110, %v2113
      %v2116 = vmul.f32 %v2112, %v2114
      %v2117 = vadd.f32 %v2115, 2.0
      %v2118 = vadd.f32 %v2116, 2.0
      %v2119 = vrcp.pop %v2117
      %v2120 = vmul.f32 %v2115, %v2119
      %v2121 = vrcp.pop %v2118
      %v2122 = vmul.f32 %v2116, %v2121
      %v2123 = vmul.f32 %v2105, %v2120
      %v2124 = vmul.f32 %v2106, %v2122
      %v2125 = vmax.f32 %v2101, %v2123
      %v2126 = vmax.f32 %v2102, %v2124
      %v2127 = vmul.f32 %v1405, %v1420
      %v2128 = vmul.f32 %v1409, %v1425
      %v2129 = vadd.f32 %v2127, %v1430
      %v2130 = vadd.f32 %v2128, %v1435
      %v2131 = vmin.f32 %v2129, 20.0
      %v2132 = vmin.f32 %v2130, 20.0
      %v2133 = vmul.f32 %v2131, 1.442695
      %v2134 = vpow.pop %v2133
      %v2135 = vmul.f32 %v2132, 1.442695
      %v2136 = vpow.pop %v2135
      %v2137 = vadd.f32 %v2134, 2.0
      %v2138 = vadd.f32 %v2136, 2.0
      %v2139 = vmul.f32 %v2134, %v2137
      %v2140 = vmul.f32 %v2136, %v2138
      %v2141 = vadd.f32 %v2139, 2.0
      %v2142 = vadd.f32 %v2140, 2.0
      %v2143 = vrcp.pop %v2141
      %v2144 = vmul.f32 %v2139, %v2143
      %v2145 = vrcp.pop %v2142
      %v2146 = vmul.f32 %v2140, %v2145
      %v2147 = vmul.f32 %v2129, %v2144
      %v2148 = vmul.f32 %v2130, %v2146
      %v2149 = vmul.f32 %v1407, %v1420
      %v2150 = vmul.f32 %v1411, %v1425
      %v2151 = vadd.f32 %v2149, %v1430
      %v2152 = vadd.f32 %v2150, %v1435
      %v2153 = vmin.f32 %v2151, 20.0
      %v2154 = vmin.f32 %v2152, 20.0
      %v2155 = vmul.f32 %v2153, 1.442695
      %v2156 = vpow.pop %v2155
      %v2157 = vmul.f32 %v2154, 1.442695
      %v2158 = vpow.pop %v2157
      %v2159 = vadd.f32 %v2156, 2.0
      %v2160 = vadd.f32 %v2158, 2.0
      %v2161 = vmul.f32 %v2156, %v2159
      %v2162 = vmul.f32 %v2158, %v2160
      %v2163 = vadd.f32 %v2161, 2.0
      %v2164 = vadd.f32 %v2162, 2.0
      %v2165 = vrcp.pop %v2163
      %v2166 = vmul.f32 %v2161, %v2165
      %v2167 = vrcp.pop %v2164
      %v2168 = vmul.f32 %v2162, %v2167
      %v2169 = vmul.f32 %v2151, %v2166
      %v2170 = vmul.f32 %v2152, %v2168
      %v2171 = vmax.f32 %v2147, %v2169
      %v2172 = vmax.f32 %v2148, %v2170
      %v2173 = vld [vmem:[%s4] sm:$0xf]
      %v2174 = vld [vmem:[%s4 + $0x4] sm:$0xf]
      %v2175 = vpack.c.bf16 %v1482, %v1481
      %v2176 = vpack.c.bf16 %v1528, %v1527
      %v2177 = vpack.c.bf16 %v1574, %v1573
      %v2178 = vpack.c.bf16 %v1620, %v1619
      %v2179 = vpack.c.bf16 %v1666, %v1665
      %v2180 = vpack.c.bf16 %v1712, %v1711
      %v2181 = vpack.c.bf16 %v1758, %v1757
      %v2182 = vpack.c.bf16 %v1804, %v1803
      %v2183 = vpack.c.bf16 %v1850, %v1849
      %v2184 = vpack.c.bf16 %v1896, %v1895
      %v2185 = vpack.c.bf16 %v1942, %v1941
      %v2186 = vpack.c.bf16 %v1988, %v1987
      %v2187 = vpack.c.bf16 %v2034, %v2033
      %v2188 = vpack.c.bf16 %v2080, %v2079
      %v2189 = vpack.c.bf16 %v2126, %v2125
      %v2190 = vpack.c.bf16 %v2172, %v2171
      %v2193 = vunpack.c.l.b16 %v2173
      %v2194 = vunpack.c.l.b16 %v2174
      %v2195 = vpack.c.b16 %v2194, %v2193
      %vm2196 = vcmask 130048
      %v2198 = vsel %vm2196, %v2195, 0
      %2200 = vmatprep.subr.bf16.mxu0 %v2176
      %2201 = vmatpush1.bf16.msra.mxu0 %v2175
      %2202 = vmatprep.subr.bf16.mxu0 0
      %2203 = vmatpush1.bf16.msra.mxu0 0
      %2204 = vmatprep.subr.bf16.mxu0 0
      %2205 = vmatpush1.bf16.msra.mxu0 0
      %2206 = vmatprep.subr.bf16.mxu0 0
      %2207 = vmatpush1.bf16.msra.mxu0 0
      %2208 = vmatprep.subr.bf16.mxu0 0
      %2209 = vmatpush1.bf16.msra.mxu0 0
      %2210 = vmatprep.subr.bf16.mxu0 0
      %2211 = vmatpush1.bf16.msra.mxu0 0
      %2212 = vmatprep.subr.bf16.mxu0 0
      %2213 = vmatpush1.bf16.msra.mxu0 0
      %2214 = vmatprep.subr.bf16.mxu0 0
      %2215 = vmatpush1.bf16.msra.mxu0 0
      %2216 = vmatprep.subr.bf16.mxu0 0
      %2217 = vmatpush1.bf16.msra.mxu0 0
      %2218 = vmatprep.subr.bf16.mxu0 0
      %2219 = vmatpush1.bf16.msra.mxu0 0
      %2220 = vmatprep.subr.bf16.mxu0 0
      %2221 = vmatpush1.bf16.msra.mxu0 0
      %2222 = vmatprep.subr.bf16.mxu0 0
      %2223 = vmatpush1.bf16.msra.mxu0 0
      %2224 = vmatprep.subr.bf16.mxu0 0
      %2225 = vmatpush1.bf16.msra.mxu0 0
      %2226 = vmatprep.subr.bf16.mxu0 0
      %2227 = vmatpush1.bf16.msra.mxu0 0
      %2228 = vmatprep.subr.bf16.mxu0 0
      %2229 = vmatpush1.bf16.msra.mxu0 0
      %2230 = vmatprep.subr.bf16.mxu0 0
      %2231 = vmatpush1.bf16.msra.mxu0 0
      %2232 = vmatprep.mubr.bf16.mxu0 0
      %2233 = vmatmul.mubr.bf16.gmra.mrb[0].mxu0 %v2198
      %v2234 = vpop.f32.mrb[0].mxu0
      %v2235 = vadd.f32 0.0, %v2234
      %v2236 = vpop.f32.mrb[0].mxu0
      %v2237 = vadd.f32 0.0, %v2236
      %v2238 = vpop.f32.mrb[0].mxu0
      %v2239 = vadd.f32 0.0, %v2238
      %v2240 = vpop.f32.mrb[0].mxu0
      %v2241 = vadd.f32 0.0, %v2240
      %2242 = vdwg.mxu0
      %2243 = vmatprep.subr.bf16.mxu0 %v2178
      %2244 = vmatpush1.bf16.msra.mxu0 %v2177
      %2245 = vmatprep.subr.bf16.mxu0 0
      %2246 = vmatpush1.bf16.msra.mxu0 0
      %2247 = vmatprep.subr.bf16.mxu0 0
      %2248 = vmatpush1.bf16.msra.mxu0 0
      %2249 = vmatprep.subr.bf16.mxu0 0
      %2250 = vmatpush1.bf16.msra.mxu0 0
      %2251 = vmatprep.subr.bf16.mxu0 0
      %2252 = vmatpush1.bf16.msra.mxu0 0
      %2253 = vmatprep.subr.bf16.mxu0 0
      %2254 = vmatpush1.bf16.msra.mxu0 0
      %2255 = vmatprep.subr.bf16.mxu0 0
      %2256 = vmatpush1.bf16.msra.mxu0 0
      %2257 = vmatprep.subr.bf16.mxu0 0
      %2258 = vmatpush1.bf16.msra.mxu0 0
      %2259 = vmatprep.subr.bf16.mxu0 0
      %2260 = vmatpush1.bf16.msra.mxu0 0
      %2261 = vmatprep.subr.bf16.mxu0 0
      %2262 = vmatpush1.bf16.msra.mxu0 0
      %2263 = vmatprep.subr.bf16.mxu0 0
      %2264 = vmatpush1.bf16.msra.mxu0 0
      %2265 = vmatprep.subr.bf16.mxu0 0
      %2266 = vmatpush1.bf16.msra.mxu0 0
      %2267 = vmatprep.subr.bf16.mxu0 0
      %2268 = vmatpush1.bf16.msra.mxu0 0
      %2269 = vmatprep.subr.bf16.mxu0 0
      %2270 = vmatpush1.bf16.msra.mxu0 0
      %2271 = vmatprep.subr.bf16.mxu0 0
      %2272 = vmatpush1.bf16.msra.mxu0 0
      %2273 = vmatprep.subr.bf16.mxu0 0
      %2274 = vmatpush1.bf16.msra.mxu0 0
      %2275 = vmatprep.mubr.bf16.mxu0 0
      %2276 = vmatmul.mubr.bf16.gmra.mrb[0].mxu0 %v2198
      %v2277 = vpop.f32.mrb[0].mxu0
      %v2278 = vadd.f32 0.0, %v2277
      %v2279 = vpop.f32.mrb[0].mxu0
      %v2280 = vadd.f32 0.0, %v2279
      %v2281 = vpop.f32.mrb[0].mxu0
      %v2282 = vadd.f32 0.0, %v2281
      %v2283 = vpop.f32.mrb[0].mxu0
      %v2284 = vadd.f32 0.0, %v2283
      %2285 = vdwg.mxu0
      %2286 = vmatprep.subr.bf16.mxu0 %v2180
      %2287 = vmatpush1.bf16.msra.mxu0 %v2179
      %2288 = vmatprep.subr.bf16.mxu0 0
      %2289 = vmatpush1.bf16.msra.mxu0 0
      %2290 = vmatprep.subr.bf16.mxu0 0
      %2291 = vmatpush1.bf16.msra.mxu0 0
      %2292 = vmatprep.subr.bf16.mxu0 0
      %2293 = vmatpush1.bf16.msra.mxu0 0
      %2294 = vmatprep.subr.bf16.mxu0 0
      %2295 = vmatpush1.bf16.msra.mxu0 0
      %2296 = vmatprep.subr.bf16.mxu0 0
      %2297 = vmatpush1.bf16.msra.mxu0 0
      %2298 = vmatprep.subr.bf16.mxu0 0
      %2299 = vmatpush1.bf16.msra.mxu0 0
      %2300 = vmatprep.subr.bf16.mxu0 0
      %2301 = vmatpush1.bf16.msra.mxu0 0
      %2302 = vmatprep.subr.bf16.mxu0 0
      %2303 = vmatpush1.bf16.msra.mxu0 0
      %2304 = vmatprep.subr.bf16.mxu0 0
      %2305 = vmatpush1.bf16.msra.mxu0 0
      %2306 = vmatprep.subr.bf16.mxu0 0
      %2307 = vmatpush1.bf16.msra.mxu0 0
      %2308 = vmatprep.subr.bf16.mxu0 0
      %2309 = vmatpush1.bf16.msra.mxu0 0
      %2310 = vmatprep.subr.bf16.mxu0 0
      %2311 = vmatpush1.bf16.msra.mxu0 0
      %2312 = vmatprep.subr.bf16.mxu0 0
      %2313 = vmatpush1.bf16.msra.mxu0 0
      %2314 = vmatprep.subr.bf16.mxu0 0
      %2315 = vmatpush1.bf16.msra.mxu0 0
      %2316 = vmatprep.subr.bf16.mxu0 0
      %2317 = vmatpush1.bf16.msra.mxu0 0
      %2318 = vmatprep.mubr.bf16.mxu0 0
      %2319 = vmatmul.mubr.bf16.gmra.mrb[0].mxu0 %v2198
      %v2320 = vpop.f32.mrb[0].mxu0
      %v2321 = vadd.f32 0.0, %v2320
      %v2322 = vpop.f32.mrb[0].mxu0
      %v2323 = vadd.f32 0.0, %v2322
      %v2324 = vpop.f32.mrb[0].mxu0
      %v2325 = vadd.f32 0.0, %v2324
      %v2326 = vpop.f32.mrb[0].mxu0
      %v2327 = vadd.f32 0.0, %v2326
      %2328 = vdwg.mxu0
      %2329 = vmatprep.subr.bf16.mxu0 %v2182
      %2330 = vmatpush1.bf16.msra.mxu0 %v2181
      %2331 = vmatprep.subr.bf16.mxu0 0
      %2332 = vmatpush1.bf16.msra.mxu0 0
      %2333 = vmatprep.subr.bf16.mxu0 0
      %2334 = vmatpush1.bf16.msra.mxu0 0
      %2335 = vmatprep.subr.bf16.mxu0 0
      %2336 = vmatpush1.bf16.msra.mxu0 0
      %2337 = vmatprep.subr.bf16.mxu0 0
      %2338 = vmatpush1.bf16.msra.mxu0 0
      %2339 = vmatprep.subr.bf16.mxu0 0
      %2340 = vmatpush1.bf16.msra.mxu0 0
      %2341 = vmatprep.subr.bf16.mxu0 0
      %2342 = vmatpush1.bf16.msra.mxu0 0
      %2343 = vmatprep.subr.bf16.mxu0 0
      %2344 = vmatpush1.bf16.msra.mxu0 0
      %2345 = vmatprep.subr.bf16.mxu0 0
      %2346 = vmatpush1.bf16.msra.mxu0 0
      %2347 = vmatprep.subr.bf16.mxu0 0
      %2348 = vmatpush1.bf16.msra.mxu0 0
      %2349 = vmatprep.subr.bf16.mxu0 0
      %2350 = vmatpush1.bf16.msra.mxu0 0
      %2351 = vmatprep.subr.bf16.mxu0 0
      %2352 = vmatpush1.bf16.msra.mxu0 0
      %2353 = vmatprep.subr.bf16.mxu0 0
      %2354 = vmatpush1.bf16.msra.mxu0 0
      %2355 = vmatprep.subr.bf16.mxu0 0
      %2356 = vmatpush1.bf16.msra.mxu0 0
      %2357 = vmatprep.subr.bf16.mxu0 0
      %2358 = vmatpush1.bf16.msra.mxu0 0
      %2359 = vmatprep.subr.bf16.mxu0 0
      %2360 = vmatpush1.bf16.msra.mxu0 0
      %2361 = vmatprep.mubr.bf16.mxu0 0
      %2362 = vmatmul.mubr.bf16.gmra.mrb[0].mxu0 %v2198
      %v2363 = vpop.f32.mrb[0].mxu0
      %v2364 = vadd.f32 0.0, %v2363
      %v2365 = vpop.f32.mrb[0].mxu0
      %v2366 = vadd.f32 0.0, %v2365
      %v2367 = vpop.f32.mrb[0].mxu0
      %v2368 = vadd.f32 0.0, %v2367
      %v2369 = vpop.f32.mrb[0].mxu0
      %v2370 = vadd.f32 0.0, %v2369
      %2371 = vdwg.mxu0
      %2372 = vmatprep.subr.bf16.mxu0 %v2184
      %2373 = vmatpush1.bf16.msra.mxu0 %v2183
      %2374 = vmatprep.subr.bf16.mxu0 0
      %2375 = vmatpush1.bf16.msra.mxu0 0
      %2376 = vmatprep.subr.bf16.mxu0 0
      %2377 = vmatpush1.bf16.msra.mxu0 0
      %2378 = vmatprep.subr.bf16.mxu0 0
      %2379 = vmatpush1.bf16.msra.mxu0 0
      %2380 = vmatprep.subr.bf16.mxu0 0
      %2381 = vmatpush1.bf16.msra.mxu0 0
      %2382 = vmatprep.subr.bf16.mxu0 0
      %2383 = vmatpush1.bf16.msra.mxu0 0
      %2384 = vmatprep.subr.bf16.mxu0 0
      %2385 = vmatpush1.bf16.msra.mxu0 0
      %2386 = vmatprep.subr.bf16.mxu0 0
      %2387 = vmatpush1.bf16.msra.mxu0 0
      %2388 = vmatprep.subr.bf16.mxu0 0
      %2389 = vmatpush1.bf16.msra.mxu0 0
      %2390 = vmatprep.subr.bf16.mxu0 0
      %2391 = vmatpush1.bf16.msra.mxu0 0
      %2392 = vmatprep.subr.bf16.mxu0 0
      %2393 = vmatpush1.bf16.msra.mxu0 0
      %2394 = vmatprep.subr.bf16.mxu0 0
      %2395 = vmatpush1.bf16.msra.mxu0 0
      %2396 = vmatprep.subr.bf16.mxu0 0
      %2397 = vmatpush1.bf16.msra.mxu0 0
      %2398 = vmatprep.subr.bf16.mxu0 0
      %2399 = vmatpush1.bf16.msra.mxu0 0
      %2400 = vmatprep.subr.bf16.mxu0 0
      %2401 = vmatpush1.bf16.msra.mxu0 0
      %2402 = vmatprep.subr.bf16.mxu0 0
      %2403 = vmatpush1.bf16.msra.mxu0 0
      %2404 = vmatprep.mubr.bf16.mxu0 0
      %2405 = vmatmul.mubr.bf16.gmra.mrb[0].mxu0 %v2198
      %v2406 = vpop.f32.mrb[0].mxu0
      %v2407 = vadd.f32 0.0, %v2406
      %v2408 = vpop.f32.mrb[0].mxu0
      %v2409 = vadd.f32 0.0, %v2408
      %v2410 = vpop.f32.mrb[0].mxu0
      %v2411 = vadd.f32 0.0, %v2410
      %v2412 = vpop.f32.mrb[0].mxu0
      %v2413 = vadd.f32 0.0, %v2412
      %2414 = vdwg.mxu0
      %2415 = vmatprep.subr.bf16.mxu0 %v2186
      %2416 = vmatpush1.bf16.msra.mxu0 %v2185
      %2417 = vmatprep.subr.bf16.mxu0 0
      %2418 = vmatpush1.bf16.msra.mxu0 0
      %2419 = vmatprep.subr.bf16.mxu0 0
      %2420 = vmatpush1.bf16.msra.mxu0 0
      %2421 = vmatprep.subr.bf16.mxu0 0
      %2422 = vmatpush1.bf16.msra.mxu0 0
      %2423 = vmatprep.subr.bf16.mxu0 0
      %2424 = vmatpush1.bf16.msra.mxu0 0
      %2425 = vmatprep.subr.bf16.mxu0 0
      %2426 = vmatpush1.bf16.msra.mxu0 0
      %2427 = vmatprep.subr.bf16.mxu0 0
      %2428 = vmatpush1.bf16.msra.mxu0 0
      %2429 = vmatprep.subr.bf16.mxu0 0
      %2430 = vmatpush1.bf16.msra.mxu0 0
      %2431 = vmatprep.subr.bf16.mxu0 0
      %2432 = vmatpush1.bf16.msra.mxu0 0
      %2433 = vmatprep.subr.bf16.mxu0 0
      %2434 = vmatpush1.bf16.msra.mxu0 0
      %2435 = vmatprep.subr.bf16.mxu0 0
      %2436 = vmatpush1.bf16.msra.mxu0 0
      %2437 = vmatprep.subr.bf16.mxu0 0
      %2438 = vmatpush1.bf16.msra.mxu0 0
      %2439 = vmatprep.subr.bf16.mxu0 0
      %2440 = vmatpush1.bf16.msra.mxu0 0
      %2441 = vmatprep.subr.bf16.mxu0 0
      %2442 = vmatpush1.bf16.msra.mxu0 0
      %2443 = vmatprep.subr.bf16.mxu0 0
      %2444 = vmatpush1.bf16.msra.mxu0 0
      %2445 = vmatprep.subr.bf16.mxu0 0
      %2446 = vmatpush1.bf16.msra.mxu0 0
      %2447 = vmatprep.mubr.bf16.mxu0 0
      %2448 = vmatmul.mubr.bf16.gmra.mrb[0].mxu0 %v2198
      %v2449 = vpop.f32.mrb[0].mxu0
      %v2450 = vadd.f32 0.0, %v2449
      %v2451 = vpop.f32.mrb[0].mxu0
      %v2452 = vadd.f32 0.0, %v2451
      %v2453 = vpop.f32.mrb[0].mxu0
      %v2454 = vadd.f32 0.0, %v2453
      %v2455 = vpop.f32.mrb[0].mxu0
      %v2456 = vadd.f32 0.0, %v2455
      %2457 = vdwg.mxu0
      %2458 = vmatprep.subr.bf16.mxu0 %v2188
      %2459 = vmatpush1.bf16.msra.mxu0 %v2187
      %2460 = vmatprep.subr.bf16.mxu0 0
      %2461 = vmatpush1.bf16.msra.mxu0 0
      %2462 = vmatprep.subr.bf16.mxu0 0
      %2463 = vmatpush1.bf16.msra.mxu0 0
      %2464 = vmatprep.subr.bf16.mxu0 0
      %2465 = vmatpush1.bf16.msra.mxu0 0
      %2466 = vmatprep.subr.bf16.mxu0 0
      %2467 = vmatpush1.bf16.msra.mxu0 0
      %2468 = vmatprep.subr.bf16.mxu0 0
      %2469 = vmatpush1.bf16.msra.mxu0 0
      %2470 = vmatprep.subr.bf16.mxu0 0
      %2471 = vmatpush1.bf16.msra.mxu0 0
      %2472 = vmatprep.subr.bf16.mxu0 0
      %2473 = vmatpush1.bf16.msra.mxu0 0
      %2474 = vmatprep.subr.bf16.mxu0 0
      %2475 = vmatpush1.bf16.msra.mxu0 0
      %2476 = vmatprep.subr.bf16.mxu0 0
      %2477 = vmatpush1.bf16.msra.mxu0 0
      %2478 = vmatprep.subr.bf16.mxu0 0
      %2479 = vmatpush1.bf16.msra.mxu0 0
      %2480 = vmatprep.subr.bf16.mxu0 0
      %2481 = vmatpush1.bf16.msra.mxu0 0
      %2482 = vmatprep.subr.bf16.mxu0 0
      %2483 = vmatpush1.bf16.msra.mxu0 0
      %2484 = vmatprep.subr.bf16.mxu0 0
      %2485 = vmatpush1.bf16.msra.mxu0 0
      %2486 = vmatprep.subr.bf16.mxu0 0
      %2487 = vmatpush1.bf16.msra.mxu0 0
      %2488 = vmatprep.subr.bf16.mxu0 0
      %2489 = vmatpush1.bf16.msra.mxu0 0
      %2490 = vmatprep.mubr.bf16.mxu0 0
      %2491 = vmatmul.mubr.bf16.gmra.mrb[0].mxu0 %v2198
      %v2492 = vpop.f32.mrb[0].mxu0
      %v2493 = vadd.f32 0.0, %v2492
      %v2494 = vpop.f32.mrb[0].mxu0
      %v2495 = vadd.f32 0.0, %v2494
      %v2496 = vpop.f32.mrb[0].mxu0
      %v2497 = vadd.f32 0.0, %v2496
      %v2498 = vpop.f32.mrb[0].mxu0
      %v2499 = vadd.f32 0.0, %v2498
      %2500 = vdwg.mxu0
      %2501 = vmatprep.subr.bf16.mxu0 %v2190
      %2502 = vmatpush1.bf16.msra.mxu0 %v2189
      %2503 = vmatprep.subr.bf16.mxu0 0
      %2504 = vmatpush1.bf16.msra.mxu0 0
      %2505 = vmatprep.subr.bf16.mxu0 0
      %2506 = vmatpush1.bf16.msra.mxu0 0
      %2507 = vmatprep.subr.bf16.mxu0 0
      %2508 = vmatpush1.bf16.msra.mxu0 0
      %2509 = vmatprep.subr.bf16.mxu0 0
      %2510 = vmatpush1.bf16.msra.mxu0 0
      %2511 = vmatprep.subr.bf16.mxu0 0
      %2512 = vmatpush1.bf16.msra.mxu0 0
      %2513 = vmatprep.subr.bf16.mxu0 0
      %2514 = vmatpush1.bf16.msra.mxu0 0
      %2515 = vmatprep.subr.bf16.mxu0 0
      %2516 = vmatpush1.bf16.msra.mxu0 0
      %2517 = vmatprep.subr.bf16.mxu0 0
      %2518 = vmatpush1.bf16.msra.mxu0 0
      %2519 = vmatprep.subr.bf16.mxu0 0
      %2520 = vmatpush1.bf16.msra.mxu0 0
      %2521 = vmatprep.subr.bf16.mxu0 0
      %2522 = vmatpush1.bf16.msra.mxu0 0
      %2523 = vmatprep.subr.bf16.mxu0 0
      %2524 = vmatpush1.bf16.msra.mxu0 0
      %2525 = vmatprep.subr.bf16.mxu0 0
      %2526 = vmatpush1.bf16.msra.mxu0 0
      %2527 = vmatprep.subr.bf16.mxu0 0
      %2528 = vmatpush1.bf16.msra.mxu0 0
      %2529 = vmatprep.subr.bf16.mxu0 0
      %2530 = vmatpush1.bf16.msra.mxu0 0
      %2531 = vmatprep.subr.bf16.mxu0 0
      %2532 = vmatpush1.bf16.msra.mxu0 0
      %2533 = vmatprep.mubr.bf16.mxu0 0
      %2534 = vmatmul.mubr.bf16.gmra.mrb[0].mxu0 %v2198
      %v2535 = vpop.f32.mrb[0].mxu0
      %v2536 = vadd.f32 0.0, %v2535
      %v2537 = vpop.f32.mrb[0].mxu0
      %v2538 = vadd.f32 0.0, %v2537
      %v2539 = vpop.f32.mrb[0].mxu0
      %v2540 = vadd.f32 0.0, %v2539
      %v2541 = vpop.f32.mrb[0].mxu0
      %v2542 = vadd.f32 0.0, %v2541
      %2543 = vdwg.mxu0
      %v2544 = vld [vmem:[%s5] sm:$0xff]
      %v2545 = vld [vmem:[%s5 + $0x8] sm:$0xff]
      %v2546 = vld [vmem:[%s6] sm:$0xff]
      %v2547 = vld [vmem:[%s6 + $0x8] sm:$0xff]
      %2549 = vset.pattern.permute.xlu0 0
      %2550 = vperm.xlu0 %2549, %v2544
      %v2551 = vpop.permute.xlu0 %2550
      %2554 = vset.pattern.permute.xlu0 0
      %2555 = vperm.xlu0 %2554, %v2545
      %v2556 = vpop.permute.xlu0 %2555
      %2559 = vset.pattern.permute.xlu0 0
      %2560 = vperm.xlu0 %2559, %v2546
      %v2561 = vpop.permute.xlu0 %2560
      %2564 = vset.pattern.permute.xlu0 0
      %2565 = vperm.xlu0 %2564, %v2547
      %v2566 = vpop.permute.xlu0 %2565
      %v2568 = vmul.f32 %v2235, %v2551
      %v2569 = vmul.f32 %v2239, %v2556
      %v2570 = vadd.f32 %v2568, %v2561
      %v2571 = vadd.f32 %v2569, %v2566
      %v2572 = vmin.f32 %v2570, 20.0
      %v2573 = vmin.f32 %v2571, 20.0
      %v2574 = vmul.f32 %v2572, 1.442695
      %v2575 = vpow.pop %v2574
      %v2576 = vmul.f32 %v2573, 1.442695
      %v2577 = vpow.pop %v2576
      %v2578 = vadd.f32 %v2575, 2.0
      %v2579 = vadd.f32 %v2577, 2.0
      %v2580 = vmul.f32 %v2575, %v2578
      %v2581 = vmul.f32 %v2577, %v2579
      %v2582 = vadd.f32 %v2580, 2.0
      %v2583 = vadd.f32 %v2581, 2.0
      %v2584 = vrcp.pop %v2582
      %v2585 = vmul.f32 %v2580, %v2584
      %v2586 = vrcp.pop %v2583
      %v2587 = vmul.f32 %v2581, %v2586
      %v2588 = vmul.f32 %v2570, %v2585
      %v2589 = vmul.f32 %v2571, %v2587
      %v2590 = vmul.f32 %v2237, %v2551
      %v2591 = vmul.f32 %v2241, %v2556
      %v2592 = vadd.f32 %v2590, %v2561
      %v2593 = vadd.f32 %v2591, %v2566
      %v2594 = vmin.f32 %v2592, 20.0
      %v2595 = vmin.f32 %v2593, 20.0
      %v2596 = vmul.f32 %v2594, 1.442695
      %v2597 = vpow.pop %v2596
      %v2598 = vmul.f32 %v2595, 1.442695
      %v2599 = vpow.pop %v2598
      %v2600 = vadd.f32 %v2597, 2.0
      %v2601 = vadd.f32 %v2599, 2.0
      %v2602 = vmul.f32 %v2597, %v2600
      %v2603 = vmul.f32 %v2599, %v2601
      %v2604 = vadd.f32 %v2602, 2.0
      %v2605 = vadd.f32 %v2603, 2.0
      %v2606 = vrcp.pop %v2604
      %v2607 = vmul.f32 %v2602, %v2606
      %v2608 = vrcp.pop %v2605
      %v2609 = vmul.f32 %v2603, %v2608
      %v2610 = vmul.f32 %v2592, %v2607
      %v2611 = vmul.f32 %v2593, %v2609
      %v2612 = vmax.f32 %v2588, %v2610
      %v2613 = vmax.f32 %v2589, %v2611
      %v2614 = vmul.f32 %v2278, %v2551
      %v2615 = vmul.f32 %v2282, %v2556
      %v2616 = vadd.f32 %v2614, %v2561
      %v2617 = vadd.f32 %v2615, %v2566
      %v2618 = vmin.f32 %v2616, 20.0
      %v2619 = vmin.f32 %v2617, 20.0
      %v2620 = vmul.f32 %v2618, 1.442695
      %v2621 = vpow.pop %v2620
      %v2622 = vmul.f32 %v2619, 1.442695
      %v2623 = vpow.pop %v2622
      %v2624 = vadd.f32 %v2621, 2.0
      %v2625 = vadd.f32 %v2623, 2.0
      %v2626 = vmul.f32 %v2621, %v2624
      %v2627 = vmul.f32 %v2623, %v2625
      %v2628 = vadd.f32 %v2626, 2.0
      %v2629 = vadd.f32 %v2627, 2.0
      %v2630 = vrcp.pop %v2628
      %v2631 = vmul.f32 %v2626, %v2630
      %v2632 = vrcp.pop %v2629
      %v2633 = vmul.f32 %v2627, %v2632
      %v2634 = vmul.f32 %v2616, %v2631
      %v2635 = vmul.f32 %v2617, %v2633
      %v2636 = vmul.f32 %v2280, %v2551
      %v2637 = vmul.f32 %v2284, %v2556
      %v2638 = vadd.f32 %v2636, %v2561
      %v2639 = vadd.f32 %v2637, %v2566
      %v2640 = vmin.f32 %v2638, 20.0
      %v2641 = vmin.f32 %v2639, 20.0
      %v2642 = vmul.f32 %v2640, 1.442695
      %v2643 = vpow.pop %v2642
      %v2644 = vmul.f32 %v2641, 1.442695
      %v2645 = vpow.pop %v2644
      %v2646 = vadd.f32 %v2643, 2.0
      %v2647 = vadd.f32 %v2645, 2.0
      %v2648 = vmul.f32 %v2643, %v2646
      %v2649 = vmul.f32 %v2645, %v2647
      %v2650 = vadd.f32 %v2648, 2.0
      %v2651 = vadd.f32 %v2649, 2.0
      %v2652 = vrcp.pop %v2650
      %v2653 = vmul.f32 %v2648, %v2652
      %v2654 = vrcp.pop %v2651
      %v2655 = vmul.f32 %v2649, %v2654
      %v2656 = vmul.f32 %v2638, %v2653
      %v2657 = vmul.f32 %v2639, %v2655
      %v2658 = vmax.f32 %v2634, %v2656
      %v2659 = vmax.f32 %v2635, %v2657
      %v2660 = vmul.f32 %v2321, %v2551
      %v2661 = vmul.f32 %v2325, %v2556
      %v2662 = vadd.f32 %v2660, %v2561
      %v2663 = vadd.f32 %v2661, %v2566
      %v2664 = vmin.f32 %v2662, 20.0
      %v2665 = vmin.f32 %v2663, 20.0
      %v2666 = vmul.f32 %v2664, 1.442695
      %v2667 = vpow.pop %v2666
      %v2668 = vmul.f32 %v2665, 1.442695
      %v2669 = vpow.pop %v2668
      %v2670 = vadd.f32 %v2667, 2.0
      %v2671 = vadd.f32 %v2669, 2.0
      %v2672 = vmul.f32 %v2667, %v2670
      %v2673 = vmul.f32 %v2669, %v2671
      %v2674 = vadd.f32 %v2672, 2.0
      %v2675 = vadd.f32 %v2673, 2.0
      %v2676 = vrcp.pop %v2674
      %v2677 = vmul.f32 %v2672, %v2676
      %v2678 = vrcp.pop %v2675
      %v2679 = vmul.f32 %v2673, %v2678
      %v2680 = vmul.f32 %v2662, %v2677
      %v2681 = vmul.f32 %v2663, %v2679
      %v2682 = vmul.f32 %v2323, %v2551
      %v2683 = vmul.f32 %v2327, %v2556
      %v2684 = vadd.f32 %v2682, %v2561
      %v2685 = vadd.f32 %v2683, %v2566
      %v2686 = vmin.f32 %v2684, 20.0
      %v2687 = vmin.f32 %v2685, 20.0
      %v2688 = vmul.f32 %v2686, 1.442695
      %v2689 = vpow.pop %v2688
      %v2690 = vmul.f32 %v2687, 1.442695
      %v2691 = vpow.pop %v2690
      %v2692 = vadd.f32 %v2689, 2.0
      %v2693 = vadd.f32 %v2691, 2.0
      %v2694 = vmul.f32 %v2689, %v2692
      %v2695 = vmul.f32 %v2691, %v2693
      %v2696 = vadd.f32 %v2694, 2.0
      %v2697 = vadd.f32 %v2695, 2.0
      %v2698 = vrcp.pop %v2696
      %v2699 = vmul.f32 %v2694, %v2698
      %v2700 = vrcp.pop %v2697
      %v2701 = vmul.f32 %v2695, %v2700
      %v2702 = vmul.f32 %v2684, %v2699
      %v2703 = vmul.f32 %v2685, %v2701
      %v2704 = vmax.f32 %v2680, %v2702
      %v2705 = vmax.f32 %v2681, %v2703
      %v2706 = vmul.f32 %v2364, %v2551
      %v2707 = vmul.f32 %v2368, %v2556
      %v2708 = vadd.f32 %v2706, %v2561
      %v2709 = vadd.f32 %v2707, %v2566
      %v2710 = vmin.f32 %v2708, 20.0
      %v2711 = vmin.f32 %v2709, 20.0
      %v2712 = vmul.f32 %v2710, 1.442695
      %v2713 = vpow.pop %v2712
      %v2714 = vmul.f32 %v2711, 1.442695
      %v2715 = vpow.pop %v2714
      %v2716 = vadd.f32 %v2713, 2.0
      %v2717 = vadd.f32 %v2715, 2.0
      %v2718 = vmul.f32 %v2713, %v2716
      %v2719 = vmul.f32 %v2715, %v2717
      %v2720 = vadd.f32 %v2718, 2.0
      %v2721 = vadd.f32 %v2719, 2.0
      %v2722 = vrcp.pop %v2720
      %v2723 = vmul.f32 %v2718, %v2722
      %v2724 = vrcp.pop %v2721
      %v2725 = vmul.f32 %v2719, %v2724
      %v2726 = vmul.f32 %v2708, %v2723
      %v2727 = vmul.f32 %v2709, %v2725
      %v2728 = vmul.f32 %v2366, %v2551
      %v2729 = vmul.f32 %v2370, %v2556
      %v2730 = vadd.f32 %v2728, %v2561
      %v2731 = vadd.f32 %v2729, %v2566
      %v2732 = vmin.f32 %v2730, 20.0
      %v2733 = vmin.f32 %v2731, 20.0
      %v2734 = vmul.f32 %v2732, 1.442695
      %v2735 = vpow.pop %v2734
      %v2736 = vmul.f32 %v2733, 1.442695
      %v2737 = vpow.pop %v2736
      %v2738 = vadd.f32 %v2735, 2.0
      %v2739 = vadd.f32 %v2737, 2.0
      %v2740 = vmul.f32 %v2735, %v2738
      %v2741 = vmul.f32 %v2737, %v2739
      %v2742 = vadd.f32 %v2740, 2.0
      %v2743 = vadd.f32 %v2741, 2.0
      %v2744 = vrcp.pop %v2742
      %v2745 = vmul.f32 %v2740, %v2744
      %v2746 = vrcp.pop %v2743
      %v2747 = vmul.f32 %v2741, %v2746
      %v2748 = vmul.f32 %v2730, %v2745
      %v2749 = vmul.f32 %v2731, %v2747
      %v2750 = vmax.f32 %v2726, %v2748
      %v2751 = vmax.f32 %v2727, %v2749
      %v2752 = vmul.f32 %v2407, %v2551
      %v2753 = vmul.f32 %v2411, %v2556
      %v2754 = vadd.f32 %v2752, %v2561
      %v2755 = vadd.f32 %v2753, %v2566
      %v2756 = vmin.f32 %v2754, 20.0
      %v2757 = vmin.f32 %v2755, 20.0
      %v2758 = vmul.f32 %v2756, 1.442695
      %v2759 = vpow.pop %v2758
      %v2760 = vmul.f32 %v2757, 1.442695
      %v2761 = vpow.pop %v2760
      %v2762 = vadd.f32 %v2759, 2.0
      %v2763 = vadd.f32 %v2761, 2.0
      %v2764 = vmul.f32 %v2759, %v2762
      %v2765 = vmul.f32 %v2761, %v2763
      %v2766 = vadd.f32 %v2764, 2.0
      %v2767 = vadd.f32 %v2765, 2.0
      %v2768 = vrcp.pop %v2766
      %v2769 = vmul.f32 %v2764, %v2768
      %v2770 = vrcp.pop %v2767
      %v2771 = vmul.f32 %v2765, %v2770
      %v2772 = vmul.f32 %v2754, %v2769
      %v2773 = vmul.f32 %v2755, %v2771
      %v2774 = vmul.f32 %v2409, %v2551
      %v2775 = vmul.f32 %v2413, %v2556
      %v2776 = vadd.f32 %v2774, %v2561
      %v2777 = vadd.f32 %v2775, %v2566
      %v2778 = vmin.f32 %v2776, 20.0
      %v2779 = vmin.f32 %v2777, 20.0
      %v2780 = vmul.f32 %v2778, 1.442695
      %v2781 = vpow.pop %v2780
      %v2782 = vmul.f32 %v2779, 1.442695
      %v2783 = vpow.pop %v2782
      %v2784 = vadd.f32 %v2781, 2.0
      %v2785 = vadd.f32 %v2783, 2.0
      %v2786 = vmul.f32 %v2781, %v2784
      %v2787 = vmul.f32 %v2783, %v2785
      %v2788 = vadd.f32 %v2786, 2.0
      %v2789 = vadd.f32 %v2787, 2.0
      %v2790 = vrcp.pop %v2788
      %v2791 = vmul.f32 %v2786, %v2790
      %v2792 = vrcp.pop %v2789
      %v2793 = vmul.f32 %v2787, %v2792
      %v2794 = vmul.f32 %v2776, %v2791
      %v2795 = vmul.f32 %v2777, %v2793
      %v2796 = vmax.f32 %v2772, %v2794
      %v2797 = vmax.f32 %v2773, %v2795
      %v2798 = vmul.f32 %v2450, %v2551
      %v2799 = vmul.f32 %v2454, %v2556
      %v2800 = vadd.f32 %v2798, %v2561
      %v2801 = vadd.f32 %v2799, %v2566
      %v2802 = vmin.f32 %v2800, 20.0
      %v2803 = vmin.f32 %v2801, 20.0
      %v2804 = vmul.f32 %v2802, 1.442695
      %v2805 = vpow.pop %v2804
      %v2806 = vmul.f32 %v2803, 1.442695
      %v2807 = vpow.pop %v2806
      %v2808 = vadd.f32 %v2805, 2.0
      %v2809 = vadd.f32 %v2807, 2.0
      %v2810 = vmul.f32 %v2805, %v2808
      %v2811 = vmul.f32 %v2807, %v2809
      %v2812 = vadd.f32 %v2810, 2.0
      %v2813 = vadd.f32 %v2811, 2.0
      %v2814 = vrcp.pop %v2812
      %v2815 = vmul.f32 %v2810, %v2814
      %v2816 = vrcp.pop %v2813
      %v2817 = vmul.f32 %v2811, %v2816
      %v2818 = vmul.f32 %v2800, %v2815
      %v2819 = vmul.f32 %v2801, %v2817
      %v2820 = vmul.f32 %v2452, %v2551
      %v2821 = vmul.f32 %v2456, %v2556
      %v2822 = vadd.f32 %v2820, %v2561
      %v2823 = vadd.f32 %v2821, %v2566
      %v2824 = vmin.f32 %v2822, 20.0
      %v2825 = vmin.f32 %v2823, 20.0
      %v2826 = vmul.f32 %v2824, 1.442695
      %v2827 = vpow.pop %v2826
      %v2828 = vmul.f32 %v2825, 1.442695
      %v2829 = vpow.pop %v2828
      %v2830 = vadd.f32 %v2827, 2.0
      %v2831 = vadd.f32 %v2829, 2.0
      %v2832 = vmul.f32 %v2827, %v2830
      %v2833 = vmul.f32 %v2829, %v2831
      %v2834 = vadd.f32 %v2832, 2.0
      %v2835 = vadd.f32 %v2833, 2.0
      %v2836 = vrcp.pop %v2834
      %v2837 = vmul.f32 %v2832, %v2836
      %v2838 = vrcp.pop %v2835
      %v2839 = vmul.f32 %v2833, %v2838
      %v2840 = vmul.f32 %v2822, %v2837
      %v2841 = vmul.f32 %v2823, %v2839
      %v2842 = vmax.f32 %v2818, %v2840
      %v2843 = vmax.f32 %v2819, %v2841
      %v2844 = vmul.f32 %v2493, %v2551
      %v2845 = vmul.f32 %v2497, %v2556
      %v2846 = vadd.f32 %v2844, %v2561
      %v2847 = vadd.f32 %v2845, %v2566
      %v2848 = vmin.f32 %v2846, 20.0
      %v2849 = vmin.f32 %v2847, 20.0
      %v2850 = vmul.f32 %v2848, 1.442695
      %v2851 = vpow.pop %v2850
      %v2852 = vmul.f32 %v2849, 1.442695
      %v2853 = vpow.pop %v2852
      %v2854 = vadd.f32 %v2851, 2.0
      %v2855 = vadd.f32 %v2853, 2.0
      %v2856 = vmul.f32 %v2851, %v2854
      %v2857 = vmul.f32 %v2853, %v2855
      %v2858 = vadd.f32 %v2856, 2.0
      %v2859 = vadd.f32 %v2857, 2.0
      %v2860 = vrcp.pop %v2858
      %v2861 = vmul.f32 %v2856, %v2860
      %v2862 = vrcp.pop %v2859
      %v2863 = vmul.f32 %v2857, %v2862
      %v2864 = vmul.f32 %v2846, %v2861
      %v2865 = vmul.f32 %v2847, %v2863
      %v2866 = vmul.f32 %v2495, %v2551
      %v2867 = vmul.f32 %v2499, %v2556
      %v2868 = vadd.f32 %v2866, %v2561
      %v2869 = vadd.f32 %v2867, %v2566
      %v2870 = vmin.f32 %v2868, 20.0
      %v2871 = vmin.f32 %v2869, 20.0
      %v2872 = vmul.f32 %v2870, 1.442695
      %v2873 = vpow.pop %v2872
      %v2874 = vmul.f32 %v2871, 1.442695
      %v2875 = vpow.pop %v2874
      %v2876 = vadd.f32 %v2873, 2.0
      %v2877 = vadd.f32 %v2875, 2.0
      %v2878 = vmul.f32 %v2873, %v2876
      %v2879 = vmul.f32 %v2875, %v2877
      %v2880 = vadd.f32 %v2878, 2.0
      %v2881 = vadd.f32 %v2879, 2.0
      %v2882 = vrcp.pop %v2880
      %v2883 = vmul.f32 %v2878, %v2882
      %v2884 = vrcp.pop %v2881
      %v2885 = vmul.f32 %v2879, %v2884
      %v2886 = vmul.f32 %v2868, %v2883
      %v2887 = vmul.f32 %v2869, %v2885
      %v2888 = vmax.f32 %v2864, %v2886
      %v2889 = vmax.f32 %v2865, %v2887
      %v2890 = vmul.f32 %v2536, %v2551
      %v2891 = vmul.f32 %v2540, %v2556
      %v2892 = vadd.f32 %v2890, %v2561
      %v2893 = vadd.f32 %v2891, %v2566
      %v2894 = vmin.f32 %v2892, 20.0
      %v2895 = vmin.f32 %v2893, 20.0
      %v2896 = vmul.f32 %v2894, 1.442695
      %v2897 = vpow.pop %v2896
      %v2898 = vmul.f32 %v2895, 1.442695
      %v2899 = vpow.pop %v2898
      %v2900 = vadd.f32 %v2897, 2.0
      %v2901 = vadd.f32 %v2899, 2.0
      %v2902 = vmul.f32 %v2897, %v2900
      %v2903 = vmul.f32 %v2899, %v2901
      %v2904 = vadd.f32 %v2902, 2.0
      %v2905 = vadd.f32 %v2903, 2.0
      %v2906 = vrcp.pop %v2904
      %v2907 = vmul.f32 %v2902, %v2906
      %v2908 = vrcp.pop %v2905
      %v2909 = vmul.f32 %v2903, %v2908
      %v2910 = vmul.f32 %v2892, %v2907
      %v2911 = vmul.f32 %v2893, %v2909
      %v2912 = vmul.f32 %v2538, %v2551
      %v2913 = vmul.f32 %v2542, %v2556
      %v2914 = vadd.f32 %v2912, %v2561
      %v2915 = vadd.f32 %v2913, %v2566
      %v2916 = vmin.f32 %v2914, 20.0
      %v2917 = vmin.f32 %v2915, 20.0
      %v2918 = vmul.f32 %v2916, 1.442695
      %v2919 = vpow.pop %v2918
      %v2920 = vmul.f32 %v2917, 1.442695
      %v2921 = vpow.pop %v2920
      %v2922 = vadd.f32 %v2919, 2.0
      %v2923 = vadd.f32 %v2921, 2.0
      %v2924 = vmul.f32 %v2919, %v2922
      %v2925 = vmul.f32 %v2921, %v2923
      %v2926 = vadd.f32 %v2924, 2.0
      %v2927 = vadd.f32 %v2925, 2.0
      %v2928 = vrcp.pop %v2926
      %v2929 = vmul.f32 %v2924, %v2928
      %v2930 = vrcp.pop %v2927
      %v2931 = vmul.f32 %v2925, %v2930
      %v2932 = vmul.f32 %v2914, %v2929
      %v2933 = vmul.f32 %v2915, %v2931
      %v2934 = vmax.f32 %v2910, %v2932
      %v2935 = vmax.f32 %v2911, %v2933
      %v2936 = vld [vmem:[%s7] sm:$0xf]
      %v2937 = vld [vmem:[%s7 + $0x4] sm:$0xf]
      %v2938 = vld [vmem:[%s7 + $0x8] sm:$0xf]
      %v2939 = vld [vmem:[%s7 + $0xc] sm:$0xf]
      %v2940 = vld [vmem:[%s7 + $0x10] sm:$0xf]
      %v2941 = vld [vmem:[%s7 + $0x14] sm:$0xf]
      %v2942 = vld [vmem:[%s8] sm:$0xff]
      %v2943 = vld [vmem:[%s8 + $0x8] sm:$0xff]
      %v2944 = vld [vmem:[%s9] sm:$0xff]
      %v2945 = vld [vmem:[%s9 + $0x8] sm:$0xff]
      %v2946 = vpack.c.bf16 %v2613, %v2612
      %v2947 = vpack.c.bf16 %v2659, %v2658
      %v2948 = vpack.c.bf16 %v2705, %v2704
      %v2949 = vpack.c.bf16 %v2751, %v2750
      %v2950 = vpack.c.bf16 %v2797, %v2796
      %v2951 = vpack.c.bf16 %v2843, %v2842
      %v2952 = vpack.c.bf16 %v2889, %v2888
      %v2953 = vpack.c.bf16 %v2935, %v2934
      %v2960 = vunpack.c.l.b16 %v2936
      %v2961 = vunpack.c.l.b16 %v2937
      %v2962 = vunpack.c.l.b16 %v2938
      %v2963 = vunpack.c.l.b16 %v2939
      %v2964 = vunpack.c.l.b16 %v2940
      %v2965 = vunpack.c.l.b16 %v2941
      %v2966 = vpack.c.b16 %v2961, %v2960
      %v2967 = vpack.c.b16 %v2963, %v2962
      %v2968 = vpack.c.b16 %v2965, %v2964
      %v2970 = vsel %vm2196, %v2966, 0
      %v2973 = vsel %vm2196, %v2967, 0
      %v2976 = vsel %vm2196, %v2968, 0
      %2978 = vmatprep.subr.bf16.mxu0 %v2947
      %2979 = vmatpush1.bf16.msra.mxu0 %v2946
      %2980 = vmatprep.subr.bf16.mxu0 0
      %2981 = vmatpush1.bf16.msra.mxu0 0
      %2982 = vmatprep.subr.bf16.mxu0 0
      %2983 = vmatpush1.bf16.msra.mxu0 0
      %2984 = vmatprep.subr.bf16.mxu0 0
      %2985 = vmatpush1.bf16.msra.mxu0 0
      %2986 = vmatprep.subr.bf16.mxu0 0
      %2987 = vmatpush1.bf16.msra.mxu0 0
      %2988 = vmatprep.subr.bf16.mxu0 0
      %2989 = vmatpush1.bf16.msra.mxu0 0
      %2990 = vmatprep.subr.bf16.mxu0 0
      %2991 = vmatpush1.bf16.msra.mxu0 0
      %2992 = vmatprep.subr.bf16.mxu0 0
      %2993 = vmatpush1.bf16.msra.mxu0 0
      %2994 = vmatprep.subr.bf16.mxu0 0
      %2995 = vmatpush1.bf16.msra.mxu0 0
      %2996 = vmatprep.subr.bf16.mxu0 0
      %2997 = vmatpush1.bf16.msra.mxu0 0
      %2998 = vmatprep.subr.bf16.mxu0 0
      %2999 = vmatpush1.bf16.msra.mxu0 0
      %3000 = vmatprep.subr.bf16.mxu0 0
      %3001 = vmatpush1.bf16.msra.mxu0 0
      %3002 = vmatprep.subr.bf16.mxu0 0
      %3003 = vmatpush1.bf16.msra.mxu0 0
      %3004 = vmatprep.subr.bf16.mxu0 0
      %3005 = vmatpush1.bf16.msra.mxu0 0
      %3006 = vmatprep.subr.bf16.mxu0 0
      %3007 = vmatpush1.bf16.msra.mxu0 0
      %3008 = vmatprep.subr.bf16.mxu0 0
      %3009 = vmatpush1.bf16.msra.mxu0 0
      %3010 = vmatprep.mubr.bf16.mxu0 0
      %3011 = vmatmul.mubr.bf16.gmra.mrb[0].mxu0 %v2970
      %v3012 = vpop.f32.mrb[0].mxu0
      %v3013 = vadd.f32 0.0, %v3012
      %v3014 = vpop.f32.mrb[0].mxu0
      %v3015 = vadd.f32 0.0, %v3014
      %v3016 = vpop.f32.mrb[0].mxu0
      %v3017 = vadd.f32 0.0, %v3016
      %v3018 = vpop.f32.mrb[0].mxu0
      %v3019 = vadd.f32 0.0, %v3018
      %3020 = vmatprep.mubr.bf16.mxu0 0
      %3021 = vmatmul.mubr.bf16.gmra.mrb[0].mxu0 %v2973
      %v3022 = vpop.f32.mrb[0].mxu0
      %v3023 = vadd.f32 0.0, %v3022
      %v3024 = vpop.f32.mrb[0].mxu0
      %v3025 = vadd.f32 0.0, %v3024
      %v3026 = vpop.f32.mrb[0].mxu0
      %v3027 = vadd.f32 0.0, %v3026
      %v3028 = vpop.f32.mrb[0].mxu0
      %v3029 = vadd.f32 0.0, %v3028
      %3030 = vmatprep.mubr.bf16.mxu0 0
      %3031 = vmatmul.mubr.bf16.gmra.mrb[0].mxu0 %v2976
      %v3032 = vpop.f32.mrb[0].mxu0
      %v3033 = vadd.f32 0.0, %v3032
      %v3034 = vpop.f32.mrb[0].mxu0
      %v3035 = vadd.f32 0.0, %v3034
      %v3036 = vpop.f32.mrb[0].mxu0
      %v3037 = vadd.f32 0.0, %v3036
      %v3038 = vpop.f32.mrb[0].mxu0
      %v3039 = vadd.f32 0.0, %v3038
      %3040 = vdwg.mxu0
      %3041 = vmatprep.subr.bf16.mxu0 %v2949
      %3042 = vmatpush1.bf16.msra.mxu0 %v2948
      %3043 = vmatprep.subr.bf16.mxu0 0
      %3044 = vmatpush1.bf16.msra.mxu0 0
      %3045 = vmatprep.subr.bf16.mxu0 0
      %3046 = vmatpush1.bf16.msra.mxu0 0
      %3047 = vmatprep.subr.bf16.mxu0 0
      %3048 = vmatpush1.bf16.msra.mxu0 0
      %3049 = vmatprep.subr.bf16.mxu0 0
      %3050 = vmatpush1.bf16.msra.mxu0 0
      %3051 = vmatprep.subr.bf16.mxu0 0
      %3052 = vmatpush1.bf16.msra.mxu0 0
      %3053 = vmatprep.subr.bf16.mxu0 0
      %3054 = vmatpush1.bf16.msra.mxu0 0
      %3055 = vmatprep.subr.bf16.mxu0 0
      %3056 = vmatpush1.bf16.msra.mxu0 0
      %3057 = vmatprep.subr.bf16.mxu0 0
      %3058 = vmatpush1.bf16.msra.mxu0 0
      %3059 = vmatprep.subr.bf16.mxu0 0
      %3060 = vmatpush1.bf16.msra.mxu0 0
      %3061 = vmatprep.subr.bf16.mxu0 0
      %3062 = vmatpush1.bf16.msra.mxu0 0
      %3063 = vmatprep.subr.bf16.mxu0 0
      %3064 = vmatpush1.bf16.msra.mxu0 0
      %3065 = vmatprep.subr.bf16.mxu0 0
      %3066 = vmatpush1.bf16.msra.mxu0 0
      %3067 = vmatprep.subr.bf16.mxu0 0
      %3068 = vmatpush1.bf16.msra.mxu0 0
      %3069 = vmatprep.subr.bf16.mxu0 0
      %3070 = vmatpush1.bf16.msra.mxu0 0
      %3071 = vmatprep.subr.bf16.mxu0 0
      %3072 = vmatpush1.bf16.msra.mxu0 0
      %3073 = vmatprep.mubr.bf16.mxu0 0
      %3074 = vmatmul.mubr.bf16.gmra.mrb[0].mxu0 %v2970
      %v3075 = vpop.f32.mrb[0].mxu0
      %v3076 = vadd.f32 0.0, %v3075
      %v3077 = vpop.f32.mrb[0].mxu0
      %v3078 = vadd.f32 0.0, %v3077
      %v3079 = vpop.f32.mrb[0].mxu0
      %v3080 = vadd.f32 0.0, %v3079
      %v3081 = vpop.f32.mrb[0].mxu0
      %v3082 = vadd.f32 0.0, %v3081
      %3083 = vmatprep.mubr.bf16.mxu0 0
      %3084 = vmatmul.mubr.bf16.gmra.mrb[0].mxu0 %v2973
      %v3085 = vpop.f32.mrb[0].mxu0
      %v3086 = vadd.f32 0.0, %v3085
      %v3087 = vpop.f32.mrb[0].mxu0
      %v3088 = vadd.f32 0.0, %v3087
      %v3089 = vpop.f32.mrb[0].mxu0
      %v3090 = vadd.f32 0.0, %v3089
      %v3091 = vpop.f32.mrb[0].mxu0
      %v3092 = vadd.f32 0.0, %v3091
      %3093 = vmatprep.mubr.bf16.mxu0 0
      %3094 = vmatmul.mubr.bf16.gmra.mrb[0].mxu0 %v2976
      %v3095 = vpop.f32.mrb[0].mxu0
      %v3096 = vadd.f32 0.0, %v3095
      %v3097 = vpop.f32.mrb[0].mxu0
      %v3098 = vadd.f32 0.0, %v3097
      %v3099 = vpop.f32.mrb[0].mxu0
      %v3100 = vadd.f32 0.0, %v3099
      %v3101 = vpop.f32.mrb[0].mxu0
      %v3102 = vadd.f32 0.0, %v3101
      %3103 = vdwg.mxu0
      %3104 = vmatprep.subr.bf16.mxu0 %v2951
      %3105 = vmatpush1.bf16.msra.mxu0 %v2950
      %3106 = vmatprep.subr.bf16.mxu0 0
      %3107 = vmatpush1.bf16.msra.mxu0 0
      %3108 = vmatprep.subr.bf16.mxu0 0
      %3109 = vmatpush1.bf16.msra.mxu0 0
      %3110 = vmatprep.subr.bf16.mxu0 0
      %3111 = vmatpush1.bf16.msra.mxu0 0
      %3112 = vmatprep.subr.bf16.mxu0 0
      %3113 = vmatpush1.bf16.msra.mxu0 0
      %3114 = vmatprep.subr.bf16.mxu0 0
      %3115 = vmatpush1.bf16.msra.mxu0 0
      %3116 = vmatprep.subr.bf16.mxu0 0
      %3117 = vmatpush1.bf16.msra.mxu0 0
      %3118 = vmatprep.subr.bf16.mxu0 0
      %3119 = vmatpush1.bf16.msra.mxu0 0
      %3120 = vmatprep.subr.bf16.mxu0 0
      %3121 = vmatpush1.bf16.msra.mxu0 0
      %3122 = vmatprep.subr.bf16.mxu0 0
      %3123 = vmatpush1.bf16.msra.mxu0 0
      %3124 = vmatprep.subr.bf16.mxu0 0
      %3125 = vmatpush1.bf16.msra.mxu0 0
      %3126 = vmatprep.subr.bf16.mxu0 0
      %3127 = vmatpush1.bf16.msra.mxu0 0
      %3128 = vmatprep.subr.bf16.mxu0 0
      %3129 = vmatpush1.bf16.msra.mxu0 0
      %3130 = vmatprep.subr.bf16.mxu0 0
      %3131 = vmatpush1.bf16.msra.mxu0 0
      %3132 = vmatprep.subr.bf16.mxu0 0
      %3133 = vmatpush1.bf16.msra.mxu0 0
      %3134 = vmatprep.subr.bf16.mxu0 0
      %3135 = vmatpush1.bf16.msra.mxu0 0
      %3136 = vmatprep.mubr.bf16.mxu0 0
      %3137 = vmatmul.mubr.bf16.gmra.mrb[0].mxu0 %v2970
      %v3138 = vpop.f32.mrb[0].mxu0
      %v3139 = vadd.f32 0.0, %v3138
      %v3140 = vpop.f32.mrb[0].mxu0
      %v3141 = vadd.f32 0.0, %v3140
      %v3142 = vpop.f32.mrb[0].mxu0
      %v3143 = vadd.f32 0.0, %v3142
      %v3144 = vpop.f32.mrb[0].mxu0
      %v3145 = vadd.f32 0.0, %v3144
      %3146 = vmatprep.mubr.bf16.mxu0 0
      %3147 = vmatmul.mubr.bf16.gmra.mrb[0].mxu0 %v2973
      %v3148 = vpop.f32.mrb[0].mxu0
      %v3149 = vadd.f32 0.0, %v3148
      %v3150 = vpop.f32.mrb[0].mxu0
      %v3151 = vadd.f32 0.0, %v3150
      %v3152 = vpop.f32.mrb[0].mxu0
      %v3153 = vadd.f32 0.0, %v3152
      %v3154 = vpop.f32.mrb[0].mxu0
      %v3155 = vadd.f32 0.0, %v3154
      %3156 = vmatprep.mubr.bf16.mxu0 0
      %3157 = vmatmul.mubr.bf16.gmra.mrb[0].mxu0 %v2976
      %v3158 = vpop.f32.mrb[0].mxu0
      %v3159 = vadd.f32 0.0, %v3158
      %v3160 = vpop.f32.mrb[0].mxu0
      %v3161 = vadd.f32 0.0, %v3160
      %v3162 = vpop.f32.mrb[0].mxu0
      %v3163 = vadd.f32 0.0, %v3162
      %v3164 = vpop.f32.mrb[0].mxu0
      %v3165 = vadd.f32 0.0, %v3164
      %3166 = vdwg.mxu0
      %3167 = vmatprep.subr.bf16.mxu0 %v2953
      %3168 = vmatpush1.bf16.msra.mxu0 %v2952
      %3169 = vmatprep.subr.bf16.mxu0 0
      %3170 = vmatpush1.bf16.msra.mxu0 0
      %3171 = vmatprep.subr.bf16.mxu0 0
      %3172 = vmatpush1.bf16.msra.mxu0 0
      %3173 = vmatprep.subr.bf16.mxu0 0
      %3174 = vmatpush1.bf16.msra.mxu0 0
      %3175 = vmatprep.subr.bf16.mxu0 0
      %3176 = vmatpush1.bf16.msra.mxu0 0
      %3177 = vmatprep.subr.bf16.mxu0 0
      %3178 = vmatpush1.bf16.msra.mxu0 0
      %3179 = vmatprep.subr.bf16.mxu0 0
      %3180 = vmatpush1.bf16.msra.mxu0 0
      %3181 = vmatprep.subr.bf16.mxu0 0
      %3182 = vmatpush1.bf16.msra.mxu0 0
      %3183 = vmatprep.subr.bf16.mxu0 0
      %3184 = vmatpush1.bf16.msra.mxu0 0
      %3185 = vmatprep.subr.bf16.mxu0 0
      %3186 = vmatpush1.bf16.msra.mxu0 0
      %3187 = vmatprep.subr.bf16.mxu0 0
      %3188 = vmatpush1.bf16.msra.mxu0 0
      %3189 = vmatprep.subr.bf16.mxu0 0
      %3190 = vmatpush1.bf16.msra.mxu0 0
      %3191 = vmatprep.subr.bf16.mxu0 0
      %3192 = vmatpush1.bf16.msra.mxu0 0
      %3193 = vmatprep.subr.bf16.mxu0 0
      %3194 = vmatpush1.bf16.msra.mxu0 0
      %3195 = vmatprep.subr.bf16.mxu0 0
      %3196 = vmatpush1.bf16.msra.mxu0 0
      %3197 = vmatprep.subr.bf16.mxu0 0
      %3198 = vmatpush1.bf16.msra.mxu0 0
      %3199 = vmatprep.mubr.bf16.mxu0 0
      %3200 = vmatmul.mubr.bf16.gmra.mrb[0].mxu0 %v2970
      %v3201 = vpop.f32.mrb[0].mxu0
      %v3202 = vadd.f32 0.0, %v3201
      %v3203 = vpop.f32.mrb[0].mxu0
      %v3204 = vadd.f32 0.0, %v3203
      %v3205 = vpop.f32.mrb[0].mxu0
      %v3206 = vadd.f32 0.0, %v3205
      %v3207 = vpop.f32.mrb[0].mxu0
      %v3208 = vadd.f32 0.0, %v3207
      %3209 = vmatprep.mubr.bf16.mxu0 0
      %3210 = vmatmul.mubr.bf16.gmra.mrb[0].mxu0 %v2973
      %v3211 = vpop.f32.mrb[0].mxu0
      %v3212 = vadd.f32 0.0, %v3211
      %v3213 = vpop.f32.mrb[0].mxu0
      %v3214 = vadd.f32 0.0, %v3213
      %v3215 = vpop.f32.mrb[0].mxu0
      %v3216 = vadd.f32 0.0, %v3215
      %v3217 = vpop.f32.mrb[0].mxu0
      %v3218 = vadd.f32 0.0, %v3217
      %3219 = vmatprep.mubr.bf16.mxu0 0
      %3220 = vmatmul.mubr.bf16.gmra.mrb[0].mxu0 %v2976
      %v3221 = vpop.f32.mrb[0].mxu0
      %v3222 = vadd.f32 0.0, %v3221
      %v3223 = vpop.f32.mrb[0].mxu0
      %v3224 = vadd.f32 0.0, %v3223
      %v3225 = vpop.f32.mrb[0].mxu0
      %v3226 = vadd.f32 0.0, %v3225
      %v3227 = vpop.f32.mrb[0].mxu0
      %v3228 = vadd.f32 0.0, %v3227
      %3229 = vdwg.mxu0
      %3231 = vset.pattern.permute.xlu0 0
      %3232 = vperm.xlu0 %3231, %v2942
      %v3233 = vpop.permute.xlu0 %3232
      %3236 = vset.pattern.permute.xlu0 0
      %3237 = vperm.xlu0 %3236, %v2943
      %v3238 = vpop.permute.xlu0 %3237
      %3241 = vset.pattern.permute.xlu0 0
      %3242 = vperm.xlu0 %3241, %v2944
      %v3243 = vpop.permute.xlu0 %3242
      %3246 = vset.pattern.permute.xlu0 0
      %3247 = vperm.xlu0 %3246, %v2945
      %v3248 = vpop.permute.xlu0 %3247
      %3252 = vrot.lane.b32.xlu0 %v3078, 1
      %v3253 = vpop.permute.xlu0 %3252
      %3254 = vrot.lane.b32.xlu0 %v3082, 1
      %v3255 = vpop.permute.xlu0 %3254
      %vm3258 = vcmask 7168
      %v3259 = vsel %vm3258, 0.0, %v3253
      %v3260 = vsel %vm3258, 0.0, %v3255
      %v3261 = vadd.f32 %v3259, %v3023
      %v3262 = vadd.f32 %v3260, %v3027
      %v3263 = vadd.f32 %v3261, %v3035
      %v3264 = vadd.f32 %v3262, %v3039
      %v3265 = vadd.f32 %v3013, %v3025
      %v3266 = vadd.f32 %v3017, %v3029
      %v3267 = vadd.f32 %v3265, %v3096
      %v3268 = vadd.f32 %v3266, %v3100
      %v3269 = vmul.f32 %v3263, %v3233
      %v3270 = vmul.f32 %v3264, %v3238
      %v3271 = vadd.f32 %v3269, %v3243
      %v3272 = vadd.f32 %v3270, %v3248
      %v3273 = vmin.f32 %v3271, 20.0
      %v3274 = vmin.f32 %v3272, 20.0
      %v3275 = vmul.f32 %v3273, 1.442695
      %v3276 = vpow.pop %v3275
      %v3277 = vmul.f32 %v3274, 1.442695
      %v3278 = vpow.pop %v3277
      %v3279 = vadd.f32 %v3276, 2.0
      %v3280 = vadd.f32 %v3278, 2.0
      %v3281 = vmul.f32 %v3276, %v3279
      %v3282 = vmul.f32 %v3278, %v3280
      %v3283 = vadd.f32 %v3281, 2.0
      %v3284 = vadd.f32 %v3282, 2.0
      %v3285 = vrcp.pop %v3283
      %v3286 = vmul.f32 %v3281, %v3285
      %v3287 = vrcp.pop %v3284
      %v3288 = vmul.f32 %v3282, %v3287
      %v3289 = vmul.f32 %v3271, %v3286
      %v3290 = vmul.f32 %v3272, %v3288
      %v3291 = vmul.f32 %v3267, %v3233
      %v3292 = vmul.f32 %v3268, %v3238
      %v3293 = vadd.f32 %v3291, %v3243
      %v3294 = vadd.f32 %v3292, %v3248
      %v3295 = vmin.f32 %v3293, 20.0
      %v3296 = vmin.f32 %v3294, 20.0
      %v3297 = vmul.f32 %v3295, 1.442695
      %v3298 = vpow.pop %v3297
      %v3299 = vmul.f32 %v3296, 1.442695
      %v3300 = vpow.pop %v3299
      %v3301 = vadd.f32 %v3298, 2.0
      %v3302 = vadd.f32 %v3300, 2.0
      %v3303 = vmul.f32 %v3298, %v3301
      %v3304 = vmul.f32 %v3300, %v3302
      %v3305 = vadd.f32 %v3303, 2.0
      %v3306 = vadd.f32 %v3304, 2.0
      %v3307 = vrcp.pop %v3305
      %v3308 = vmul.f32 %v3303, %v3307
      %v3309 = vrcp.pop %v3306
      %v3310 = vmul.f32 %v3304, %v3309
      %v3311 = vmul.f32 %v3293, %v3308
      %v3312 = vmul.f32 %v3294, %v3310
      %v3313 = vmax.f32 %v3289, %v3311
      %v3314 = vmax.f32 %v3290, %v3312
      %v3315 = vadd.f32 %v3015, %v3086
      %v3316 = vadd.f32 %v3019, %v3090
      %v3317 = vadd.f32 %v3315, %v3098
      %v3318 = vadd.f32 %v3316, %v3102
      %3321 = vrot.lane.b32.xlu0 %v3033, 127
      %v3322 = vpop.permute.xlu0 %3321
      %3323 = vrot.lane.b32.xlu0 %v3037, 127
      %v3324 = vpop.permute.xlu0 %3323
      %vm3327 = vcmask 1039360
      %v3328 = vsel %vm3327, %v3322, 0.0
      %v3329 = vsel %vm3327, %v3324, 0.0
      %v3330 = vadd.f32 %v3076, %v3088
      %v3331 = vadd.f32 %v3080, %v3092
      %v3332 = vadd.f32 %v3330, %v3328
      %v3333 = vadd.f32 %v3331, %v3329
      %v3334 = vmul.f32 %v3317, %v3233
      %v3335 = vmul.f32 %v3318, %v3238
      %v3336 = vadd.f32 %v3334, %v3243
      %v3337 = vadd.f32 %v3335, %v3248
      %v3338 = vmin.f32 %v3336, 20.0
      %v3339 = vmin.f32 %v3337, 20.0
      %v3340 = vmul.f32 %v3338, 1.442695
      %v3341 = vpow.pop %v3340
      %v3342 = vmul.f32 %v3339, 1.442695
      %v3343 = vpow.pop %v3342
      %v3344 = vadd.f32 %v3341, 2.0
      %v3345 = vadd.f32 %v3343, 2.0
      %v3346 = vmul.f32 %v3341, %v3344
      %v3347 = vmul.f32 %v3343, %v3345
      %v3348 = vadd.f32 %v3346, 2.0
      %v3349 = vadd.f32 %v3347, 2.0
      %v3350 = vrcp.pop %v3348
      %v3351 = vmul.f32 %v3346, %v3350
      %v3352 = vrcp.pop %v3349
      %v3353 = vmul.f32 %v3347, %v3352
      %v3354 = vmul.f32 %v3336, %v3351
      %v3355 = vmul.f32 %v3337, %v3353
      %v3356 = vmul.f32 %v3332, %v3233
      %v3357 = vmul.f32 %v3333, %v3238
      %v3358 = vadd.f32 %v3356, %v3243
      %v3359 = vadd.f32 %v3357, %v3248
      %v3360 = vmin.f32 %v3358, 20.0
      %v3361 = vmin.f32 %v3359, 20.0
      %v3362 = vmul.f32 %v3360, 1.442695
      %v3363 = vpow.pop %v3362
      %v3364 = vmul.f32 %v3361, 1.442695
      %v3365 = vpow.pop %v3364
      %v3366 = vadd.f32 %v3363, 2.0
      %v3367 = vadd.f32 %v3365, 2.0
      %v3368 = vmul.f32 %v3363, %v3366
      %v3369 = vmul.f32 %v3365, %v3367
      %v3370 = vadd.f32 %v3368, 2.0
      %v3371 = vadd.f32 %v3369, 2.0
      %v3372 = vrcp.pop %v3370
      %v3373 = vmul.f32 %v3368, %v3372
      %v3374 = vrcp.pop %v3371
      %v3375 = vmul.f32 %v3369, %v3374
      %v3376 = vmul.f32 %v3358, %v3373
      %v3377 = vmul.f32 %v3359, %v3375
      %v3378 = vmax.f32 %v3354, %v3376
      %v3379 = vmax.f32 %v3355, %v3377
      %3382 = vrot.lane.b32.xlu0 %v3204, 1
      %v3383 = vpop.permute.xlu0 %3382
      %3384 = vrot.lane.b32.xlu0 %v3208, 1
      %v3385 = vpop.permute.xlu0 %3384
      %v3388 = vsel %vm3258, 0.0, %v3383
      %v3389 = vsel %vm3258, 0.0, %v3385
      %v3390 = vadd.f32 %v3388, %v3149
      %v3391 = vadd.f32 %v3389, %v3153
      %v3392 = vadd.f32 %v3390, %v3161
      %v3393 = vadd.f32 %v3391, %v3165
      %v3394 = vadd.f32 %v3139, %v3151
      %v3395 = vadd.f32 %v3143, %v3155
      %v3396 = vadd.f32 %v3394, %v3222
      %v3397 = vadd.f32 %v3395, %v3226
      %v3398 = vmul.f32 %v3392, %v3233
      %v3399 = vmul.f32 %v3393, %v3238
      %v3400 = vadd.f32 %v3398, %v3243
      %v3401 = vadd.f32 %v3399, %v3248
      %v3402 = vmin.f32 %v3400, 20.0
      %v3403 = vmin.f32 %v3401, 20.0
      %v3404 = vmul.f32 %v3402, 1.442695
      %v3405 = vpow.pop %v3404
      %v3406 = vmul.f32 %v3403, 1.442695
      %v3407 = vpow.pop %v3406
      %v3408 = vadd.f32 %v3405, 2.0
      %v3409 = vadd.f32 %v3407, 2.0
      %v3410 = vmul.f32 %v3405, %v3408
      %v3411 = vmul.f32 %v3407, %v3409
      %v3412 = vadd.f32 %v3410, 2.0
      %v3413 = vadd.f32 %v3411, 2.0
      %v3414 = vrcp.pop %v3412
      %v3415 = vmul.f32 %v3410, %v3414
      %v3416 = vrcp.pop %v3413
      %v3417 = vmul.f32 %v3411, %v3416
      %v3418 = vmul.f32 %v3400, %v3415
      %v3419 = vmul.f32 %v3401, %v3417
      %v3420 = vmul.f32 %v3396, %v3233
      %v3421 = vmul.f32 %v3397, %v3238
      %v3422 = vadd.f32 %v3420, %v3243
      %v3423 = vadd.f32 %v3421, %v3248
      %v3424 = vmin.f32 %v3422, 20.0
      %v3425 = vmin.f32 %v3423, 20.0
      %v3426 = vmul.f32 %v3424, 1.442695
      %v3427 = vpow.pop %v3426
      %v3428 = vmul.f32 %v3425, 1.442695
      %v3429 = vpow.pop %v3428
      %v3430 = vadd.f32 %v3427, 2.0
      %v3431 = vadd.f32 %v3429, 2.0
      %v3432 = vmul.f32 %v3427, %v3430
      %v3433 = vmul.f32 %v3429, %v3431
      %v3434 = vadd.f32 %v3432, 2.0
      %v3435 = vadd.f32 %v3433, 2.0
      %v3436 = vrcp.pop %v3434
      %v3437 = vmul.f32 %v3432, %v3436
      %v3438 = vrcp.pop %v3435
      %v3439 = vmul.f32 %v3433, %v3438
      %v3440 = vmul.f32 %v3422, %v3437
      %v3441 = vmul.f32 %v3423, %v3439
      %v3442 = vmax.f32 %v3418, %v3440
      %v3443 = vmax.f32 %v3419, %v3441
      %v3444 = vadd.f32 %v3141, %v3212
      %v3445 = vadd.f32 %v3145, %v3216
      %v3446 = vadd.f32 %v3444, %v3224
      %v3447 = vadd.f32 %v3445, %v3228
      %3450 = vrot.lane.b32.xlu0 %v3159, 127
      %v3451 = vpop.permute.xlu0 %3450
      %3452 = vrot.lane.b32.xlu0 %v3163, 127
      %v3453 = vpop.permute.xlu0 %3452
      %v3456 = vsel %vm3327, %v3451, 0.0
      %v3457 = vsel %vm3327, %v3453, 0.0
      %v3458 = vadd.f32 %v3202, %v3214
      %v3459 = vadd.f32 %v3206, %v3218
      %v3460 = vadd.f32 %v3458, %v3456
      %v3461 = vadd.f32 %v3459, %v3457
      %v3462 = vmul.f32 %v3446, %v3233
      %v3463 = vmul.f32 %v3447, %v3238
      %v3464 = vadd.f32 %v3462, %v3243
      %v3465 = vadd.f32 %v3463, %v3248
      %v3466 = vmin.f32 %v3464, 20.0
      %v3467 = vmin.f32 %v3465, 20.0
      %v3468 = vmul.f32 %v3466, 1.442695
      %v3469 = vpow.pop %v3468
      %v3470 = vmul.f32 %v3467, 1.442695
      %v3471 = vpow.pop %v3470
      %v3472 = vadd.f32 %v3469, 2.0
      %v3473 = vadd.f32 %v3471, 2.0
      %v3474 = vmul.f32 %v3469, %v3472
      %v3475 = vmul.f32 %v3471, %v3473
      %v3476 = vadd.f32 %v3474, 2.0
      %v3477 = vadd.f32 %v3475, 2.0
      %v3478 = vrcp.pop %v3476
      %v3479 = vmul.f32 %v3474, %v3478
      %v3480 = vrcp.pop %v3477
      %v3481 = vmul.f32 %v3475, %v3480
      %v3482 = vmul.f32 %v3464, %v3479
      %v3483 = vmul.f32 %v3465, %v3481
      %v3484 = vmul.f32 %v3460, %v3233
      %v3485 = vmul.f32 %v3461, %v3238
      %v3486 = vadd.f32 %v3484, %v3243
      %v3487 = vadd.f32 %v3485, %v3248
      %v3488 = vmin.f32 %v3486, 20.0
      %v3489 = vmin.f32 %v3487, 20.0
      %v3490 = vmul.f32 %v3488, 1.442695
      %v3491 = vpow.pop %v3490
      %v3492 = vmul.f32 %v3489, 1.442695
      %v3493 = vpow.pop %v3492
      %v3494 = vadd.f32 %v3491, 2.0
      %v3495 = vadd.f32 %v3493, 2.0
      %v3496 = vmul.f32 %v3491, %v3494
      %v3497 = vmul.f32 %v3493, %v3495
      %v3498 = vadd.f32 %v3496, 2.0
      %v3499 = vadd.f32 %v3497, 2.0
      %v3500 = vrcp.pop %v3498
      %v3501 = vmul.f32 %v3496, %v3500
      %v3502 = vrcp.pop %v3499
      %v3503 = vmul.f32 %v3497, %v3502
      %v3504 = vmul.f32 %v3486, %v3501
      %v3505 = vmul.f32 %v3487, %v3503
      %v3506 = vmax.f32 %v3482, %v3504
      %v3507 = vmax.f32 %v3483, %v3505
      %v3508 = vld [vmem:[%s10] sm:$0xf]
      %v3509 = vld [vmem:[%s10 + $0x4] sm:$0xf]
      %v3510 = vld [vmem:[%s10 + $0x8] sm:$0xf]
      %v3511 = vld [vmem:[%s11] sm:$0xff]
      %v3512 = vld [vmem:[%s12] sm:$0xff]
      %v3513 = vpack.c.bf16 %v3314, %v3313
      %v3514 = vpack.c.bf16 %v3379, %v3378
      %v3515 = vpack.c.bf16 %v3443, %v3442
      %v3516 = vpack.c.bf16 %v3507, %v3506
      %v3520 = vunpack.c.l.b16 %v3508
      %v3521 = vunpack.c.l.b16 %v3509
      %v3522 = vunpack.c.l.b16 %v3510
      %v3523 = vpack.c.b16 %v3521, %v3520
      %v3524 = vpack.c.b16 %v3522, %v3522
      %v3526 = vsel %vm2196, %v3523, 0
      %v3529 = vsel %vm2196, %v3524, 0
      %3531 = vmatprep.subr.bf16.mxu0 %v3514
      %3532 = vmatpush1.bf16.msra.mxu0 %v3513
      %3533 = vmatprep.subr.bf16.mxu0 0
      %3534 = vmatpush1.bf16.msra.mxu0 0
      %3535 = vmatprep.subr.bf16.mxu0 0
      %3536 = vmatpush1.bf16.msra.mxu0 0
      %3537 = vmatprep.subr.bf16.mxu0 0
      %3538 = vmatpush1.bf16.msra.mxu0 0
      %3539 = vmatprep.subr.bf16.mxu0 0
      %3540 = vmatpush1.bf16.msra.mxu0 0
      %3541 = vmatprep.subr.bf16.mxu0 0
      %3542 = vmatpush1.bf16.msra.mxu0 0
      %3543 = vmatprep.subr.bf16.mxu0 0
      %3544 = vmatpush1.bf16.msra.mxu0 0
      %3545 = vmatprep.subr.bf16.mxu0 0
      %3546 = vmatpush1.bf16.msra.mxu0 0
      %3547 = vmatprep.subr.bf16.mxu0 0
      %3548 = vmatpush1.bf16.msra.mxu0 0
      %3549 = vmatprep.subr.bf16.mxu0 0
      %3550 = vmatpush1.bf16.msra.mxu0 0
      %3551 = vmatprep.subr.bf16.mxu0 0
      %3552 = vmatpush1.bf16.msra.mxu0 0
      %3553 = vmatprep.subr.bf16.mxu0 0
      %3554 = vmatpush1.bf16.msra.mxu0 0
      %3555 = vmatprep.subr.bf16.mxu0 0
      %3556 = vmatpush1.bf16.msra.mxu0 0
      %3557 = vmatprep.subr.bf16.mxu0 0
      %3558 = vmatpush1.bf16.msra.mxu0 0
      %3559 = vmatprep.subr.bf16.mxu0 0
      %3560 = vmatpush1.bf16.msra.mxu0 0
      %3561 = vmatprep.subr.bf16.mxu0 0
      %3562 = vmatpush1.bf16.msra.mxu0 0
      %3563 = vmatprep.mubr.bf16.mxu0 0
      %3564 = vmatmul.mubr.bf16.gmra.mrb[0].mxu0 %v3526
      %v3565 = vpop.f32.mrb[0].mxu0
      %v3566 = vadd.f32 0.0, %v3565
      %v3567 = vpop.f32.mrb[0].mxu0
      %v3568 = vadd.f32 0.0, %v3567
      %v3569 = vpop.f32.mrb[0].mxu0
      %v3570 = vadd.f32 0.0, %v3569
      %v3571 = vpop.f32.mrb[0].mxu0
      %v3572 = vadd.f32 0.0, %v3571
      %3573 = vmatprep.mubr.bf16.mxu0 0
      %3574 = vmatmul.mubr.bf16.gmra.mrb[0].mxu0 %v3529
      %v3575 = vpop.f32.mrb[0].mxu0
      %v3576 = vadd.f32 0.0, %v3575
      %v3577 = vpop.f32.mrb[0].mxu0
      %v3578 = vadd.f32 0.0, %v3577
      %v3579 = vpop.f32.mrb[0].mxu0
      %v3580 = vpop.f32.mrb[0].mxu0
      %3581 = vdwg.mxu0
      %3582 = vmatprep.subr.bf16.mxu0 %v3516
      %3583 = vmatpush1.bf16.msra.mxu0 %v3515
      %3584 = vmatprep.subr.bf16.mxu0 0
      %3585 = vmatpush1.bf16.msra.mxu0 0
      %3586 = vmatprep.subr.bf16.mxu0 0
      %3587 = vmatpush1.bf16.msra.mxu0 0
      %3588 = vmatprep.subr.bf16.mxu0 0
      %3589 = vmatpush1.bf16.msra.mxu0 0
      %3590 = vmatprep.subr.bf16.mxu0 0
      %3591 = vmatpush1.bf16.msra.mxu0 0
      %3592 = vmatprep.subr.bf16.mxu0 0
      %3593 = vmatpush1.bf16.msra.mxu0 0
      %3594 = vmatprep.subr.bf16.mxu0 0
      %3595 = vmatpush1.bf16.msra.mxu0 0
      %3596 = vmatprep.subr.bf16.mxu0 0
      %3597 = vmatpush1.bf16.msra.mxu0 0
      %3598 = vmatprep.subr.bf16.mxu0 0
      %3599 = vmatpush1.bf16.msra.mxu0 0
      %3600 = vmatprep.subr.bf16.mxu0 0
      %3601 = vmatpush1.bf16.msra.mxu0 0
      %3602 = vmatprep.subr.bf16.mxu0 0
      %3603 = vmatpush1.bf16.msra.mxu0 0
      %3604 = vmatprep.subr.bf16.mxu0 0
      %3605 = vmatpush1.bf16.msra.mxu0 0
      %3606 = vmatprep.subr.bf16.mxu0 0
      %3607 = vmatpush1.bf16.msra.mxu0 0
      %3608 = vmatprep.subr.bf16.mxu0 0
      %3609 = vmatpush1.bf16.msra.mxu0 0
      %3610 = vmatprep.subr.bf16.mxu0 0
      %3611 = vmatpush1.bf16.msra.mxu0 0
      %3612 = vmatprep.subr.bf16.mxu0 0
      %3613 = vmatpush1.bf16.msra.mxu0 0
      %3614 = vmatprep.mubr.bf16.mxu0 0
      %3615 = vmatmul.mubr.bf16.gmra.mrb[0].mxu0 %v3526
      %v3616 = vpop.f32.mrb[0].mxu0
      %v3617 = vadd.f32 0.0, %v3616
      %v3618 = vpop.f32.mrb[0].mxu0
      %v3619 = vadd.f32 0.0, %v3618
      %v3620 = vpop.f32.mrb[0].mxu0
      %v3621 = vadd.f32 0.0, %v3620
      %v3622 = vpop.f32.mrb[0].mxu0
      %v3623 = vadd.f32 0.0, %v3622
      %3624 = vmatprep.mubr.bf16.mxu0 0
      %3625 = vmatmul.mubr.bf16.gmra.mrb[0].mxu0 %v3529
      %v3626 = vpop.f32.mrb[0].mxu0
      %v3627 = vadd.f32 0.0, %v3626
      %v3628 = vpop.f32.mrb[0].mxu0
      %v3629 = vadd.f32 0.0, %v3628
      %v3630 = vpop.f32.mrb[0].mxu0
      %v3631 = vpop.f32.mrb[0].mxu0
      %3632 = vdwg.mxu0
      %3634 = vset.pattern.permute.xlu0 0
      %3635 = vperm.xlu0 %3634, %v3511
      %v3636 = vpop.permute.xlu0 %3635
      %3639 = vset.pattern.permute.xlu0 0
      %3640 = vperm.xlu0 %3639, %v3512
      %v3641 = vpop.permute.xlu0 %3640
      %3644 = vrot.lane.b32.xlu0 %v3568, 1
      %v3645 = vpop.permute.xlu0 %3644
      %v3647 = vsel %vm3258, 0.0, %v3645
      %v3648 = vadd.f32 %v3647, %v3570
      %v3649 = vadd.f32 %v3648, %v3578
      %3651 = vrot.lane.b32.xlu0 %v3576, 127
      %v3652 = vpop.permute.xlu0 %3651
      %v3654 = vsel %vm3327, %v3652, 0.0
      %v3655 = vadd.f32 %v3566, %v3572
      %v3656 = vadd.f32 %v3655, %v3654
      %v3657 = vmul.f32 %v3649, %v3636
      %v3658 = vadd.f32 %v3657, %v3641
      %v3659 = vmin.f32 %v3658, 20.0
      %v3660 = vmul.f32 %v3659, 1.442695
      %v3661 = vpow.pop %v3660
      %v3662 = vadd.f32 %v3661, 2.0
      %v3663 = vmul.f32 %v3661, %v3662
      %v3664 = vadd.f32 %v3663, 2.0
      %v3665 = vrcp.pop %v3664
      %v3666 = vmul.f32 %v3663, %v3665
      %v3667 = vmul.f32 %v3658, %v3666
      %v3668 = vmul.f32 %v3656, %v3636
      %v3669 = vadd.f32 %v3668, %v3641
      %v3670 = vmin.f32 %v3669, 20.0
      %v3671 = vmul.f32 %v3670, 1.442695
      %v3672 = vpow.pop %v3671
      %v3673 = vadd.f32 %v3672, 2.0
      %v3674 = vmul.f32 %v3672, %v3673
      %v3675 = vadd.f32 %v3674, 2.0
      %v3676 = vrcp.pop %v3675
      %v3677 = vmul.f32 %v3674, %v3676
      %v3678 = vmul.f32 %v3669, %v3677
      %v3679 = vmax.f32 %v3667, %v3678
      %3681 = vrot.lane.b32.xlu0 %v3619, 1
      %v3682 = vpop.permute.xlu0 %3681
      %v3684 = vsel %vm3258, 0.0, %v3682
      %v3685 = vadd.f32 %v3684, %v3621
      %v3686 = vadd.f32 %v3685, %v3629
      %3688 = vrot.lane.b32.xlu0 %v3627, 127
      %v3689 = vpop.permute.xlu0 %3688
      %v3691 = vsel %vm3327, %v3689, 0.0
      %v3692 = vadd.f32 %v3617, %v3623
      %v3693 = vadd.f32 %v3692, %v3691
      %v3694 = vmul.f32 %v3686, %v3636
      %v3695 = vadd.f32 %v3694, %v3641
      %v3696 = vmin.f32 %v3695, 20.0
      %v3697 = vmul.f32 %v3696, 1.442695
      %v3698 = vpow.pop %v3697
      %v3699 = vadd.f32 %v3698, 2.0
      %v3700 = vmul.f32 %v3698, %v3699
      %v3701 = vadd.f32 %v3700, 2.0
      %v3702 = vrcp.pop %v3701
      %v3703 = vmul.f32 %v3700, %v3702
      %v3704 = vmul.f32 %v3695, %v3703
      %v3705 = vmul.f32 %v3693, %v3636
      %v3706 = vadd.f32 %v3705, %v3641
      %v3707 = vmin.f32 %v3706, 20.0
      %v3708 = vmul.f32 %v3707, 1.442695
      %v3709 = vpow.pop %v3708
      %v3710 = vadd.f32 %v3709, 2.0
      %v3711 = vmul.f32 %v3709, %v3710
      %v3712 = vadd.f32 %v3711, 2.0
      %v3713 = vrcp.pop %v3712
      %v3714 = vmul.f32 %v3711, %v3713
      %v3715 = vmul.f32 %v3706, %v3714
      %v3716 = vmax.f32 %v3704, %v3715
      %3717 = vst [vmem:[#allocation2] sm:$0x1] %v3679
      %v3720 = vunpack.c.l.s4 1983009808
      %v3721 = vunpack.c.0.s8 %v3720
      %v3722 = vlaneseq
      %v3723 = vshrl.u32 %v3722, 7
      %v3724 = vsub.s32 %v3721, %v3723
      %v3725 = vrot.slane %v3679, %v3724
      %v3726 = vrot.slane %v3725, 7
      %v3727 = vrot.slane %v3726, 2
      %3729 = vst [vmem:[#allocation2 + $0x2] sm:$0x1] %v3727
      %v3730 = vcombine.high %v3725, %v3725
      %3732 = vst [vmem:[#allocation2 + $0x4] sm:$0x1] %v3730
      %v3733 = vrot.slane %v3730, 7
      %v3734 = vrot.slane %v3733, 2
      %3736 = vst [vmem:[#allocation2 + $0x6] sm:$0x1] %v3734
      %v3737 = vcombine.high %v3679, %v3679
      %v3739 = vunpack.c.l.s4 1983009808
      %v3740 = vunpack.c.0.s8 %v3739
      %v3741 = vlaneseq
      %v3742 = vshrl.u32 %v3741, 7
      %v3743 = vsub.s32 %v3740, %v3742
      %v3744 = vrot.slane %v3737, %v3743
      %3746 = vst [vmem:[#allocation2 + $0x8] sm:$0x1] %v3744
      %v3747 = vrot.slane %v3744, 7
      %v3748 = vrot.slane %v3747, 2
      %3750 = vst [vmem:[#allocation2 + $0xa] sm:$0x1] %v3748
      %v3751 = vcombine.high %v3744, %v3744
      %3753 = vst [vmem:[#allocation2 + $0xc] sm:$0x1] %v3751
      %v3754 = vrot.slane %v3751, 7
      %v3755 = vrot.slane %v3754, 2
      %3757 = vst [vmem:[#allocation2 + $0xe] sm:$0x1] %v3755
      %3758 = vst [vmem:[#allocation2 + $0x1] sm:$0x1] %v3716
      %v3761 = vunpack.c.l.s4 1983009808
      %v3762 = vunpack.c.0.s8 %v3761
      %v3763 = vlaneseq
      %v3764 = vshrl.u32 %v3763, 7
      %v3765 = vsub.s32 %v3762, %v3764
      %v3766 = vrot.slane %v3716, %v3765
      %v3767 = vrot.slane %v3766, 7
      %v3768 = vrot.slane %v3767, 2
      %3770 = vst [vmem:[#allocation2 + $0x3] sm:$0x1] %v3768
      %v3771 = vcombine.high %v3766, %v3766
      %3773 = vst [vmem:[#allocation2 + $0x5] sm:$0x1] %v3771
      %v3774 = vrot.slane %v3771, 7
      %v3775 = vrot.slane %v3774, 2
      %3777 = vst [vmem:[#allocation2 + $0x7] sm:$0x1] %v3775
      %v3778 = vcombine.high %v3716, %v3716
      %v3780 = vunpack.c.l.s4 1983009808
      %v3781 = vunpack.c.0.s8 %v3780
      %v3782 = vlaneseq
      %v3783 = vshrl.u32 %v3782, 7
      %v3784 = vsub.s32 %v3781, %v3783
      %v3785 = vrot.slane %v3778, %v3784
      %3787 = vst [vmem:[#allocation2 + $0x9] sm:$0x1] %v3785
      %v3788 = vrot.slane %v3785, 7
      %v3789 = vrot.slane %v3788, 2
      %3791 = vst [vmem:[#allocation2 + $0xb] sm:$0x1] %v3789
      %v3792 = vcombine.high %v3785, %v3785
      %3794 = vst [vmem:[#allocation2 + $0xd] sm:$0x1] %v3792
      %v3795 = vrot.slane %v3792, 7
      %v3796 = vrot.slane %v3795, 2
      %3798 = vst [vmem:[#allocation2 + $0xf] sm:$0x1] %v3796
      %v3799 = vld [vmem:[#allocation2] sm:$0xff]
      %v3800 = vld [vmem:[#allocation2 + $0x8] sm:$0xff]
      %v3803 = vcombine.high %v3799, %v3799
      %v3805 = vunpack.c.l.s4 1983009808
      %v3806 = vunpack.c.0.s8 %v3805
      %v3807 = vlaneseq
      %v3808 = vshrl.u32 %v3807, 7
      %v3809 = vsub.s32 %v3806, %v3808
      %v3810 = vrot.slane %v3799, %v3809
      %v3812 = vunpack.c.l.s4 1983009808
      %v3813 = vunpack.c.0.s8 %v3812
      %v3814 = vlaneseq
      %v3815 = vshrl.u32 %v3814, 7
      %v3816 = vsub.s32 %v3813, %v3815
      %v3817 = vrot.slane %v3803, %v3816
      %v3818 = vcombine.high %v3810, %v3810
      %v3819 = vcombine.high %v3817, %v3817
      %v3820 = vcombine.high %v3800, %v3800
      %v3822 = vunpack.c.l.s4 1983009808
      %v3823 = vunpack.c.0.s8 %v3822
      %v3824 = vlaneseq
      %v3825 = vshrl.u32 %v3824, 7
      %v3826 = vsub.s32 %v3823, %v3825
      %v3827 = vrot.slane %v3800, %v3826
      %v3829 = vunpack.c.l.s4 1983009808
      %v3830 = vunpack.c.0.s8 %v3829
      %v3831 = vlaneseq
      %v3832 = vshrl.u32 %v3831, 7
      %v3833 = vsub.s32 %v3830, %v3832
      %v3834 = vrot.slane %v3820, %v3833
      %v3835 = vcombine.high %v3827, %v3827
      %v3836 = vcombine.high %v3834, %v3834
      %v3845 = vpack.c.bf16 %v3810, %v3810
      %v3846 = vpack.c.bf16 %v3818, %v3818
      %v3847 = vpack.c.bf16 %v3817, %v3817
      %v3848 = vpack.c.bf16 %v3819, %v3819
      %v3849 = vpack.c.bf16 %v3827, %v3827
      %v3850 = vpack.c.bf16 %v3835, %v3835
      %v3851 = vpack.c.bf16 %v3834, %v3834
      %v3852 = vpack.c.bf16 %v3836, %v3836
      %v3853 = vld [vmem:[%s13] sm:$0xff]
      %v3854 = vld [vmem:[%s13 + $0x8] sm:$0xff]
      %v3855 = vld [vmem:[%s13 + $0x10] sm:$0xff]
      %v3856 = vld [vmem:[%s13 + $0x18] sm:$0xff]
      %v3857 = vld [vmem:[%s13 + $0x20] sm:$0xff]
      %v3858 = vld [vmem:[%s13 + $0x28] sm:$0xff]
      %v3859 = vld [vmem:[%s13 + $0x30] sm:$0xff]
      %v3860 = vld [vmem:[%s13 + $0x38] sm:$0xff]
      %v3861 = vld [vmem:[%s13 + $0x40] sm:$0xff]
      %v3862 = vld [vmem:[%s13 + $0x48] sm:$0xff]
      %v3863 = vld [vmem:[%s13 + $0x50] sm:$0xff]
      %v3864 = vld [vmem:[%s13 + $0x58] sm:$0xff]
      %v3865 = vld [vmem:[%s13 + $0x60] sm:$0xff]
      %v3866 = vld [vmem:[%s13 + $0x68] sm:$0xff]
      %v3867 = vld [vmem:[%s13 + $0x70] sm:$0xff]
      %v3868 = vld [vmem:[%s13 + $0x78] sm:$0xff]
      %v3869 = vld [vmem:[%s13 + $0x80] sm:$0xff]
      %v3870 = vld [vmem:[%s13 + $0x88] sm:$0xff]
      %v3871 = vld [vmem:[%s13 + $0x90] sm:$0xff]
      %v3872 = vld [vmem:[%s13 + $0x98] sm:$0xff]
      %v3873 = vld [vmem:[%s13 + $0xa0] sm:$0xff]
      %v3874 = vld [vmem:[%s13 + $0xa8] sm:$0xff]
      %v3875 = vld [vmem:[%s13 + $0xb0] sm:$0xff]
      %v3876 = vld [vmem:[%s13 + $0xb8] sm:$0xff]
      %v3877 = vld [vmem:[%s13 + $0xc0] sm:$0xff]
      %v3878 = vld [vmem:[%s13 + $0xc8] sm:$0xff]
      %v3879 = vld [vmem:[%s13 + $0xd0] sm:$0xff]
      %v3880 = vld [vmem:[%s13 + $0xd8] sm:$0xff]
      %v3881 = vld [vmem:[%s13 + $0xe0] sm:$0xff]
      %v3882 = vld [vmem:[%s13 + $0xe8] sm:$0xff]
      %v3883 = vld [vmem:[%s13 + $0xf0] sm:$0xff]
      %v3884 = vld [vmem:[%s13 + $0xf8] sm:$0xff]
      %v3885 = vld [vmem:[%s13 + $0x100] sm:$0xff]
      %v3886 = vld [vmem:[%s13 + $0x108] sm:$0xff]
      %v3887 = vld [vmem:[%s13 + $0x110] sm:$0xff]
      %v3888 = vld [vmem:[%s13 + $0x118] sm:$0xff]
      %v3889 = vld [vmem:[%s13 + $0x120] sm:$0xff]
      %v3890 = vld [vmem:[%s13 + $0x128] sm:$0xff]
      %v3891 = vld [vmem:[%s13 + $0x130] sm:$0xff]
      %v3892 = vld [vmem:[%s13 + $0x138] sm:$0xff]
      %v3893 = vld [vmem:[%s13 + $0x140] sm:$0xff]
      %v3894 = vld [vmem:[%s13 + $0x148] sm:$0xff]
      %v3895 = vld [vmem:[%s13 + $0x150] sm:$0xff]
      %v3896 = vld [vmem:[%s13 + $0x158] sm:$0xff]
      %v3897 = vld [vmem:[%s13 + $0x160] sm:$0xff]
      %v3898 = vld [vmem:[%s13 + $0x168] sm:$0xff]
      %v3899 = vld [vmem:[%s13 + $0x170] sm:$0xff]
      %v3900 = vld [vmem:[%s13 + $0x178] sm:$0xff]
      %v3901 = vld [vmem:[%s13 + $0x180] sm:$0xff]
      %v3902 = vld [vmem:[%s13 + $0x188] sm:$0xff]
      %v3903 = vld [vmem:[%s13 + $0x190] sm:$0xff]
      %v3904 = vld [vmem:[%s13 + $0x198] sm:$0xff]
      %v3905 = vld [vmem:[%s13 + $0x1a0] sm:$0xff]
      %v3906 = vld [vmem:[%s13 + $0x1a8] sm:$0xff]
      %v3907 = vld [vmem:[%s13 + $0x1b0] sm:$0xff]
      %v3908 = vld [vmem:[%s13 + $0x1b8] sm:$0xff]
      %v3909 = vld [vmem:[%s13 + $0x1c0] sm:$0xff]
      %v3910 = vld [vmem:[%s13 + $0x1c8] sm:$0xff]
      %v3911 = vld [vmem:[%s13 + $0x1d0] sm:$0xff]
      %v3912 = vld [vmem:[%s13 + $0x1d8] sm:$0xff]
      %v3913 = vld [vmem:[%s13 + $0x1e0] sm:$0xff]
      %v3914 = vld [vmem:[%s13 + $0x1e8] sm:$0xff]
      %v3915 = vld [vmem:[%s13 + $0x1f0] sm:$0xff]
      %v3916 = vld [vmem:[%s13 + $0x1f8] sm:$0xff]
      %v3917 = vld [vmem:[%s13 + $0x200] sm:$0xff]
      %v3918 = vld [vmem:[%s13 + $0x208] sm:$0xff]
      %v3919 = vld [vmem:[%s13 + $0x210] sm:$0xff]
      %v3920 = vld [vmem:[%s13 + $0x218] sm:$0xff]
      %v3921 = vld [vmem:[%s13 + $0x220] sm:$0xff]
      %v3922 = vld [vmem:[%s13 + $0x228] sm:$0xff]
      %v3923 = vld [vmem:[%s13 + $0x230] sm:$0xff]
      %v3924 = vld [vmem:[%s13 + $0x238] sm:$0xff]
      %v3925 = vld [vmem:[%s13 + $0x240] sm:$0xff]
      %v3926 = vld [vmem:[%s13 + $0x248] sm:$0xff]
      %v3927 = vld [vmem:[%s13 + $0x250] sm:$0xff]
      %v3928 = vld [vmem:[%s13 + $0x258] sm:$0xff]
      %v3929 = vld [vmem:[%s13 + $0x260] sm:$0xff]
      %v3930 = vld [vmem:[%s13 + $0x268] sm:$0xff]
      %v3931 = vld [vmem:[%s13 + $0x270] sm:$0xff]
      %v3932 = vld [vmem:[%s13 + $0x278] sm:$0xff]
      %v3933 = vld [vmem:[%s13 + $0x280] sm:$0xff]
      %v3934 = vld [vmem:[%s13 + $0x288] sm:$0xff]
      %v3935 = vld [vmem:[%s13 + $0x290] sm:$0xff]
      %v3936 = vld [vmem:[%s13 + $0x298] sm:$0xff]
      %v3937 = vld [vmem:[%s13 + $0x2a0] sm:$0xff]
      %v3938 = vld [vmem:[%s13 + $0x2a8] sm:$0xff]
      %v3939 = vld [vmem:[%s13 + $0x2b0] sm:$0xff]
      %v3940 = vld [vmem:[%s13 + $0x2b8] sm:$0xff]
      %v3941 = vld [vmem:[%s13 + $0x2c0] sm:$0xff]
      %v3942 = vld [vmem:[%s13 + $0x2c8] sm:$0xff]
      %v3943 = vld [vmem:[%s13 + $0x2d0] sm:$0xff]
      %v3944 = vld [vmem:[%s13 + $0x2d8] sm:$0xff]
      %v3945 = vld [vmem:[%s13 + $0x2e0] sm:$0xff]
      %v3946 = vld [vmem:[%s13 + $0x2e8] sm:$0xff]
      %v3947 = vld [vmem:[%s13 + $0x2f0] sm:$0xff]
      %v3948 = vld [vmem:[%s13 + $0x2f8] sm:$0xff]
      %v3949 = vld [vmem:[%s13 + $0x300] sm:$0xff]
      %v3950 = vld [vmem:[%s13 + $0x308] sm:$0xff]
      %v3951 = vld [vmem:[%s13 + $0x310] sm:$0xff]
      %v3952 = vld [vmem:[%s13 + $0x318] sm:$0xff]
      %v3953 = vld [vmem:[%s13 + $0x320] sm:$0xff]
      %v3954 = vld [vmem:[%s13 + $0x328] sm:$0xff]
      %v3955 = vld [vmem:[%s13 + $0x330] sm:$0xff]
      %v3956 = vld [vmem:[%s13 + $0x338] sm:$0xff]
      %v3957 = vld [vmem:[%s13 + $0x340] sm:$0xff]
      %v3958 = vld [vmem:[%s13 + $0x348] sm:$0xff]
      %v3959 = vld [vmem:[%s13 + $0x350] sm:$0xff]
      %v3960 = vld [vmem:[%s13 + $0x358] sm:$0xff]
      %v3961 = vld [vmem:[%s13 + $0x360] sm:$0xff]
      %v3962 = vld [vmem:[%s13 + $0x368] sm:$0xff]
      %v3963 = vld [vmem:[%s13 + $0x370] sm:$0xff]
      %v3964 = vld [vmem:[%s13 + $0x378] sm:$0xff]
      %v3965 = vld [vmem:[%s13 + $0x380] sm:$0xff]
      %v3966 = vld [vmem:[%s13 + $0x388] sm:$0xff]
      %v3967 = vld [vmem:[%s13 + $0x390] sm:$0xff]
      %v3968 = vld [vmem:[%s13 + $0x398] sm:$0xff]
      %v3969 = vld [vmem:[%s13 + $0x3a0] sm:$0xff]
      %v3970 = vld [vmem:[%s13 + $0x3a8] sm:$0xff]
      %v3971 = vld [vmem:[%s13 + $0x3b0] sm:$0xff]
      %v3972 = vld [vmem:[%s13 + $0x3b8] sm:$0xff]
      %v3973 = vld [vmem:[%s13 + $0x3c0] sm:$0xff]
      %v3974 = vld [vmem:[%s13 + $0x3c8] sm:$0xff]
      %v3975 = vld [vmem:[%s13 + $0x3d0] sm:$0xff]
      %v3976 = vld [vmem:[%s13 + $0x3d8] sm:$0xff]
      %v3977 = vld [vmem:[%s13 + $0x3e0] sm:$0xff]
      %v3978 = vld [vmem:[%s13 + $0x3e8] sm:$0xff]
      %v3979 = vld [vmem:[%s13 + $0x3f0] sm:$0xff]
      %v3980 = vld [vmem:[%s13 + $0x3f8] sm:$0xff]
      %v3981 = vld [vmem:[%s13 + $0x400] sm:$0xff]
      %v3982 = vld [vmem:[%s13 + $0x408] sm:$0xff]
      %v3983 = vld [vmem:[%s13 + $0x410] sm:$0xff]
      %v3984 = vld [vmem:[%s13 + $0x418] sm:$0xff]
      %v3985 = vld [vmem:[%s13 + $0x420] sm:$0xff]
      %v3986 = vld [vmem:[%s13 + $0x428] sm:$0xff]
      %v3987 = vld [vmem:[%s13 + $0x430] sm:$0xff]
      %v3988 = vld [vmem:[%s13 + $0x438] sm:$0xff]
      %v3989 = vld [vmem:[%s13 + $0x440] sm:$0xff]
      %v3990 = vld [vmem:[%s13 + $0x448] sm:$0xff]
      %v3991 = vld [vmem:[%s13 + $0x450] sm:$0xff]
      %v3992 = vld [vmem:[%s13 + $0x458] sm:$0xff]
      %v3993 = vld [vmem:[%s13 + $0x460] sm:$0xff]
      %v3994 = vld [vmem:[%s13 + $0x468] sm:$0xff]
      %v3995 = vld [vmem:[%s13 + $0x470] sm:$0xff]
      %v3996 = vld [vmem:[%s13 + $0x478] sm:$0xff]
      %v3997 = vld [vmem:[%s13 + $0x480] sm:$0xff]
      %v3998 = vld [vmem:[%s13 + $0x488] sm:$0xff]
      %v3999 = vld [vmem:[%s13 + $0x490] sm:$0xff]
      %v4000 = vld [vmem:[%s13 + $0x498] sm:$0xff]
      %v4001 = vld [vmem:[%s13 + $0x4a0] sm:$0xff]
      %v4002 = vld [vmem:[%s13 + $0x4a8] sm:$0xff]
      %v4003 = vld [vmem:[%s13 + $0x4b0] sm:$0xff]
      %v4004 = vld [vmem:[%s13 + $0x4b8] sm:$0xff]
      %v4005 = vld [vmem:[%s13 + $0x4c0] sm:$0xff]
      %v4006 = vld [vmem:[%s13 + $0x4c8] sm:$0xff]
      %v4007 = vld [vmem:[%s13 + $0x4d0] sm:$0xff]
      %v4008 = vld [vmem:[%s13 + $0x4d8] sm:$0xff]
      %v4009 = vld [vmem:[%s13 + $0x4e0] sm:$0xff]
      %v4010 = vld [vmem:[%s13 + $0x4e8] sm:$0xff]
      %v4011 = vld [vmem:[%s13 + $0x4f0] sm:$0xff]
      %v4012 = vld [vmem:[%s13 + $0x4f8] sm:$0xff]
      %v4013 = vld [vmem:[%s13 + $0x500] sm:$0xff]
      %v4014 = vld [vmem:[%s13 + $0x508] sm:$0xff]
      %v4015 = vld [vmem:[%s13 + $0x510] sm:$0xff]
      %v4016 = vld [vmem:[%s13 + $0x518] sm:$0xff]
      %v4017 = vld [vmem:[%s13 + $0x520] sm:$0xff]
      %v4018 = vld [vmem:[%s13 + $0x528] sm:$0xff]
      %v4019 = vld [vmem:[%s13 + $0x530] sm:$0xff]
      %v4020 = vld [vmem:[%s13 + $0x538] sm:$0xff]
      %v4021 = vld [vmem:[%s13 + $0x540] sm:$0xff]
      %v4022 = vld [vmem:[%s13 + $0x548] sm:$0xff]
      %v4023 = vld [vmem:[%s13 + $0x550] sm:$0xff]
      %v4024 = vld [vmem:[%s13 + $0x558] sm:$0xff]
      %v4025 = vld [vmem:[%s13 + $0x560] sm:$0xff]
      %v4026 = vld [vmem:[%s13 + $0x568] sm:$0xff]
      %v4027 = vld [vmem:[%s13 + $0x570] sm:$0xff]
      %v4028 = vld [vmem:[%s13 + $0x578] sm:$0xff]
      %v4029 = vld [vmem:[%s13 + $0x580] sm:$0xff]
      %v4030 = vld [vmem:[%s13 + $0x588] sm:$0xff]
      %v4031 = vld [vmem:[%s13 + $0x590] sm:$0xff]
      %v4032 = vld [vmem:[%s13 + $0x598] sm:$0xff]
      %v4033 = vld [vmem:[%s13 + $0x5a0] sm:$0xff]
      %v4034 = vld [vmem:[%s13 + $0x5a8] sm:$0xff]
      %v4035 = vld [vmem:[%s13 + $0x5b0] sm:$0xff]
      %v4036 = vld [vmem:[%s13 + $0x5b8] sm:$0xff]
      %v4037 = vld [vmem:[%s13 + $0x5c0] sm:$0xff]
      %v4038 = vld [vmem:[%s13 + $0x5c8] sm:$0xff]
      %v4039 = vld [vmem:[%s13 + $0x5d0] sm:$0xff]
      %v4040 = vld [vmem:[%s13 + $0x5d8] sm:$0xff]
      %v4041 = vld [vmem:[%s13 + $0x5e0] sm:$0xff]
      %v4042 = vld [vmem:[%s13 + $0x5e8] sm:$0xff]
      %v4043 = vld [vmem:[%s13 + $0x5f0] sm:$0xff]
      %v4044 = vld [vmem:[%s13 + $0x5f8] sm:$0xff]
      %v4045 = vld [vmem:[%s13 + $0x600] sm:$0xff]
      %v4046 = vld [vmem:[%s13 + $0x608] sm:$0xff]
      %v4047 = vld [vmem:[%s13 + $0x610] sm:$0xff]
      %v4048 = vld [vmem:[%s13 + $0x618] sm:$0xff]
      %v4049 = vld [vmem:[%s13 + $0x620] sm:$0xff]
      %v4050 = vld [vmem:[%s13 + $0x628] sm:$0xff]
      %v4051 = vld [vmem:[%s13 + $0x630] sm:$0xff]
      %v4052 = vld [vmem:[%s13 + $0x638] sm:$0xff]
      %v4053 = vld [vmem:[%s13 + $0x640] sm:$0xff]
      %v4054 = vld [vmem:[%s13 + $0x648] sm:$0xff]
      %v4055 = vld [vmem:[%s13 + $0x650] sm:$0xff]
      %v4056 = vld [vmem:[%s13 + $0x658] sm:$0xff]
      %v4057 = vld [vmem:[%s13 + $0x660] sm:$0xff]
      %v4058 = vld [vmem:[%s13 + $0x668] sm:$0xff]
      %v4059 = vld [vmem:[%s13 + $0x670] sm:$0xff]
      %v4060 = vld [vmem:[%s13 + $0x678] sm:$0xff]
      %v4061 = vld [vmem:[%s13 + $0x680] sm:$0xff]
      %v4062 = vld [vmem:[%s13 + $0x688] sm:$0xff]
      %v4063 = vld [vmem:[%s13 + $0x690] sm:$0xff]
      %v4064 = vld [vmem:[%s13 + $0x698] sm:$0xff]
      %v4065 = vld [vmem:[%s13 + $0x6a0] sm:$0xff]
      %v4066 = vld [vmem:[%s13 + $0x6a8] sm:$0xff]
      %v4067 = vld [vmem:[%s13 + $0x6b0] sm:$0xff]
      %v4068 = vld [vmem:[%s13 + $0x6b8] sm:$0xff]
      %v4069 = vld [vmem:[%s13 + $0x6c0] sm:$0xff]
      %v4070 = vld [vmem:[%s13 + $0x6c8] sm:$0xff]
      %v4071 = vld [vmem:[%s13 + $0x6d0] sm:$0xff]
      %v4072 = vld [vmem:[%s13 + $0x6d8] sm:$0xff]
      %v4073 = vld [vmem:[%s13 + $0x6e0] sm:$0xff]
      %v4074 = vld [vmem:[%s13 + $0x6e8] sm:$0xff]
      %v4075 = vld [vmem:[%s13 + $0x6f0] sm:$0xff]
      %v4076 = vld [vmem:[%s13 + $0x6f8] sm:$0xff]
      %v4077 = vld [vmem:[%s13 + $0x700] sm:$0xff]
      %v4078 = vld [vmem:[%s13 + $0x708] sm:$0xff]
      %v4079 = vld [vmem:[%s13 + $0x710] sm:$0xff]
      %v4080 = vld [vmem:[%s13 + $0x718] sm:$0xff]
      %v4081 = vld [vmem:[%s13 + $0x720] sm:$0xff]
      %v4082 = vld [vmem:[%s13 + $0x728] sm:$0xff]
      %v4083 = vld [vmem:[%s13 + $0x730] sm:$0xff]
      %v4084 = vld [vmem:[%s13 + $0x738] sm:$0xff]
      %v4085 = vld [vmem:[%s13 + $0x740] sm:$0xff]
      %v4086 = vld [vmem:[%s13 + $0x748] sm:$0xff]
      %v4087 = vld [vmem:[%s13 + $0x750] sm:$0xff]
      %v4088 = vld [vmem:[%s13 + $0x758] sm:$0xff]
      %v4089 = vld [vmem:[%s13 + $0x760] sm:$0xff]
      %v4090 = vld [vmem:[%s13 + $0x768] sm:$0xff]
      %v4091 = vld [vmem:[%s13 + $0x770] sm:$0xff]
      %v4092 = vld [vmem:[%s13 + $0x778] sm:$0xff]
      %v4093 = vld [vmem:[%s13 + $0x780] sm:$0xff]
      %v4094 = vld [vmem:[%s13 + $0x788] sm:$0xff]
      %v4095 = vld [vmem:[%s13 + $0x790] sm:$0xff]
      %v4096 = vld [vmem:[%s13 + $0x798] sm:$0xff]
      %v4097 = vld [vmem:[%s13 + $0x7a0] sm:$0xff]
      %v4098 = vld [vmem:[%s13 + $0x7a8] sm:$0xff]
      %v4099 = vld [vmem:[%s13 + $0x7b0] sm:$0xff]
      %v4100 = vld [vmem:[%s13 + $0x7b8] sm:$0xff]
      %v4101 = vld [vmem:[%s13 + $0x7c0] sm:$0xff]
      %v4102 = vld [vmem:[%s13 + $0x7c8] sm:$0xff]
      %v4103 = vld [vmem:[%s13 + $0x7d0] sm:$0xff]
      %v4104 = vld [vmem:[%s13 + $0x7d8] sm:$0xff]
      %v4105 = vld [vmem:[%s13 + $0x7e0] sm:$0xff]
      %v4106 = vld [vmem:[%s13 + $0x7e8] sm:$0xff]
      %v4107 = vld [vmem:[%s13 + $0x7f0] sm:$0xff]
      %v4108 = vld [vmem:[%s13 + $0x7f8] sm:$0xff]
      %v4365 = vunpack.c.l.b16 %v3853
      %v4366 = vunpack.c.h.b16 %v3853
      %v4367 = vunpack.c.l.b16 %v3854
      %v4368 = vunpack.c.h.b16 %v3854
      %v4369 = vunpack.c.l.b16 %v3855
      %v4370 = vunpack.c.h.b16 %v3855
      %v4371 = vunpack.c.l.b16 %v3856
      %v4372 = vunpack.c.h.b16 %v3856
      %v4373 = vunpack.c.l.b16 %v3857
      %v4374 = vunpack.c.h.b16 %v3857
      %v4375 = vunpack.c.l.b16 %v3858
      %v4376 = vunpack.c.h.b16 %v3858
      %v4377 = vunpack.c.l.b16 %v3859
      %v4378 = vunpack.c.h.b16 %v3859
      %v4379 = vunpack.c.l.b16 %v3860
      %v4380 = vunpack.c.h.b16 %v3860
      %v4381 = vunpack.c.l.b16 %v3861
      %v4382 = vunpack.c.h.b16 %v3861
      %v4383 = vunpack.c.l.b16 %v3862
      %v4384 = vunpack.c.h.b16 %v3862
      %v4385 = vunpack.c.l.b16 %v3863
      %v4386 = vunpack.c.h.b16 %v3863
      %v4387 = vunpack.c.l.b16 %v3864
      %v4388 = vunpack.c.h.b16 %v3864
      %v4389 = vunpack.c.l.b16 %v3865
      %v4390 = vunpack.c.h.b16 %v3865
      %v4391 = vunpack.c.l.b16 %v3866
      %v4392 = vunpack.c.h.b16 %v3866
      %v4393 = vunpack.c.l.b16 %v3867
      %v4394 = vunpack.c.h.b16 %v3867
      %v4395 = vunpack.c.l.b16 %v3868
      %v4396 = vunpack.c.h.b16 %v3868
      %v4397 = vunpack.c.l.b16 %v3869
      %v4398 = vunpack.c.h.b16 %v3869
      %v4399 = vunpack.c.l.b16 %v3870
      %v4400 = vunpack.c.h.b16 %v3870
      %v4401 = vunpack.c.l.b16 %v3871
      %v4402 = vunpack.c.h.b16 %v3871
      %v4403 = vunpack.c.l.b16 %v3872
      %v4404 = vunpack.c.h.b16 %v3872
      %v4405 = vunpack.c.l.b16 %v3873
      %v4406 = vunpack.c.h.b16 %v3873
      %v4407 = vunpack.c.l.b16 %v3874
      %v4408 = vunpack.c.h.b16 %v3874
      %v4409 = vunpack.c.l.b16 %v3875
      %v4410 = vunpack.c.h.b16 %v3875
      %v4411 = vunpack.c.l.b16 %v3876
      %v4412 = vunpack.c.h.b16 %v3876
      %v4413 = vunpack.c.l.b16 %v3877
      %v4414 = vunpack.c.h.b16 %v3877
      %v4415 = vunpack.c.l.b16 %v3878
      %v4416 = vunpack.c.h.b16 %v3878
      %v4417 = vunpack.c.l.b16 %v3879
      %v4418 = vunpack.c.h.b16 %v3879
      %v4419 = vunpack.c.l.b16 %v3880
      %v4420 = vunpack.c.h.b16 %v3880
      %v4421 = vunpack.c.l.b16 %v3881
      %v4422 = vunpack.c.h.b16 %v3881
      %v4423 = vunpack.c.l.b16 %v3882
      %v4424 = vunpack.c.h.b16 %v3882
      %v4425 = vunpack.c.l.b16 %v3883
      %v4426 = vunpack.c.h.b16 %v3883
      %v4427 = vunpack.c.l.b16 %v3884
      %v4428 = vunpack.c.h.b16 %v3884
      %v4429 = vunpack.c.l.b16 %v3885
      %v4430 = vunpack.c.h.b16 %v3885
      %v4431 = vunpack.c.l.b16 %v3886
      %v4432 = vunpack.c.h.b16 %v3886
      %v4433 = vunpack.c.l.b16 %v3887
      %v4434 = vunpack.c.h.b16 %v3887
      %v4435 = vunpack.c.l.b16 %v3888
      %v4436 = vunpack.c.h.b16 %v3888
      %v4437 = vunpack.c.l.b16 %v3889
      %v4438 = vunpack.c.h.b16 %v3889
      %v4439 = vunpack.c.l.b16 %v3890
      %v4440 = vunpack.c.h.b16 %v3890
      %v4441 = vunpack.c.l.b16 %v3891
      %v4442 = vunpack.c.h.b16 %v3891
      %v4443 = vunpack.c.l.b16 %v3892
      %v4444 = vunpack.c.h.b16 %v3892
      %v4445 = vunpack.c.l.b16 %v3893
      %v4446 = vunpack.c.h.b16 %v3893
      %v4447 = vunpack.c.l.b16 %v3894
      %v4448 = vunpack.c.h.b16 %v3894
      %v4449 = vunpack.c.l.b16 %v3895
      %v4450 = vunpack.c.h.b16 %v3895
      %v4451 = vunpack.c.l.b16 %v3896
      %v4452 = vunpack.c.h.b16 %v3896
      %v4453 = vunpack.c.l.b16 %v3897
      %v4454 = vunpack.c.h.b16 %v3897
      %v4455 = vunpack.c.l.b16 %v3898
      %v4456 = vunpack.c.h.b16 %v3898
      %v4457 = vunpack.c.l.b16 %v3899
      %v4458 = vunpack.c.h.b16 %v3899
      %v4459 = vunpack.c.l.b16 %v3900
      %v4460 = vunpack.c.h.b16 %v3900
      %v4461 = vunpack.c.l.b16 %v3901
      %v4462 = vunpack.c.h.b16 %v3901
      %v4463 = vunpack.c.l.b16 %v3902
      %v4464 = vunpack.c.h.b16 %v3902
      %v4465 = vunpack.c.l.b16 %v3903
      %v4466 = vunpack.c.h.b16 %v3903
      %v4467 = vunpack.c.l.b16 %v3904
      %v4468 = vunpack.c.h.b16 %v3904
      %v4469 = vunpack.c.l.b16 %v3905
      %v4470 = vunpack.c.h.b16 %v3905
      %v4471 = vunpack.c.l.b16 %v3906
      %v4472 = vunpack.c.h.b16 %v3906
      %v4473 = vunpack.c.l.b16 %v3907
      %v4474 = vunpack.c.h.b16 %v3907
      %v4475 = vunpack.c.l.b16 %v3908
      %v4476 = vunpack.c.h.b16 %v3908
      %v4477 = vunpack.c.l.b16 %v3909
      %v4478 = vunpack.c.h.b16 %v3909
      %v4479 = vunpack.c.l.b16 %v3910
      %v4480 = vunpack.c.h.b16 %v3910
      %v4481 = vunpack.c.l.b16 %v3911
      %v4482 = vunpack.c.h.b16 %v3911
      %v4483 = vunpack.c.l.b16 %v3912
      %v4484 = vunpack.c.h.b16 %v3912
      %v4485 = vunpack.c.l.b16 %v3913
      %v4486 = vunpack.c.h.b16 %v3913
      %v4487 = vunpack.c.l.b16 %v3914
      %v4488 = vunpack.c.h.b16 %v3914
      %v4489 = vunpack.c.l.b16 %v3915
      %v4490 = vunpack.c.h.b16 %v3915
      %v4491 = vunpack.c.l.b16 %v3916
      %v4492 = vunpack.c.h.b16 %v3916
      %v4493 = vunpack.c.l.b16 %v3917
      %v4494 = vunpack.c.h.b16 %v3917
      %v4495 = vunpack.c.l.b16 %v3918
      %v4496 = vunpack.c.h.b16 %v3918
      %v4497 = vunpack.c.l.b16 %v3919
      %v4498 = vunpack.c.h.b16 %v3919
      %v4499 = vunpack.c.l.b16 %v3920
      %v4500 = vunpack.c.h.b16 %v3920
      %v4501 = vunpack.c.l.b16 %v3921
      %v4502 = vunpack.c.h.b16 %v3921
      %v4503 = vunpack.c.l.b16 %v3922
      %v4504 = vunpack.c.h.b16 %v3922
      %v4505 = vunpack.c.l.b16 %v3923
      %v4506 = vunpack.c.h.b16 %v3923
      %v4507 = vunpack.c.l.b16 %v3924
      %v4508 = vunpack.c.h.b16 %v3924
      %v4509 = vunpack.c.l.b16 %v3925
      %v4510 = vunpack.c.h.b16 %v3925
      %v4511 = vunpack.c.l.b16 %v3926
      %v4512 = vunpack.c.h.b16 %v3926
      %v4513 = vunpack.c.l.b16 %v3927
      %v4514 = vunpack.c.h.b16 %v3927
      %v4515 = vunpack.c.l.b16 %v3928
      %v4516 = vunpack.c.h.b16 %v3928
      %v4517 = vunpack.c.l.b16 %v3929
      %v4518 = vunpack.c.h.b16 %v3929
      %v4519 = vunpack.c.l.b16 %v3930
      %v4520 = vunpack.c.h.b16 %v3930
      %v4521 = vunpack.c.l.b16 %v3931
      %v4522 = vunpack.c.h.b16 %v3931
      %v4523 = vunpack.c.l.b16 %v3932
      %v4524 = vunpack.c.h.b16 %v3932
      %v4525 = vunpack.c.l.b16 %v3933
      %v4526 = vunpack.c.h.b16 %v3933
      %v4527 = vunpack.c.l.b16 %v3934
      %v4528 = vunpack.c.h.b16 %v3934
      %v4529 = vunpack.c.l.b16 %v3935
      %v4530 = vunpack.c.h.b16 %v3935
      %v4531 = vunpack.c.l.b16 %v3936
      %v4532 = vunpack.c.h.b16 %v3936
      %v4533 = vunpack.c.l.b16 %v3937
      %v4534 = vunpack.c.h.b16 %v3937
      %v4535 = vunpack.c.l.b16 %v3938
      %v4536 = vunpack.c.h.b16 %v3938
      %v4537 = vunpack.c.l.b16 %v3939
      %v4538 = vunpack.c.h.b16 %v3939
      %v4539 = vunpack.c.l.b16 %v3940
      %v4540 = vunpack.c.h.b16 %v3940
      %v4541 = vunpack.c.l.b16 %v3941
      %v4542 = vunpack.c.h.b16 %v3941
      %v4543 = vunpack.c.l.b16 %v3942
      %v4544 = vunpack.c.h.b16 %v3942
      %v4545 = vunpack.c.l.b16 %v3943
      %v4546 = vunpack.c.h.b16 %v3943
      %v4547 = vunpack.c.l.b16 %v3944
      %v4548 = vunpack.c.h.b16 %v3944
      %v4549 = vunpack.c.l.b16 %v3945
      %v4550 = vunpack.c.h.b16 %v3945
      %v4551 = vunpack.c.l.b16 %v3946
      %v4552 = vunpack.c.h.b16 %v3946
      %v4553 = vunpack.c.l.b16 %v3947
      %v4554 = vunpack.c.h.b16 %v3947
      %v4555 = vunpack.c.l.b16 %v3948
      %v4556 = vunpack.c.h.b16 %v3948
      %v4557 = vunpack.c.l.b16 %v3949
      %v4558 = vunpack.c.h.b16 %v3949
      %v4559 = vunpack.c.l.b16 %v3950
      %v4560 = vunpack.c.h.b16 %v3950
      %v4561 = vunpack.c.l.b16 %v3951
      %v4562 = vunpack.c.h.b16 %v3951
      %v4563 = vunpack.c.l.b16 %v3952
      %v4564 = vunpack.c.h.b16 %v3952
      %v4565 = vunpack.c.l.b16 %v3953
      %v4566 = vunpack.c.h.b16 %v3953
      %v4567 = vunpack.c.l.b16 %v3954
      %v4568 = vunpack.c.h.b16 %v3954
      %v4569 = vunpack.c.l.b16 %v3955
      %v4570 = vunpack.c.h.b16 %v3955
      %v4571 = vunpack.c.l.b16 %v3956
      %v4572 = vunpack.c.h.b16 %v3956
      %v4573 = vunpack.c.l.b16 %v3957
      %v4574 = vunpack.c.h.b16 %v3957
      %v4575 = vunpack.c.l.b16 %v3958
      %v4576 = vunpack.c.h.b16 %v3958
      %v4577 = vunpack.c.l.b16 %v3959
      %v4578 = vunpack.c.h.b16 %v3959
      %v4579 = vunpack.c.l.b16 %v3960
      %v4580 = vunpack.c.h.b16 %v3960
      %v4581 = vunpack.c.l.b16 %v3961
      %v4582 = vunpack.c.h.b16 %v3961
      %v4583 = vunpack.c.l.b16 %v3962
      %v4584 = vunpack.c.h.b16 %v3962
      %v4585 = vunpack.c.l.b16 %v3963
      %v4586 = vunpack.c.h.b16 %v3963
      %v4587 = vunpack.c.l.b16 %v3964
      %v4588 = vunpack.c.h.b16 %v3964
      %v4589 = vunpack.c.l.b16 %v3965
      %v4590 = vunpack.c.h.b16 %v3965
      %v4591 = vunpack.c.l.b16 %v3966
      %v4592 = vunpack.c.h.b16 %v3966
      %v4593 = vunpack.c.l.b16 %v3967
      %v4594 = vunpack.c.h.b16 %v3967
      %v4595 = vunpack.c.l.b16 %v3968
      %v4596 = vunpack.c.h.b16 %v3968
      %v4597 = vunpack.c.l.b16 %v3969
      %v4598 = vunpack.c.h.b16 %v3969
      %v4599 = vunpack.c.l.b16 %v3970
      %v4600 = vunpack.c.h.b16 %v3970
      %v4601 = vunpack.c.l.b16 %v3971
      %v4602 = vunpack.c.h.b16 %v3971
      %v4603 = vunpack.c.l.b16 %v3972
      %v4604 = vunpack.c.h.b16 %v3972
      %v4605 = vunpack.c.l.b16 %v3973
      %v4606 = vunpack.c.h.b16 %v3973
      %v4607 = vunpack.c.l.b16 %v3974
      %v4608 = vunpack.c.h.b16 %v3974
      %v4609 = vunpack.c.l.b16 %v3975
      %v4610 = vunpack.c.h.b16 %v3975
      %v4611 = vunpack.c.l.b16 %v3976
      %v4612 = vunpack.c.h.b16 %v3976
      %v4613 = vunpack.c.l.b16 %v3977
      %v4614 = vunpack.c.h.b16 %v3977
      %v4615 = vunpack.c.l.b16 %v3978
      %v4616 = vunpack.c.h.b16 %v3978
      %v4617 = vunpack.c.l.b16 %v3979
      %v4618 = vunpack.c.h.b16 %v3979
      %v4619 = vunpack.c.l.b16 %v3980
      %v4620 = vunpack.c.h.b16 %v3980
      %v4621 = vunpack.c.l.b16 %v3981
      %v4622 = vunpack.c.h.b16 %v3981
      %v4623 = vunpack.c.l.b16 %v3982
      %v4624 = vunpack.c.h.b16 %v3982
      %v4625 = vunpack.c.l.b16 %v3983
      %v4626 = vunpack.c.h.b16 %v3983
      %v4627 = vunpack.c.l.b16 %v3984
      %v4628 = vunpack.c.h.b16 %v3984
      %v4629 = vunpack.c.l.b16 %v3985
      %v4630 = vunpack.c.h.b16 %v3985
      %v4631 = vunpack.c.l.b16 %v3986
      %v4632 = vunpack.c.h.b16 %v3986
      %v4633 = vunpack.c.l.b16 %v3987
      %v4634 = vunpack.c.h.b16 %v3987
      %v4635 = vunpack.c.l.b16 %v3988
      %v4636 = vunpack.c.h.b16 %v3988
      %v4637 = vunpack.c.l.b16 %v3989
      %v4638 = vunpack.c.h.b16 %v3989
      %v4639 = vunpack.c.l.b16 %v3990
      %v4640 = vunpack.c.h.b16 %v3990
      %v4641 = vunpack.c.l.b16 %v3991
      %v4642 = vunpack.c.h.b16 %v3991
      %v4643 = vunpack.c.l.b16 %v3992
      %v4644 = vunpack.c.h.b16 %v3992
      %v4645 = vunpack.c.l.b16 %v3993
      %v4646 = vunpack.c.h.b16 %v3993
      %v4647 = vunpack.c.l.b16 %v3994
      %v4648 = vunpack.c.h.b16 %v3994
      %v4649 = vunpack.c.l.b16 %v3995
      %v4650 = vunpack.c.h.b16 %v3995
      %v4651 = vunpack.c.l.b16 %v3996
      %v4652 = vunpack.c.h.b16 %v3996
      %v4653 = vunpack.c.l.b16 %v3997
      %v4654 = vunpack.c.h.b16 %v3997
      %v4655 = vunpack.c.l.b16 %v3998
      %v4656 = vunpack.c.h.b16 %v3998
      %v4657 = vunpack.c.l.b16 %v3999
      %v4658 = vunpack.c.h.b16 %v3999
      %v4659 = vunpack.c.l.b16 %v4000
      %v4660 = vunpack.c.h.b16 %v4000
      %v4661 = vunpack.c.l.b16 %v4001
      %v4662 = vunpack.c.h.b16 %v4001
      %v4663 = vunpack.c.l.b16 %v4002
      %v4664 = vunpack.c.h.b16 %v4002
      %v4665 = vunpack.c.l.b16 %v4003
      %v4666 = vunpack.c.h.b16 %v4003
      %v4667 = vunpack.c.l.b16 %v4004
      %v4668 = vunpack.c.h.b16 %v4004
      %v4669 = vunpack.c.l.b16 %v4005
      %v4670 = vunpack.c.h.b16 %v4005
      %v4671 = vunpack.c.l.b16 %v4006
      %v4672 = vunpack.c.h.b16 %v4006
      %v4673 = vunpack.c.l.b16 %v4007
      %v4674 = vunpack.c.h.b16 %v4007
      %v4675 = vunpack.c.l.b16 %v4008
      %v4676 = vunpack.c.h.b16 %v4008
      %v4677 = vunpack.c.l.b16 %v4009
      %v4678 = vunpack.c.h.b16 %v4009
      %v4679 = vunpack.c.l.b16 %v4010
      %v4680 = vunpack.c.h.b16 %v4010
      %v4681 = vunpack.c.l.b16 %v4011
      %v4682 = vunpack.c.h.b16 %v4011
      %v4683 = vunpack.c.l.b16 %v4012
      %v4684 = vunpack.c.h.b16 %v4012
      %v4685 = vunpack.c.l.b16 %v4013
      %v4686 = vunpack.c.h.b16 %v4013
      %v4687 = vunpack.c.l.b16 %v4014
      %v4688 = vunpack.c.h.b16 %v4014
      %v4689 = vunpack.c.l.b16 %v4015
      %v4690 = vunpack.c.h.b16 %v4015
      %v4691 = vunpack.c.l.b16 %v4016
      %v4692 = vunpack.c.h.b16 %v4016
      %v4693 = vunpack.c.l.b16 %v4017
      %v4694 = vunpack.c.h.b16 %v4017
      %v4695 = vunpack.c.l.b16 %v4018
      %v4696 = vunpack.c.h.b16 %v4018
      %v4697 = vunpack.c.l.b16 %v4019
      %v4698 = vunpack.c.h.b16 %v4019
      %v4699 = vunpack.c.l.b16 %v4020
      %v4700 = vunpack.c.h.b16 %v4020
      %v4701 = vunpack.c.l.b16 %v4021
      %v4702 = vunpack.c.h.b16 %v4021
      %v4703 = vunpack.c.l.b16 %v4022
      %v4704 = vunpack.c.h.b16 %v4022
      %v4705 = vunpack.c.l.b16 %v4023
      %v4706 = vunpack.c.h.b16 %v4023
      %v4707 = vunpack.c.l.b16 %v4024
      %v4708 = vunpack.c.h.b16 %v4024
      %v4709 = vunpack.c.l.b16 %v4025
      %v4710 = vunpack.c.h.b16 %v4025
      %v4711 = vunpack.c.l.b16 %v4026
      %v4712 = vunpack.c.h.b16 %v4026
      %v4713 = vunpack.c.l.b16 %v4027
      %v4714 = vunpack.c.h.b16 %v4027
      %v4715 = vunpack.c.l.b16 %v4028
      %v4716 = vunpack.c.h.b16 %v4028
      %v4717 = vunpack.c.l.b16 %v4029
      %v4718 = vunpack.c.h.b16 %v4029
      %v4719 = vunpack.c.l.b16 %v4030
      %v4720 = vunpack.c.h.b16 %v4030
      %v4721 = vunpack.c.l.b16 %v4031
      %v4722 = vunpack.c.h.b16 %v4031
      %v4723 = vunpack.c.l.b16 %v4032
      %v4724 = vunpack.c.h.b16 %v4032
      %v4725 = vunpack.c.l.b16 %v4033
      %v4726 = vunpack.c.h.b16 %v4033
      %v4727 = vunpack.c.l.b16 %v4034
      %v4728 = vunpack.c.h.b16 %v4034
      %v4729 = vunpack.c.l.b16 %v4035
      %v4730 = vunpack.c.h.b16 %v4035
      %v4731 = vunpack.c.l.b16 %v4036
      %v4732 = vunpack.c.h.b16 %v4036
      %v4733 = vunpack.c.l.b16 %v4037
      %v4734 = vunpack.c.h.b16 %v4037
      %v4735 = vunpack.c.l.b16 %v4038
      %v4736 = vunpack.c.h.b16 %v4038
      %v4737 = vunpack.c.l.b16 %v4039
      %v4738 = vunpack.c.h.b16 %v4039
      %v4739 = vunpack.c.l.b16 %v4040
      %v4740 = vunpack.c.h.b16 %v4040
      %v4741 = vunpack.c.l.b16 %v4041
      %v4742 = vunpack.c.h.b16 %v4041
      %v4743 = vunpack.c.l.b16 %v4042
      %v4744 = vunpack.c.h.b16 %v4042
      %v4745 = vunpack.c.l.b16 %v4043
      %v4746 = vunpack.c.h.b16 %v4043
      %v4747 = vunpack.c.l.b16 %v4044
      %v4748 = vunpack.c.h.b16 %v4044
      %v4749 = vunpack.c.l.b16 %v4045
      %v4750 = vunpack.c.h.b16 %v4045
      %v4751 = vunpack.c.l.b16 %v4046
      %v4752 = vunpack.c.h.b16 %v4046
      %v4753 = vunpack.c.l.b16 %v4047
      %v4754 = vunpack.c.h.b16 %v4047
      %v4755 = vunpack.c.l.b16 %v4048
      %v4756 = vunpack.c.h.b16 %v4048
      %v4757 = vunpack.c.l.b16 %v4049
      %v4758 = vunpack.c.h.b16 %v4049
      %v4759 = vunpack.c.l.b16 %v4050
      %v4760 = vunpack.c.h.b16 %v4050
      %v4761 = vunpack.c.l.b16 %v4051
      %v4762 = vunpack.c.h.b16 %v4051
      %v4763 = vunpack.c.l.b16 %v4052
      %v4764 = vunpack.c.h.b16 %v4052
      %v4765 = vunpack.c.l.b16 %v4053
      %v4766 = vunpack.c.h.b16 %v4053
      %v4767 = vunpack.c.l.b16 %v4054
      %v4768 = vunpack.c.h.b16 %v4054
      %v4769 = vunpack.c.l.b16 %v4055
      %v4770 = vunpack.c.h.b16 %v4055
      %v4771 = vunpack.c.l.b16 %v4056
      %v4772 = vunpack.c.h.b16 %v4056
      %v4773 = vunpack.c.l.b16 %v4057
      %v4774 = vunpack.c.h.b16 %v4057
      %v4775 = vunpack.c.l.b16 %v4058
      %v4776 = vunpack.c.h.b16 %v4058
      %v4777 = vunpack.c.l.b16 %v4059
      %v4778 = vunpack.c.h.b16 %v4059
      %v4779 = vunpack.c.l.b16 %v4060
      %v4780 = vunpack.c.h.b16 %v4060
      %v4781 = vunpack.c.l.b16 %v4061
      %v4782 = vunpack.c.h.b16 %v4061
      %v4783 = vunpack.c.l.b16 %v4062
      %v4784 = vunpack.c.h.b16 %v4062
      %v4785 = vunpack.c.l.b16 %v4063
      %v4786 = vunpack.c.h.b16 %v4063
      %v4787 = vunpack.c.l.b16 %v4064
      %v4788 = vunpack.c.h.b16 %v4064
      %v4789 = vunpack.c.l.b16 %v4065
      %v4790 = vunpack.c.h.b16 %v4065
      %v4791 = vunpack.c.l.b16 %v4066
      %v4792 = vunpack.c.h.b16 %v4066
      %v4793 = vunpack.c.l.b16 %v4067
      %v4794 = vunpack.c.h.b16 %v4067
      %v4795 = vunpack.c.l.b16 %v4068
      %v4796 = vunpack.c.h.b16 %v4068
      %v4797 = vunpack.c.l.b16 %v4069
      %v4798 = vunpack.c.h.b16 %v4069
      %v4799 = vunpack.c.l.b16 %v4070
      %v4800 = vunpack.c.h.b16 %v4070
      %v4801 = vunpack.c.l.b16 %v4071
      %v4802 = vunpack.c.h.b16 %v4071
      %v4803 = vunpack.c.l.b16 %v4072
      %v4804 = vunpack.c.h.b16 %v4072
      %v4805 = vunpack.c.l.b16 %v4073
      %v4806 = vunpack.c.h.b16 %v4073
      %v4807 = vunpack.c.l.b16 %v4074
      %v4808 = vunpack.c.h.b16 %v4074
      %v4809 = vunpack.c.l.b16 %v4075
      %v4810 = vunpack.c.h.b16 %v4075
      %v4811 = vunpack.c.l.b16 %v4076
      %v4812 = vunpack.c.h.b16 %v4076
      %v4813 = vunpack.c.l.b16 %v4077
      %v4814 = vunpack.c.h.b16 %v4077
      %v4815 = vunpack.c.l.b16 %v4078
      %v4816 = vunpack.c.h.b16 %v4078
      %v4817 = vunpack.c.l.b16 %v4079
      %v4818 = vunpack.c.h.b16 %v4079
      %v4819 = vunpack.c.l.b16 %v4080
      %v4820 = vunpack.c.h.b16 %v4080
      %v4821 = vunpack.c.l.b16 %v4081
      %v4822 = vunpack.c.h.b16 %v4081
      %v4823 = vunpack.c.l.b16 %v4082
      %v4824 = vunpack.c.h.b16 %v4082
      %v4825 = vunpack.c.l.b16 %v4083
      %v4826 = vunpack.c.h.b16 %v4083
      %v4827 = vunpack.c.l.b16 %v4084
      %v4828 = vunpack.c.h.b16 %v4084
      %v4829 = vunpack.c.l.b16 %v4085
      %v4830 = vunpack.c.h.b16 %v4085
      %v4831 = vunpack.c.l.b16 %v4086
      %v4832 = vunpack.c.h.b16 %v4086
      %v4833 = vunpack.c.l.b16 %v4087
      %v4834 = vunpack.c.h.b16 %v4087
      %v4835 = vunpack.c.l.b16 %v4088
      %v4836 = vunpack.c.h.b16 %v4088
      %v4837 = vunpack.c.l.b16 %v4089
      %v4838 = vunpack.c.h.b16 %v4089
      %v4839 = vunpack.c.l.b16 %v4090
      %v4840 = vunpack.c.h.b16 %v4090
      %v4841 = vunpack.c.l.b16 %v4091
      %v4842 = vunpack.c.h.b16 %v4091
      %v4843 = vunpack.c.l.b16 %v4092
      %v4844 = vunpack.c.h.b16 %v4092
      %v4845 = vunpack.c.l.b16 %v4093
      %v4846 = vunpack.c.h.b16 %v4093
      %v4847 = vunpack.c.l.b16 %v4094
      %v4848 = vunpack.c.h.b16 %v4094
      %v4849 = vunpack.c.l.b16 %v4095
      %v4850 = vunpack.c.h.b16 %v4095
      %v4851 = vunpack.c.l.b16 %v4096
      %v4852 = vunpack.c.h.b16 %v4096
      %v4853 = vunpack.c.l.b16 %v4097
      %v4854 = vunpack.c.h.b16 %v4097
      %v4855 = vunpack.c.l.b16 %v4098
      %v4856 = vunpack.c.h.b16 %v4098
      %v4857 = vunpack.c.l.b16 %v4099
      %v4858 = vunpack.c.h.b16 %v4099
      %v4859 = vunpack.c.l.b16 %v4100
      %v4860 = vunpack.c.h.b16 %v4100
      %v4861 = vunpack.c.l.b16 %v4101
      %v4862 = vunpack.c.h.b16 %v4101
      %v4863 = vunpack.c.l.b16 %v4102
      %v4864 = vunpack.c.h.b16 %v4102
      %v4865 = vunpack.c.l.b16 %v4103
      %v4866 = vunpack.c.h.b16 %v4103
      %v4867 = vunpack.c.l.b16 %v4104
      %v4868 = vunpack.c.h.b16 %v4104
      %v4869 = vunpack.c.l.b16 %v4105
      %v4870 = vunpack.c.h.b16 %v4105
      %v4871 = vunpack.c.l.b16 %v4106
      %v4872 = vunpack.c.h.b16 %v4106
      %v4873 = vunpack.c.l.b16 %v4107
      %v4874 = vunpack.c.h.b16 %v4107
      %v4875 = vunpack.c.l.b16 %v4108
      %v4876 = vunpack.c.h.b16 %v4108
      %v4877 = vpack.c.b16 %v4369, %v4365
      %v4878 = vpack.c.b16 %v4370, %v4366
      %v4879 = vpack.c.b16 %v4371, %v4367
      %v4880 = vpack.c.b16 %v4372, %v4368
      %v4881 = vpack.c.b16 %v4377, %v4373
      %v4882 = vpack.c.b16 %v4378, %v4374
      %v4883 = vpack.c.b16 %v4379, %v4375
      %v4884 = vpack.c.b16 %v4380, %v4376
      %v4885 = vpack.c.b16 %v4385, %v4381
      %v4886 = vpack.c.b16 %v4386, %v4382
      %v4887 = vpack.c.b16 %v4387, %v4383
      %v4888 = vpack.c.b16 %v4388, %v4384
      %v4889 = vpack.c.b16 %v4393, %v4389
      %v4890 = vpack.c.b16 %v4394, %v4390
      %v4891 = vpack.c.b16 %v4395, %v4391
      %v4892 = vpack.c.b16 %v4396, %v4392
      %v4893 = vpack.c.b16 %v4401, %v4397
      %v4894 = vpack.c.b16 %v4402, %v4398
      %v4895 = vpack.c.b16 %v4403, %v4399
      %v4896 = vpack.c.b16 %v4404, %v4400
      %v4897 = vpack.c.b16 %v4409, %v4405
      %v4898 = vpack.c.b16 %v4410, %v4406
      %v4899 = vpack.c.b16 %v4411, %v4407
      %v4900 = vpack.c.b16 %v4412, %v4408
      %v4901 = vpack.c.b16 %v4417, %v4413
      %v4902 = vpack.c.b16 %v4418, %v4414
      %v4903 = vpack.c.b16 %v4419, %v4415
      %v4904 = vpack.c.b16 %v4420, %v4416
      %v4905 = vpack.c.b16 %v4425, %v4421
      %v4906 = vpack.c.b16 %v4426, %v4422
      %v4907 = vpack.c.b16 %v4427, %v4423
      %v4908 = vpack.c.b16 %v4428, %v4424
      %v4909 = vpack.c.b16 %v4433, %v4429
      %v4910 = vpack.c.b16 %v4434, %v4430
      %v4911 = vpack.c.b16 %v4435, %v4431
      %v4912 = vpack.c.b16 %v4436, %v4432
      %v4913 = vpack.c.b16 %v4441, %v4437
      %v4914 = vpack.c.b16 %v4442, %v4438
      %v4915 = vpack.c.b16 %v4443, %v4439
      %v4916 = vpack.c.b16 %v4444, %v4440
      %v4917 = vpack.c.b16 %v4449, %v4445
      %v4918 = vpack.c.b16 %v4450, %v4446
      %v4919 = vpack.c.b16 %v4451, %v4447
      %v4920 = vpack.c.b16 %v4452, %v4448
      %v4921 = vpack.c.b16 %v4457, %v4453
      %v4922 = vpack.c.b16 %v4458, %v4454
      %v4923 = vpack.c.b16 %v4459, %v4455
      %v4924 = vpack.c.b16 %v4460, %v4456
      %v4925 = vpack.c.b16 %v4465, %v4461
      %v4926 = vpack.c.b16 %v4466, %v4462
      %v4927 = vpack.c.b16 %v4467, %v4463
      %v4928 = vpack.c.b16 %v4468, %v4464
      %v4929 = vpack.c.b16 %v4473, %v4469
      %v4930 = vpack.c.b16 %v4474, %v4470
      %v4931 = vpack.c.b16 %v4475, %v4471
      %v4932 = vpack.c.b16 %v4476, %v4472
      %v4933 = vpack.c.b16 %v4481, %v4477
      %v4934 = vpack.c.b16 %v4482, %v4478
      %v4935 = vpack.c.b16 %v4483, %v4479
      %v4936 = vpack.c.b16 %v4484, %v4480
      %v4937 = vpack.c.b16 %v4489, %v4485
      %v4938 = vpack.c.b16 %v4490, %v4486
      %v4939 = vpack.c.b16 %v4491, %v4487
      %v4940 = vpack.c.b16 %v4492, %v4488
      %v4941 = vpack.c.b16 %v4497, %v4493
      %v4942 = vpack.c.b16 %v4498, %v4494
      %v4943 = vpack.c.b16 %v4499, %v4495
      %v4944 = vpack.c.b16 %v4500, %v4496
      %v4945 = vpack.c.b16 %v4505, %v4501
      %v4946 = vpack.c.b16 %v4506, %v4502
      %v4947 = vpack.c.b16 %v4507, %v4503
      %v4948 = vpack.c.b16 %v4508, %v4504
      %v4949 = vpack.c.b16 %v4513, %v4509
      %v4950 = vpack.c.b16 %v4514, %v4510
      %v4951 = vpack.c.b16 %v4515, %v4511
      %v4952 = vpack.c.b16 %v4516, %v4512
      %v4953 = vpack.c.b16 %v4521, %v4517
      %v4954 = vpack.c.b16 %v4522, %v4518
      %v4955 = vpack.c.b16 %v4523, %v4519
      %v4956 = vpack.c.b16 %v4524, %v4520
      %v4957 = vpack.c.b16 %v4529, %v4525
      %v4958 = vpack.c.b16 %v4530, %v4526
      %v4959 = vpack.c.b16 %v4531, %v4527
      %v4960 = vpack.c.b16 %v4532, %v4528
      %v4961 = vpack.c.b16 %v4537, %v4533
      %v4962 = vpack.c.b16 %v4538, %v4534
      %v4963 = vpack.c.b16 %v4539, %v4535
      %v4964 = vpack.c.b16 %v4540, %v4536
      %v4965 = vpack.c.b16 %v4545, %v4541
      %v4966 = vpack.c.b16 %v4546, %v4542
      %v4967 = vpack.c.b16 %v4547, %v4543
      %v4968 = vpack.c.b16 %v4548, %v4544
      %v4969 = vpack.c.b16 %v4553, %v4549
      %v4970 = vpack.c.b16 %v4554, %v4550
      %v4971 = vpack.c.b16 %v4555, %v4551
      %v4972 = vpack.c.b16 %v4556, %v4552
      %v4973 = vpack.c.b16 %v4561, %v4557
      %v4974 = vpack.c.b16 %v4562, %v4558
      %v4975 = vpack.c.b16 %v4563, %v4559
      %v4976 = vpack.c.b16 %v4564, %v4560
      %v4977 = vpack.c.b16 %v4569, %v4565
      %v4978 = vpack.c.b16 %v4570, %v4566
      %v4979 = vpack.c.b16 %v4571, %v4567
      %v4980 = vpack.c.b16 %v4572, %v4568
      %v4981 = vpack.c.b16 %v4577, %v4573
      %v4982 = vpack.c.b16 %v4578, %v4574
      %v4983 = vpack.c.b16 %v4579, %v4575
      %v4984 = vpack.c.b16 %v4580, %v4576
      %v4985 = vpack.c.b16 %v4585, %v4581
      %v4986 = vpack.c.b16 %v4586, %v4582
      %v4987 = vpack.c.b16 %v4587, %v4583
      %v4988 = vpack.c.b16 %v4588, %v4584
      %v4989 = vpack.c.b16 %v4593, %v4589
      %v4990 = vpack.c.b16 %v4594, %v4590
      %v4991 = vpack.c.b16 %v4595, %v4591
      %v4992 = vpack.c.b16 %v4596, %v4592
      %v4993 = vpack.c.b16 %v4601, %v4597
      %v4994 = vpack.c.b16 %v4602, %v4598
      %v4995 = vpack.c.b16 %v4603, %v4599
      %v4996 = vpack.c.b16 %v4604, %v4600
      %v4997 = vpack.c.b16 %v4609, %v4605
      %v4998 = vpack.c.b16 %v4610, %v4606
      %v4999 = vpack.c.b16 %v4611, %v4607
      %v5000 = vpack.c.b16 %v4612, %v4608
      %v5001 = vpack.c.b16 %v4617, %v4613
      %v5002 = vpack.c.b16 %v4618, %v4614
      %v5003 = vpack.c.b16 %v4619, %v4615
      %v5004 = vpack.c.b16 %v4620, %v4616
      %v5005 = vpack.c.b16 %v4625, %v4621
      %v5006 = vpack.c.b16 %v4626, %v4622
      %v5007 = vpack.c.b16 %v4627, %v4623
      %v5008 = vpack.c.b16 %v4628, %v4624
      %v5009 = vpack.c.b16 %v4633, %v4629
      %v5010 = vpack.c.b16 %v4634, %v4630
      %v5011 = vpack.c.b16 %v4635, %v4631
      %v5012 = vpack.c.b16 %v4636, %v4632
      %v5013 = vpack.c.b16 %v4641, %v4637
      %v5014 = vpack.c.b16 %v4642, %v4638
      %v5015 = vpack.c.b16 %v4643, %v4639
      %v5016 = vpack.c.b16 %v4644, %v4640
      %v5017 = vpack.c.b16 %v4649, %v4645
      %v5018 = vpack.c.b16 %v4650, %v4646
      %v5019 = vpack.c.b16 %v4651, %v4647
      %v5020 = vpack.c.b16 %v4652, %v4648
      %v5021 = vpack.c.b16 %v4657, %v4653
      %v5022 = vpack.c.b16 %v4658, %v4654
      %v5023 = vpack.c.b16 %v4659, %v4655
      %v5024 = vpack.c.b16 %v4660, %v4656
      %v5025 = vpack.c.b16 %v4665, %v4661
      %v5026 = vpack.c.b16 %v4666, %v4662
      %v5027 = vpack.c.b16 %v4667, %v4663
      %v5028 = vpack.c.b16 %v4668, %v4664
      %v5029 = vpack.c.b16 %v4673, %v4669
      %v5030 = vpack.c.b16 %v4674, %v4670
      %v5031 = vpack.c.b16 %v4675, %v4671
      %v5032 = vpack.c.b16 %v4676, %v4672
      %v5033 = vpack.c.b16 %v4681, %v4677
      %v5034 = vpack.c.b16 %v4682, %v4678
      %v5035 = vpack.c.b16 %v4683, %v4679
      %v5036 = vpack.c.b16 %v4684, %v4680
      %v5037 = vpack.c.b16 %v4689, %v4685
      %v5038 = vpack.c.b16 %v4690, %v4686
      %v5039 = vpack.c.b16 %v4691, %v4687
      %v5040 = vpack.c.b16 %v4692, %v4688
      %v5041 = vpack.c.b16 %v4697, %v4693
      %v5042 = vpack.c.b16 %v4698, %v4694
      %v5043 = vpack.c.b16 %v4699, %v4695
      %v5044 = vpack.c.b16 %v4700, %v4696
      %v5045 = vpack.c.b16 %v4705, %v4701
      %v5046 = vpack.c.b16 %v4706, %v4702
      %v5047 = vpack.c.b16 %v4707, %v4703
      %v5048 = vpack.c.b16 %v4708, %v4704
      %v5049 = vpack.c.b16 %v4713, %v4709
      %v5050 = vpack.c.b16 %v4714, %v4710
      %v5051 = vpack.c.b16 %v4715, %v4711
      %v5052 = vpack.c.b16 %v4716, %v4712
      %v5053 = vpack.c.b16 %v4721, %v4717
      %v5054 = vpack.c.b16 %v4722, %v4718
      %v5055 = vpack.c.b16 %v4723, %v4719
      %v5056 = vpack.c.b16 %v4724, %v4720
      %v5057 = vpack.c.b16 %v4729, %v4725
      %v5058 = vpack.c.b16 %v4730, %v4726
      %v5059 = vpack.c.b16 %v4731, %v4727
      %v5060 = vpack.c.b16 %v4732, %v4728
      %v5061 = vpack.c.b16 %v4737, %v4733
      %v5062 = vpack.c.b16 %v4738, %v4734
      %v5063 = vpack.c.b16 %v4739, %v4735
      %v5064 = vpack.c.b16 %v4740, %v4736
      %v5065 = vpack.c.b16 %v4745, %v4741
      %v5066 = vpack.c.b16 %v4746, %v4742
      %v5067 = vpack.c.b16 %v4747, %v4743
      %v5068 = vpack.c.b16 %v4748, %v4744
      %v5069 = vpack.c.b16 %v4753, %v4749
      %v5070 = vpack.c.b16 %v4754, %v4750
      %v5071 = vpack.c.b16 %v4755, %v4751
      %v5072 = vpack.c.b16 %v4756, %v4752
      %v5073 = vpack.c.b16 %v4761, %v4757
      %v5074 = vpack.c.b16 %v4762, %v4758
      %v5075 = vpack.c.b16 %v4763, %v4759
      %v5076 = vpack.c.b16 %v4764, %v4760
      %v5077 = vpack.c.b16 %v4769, %v4765
      %v5078 = vpack.c.b16 %v4770, %v4766
      %v5079 = vpack.c.b16 %v4771, %v4767
      %v5080 = vpack.c.b16 %v4772, %v4768
      %v5081 = vpack.c.b16 %v4777, %v4773
      %v5082 = vpack.c.b16 %v4778, %v4774
      %v5083 = vpack.c.b16 %v4779, %v4775
      %v5084 = vpack.c.b16 %v4780, %v4776
      %v5085 = vpack.c.b16 %v4785, %v4781
      %v5086 = vpack.c.b16 %v4786, %v4782
      %v5087 = vpack.c.b16 %v4787, %v4783
      %v5088 = vpack.c.b16 %v4788, %v4784
      %v5089 = vpack.c.b16 %v4793, %v4789
      %v5090 = vpack.c.b16 %v4794, %v4790
      %v5091 = vpack.c.b16 %v4795, %v4791
      %v5092 = vpack.c.b16 %v4796, %v4792
      %v5093 = vpack.c.b16 %v4801, %v4797
      %v5094 = vpack.c.b16 %v4802, %v4798
      %v5095 = vpack.c.b16 %v4803, %v4799
      %v5096 = vpack.c.b16 %v4804, %v4800
      %v5097 = vpack.c.b16 %v4809, %v4805
      %v5098 = vpack.c.b16 %v4810, %v4806
      %v5099 = vpack.c.b16 %v4811, %v4807
      %v5100 = vpack.c.b16 %v4812, %v4808
      %v5101 = vpack.c.b16 %v4817, %v4813
      %v5102 = vpack.c.b16 %v4818, %v4814
      %v5103 = vpack.c.b16 %v4819, %v4815
      %v5104 = vpack.c.b16 %v4820, %v4816
      %v5105 = vpack.c.b16 %v4825, %v4821
      %v5106 = vpack.c.b16 %v4826, %v4822
      %v5107 = vpack.c.b16 %v4827, %v4823
      %v5108 = vpack.c.b16 %v4828, %v4824
      %v5109 = vpack.c.b16 %v4833, %v4829
      %v5110 = vpack.c.b16 %v4834, %v4830
      %v5111 = vpack.c.b16 %v4835, %v4831
      %v5112 = vpack.c.b16 %v4836, %v4832
      %v5113 = vpack.c.b16 %v4841, %v4837
      %v5114 = vpack.c.b16 %v4842, %v4838
      %v5115 = vpack.c.b16 %v4843, %v4839
      %v5116 = vpack.c.b16 %v4844, %v4840
      %v5117 = vpack.c.b16 %v4849, %v4845
      %v5118 = vpack.c.b16 %v4850, %v4846
      %v5119 = vpack.c.b16 %v4851, %v4847
      %v5120 = vpack.c.b16 %v4852, %v4848
      %v5121 = vpack.c.b16 %v4857, %v4853
      %v5122 = vpack.c.b16 %v4858, %v4854
      %v5123 = vpack.c.b16 %v4859, %v4855
      %v5124 = vpack.c.b16 %v4860, %v4856
      %v5125 = vpack.c.b16 %v4865, %v4861
      %v5126 = vpack.c.b16 %v4866, %v4862
      %v5127 = vpack.c.b16 %v4867, %v4863
      %v5128 = vpack.c.b16 %v4868, %v4864
      %v5129 = vpack.c.b16 %v4873, %v4869
      %v5130 = vpack.c.b16 %v4874, %v4870
      %v5131 = vpack.c.b16 %v4875, %v4871
      %v5132 = vpack.c.b16 %v4876, %v4872
      %5389 = vmatprep.subr.bf16.mxu0 %v4878
      %5390 = vmatpush1.bf16.msra.mxu0 %v4877
      %5391 = vmatprep.subr.bf16.mxu0 %v4882
      %5392 = vmatpush1.bf16.msra.mxu0 %v4881
      %5393 = vmatprep.subr.bf16.mxu0 %v4886
      %5394 = vmatpush1.bf16.msra.mxu0 %v4885
      %5395 = vmatprep.subr.bf16.mxu0 %v4890
      %5396 = vmatpush1.bf16.msra.mxu0 %v4889
      %5397 = vmatprep.subr.bf16.mxu0 %v4894
      %5398 = vmatpush1.bf16.msra.mxu0 %v4893
      %5399 = vmatprep.subr.bf16.mxu0 %v4898
      %5400 = vmatpush1.bf16.msra.mxu0 %v4897
      %5401 = vmatprep.subr.bf16.mxu0 %v4902
      %5402 = vmatpush1.bf16.msra.mxu0 %v4901
      %5403 = vmatprep.subr.bf16.mxu0 %v4906
      %5404 = vmatpush1.bf16.msra.mxu0 %v4905
      %5405 = vmatprep.subr.bf16.mxu0 %v4910
      %5406 = vmatpush1.bf16.msra.mxu0 %v4909
      %5407 = vmatprep.subr.bf16.mxu0 %v4914
      %5408 = vmatpush1.bf16.msra.mxu0 %v4913
      %5409 = vmatprep.subr.bf16.mxu0 %v4918
      %5410 = vmatpush1.bf16.msra.mxu0 %v4917
      %5411 = vmatprep.subr.bf16.mxu0 %v4922
      %5412 = vmatpush1.bf16.msra.mxu0 %v4921
      %5413 = vmatprep.subr.bf16.mxu0 %v4926
      %5414 = vmatpush1.bf16.msra.mxu0 %v4925
      %5415 = vmatprep.subr.bf16.mxu0 %v4930
      %5416 = vmatpush1.bf16.msra.mxu0 %v4929
      %5417 = vmatprep.subr.bf16.mxu0 %v4934
      %5418 = vmatpush1.bf16.msra.mxu0 %v4933
      %5419 = vmatprep.subr.bf16.mxu0 %v4938
      %5420 = vmatpush1.bf16.msra.mxu0 %v4937
      %5421 = vmatprep.mubr.bf16.mxu0 %v3846
      %5422 = vmatmul.mubr.bf16.gmra.mrb[0].mxu0 %v3845
      %v5423 = vpop.f32.mrb[0].mxu0
      %v5424 = vadd.f32 0.0, %v5423
      %v5425 = vpop.f32.mrb[0].mxu0
      %v5426 = vadd.f32 0.0, %v5425
      %v5427 = vpop.f32.mrb[0].mxu0
      %v5428 = vpop.f32.mrb[0].mxu0
      %5429 = vdwg.mxu0
      %5430 = vmatprep.subr.bf16.mxu0 %v4942
      %5431 = vmatpush1.bf16.msra.mxu0 %v4941
      %5432 = vmatprep.subr.bf16.mxu0 %v4946
      %5433 = vmatpush1.bf16.msra.mxu0 %v4945
      %5434 = vmatprep.subr.bf16.mxu0 %v4950
      %5435 = vmatpush1.bf16.msra.mxu0 %v4949
      %5436 = vmatprep.subr.bf16.mxu0 %v4954
      %5437 = vmatpush1.bf16.msra.mxu0 %v4953
      %5438 = vmatprep.subr.bf16.mxu0 %v4958
      %5439 = vmatpush1.bf16.msra.mxu0 %v4957
      %5440 = vmatprep.subr.bf16.mxu0 %v4962
      %5441 = vmatpush1.bf16.msra.mxu0 %v4961
      %5442 = vmatprep.subr.bf16.mxu0 %v4966
      %5443 = vmatpush1.bf16.msra.mxu0 %v4965
      %5444 = vmatprep.subr.bf16.mxu0 %v4970
      %5445 = vmatpush1.bf16.msra.mxu0 %v4969
      %5446 = vmatprep.subr.bf16.mxu0 %v4974
      %5447 = vmatpush1.bf16.msra.mxu0 %v4973
      %5448 = vmatprep.subr.bf16.mxu0 %v4978
      %5449 = vmatpush1.bf16.msra.mxu0 %v4977
      %5450 = vmatprep.subr.bf16.mxu0 %v4982
      %5451 = vmatpush1.bf16.msra.mxu0 %v4981
      %5452 = vmatprep.subr.bf16.mxu0 %v4986
      %5453 = vmatpush1.bf16.msra.mxu0 %v4985
      %5454 = vmatprep.subr.bf16.mxu0 %v4990
      %5455 = vmatpush1.bf16.msra.mxu0 %v4989
      %5456 = vmatprep.subr.bf16.mxu0 %v4994
      %5457 = vmatpush1.bf16.msra.mxu0 %v4993
      %5458 = vmatprep.subr.bf16.mxu0 %v4998
      %5459 = vmatpush1.bf16.msra.mxu0 %v4997
      %5460 = vmatprep.subr.bf16.mxu0 %v5002
      %5461 = vmatpush1.bf16.msra.mxu0 %v5001
      %5462 = vmatprep.mubr.bf16.mxu0 %v3848
      %5463 = vmatmul.mubr.bf16.gmra.mrb[0].mxu0 %v3847
      %v5464 = vpop.f32.mrb[0].mxu0
      %v5465 = vadd.f32 %v5424, %v5464
      %v5466 = vpop.f32.mrb[0].mxu0
      %v5467 = vadd.f32 %v5426, %v5466
      %v5468 = vpop.f32.mrb[0].mxu0
      %v5469 = vpop.f32.mrb[0].mxu0
      %5470 = vdwg.mxu0
      %5471 = vmatprep.subr.bf16.mxu0 %v5006
      %5472 = vmatpush1.bf16.msra.mxu0 %v5005
      %5473 = vmatprep.subr.bf16.mxu0 %v5010
      %5474 = vmatpush1.bf16.msra.mxu0 %v5009
      %5475 = vmatprep.subr.bf16.mxu0 %v5014
      %5476 = vmatpush1.bf16.msra.mxu0 %v5013
      %5477 = vmatprep.subr.bf16.mxu0 %v5018
      %5478 = vmatpush1.bf16.msra.mxu0 %v5017
      %5479 = vmatprep.subr.bf16.mxu0 %v5022
      %5480 = vmatpush1.bf16.msra.mxu0 %v5021
      %5481 = vmatprep.subr.bf16.mxu0 %v5026
      %5482 = vmatpush1.bf16.msra.mxu0 %v5025
      %5483 = vmatprep.subr.bf16.mxu0 %v5030
      %5484 = vmatpush1.bf16.msra.mxu0 %v5029
      %5485 = vmatprep.subr.bf16.mxu0 %v5034
      %5486 = vmatpush1.bf16.msra.mxu0 %v5033
      %5487 = vmatprep.subr.bf16.mxu0 %v5038
      %5488 = vmatpush1.bf16.msra.mxu0 %v5037
      %5489 = vmatprep.subr.bf16.mxu0 %v5042
      %5490 = vmatpush1.bf16.msra.mxu0 %v5041
      %5491 = vmatprep.subr.bf16.mxu0 %v5046
      %5492 = vmatpush1.bf16.msra.mxu0 %v5045
      %5493 = vmatprep.subr.bf16.mxu0 %v5050
      %5494 = vmatpush1.bf16.msra.mxu0 %v5049
      %5495 = vmatprep.subr.bf16.mxu0 %v5054
      %5496 = vmatpush1.bf16.msra.mxu0 %v5053
      %5497 = vmatprep.subr.bf16.mxu0 %v5058
      %5498 = vmatpush1.bf16.msra.mxu0 %v5057
      %5499 = vmatprep.subr.bf16.mxu0 %v5062
      %5500 = vmatpush1.bf16.msra.mxu0 %v5061
      %5501 = vmatprep.subr.bf16.mxu0 %v5066
      %5502 = vmatpush1.bf16.msra.mxu0 %v5065
      %5503 = vmatprep.mubr.bf16.mxu0 %v3850
      %5504 = vmatmul.mubr.bf16.gmra.mrb[0].mxu0 %v3849
      %v5505 = vpop.f32.mrb[0].mxu0
      %v5506 = vadd.f32 %v5465, %v5505
      %v5507 = vpop.f32.mrb[0].mxu0
      %v5508 = vadd.f32 %v5467, %v5507
      %v5509 = vpop.f32.mrb[0].mxu0
      %v5510 = vpop.f32.mrb[0].mxu0
      %5511 = vdwg.mxu0
      %5512 = vmatprep.subr.bf16.mxu0 %v5070
      %5513 = vmatpush1.bf16.msra.mxu0 %v5069
      %5514 = vmatprep.subr.bf16.mxu0 %v5074
      %5515 = vmatpush1.bf16.msra.mxu0 %v5073
      %5516 = vmatprep.subr.bf16.mxu0 %v5078
      %5517 = vmatpush1.bf16.msra.mxu0 %v5077
      %5518 = vmatprep.subr.bf16.mxu0 %v5082
      %5519 = vmatpush1.bf16.msra.mxu0 %v5081
      %5520 = vmatprep.subr.bf16.mxu0 %v5086
      %5521 = vmatpush1.bf16.msra.mxu0 %v5085
      %5522 = vmatprep.subr.bf16.mxu0 %v5090
      %5523 = vmatpush1.bf16.msra.mxu0 %v5089
      %5524 = vmatprep.subr.bf16.mxu0 %v5094
      %5525 = vmatpush1.bf16.msra.mxu0 %v5093
      %5526 = vmatprep.subr.bf16.mxu0 %v5098
      %5527 = vmatpush1.bf16.msra.mxu0 %v5097
      %5528 = vmatprep.subr.bf16.mxu0 %v5102
      %5529 = vmatpush1.bf16.msra.mxu0 %v5101
      %5530 = vmatprep.subr.bf16.mxu0 %v5106
      %5531 = vmatpush1.bf16.msra.mxu0 %v5105
      %5532 = vmatprep.subr.bf16.mxu0 %v5110
      %5533 = vmatpush1.bf16.msra.mxu0 %v5109
      %5534 = vmatprep.subr.bf16.mxu0 %v5114
      %5535 = vmatpush1.bf16.msra.mxu0 %v5113
      %5536 = vmatprep.subr.bf16.mxu0 %v5118
      %5537 = vmatpush1.bf16.msra.mxu0 %v5117
      %5538 = vmatprep.subr.bf16.mxu0 %v5122
      %5539 = vmatpush1.bf16.msra.mxu0 %v5121
      %5540 = vmatprep.subr.bf16.mxu0 %v5126
      %5541 = vmatpush1.bf16.msra.mxu0 %v5125
      %5542 = vmatprep.subr.bf16.mxu0 %v5130
      %5543 = vmatpush1.bf16.msra.mxu0 %v5129
      %5544 = vmatprep.mubr.bf16.mxu0 %v3852
      %5545 = vmatmul.mubr.bf16.gmra.mrb[0].mxu0 %v3851
      %v5546 = vpop.f32.mrb[0].mxu0
      %v5547 = vadd.f32 %v5506, %v5546
      %v5548 = vpop.f32.mrb[0].mxu0
      %v5549 = vadd.f32 %v5508, %v5548
      %v5550 = vpop.f32.mrb[0].mxu0
      %v5551 = vpop.f32.mrb[0].mxu0
      %5552 = vdwg.mxu0
      %5553 = vmatprep.subr.bf16.mxu0 %v4880
      %5554 = vmatpush1.bf16.msra.mxu0 %v4879
      %5555 = vmatprep.subr.bf16.mxu0 %v4884
      %5556 = vmatpush1.bf16.msra.mxu0 %v4883
      %5557 = vmatprep.subr.bf16.mxu0 %v4888
      %5558 = vmatpush1.bf16.msra.mxu0 %v4887
      %5559 = vmatprep.subr.bf16.mxu0 %v4892
      %5560 = vmatpush1.bf16.msra.mxu0 %v4891
      %5561 = vmatprep.subr.bf16.mxu0 %v4896
      %5562 = vmatpush1.bf16.msra.mxu0 %v4895
      %5563 = vmatprep.subr.bf16.mxu0 %v4900
      %5564 = vmatpush1.bf16.msra.mxu0 %v4899
      %5565 = vmatprep.subr.bf16.mxu0 %v4904
      %5566 = vmatpush1.bf16.msra.mxu0 %v4903
      %5567 = vmatprep.subr.bf16.mxu0 %v4908
      %5568 = vmatpush1.bf16.msra.mxu0 %v4907
      %5569 = vmatprep.subr.bf16.mxu0 %v4912
      %5570 = vmatpush1.bf16.msra.mxu0 %v4911
      %5571 = vmatprep.subr.bf16.mxu0 %v4916
      %5572 = vmatpush1.bf16.msra.mxu0 %v4915
      %5573 = vmatprep.subr.bf16.mxu0 %v4920
      %5574 = vmatpush1.bf16.msra.mxu0 %v4919
      %5575 = vmatprep.subr.bf16.mxu0 %v4924
      %5576 = vmatpush1.bf16.msra.mxu0 %v4923
      %5577 = vmatprep.subr.bf16.mxu0 %v4928
      %5578 = vmatpush1.bf16.msra.mxu0 %v4927
      %5579 = vmatprep.subr.bf16.mxu0 %v4932
      %5580 = vmatpush1.bf16.msra.mxu0 %v4931
      %5581 = vmatprep.subr.bf16.mxu0 %v4936
      %5582 = vmatpush1.bf16.msra.mxu0 %v4935
      %5583 = vmatprep.subr.bf16.mxu0 %v4940
      %5584 = vmatpush1.bf16.msra.mxu0 %v4939
      %5585 = vmatprep.mubr.bf16.mxu0 %v3846
      %5586 = vmatmul.mubr.bf16.gmra.mrb[0].mxu0 %v3845
      %v5587 = vpop.f32.mrb[0].mxu0
      %v5588 = vadd.f32 0.0, %v5587
      %v5589 = vpop.f32.mrb[0].mxu0
      %v5590 = vadd.f32 0.0, %v5589
      %v5591 = vpop.f32.mrb[0].mxu0
      %v5592 = vpop.f32.mrb[0].mxu0
      %5593 = vdwg.mxu0
      %5594 = vmatprep.subr.bf16.mxu0 %v4944
      %5595 = vmatpush1.bf16.msra.mxu0 %v4943
      %5596 = vmatprep.subr.bf16.mxu0 %v4948
      %5597 = vmatpush1.bf16.msra.mxu0 %v4947
      %5598 = vmatprep.subr.bf16.mxu0 %v4952
      %5599 = vmatpush1.bf16.msra.mxu0 %v4951
      %5600 = vmatprep.subr.bf16.mxu0 %v4956
      %5601 = vmatpush1.bf16.msra.mxu0 %v4955
      %5602 = vmatprep.subr.bf16.mxu0 %v4960
      %5603 = vmatpush1.bf16.msra.mxu0 %v4959
      %5604 = vmatprep.subr.bf16.mxu0 %v4964
      %5605 = vmatpush1.bf16.msra.mxu0 %v4963
      %5606 = vmatprep.subr.bf16.mxu0 %v4968
      %5607 = vmatpush1.bf16.msra.mxu0 %v4967
      %5608 = vmatprep.subr.bf16.mxu0 %v4972
      %5609 = vmatpush1.bf16.msra.mxu0 %v4971
      %5610 = vmatprep.subr.bf16.mxu0 %v4976
      %5611 = vmatpush1.bf16.msra.mxu0 %v4975
      %5612 = vmatprep.subr.bf16.mxu0 %v4980
      %5613 = vmatpush1.bf16.msra.mxu0 %v4979
      %5614 = vmatprep.subr.bf16.mxu0 %v4984
      %5615 = vmatpush1.bf16.msra.mxu0 %v4983
      %5616 = vmatprep.subr.bf16.mxu0 %v4988
      %5617 = vmatpush1.bf16.msra.mxu0 %v4987
      %5618 = vmatprep.subr.bf16.mxu0 %v4992
      %5619 = vmatpush1.bf16.msra.mxu0 %v4991
      %5620 = vmatprep.subr.bf16.mxu0 %v4996
      %5621 = vmatpush1.bf16.msra.mxu0 %v4995
      %5622 = vmatprep.subr.bf16.mxu0 %v5000
      %5623 = vmatpush1.bf16.msra.mxu0 %v4999
      %5624 = vmatprep.subr.bf16.mxu0 %v5004
      %5625 = vmatpush1.bf16.msra.mxu0 %v5003
      %5626 = vmatprep.mubr.bf16.mxu0 %v3848
      %5627 = vmatmul.mubr.bf16.gmra.mrb[0].mxu0 %v3847
      %v5628 = vpop.f32.mrb[0].mxu0
      %v5629 = vadd.f32 %v5588, %v5628
      %v5630 = vpop.f32.mrb[0].mxu0
      %v5631 = vadd.f32 %v5590, %v5630
      %v5632 = vpop.f32.mrb[0].mxu0
      %v5633 = vpop.f32.mrb[0].mxu0
      %5634 = vdwg.mxu0
      %5635 = vmatprep.subr.bf16.mxu0 %v5008
      %5636 = vmatpush1.bf16.msra.mxu0 %v5007
      %5637 = vmatprep.subr.bf16.mxu0 %v5012
      %5638 = vmatpush1.bf16.msra.mxu0 %v5011
      %5639 = vmatprep.subr.bf16.mxu0 %v5016
      %5640 = vmatpush1.bf16.msra.mxu0 %v5015
      %5641 = vmatprep.subr.bf16.mxu0 %v5020
      %5642 = vmatpush1.bf16.msra.mxu0 %v5019
      %5643 = vmatprep.subr.bf16.mxu0 %v5024
      %5644 = vmatpush1.bf16.msra.mxu0 %v5023
      %5645 = vmatprep.subr.bf16.mxu0 %v5028
      %5646 = vmatpush1.bf16.msra.mxu0 %v5027
      %5647 = vmatprep.subr.bf16.mxu0 %v5032
      %5648 = vmatpush1.bf16.msra.mxu0 %v5031
      %5649 = vmatprep.subr.bf16.mxu0 %v5036
      %5650 = vmatpush1.bf16.msra.mxu0 %v5035
      %5651 = vmatprep.subr.bf16.mxu0 %v5040
      %5652 = vmatpush1.bf16.msra.mxu0 %v5039
      %5653 = vmatprep.subr.bf16.mxu0 %v5044
      %5654 = vmatpush1.bf16.msra.mxu0 %v5043
      %5655 = vmatprep.subr.bf16.mxu0 %v5048
      %5656 = vmatpush1.bf16.msra.mxu0 %v5047
      %5657 = vmatprep.subr.bf16.mxu0 %v5052
      %5658 = vmatpush1.bf16.msra.mxu0 %v5051
      %5659 = vmatprep.subr.bf16.mxu0 %v5056
      %5660 = vmatpush1.bf16.msra.mxu0 %v5055
      %5661 = vmatprep.subr.bf16.mxu0 %v5060
      %5662 = vmatpush1.bf16.msra.mxu0 %v5059
      %5663 = vmatprep.subr.bf16.mxu0 %v5064
      %5664 = vmatpush1.bf16.msra.mxu0 %v5063
      %5665 = vmatprep.subr.bf16.mxu0 %v5068
      %5666 = vmatpush1.bf16.msra.mxu0 %v5067
      %5667 = vmatprep.mubr.bf16.mxu0 %v3850
      %5668 = vmatmul.mubr.bf16.gmra.mrb[0].mxu0 %v3849
      %v5669 = vpop.f32.mrb[0].mxu0
      %v5670 = vadd.f32 %v5629, %v5669
      %v5671 = vpop.f32.mrb[0].mxu0
      %v5672 = vadd.f32 %v5631, %v5671
      %v5673 = vpop.f32.mrb[0].mxu0
      %v5674 = vpop.f32.mrb[0].mxu0
      %5675 = vdwg.mxu0
      %5676 = vmatprep.subr.bf16.mxu0 %v5072
      %5677 = vmatpush1.bf16.msra.mxu0 %v5071
      %5678 = vmatprep.subr.bf16.mxu0 %v5076
      %5679 = vmatpush1.bf16.msra.mxu0 %v5075
      %5680 = vmatprep.subr.bf16.mxu0 %v5080
      %5681 = vmatpush1.bf16.msra.mxu0 %v5079
      %5682 = vmatprep.subr.bf16.mxu0 %v5084
      %5683 = vmatpush1.bf16.msra.mxu0 %v5083
      %5684 = vmatprep.subr.bf16.mxu0 %v5088
      %5685 = vmatpush1.bf16.msra.mxu0 %v5087
      %5686 = vmatprep.subr.bf16.mxu0 %v5092
      %5687 = vmatpush1.bf16.msra.mxu0 %v5091
      %5688 = vmatprep.subr.bf16.mxu0 %v5096
      %5689 = vmatpush1.bf16.msra.mxu0 %v5095
      %5690 = vmatprep.subr.bf16.mxu0 %v5100
      %5691 = vmatpush1.bf16.msra.mxu0 %v5099
      %5692 = vmatprep.subr.bf16.mxu0 %v5104
      %5693 = vmatpush1.bf16.msra.mxu0 %v5103
      %5694 = vmatprep.subr.bf16.mxu0 %v5108
      %5695 = vmatpush1.bf16.msra.mxu0 %v5107
      %5696 = vmatprep.subr.bf16.mxu0 %v5112
      %5697 = vmatpush1.bf16.msra.mxu0 %v5111
      %5698 = vmatprep.subr.bf16.mxu0 %v5116
      %5699 = vmatpush1.bf16.msra.mxu0 %v5115
      %5700 = vmatprep.subr.bf16.mxu0 %v5120
      %5701 = vmatpush1.bf16.msra.mxu0 %v5119
      %5702 = vmatprep.subr.bf16.mxu0 %v5124
      %5703 = vmatpush1.bf16.msra.mxu0 %v5123
      %5704 = vmatprep.subr.bf16.mxu0 %v5128
      %5705 = vmatpush1.bf16.msra.mxu0 %v5127
      %5706 = vmatprep.subr.bf16.mxu0 %v5132
      %5707 = vmatpush1.bf16.msra.mxu0 %v5131
      %5708 = vmatprep.mubr.bf16.mxu0 %v3852
      %5709 = vmatmul.mubr.bf16.gmra.mrb[0].mxu0 %v3851
      %v5710 = vpop.f32.mrb[0].mxu0
      %v5711 = vadd.f32 %v5670, %v5710
      %v5712 = vpop.f32.mrb[0].mxu0
      %v5713 = vadd.f32 %v5672, %v5712
      %v5714 = vpop.f32.mrb[0].mxu0
      %v5715 = vpop.f32.mrb[0].mxu0
      %5716 = vdwg.mxu0
      %v5717 = vmin.f32 %v5547, 20.0
      %v5718 = vmin.f32 %v5549, 20.0
      %v5719 = vmin.f32 %v5711, 20.0
      %v5720 = vmin.f32 %v5713, 20.0
      %v5721 = vmul.f32 %v5717, 1.442695
      %v5722 = vpow.pop %v5721
      %v5723 = vmul.f32 %v5718, 1.442695
      %v5724 = vpow.pop %v5723
      %v5725 = vmul.f32 %v5719, 1.442695
      %v5726 = vpow.pop %v5725
      %v5727 = vmul.f32 %v5720, 1.442695
      %v5728 = vpow.pop %v5727
      %v5729 = vadd.f32 %v5722, 2.0
      %v5730 = vadd.f32 %v5724, 2.0
      %v5731 = vadd.f32 %v5726, 2.0
      %v5732 = vadd.f32 %v5728, 2.0
      %v5733 = vmul.f32 %v5722, %v5729
      %v5734 = vmul.f32 %v5724, %v5730
      %v5735 = vmul.f32 %v5726, %v5731
      %v5736 = vmul.f32 %v5728, %v5732
      %v5737 = vadd.f32 %v5733, 2.0
      %v5738 = vadd.f32 %v5734, 2.0
      %v5739 = vadd.f32 %v5735, 2.0
      %v5740 = vadd.f32 %v5736, 2.0
      %v5741 = vrcp.pop %v5737
      %v5742 = vmul.f32 %v5733, %v5741
      %v5743 = vrcp.pop %v5738
      %v5744 = vmul.f32 %v5734, %v5743
      %v5745 = vrcp.pop %v5739
      %v5746 = vmul.f32 %v5735, %v5745
      %v5747 = vrcp.pop %v5740
      %v5748 = vmul.f32 %v5736, %v5747
      %v5749 = vmul.f32 %v5547, %v5742
      %v5750 = vmul.f32 %v5549, %v5744
      %v5751 = vmul.f32 %v5711, %v5746
      %v5752 = vmul.f32 %v5713, %v5748
      %v5753 = vpack.c.bf16 %v5749, %v5749
      %v5754 = vpack.c.bf16 %v5750, %v5750
      %v5755 = vpack.c.bf16 %v5751, %v5751
      %v5756 = vpack.c.bf16 %v5752, %v5752
      %v5757 = vld [vmem:[%s14] sm:$0xf]
      %v5758 = vld [vmem:[%s14 + $0x4] sm:$0xf]
      %v5759 = vld [vmem:[%s14 + $0x8] sm:$0xf]
      %v5760 = vld [vmem:[%s14 + $0xc] sm:$0xf]
      %v5761 = vld [vmem:[%s14 + $0x10] sm:$0xf]
      %v5762 = vld [vmem:[%s14 + $0x14] sm:$0xf]
      %v5763 = vld [vmem:[%s14 + $0x18] sm:$0xf]
      %v5764 = vld [vmem:[%s14 + $0x1c] sm:$0xf]
      %v5765 = vld [vmem:[%s14 + $0x20] sm:$0xf]
      %v5766 = vld [vmem:[%s14 + $0x24] sm:$0xf]
      %v5767 = vld [vmem:[%s14 + $0x28] sm:$0xf]
      %v5768 = vld [vmem:[%s14 + $0x2c] sm:$0xf]
      %v5769 = vld [vmem:[%s14 + $0x30] sm:$0xf]
      %v5770 = vld [vmem:[%s14 + $0x34] sm:$0xf]
      %v5771 = vld [vmem:[%s14 + $0x38] sm:$0xf]
      %v5772 = vld [vmem:[%s14 + $0x3c] sm:$0xf]
      %v5773 = vld [vmem:[%s14 + $0x40] sm:$0xf]
      %v5774 = vld [vmem:[%s14 + $0x44] sm:$0xf]
      %v5775 = vld [vmem:[%s14 + $0x48] sm:$0xf]
      %v5776 = vld [vmem:[%s14 + $0x4c] sm:$0xf]
      %v5777 = vld [vmem:[%s14 + $0x50] sm:$0xf]
      %v5778 = vld [vmem:[%s14 + $0x54] sm:$0xf]
      %v5779 = vld [vmem:[%s14 + $0x58] sm:$0xf]
      %v5780 = vld [vmem:[%s14 + $0x5c] sm:$0xf]
      %v5781 = vld [vmem:[%s14 + $0x60] sm:$0xf]
      %v5782 = vld [vmem:[%s14 + $0x64] sm:$0xf]
      %v5783 = vld [vmem:[%s14 + $0x68] sm:$0xf]
      %v5784 = vld [vmem:[%s14 + $0x6c] sm:$0xf]
      %v5785 = vld [vmem:[%s14 + $0x70] sm:$0xf]
      %v5786 = vld [vmem:[%s14 + $0x74] sm:$0xf]
      %v5787 = vld [vmem:[%s14 + $0x78] sm:$0xf]
      %v5788 = vld [vmem:[%s14 + $0x7c] sm:$0xf]
      %v5789 = vld [vmem:[%s14 + $0x80] sm:$0xf]
      %v5790 = vld [vmem:[%s14 + $0x84] sm:$0xf]
      %v5791 = vld [vmem:[%s14 + $0x88] sm:$0xf]
      %v5792 = vld [vmem:[%s14 + $0x8c] sm:$0xf]
      %v5793 = vld [vmem:[%s14 + $0x90] sm:$0xf]
      %v5794 = vld [vmem:[%s14 + $0x94] sm:$0xf]
      %v5795 = vld [vmem:[%s14 + $0x98] sm:$0xf]
      %v5796 = vld [vmem:[%s14 + $0x9c] sm:$0xf]
      %v5797 = vld [vmem:[%s14 + $0xa0] sm:$0xf]
      %v5798 = vld [vmem:[%s14 + $0xa4] sm:$0xf]
      %v5799 = vld [vmem:[%s14 + $0xa8] sm:$0xf]
      %v5800 = vld [vmem:[%s14 + $0xac] sm:$0xf]
      %v5801 = vld [vmem:[%s14 + $0xb0] sm:$0xf]
      %v5802 = vld [vmem:[%s14 + $0xb4] sm:$0xf]
      %v5803 = vld [vmem:[%s14 + $0xb8] sm:$0xf]
      %v5804 = vld [vmem:[%s14 + $0xbc] sm:$0xf]
      %v5805 = vld [vmem:[%s14 + $0xc0] sm:$0xf]
      %v5806 = vld [vmem:[%s14 + $0xc4] sm:$0xf]
      %v5807 = vld [vmem:[%s14 + $0xc8] sm:$0xf]
      %v5808 = vld [vmem:[%s14 + $0xcc] sm:$0xf]
      %v5809 = vld [vmem:[%s14 + $0xd0] sm:$0xf]
      %v5810 = vld [vmem:[%s14 + $0xd4] sm:$0xf]
      %v5811 = vld [vmem:[%s14 + $0xd8] sm:$0xf]
      %v5812 = vld [vmem:[%s14 + $0xdc] sm:$0xf]
      %v5813 = vld [vmem:[%s14 + $0xe0] sm:$0xf]
      %v5814 = vld [vmem:[%s14 + $0xe4] sm:$0xf]
      %v5815 = vld [vmem:[%s14 + $0xe8] sm:$0xf]
      %v5816 = vld [vmem:[%s14 + $0xec] sm:$0xf]
      %v5817 = vld [vmem:[%s14 + $0xf0] sm:$0xf]
      %v5818 = vld [vmem:[%s14 + $0xf4] sm:$0xf]
      %v5819 = vld [vmem:[%s14 + $0xf8] sm:$0xf]
      %v5820 = vld [vmem:[%s14 + $0xfc] sm:$0xf]
      %v5885 = vunpack.c.l.b16 %v5757
      %v5886 = vunpack.c.l.b16 %v5758
      %v5887 = vunpack.c.l.b16 %v5759
      %v5888 = vunpack.c.l.b16 %v5760
      %v5889 = vunpack.c.l.b16 %v5761
      %v5890 = vunpack.c.l.b16 %v5762
      %v5891 = vunpack.c.l.b16 %v5763
      %v5892 = vunpack.c.l.b16 %v5764
      %v5893 = vunpack.c.l.b16 %v5765
      %v5894 = vunpack.c.l.b16 %v5766
      %v5895 = vunpack.c.l.b16 %v5767
      %v5896 = vunpack.c.l.b16 %v5768
      %v5897 = vunpack.c.l.b16 %v5769
      %v5898 = vunpack.c.l.b16 %v5770
      %v5899 = vunpack.c.l.b16 %v5771
      %v5900 = vunpack.c.l.b16 %v5772
      %v5901 = vunpack.c.l.b16 %v5773
      %v5902 = vunpack.c.l.b16 %v5774
      %v5903 = vunpack.c.l.b16 %v5775
      %v5904 = vunpack.c.l.b16 %v5776
      %v5905 = vunpack.c.l.b16 %v5777
      %v5906 = vunpack.c.l.b16 %v5778
      %v5907 = vunpack.c.l.b16 %v5779
      %v5908 = vunpack.c.l.b16 %v5780
      %v5909 = vunpack.c.l.b16 %v5781
      %v5910 = vunpack.c.l.b16 %v5782
      %v5911 = vunpack.c.l.b16 %v5783
      %v5912 = vunpack.c.l.b16 %v5784
      %v5913 = vunpack.c.l.b16 %v5785
      %v5914 = vunpack.c.l.b16 %v5786
      %v5915 = vunpack.c.l.b16 %v5787
      %v5916 = vunpack.c.l.b16 %v5788
      %v5917 = vunpack.c.l.b16 %v5789
      %v5918 = vunpack.c.l.b16 %v5790
      %v5919 = vunpack.c.l.b16 %v5791
      %v5920 = vunpack.c.l.b16 %v5792
      %v5921 = vunpack.c.l.b16 %v5793
      %v5922 = vunpack.c.l.b16 %v5794
      %v5923 = vunpack.c.l.b16 %v5795
      %v5924 = vunpack.c.l.b16 %v5796
      %v5925 = vunpack.c.l.b16 %v5797
      %v5926 = vunpack.c.l.b16 %v5798
      %v5927 = vunpack.c.l.b16 %v5799
      %v5928 = vunpack.c.l.b16 %v5800
      %v5929 = vunpack.c.l.b16 %v5801
      %v5930 = vunpack.c.l.b16 %v5802
      %v5931 = vunpack.c.l.b16 %v5803
      %v5932 = vunpack.c.l.b16 %v5804
      %v5933 = vunpack.c.l.b16 %v5805
      %v5934 = vunpack.c.l.b16 %v5806
      %v5935 = vunpack.c.l.b16 %v5807
      %v5936 = vunpack.c.l.b16 %v5808
      %v5937 = vunpack.c.l.b16 %v5809
      %v5938 = vunpack.c.l.b16 %v5810
      %v5939 = vunpack.c.l.b16 %v5811
      %v5940 = vunpack.c.l.b16 %v5812
      %v5941 = vunpack.c.l.b16 %v5813
      %v5942 = vunpack.c.l.b16 %v5814
      %v5943 = vunpack.c.l.b16 %v5815
      %v5944 = vunpack.c.l.b16 %v5816
      %v5945 = vunpack.c.l.b16 %v5817
      %v5946 = vunpack.c.l.b16 %v5818
      %v5947 = vunpack.c.l.b16 %v5819
      %v5948 = vunpack.c.l.b16 %v5820
      %v5949 = vpack.c.b16 %v5886, %v5885
      %v5950 = vpack.c.b16 %v5888, %v5887
      %v5951 = vpack.c.b16 %v5890, %v5889
      %v5952 = vpack.c.b16 %v5892, %v5891
      %v5953 = vpack.c.b16 %v5894, %v5893
      %v5954 = vpack.c.b16 %v5896, %v5895
      %v5955 = vpack.c.b16 %v5898, %v5897
      %v5956 = vpack.c.b16 %v5900, %v5899
      %v5957 = vpack.c.b16 %v5902, %v5901
      %v5958 = vpack.c.b16 %v5904, %v5903
      %v5959 = vpack.c.b16 %v5906, %v5905
      %v5960 = vpack.c.b16 %v5908, %v5907
      %v5961 = vpack.c.b16 %v5910, %v5909
      %v5962 = vpack.c.b16 %v5912, %v5911
      %v5963 = vpack.c.b16 %v5914, %v5913
      %v5964 = vpack.c.b16 %v5916, %v5915
      %v5965 = vpack.c.b16 %v5918, %v5917
      %v5966 = vpack.c.b16 %v5920, %v5919
      %v5967 = vpack.c.b16 %v5922, %v5921
      %v5968 = vpack.c.b16 %v5924, %v5923
      %v5969 = vpack.c.b16 %v5926, %v5925
      %v5970 = vpack.c.b16 %v5928, %v5927
      %v5971 = vpack.c.b16 %v5930, %v5929
      %v5972 = vpack.c.b16 %v5932, %v5931
      %v5973 = vpack.c.b16 %v5934, %v5933
      %v5974 = vpack.c.b16 %v5936, %v5935
      %v5975 = vpack.c.b16 %v5938, %v5937
      %v5976 = vpack.c.b16 %v5940, %v5939
      %v5977 = vpack.c.b16 %v5942, %v5941
      %v5978 = vpack.c.b16 %v5944, %v5943
      %v5979 = vpack.c.b16 %v5946, %v5945
      %v5980 = vpack.c.b16 %v5948, %v5947
      %6013 = vmatprep.subr.bf16.mxu0 0
      %6014 = vmatpush1.bf16.msra.mxu0 %v5949
      %6015 = vmatprep.subr.bf16.mxu0 0
      %6016 = vmatpush1.bf16.msra.mxu0 %v5950
      %6017 = vmatprep.subr.bf16.mxu0 0
      %6018 = vmatpush1.bf16.msra.mxu0 %v5951
      %6019 = vmatprep.subr.bf16.mxu0 0
      %6020 = vmatpush1.bf16.msra.mxu0 %v5952
      %6021 = vmatprep.subr.bf16.mxu0 0
      %6022 = vmatpush1.bf16.msra.mxu0 %v5953
      %6023 = vmatprep.subr.bf16.mxu0 0
      %6024 = vmatpush1.bf16.msra.mxu0 %v5954
      %6025 = vmatprep.subr.bf16.mxu0 0
      %6026 = vmatpush1.bf16.msra.mxu0 %v5955
      %6027 = vmatprep.subr.bf16.mxu0 0
      %6028 = vmatpush1.bf16.msra.mxu0 %v5956
      %6029 = vmatprep.subr.bf16.mxu0 0
      %6030 = vmatpush1.bf16.msra.mxu0 %v5957
      %6031 = vmatprep.subr.bf16.mxu0 0
      %6032 = vmatpush1.bf16.msra.mxu0 %v5958
      %6033 = vmatprep.subr.bf16.mxu0 0
      %6034 = vmatpush1.bf16.msra.mxu0 %v5959
      %6035 = vmatprep.subr.bf16.mxu0 0
      %6036 = vmatpush1.bf16.msra.mxu0 %v5960
      %6037 = vmatprep.subr.bf16.mxu0 0
      %6038 = vmatpush1.bf16.msra.mxu0 %v5961
      %6039 = vmatprep.subr.bf16.mxu0 0
      %6040 = vmatpush1.bf16.msra.mxu0 %v5962
      %6041 = vmatprep.subr.bf16.mxu0 0
      %6042 = vmatpush1.bf16.msra.mxu0 %v5963
      %6043 = vmatprep.subr.bf16.mxu0 0
      %6044 = vmatpush1.bf16.msra.mxu0 %v5964
      %6045 = vmatprep.mubr.bf16.mxu0 %v5754
      %6046 = vmatmul.mubr.bf16.gmra.mrb[0].mxu0 %v5753
      %v6047 = vpop.f32.mrb[0].mxu0
      %v6048 = vadd.f32 0.0, %v6047
      %v6049 = vpop.f32.mrb[0].mxu0
      %v6050 = vpop.f32.mrb[0].mxu0
      %v6051 = vpop.f32.mrb[0].mxu0
      %6052 = vdwg.mxu0
      %6053 = vmatprep.subr.bf16.mxu0 0
      %6054 = vmatpush1.bf16.msra.mxu0 %v5965
      %6055 = vmatprep.subr.bf16.mxu0 0
      %6056 = vmatpush1.bf16.msra.mxu0 %v5966
      %6057 = vmatprep.subr.bf16.mxu0 0
      %6058 = vmatpush1.bf16.msra.mxu0 %v5967
      %6059 = vmatprep.subr.bf16.mxu0 0
      %6060 = vmatpush1.bf16.msra.mxu0 %v5968
      %6061 = vmatprep.subr.bf16.mxu0 0
      %6062 = vmatpush1.bf16.msra.mxu0 %v5969
      %6063 = vmatprep.subr.bf16.mxu0 0
      %6064 = vmatpush1.bf16.msra.mxu0 %v5970
      %6065 = vmatprep.subr.bf16.mxu0 0
      %6066 = vmatpush1.bf16.msra.mxu0 %v5971
      %6067 = vmatprep.subr.bf16.mxu0 0
      %6068 = vmatpush1.bf16.msra.mxu0 %v5972
      %6069 = vmatprep.subr.bf16.mxu0 0
      %6070 = vmatpush1.bf16.msra.mxu0 %v5973
      %6071 = vmatprep.subr.bf16.mxu0 0
      %6072 = vmatpush1.bf16.msra.mxu0 %v5974
      %6073 = vmatprep.subr.bf16.mxu0 0
      %6074 = vmatpush1.bf16.msra.mxu0 %v5975
      %6075 = vmatprep.subr.bf16.mxu0 0
      %6076 = vmatpush1.bf16.msra.mxu0 %v5976
      %6077 = vmatprep.subr.bf16.mxu0 0
      %6078 = vmatpush1.bf16.msra.mxu0 %v5977
      %6079 = vmatprep.subr.bf16.mxu0 0
      %6080 = vmatpush1.bf16.msra.mxu0 %v5978
      %6081 = vmatprep.subr.bf16.mxu0 0
      %6082 = vmatpush1.bf16.msra.mxu0 %v5979
      %6083 = vmatprep.subr.bf16.mxu0 0
      %6084 = vmatpush1.bf16.msra.mxu0 %v5980
      %6085 = vmatprep.mubr.bf16.mxu0 %v5756
      %6086 = vmatmul.mubr.bf16.gmra.mrb[0].mxu0 %v5755
      %v6087 = vpop.f32.mrb[0].mxu0
      %v6088 = vadd.f32 %v6048, %v6087
      %v6089 = vpop.f32.mrb[0].mxu0
      %v6090 = vpop.f32.mrb[0].mxu0
      %v6091 = vpop.f32.mrb[0].mxu0
      %6092 = vdwg.mxu0
      %v6093 = vmin.f32 %v6088, 20.0
      %v6094 = vmul.f32 %v6093, 1.442695
      %v6095 = vpow.pop %v6094
      %v6096 = vadd.f32 %v6095, 2.0
      %v6097 = vmul.f32 %v6095, %v6096
      %v6098 = vadd.f32 %v6097, 2.0
      %v6099 = vrcp.pop %v6098
      %v6100 = vmul.f32 %v6097, %v6099
      %v6101 = vmul.f32 %v6088, %v6100
      %v6102 = vpack.c.bf16 %v6101, %v6101
      %v6103 = vld [vmem:[%s15] sm:$0xf]
      %v6104 = vld [vmem:[%s15 + $0x4] sm:$0xf]
      %v6105 = vld [vmem:[%s15 + $0x8] sm:$0xf]
      %v6106 = vld [vmem:[%s15 + $0xc] sm:$0xf]
      %v6107 = vld [vmem:[%s15 + $0x10] sm:$0xf]
      %v6108 = vld [vmem:[%s15 + $0x14] sm:$0xf]
      %v6109 = vld [vmem:[%s15 + $0x18] sm:$0xf]
      %v6110 = vld [vmem:[%s15 + $0x1c] sm:$0xf]
      %v6111 = vld [vmem:[%s15 + $0x20] sm:$0xf]
      %v6112 = vld [vmem:[%s15 + $0x24] sm:$0xf]
      %v6113 = vld [vmem:[%s15 + $0x28] sm:$0xf]
      %v6114 = vld [vmem:[%s15 + $0x2c] sm:$0xf]
      %v6115 = vld [vmem:[%s15 + $0x30] sm:$0xf]
      %v6116 = vld [vmem:[%s15 + $0x34] sm:$0xf]
      %v6117 = vld [vmem:[%s15 + $0x38] sm:$0xf]
      %v6118 = vld [vmem:[%s15 + $0x3c] sm:$0xf]
      %v6135 = vunpack.c.l.b16 %v6103
      %v6136 = vunpack.c.l.b16 %v6104
      %v6137 = vunpack.c.l.b16 %v6105
      %v6138 = vunpack.c.l.b16 %v6106
      %v6139 = vunpack.c.l.b16 %v6107
      %v6140 = vunpack.c.l.b16 %v6108
      %v6141 = vunpack.c.l.b16 %v6109
      %v6142 = vunpack.c.l.b16 %v6110
      %v6143 = vunpack.c.l.b16 %v6111
      %v6144 = vunpack.c.l.b16 %v6112
      %v6145 = vunpack.c.l.b16 %v6113
      %v6146 = vunpack.c.l.b16 %v6114
      %v6147 = vunpack.c.l.b16 %v6115
      %v6148 = vunpack.c.l.b16 %v6116
      %v6149 = vunpack.c.l.b16 %v6117
      %v6150 = vunpack.c.l.b16 %v6118
      %v6151 = vpack.c.b16 %v6136, %v6135
      %v6152 = vpack.c.b16 %v6138, %v6137
      %v6153 = vpack.c.b16 %v6140, %v6139
      %v6154 = vpack.c.b16 %v6142, %v6141
      %v6155 = vpack.c.b16 %v6144, %v6143
      %v6156 = vpack.c.b16 %v6146, %v6145
      %v6157 = vpack.c.b16 %v6148, %v6147
      %v6158 = vpack.c.b16 %v6150, %v6149
      %6167 = vmatprep.subr.bf16.mxu0 0
      %6168 = vmatpush1.bf16.msra.mxu0 %v6151
      %6169 = vmatprep.subr.bf16.mxu0 0
      %6170 = vmatpush1.bf16.msra.mxu0 %v6152
      %6171 = vmatprep.subr.bf16.mxu0 0
      %6172 = vmatpush1.bf16.msra.mxu0 %v6153
      %6173 = vmatprep.subr.bf16.mxu0 0
      %6174 = vmatpush1.bf16.msra.mxu0 %v6154
      %6175 = vmatprep.subr.bf16.mxu0 0
      %6176 = vmatpush1.bf16.msra.mxu0 %v6155
      %6177 = vmatprep.subr.bf16.mxu0 0
      %6178 = vmatpush1.bf16.msra.mxu0 %v6156
      %6179 = vmatprep.subr.bf16.mxu0 0
      %6180 = vmatpush1.bf16.msra.mxu0 %v6157
      %6181 = vmatprep.subr.bf16.mxu0 0
      %6182 = vmatpush1.bf16.msra.mxu0 %v6158
      %6183 = vmatprep.subr.bf16.mxu0 0
      %6184 = vmatpush1.bf16.msra.mxu0 0
      %6185 = vmatprep.subr.bf16.mxu0 0
      %6186 = vmatpush1.bf16.msra.mxu0 0
      %6187 = vmatprep.subr.bf16.mxu0 0
      %6188 = vmatpush1.bf16.msra.mxu0 0
      %6189 = vmatprep.subr.bf16.mxu0 0
      %6190 = vmatpush1.bf16.msra.mxu0 0
      %6191 = vmatprep.subr.bf16.mxu0 0
      %6192 = vmatpush1.bf16.msra.mxu0 0
      %6193 = vmatprep.subr.bf16.mxu0 0
      %6194 = vmatpush1.bf16.msra.mxu0 0
      %6195 = vmatprep.subr.bf16.mxu0 0
      %6196 = vmatpush1.bf16.msra.mxu0 0
      %6197 = vmatprep.subr.bf16.mxu0 0
      %6198 = vmatpush1.bf16.msra.mxu0 0
      %6199 = vmatprep.mubr.bf16.mxu0 0
      %6200 = vmatmul.mubr.bf16.gmra.mrb[0].mxu0 %v6102
      %v6201 = vpop.f32.mrb[0].mxu0
      %v6202 = vadd.f32 0.0, %v6201
      %v6203 = vpop.f32.mrb[0].mxu0
      %v6204 = vpop.f32.mrb[0].mxu0
      %v6205 = vpop.f32.mrb[0].mxu0
      %6206 = vdwg.mxu0
      %v6207 = vmin.f32 %v6202, 20.0
      %v6208 = vmul.f32 %v6207, 1.442695
      %v6209 = vpow.pop %v6208
      %v6210 = vadd.f32 %v6209, 2.0
      %v6211 = vmul.f32 %v6209, %v6210
      %v6212 = vadd.f32 %v6211, 2.0
      %v6213 = vrcp.pop %v6212
      %v6214 = vmul.f32 %v6211, %v6213
      %v6215 = vmul.f32 %v6202, %v6214
      %6216 = vst [vmem:[%s519] sm:$0x3] %v6215
      %p6217 = scmp.lt.s32.totalorder %s27, 1
      %s6218 = scalar_select %p6217, %s27, 1
      %s6219 = smul.addr %s6218, 2
      %s6220 = scalar_lea.vmem %s16, %s6219
      // Predicated region
      $region85: #{q_net_forward.1} parent=83 // pred_check
        %p6221 = pneg %p386
      $region86: #{q_net_forward.1} parent=83 // pred_check_branch
        %6223 = sbr.rel (%p6221) target = $region88
      $region87: #{q_net_forward.1} parent=83 // pred_region
        _
      $region88: #{q_net_forward.1} parent=83 // pred_fallthru
        _
    $region84: #{q_net_forward.1} parent=5 // pred_fallthru
      _
    %p6224 = scmp.le.s32.totalorder 2, %s22
    // Predicated region
    $region89: #{q_net_forward.1} parent=5 // pred_check
      %p6225 = pneg %p6224
    $region90: #{q_net_forward.1} parent=5 // pred_check_branch
      %6227 = sbr.rel (%p6225) target = $region92
    $region91: #{q_net_forward.1} parent=5 // pred_region
      %s6228 = ssub.s32 %s22, 2
      // Predicated region
      $region93: #{q_net_forward.1} parent=91 // pred_check
        %p6229 = pneg %p392
      $region94: #{q_net_forward.1} parent=91 // pred_check_branch
        %6231 = sbr.rel (%p6229) target = $region96
      $region95: #{q_net_forward.1} parent=91 // pred_region
        %p6232 = scmp.lt.s32.totalorder %s28, 1
        %s6233 = scalar_select %p6232, %s28, 1
        %s6234 = smul.addr %s6233, 2
        %s6235 = scalar_lea.vmem %s16, %s6234
      $region96: #{q_net_forward.1} parent=91 // pred_fallthru
        _
    $region92: #{q_net_forward.1} parent=5 // pred_fallthru
      _
  $region6: #{q_net_forward.1} parent=0 // loop_footer
    %s26 = sadd.s32 1, %s22
  $region7: #{q_net_forward.1} parent=0 // loop_footer_branch
    %21 = sbr.rel target = $region3
  $region8: #{q_net_forward.1} parent=0 // loop_exit
    _

</llo_original>
